<compile_context>
chip_gen: v7x
topology: tpu7x:2x2x1
jax: 0.10.0
libtpu: 0.0.40
codegen_flags: <defaults>
</compile_context>

<pallas_src>
import functools

import jax
import jax.numpy as jnp
from jax.experimental import pallas as pl
from jax.experimental.pallas import tpu as pltpu

_MXU_DTYPE = jnp.bfloat16      # MXU operand dtype
_STORE_DTYPE = jnp.bfloat16    # HBM-resident intermediate dtype
_MATMUL_TM = 2048              # row tile for the 1x1-conv / linear matmuls
_STATS_TM = 2048               # row tile for the standalone BN-stats kernel
_ATTN_TN = 1024                # N (pixel) tile for the attention kernels
_BN_EPS = 1e-5

_vmem_cache = [None]


def _vmem_limit():
    """Generation-aware scoped-VMEM limit (falls back to a safe 48 MiB)."""
    if _vmem_cache[0] is None:
        try:
            cap = int(pltpu.get_tpu_info().vmem_capacity_bytes)
            _vmem_cache[0] = int(max(32 << 20, min((cap * 3) // 4, 100 << 20)))
        except Exception:  # attribute / backend differences -> conservative
            _vmem_cache[0] = 48 << 20
    return _vmem_cache[0]


def _cparams(sem):
    return pltpu.CompilerParams(dimension_semantics=sem,
                                vmem_limit_bytes=_vmem_limit())


def _gelu(x):
    # exact (erf-based) GELU, matching nn.GELU() default
    return 0.5 * x * (1.0 + jax.lax.erf(x * 0.7071067811865476))


def _pick_th(h, w, c, budget_bytes=4 * 1024 * 1024):
    """H-strip for the depthwise conv: largest strip whose f32 copy fits budget."""
    th = budget_bytes // max(1, w * c * 4)
    return int(max(1, min(h, th)))


# ----------------------------------------------------------------------------
# Fused matmul family:
#   y_i = (BN(x)) @ W_i   (+ bias, GELU, + residual applied to y_0)
# Optionally emits accumulated per-channel (sum, sum^2) of y_0 so the next
# BatchNorm needs no extra HBM pass over x.
# ----------------------------------------------------------------------------
def _make_matmul_kernel(n_w, has_bn, has_bias, has_res, activation,
                        emit_stats, m_total, tm, bn_eps):
    def kernel(*refs):
        refs = list(refs)
        x_ref = refs.pop(0)
        w_refs = [refs.pop(0) for _ in range(n_w)]
        if has_bn:
            st_ref = refs.pop(0)
            g_ref = refs.pop(0)
            bb_ref = refs.pop(0)
        if has_bias:
            bias_ref = refs.pop(0)
        if has_res:
            res_ref = refs.pop(0)
        out_refs = [refs.pop(0) for _ in range(n_w)]
        stats_ref = refs.pop(0) if emit_stats else None

        x = x_ref[...].astype(jnp.float32)
        if has_bn:
            inv_m = 1.0 / m_total
            mean = st_ref[0:1, :] * inv_m
            var = jnp.maximum(st_ref[1:2, :] * inv_m - mean * mean, 0.0)
            scale = g_ref[...].astype(jnp.float32) * jax.lax.rsqrt(var + bn_eps)
            shift = bb_ref[...].astype(jnp.float32) - mean * scale
            x = x * scale + shift
        xo = x.astype(w_refs[0].dtype)
        ys = [jnp.dot(xo, wr[...], preferred_element_type=jnp.float32)
              for wr in w_refs]
        if has_bias:
            ys[0] = ys[0] + bias_ref[...].astype(jnp.float32)
        if activation == "gelu":
            ys[0] = _gelu(ys[0])
        if has_res:
            ys[0] = ys[0] + res_ref[...].astype(jnp.float32)
        for y, o_ref in zip(ys, out_refs):
            o_ref[...] = y.astype(o_ref.dtype)

        if emit_stats:
            i = pl.program_id(0)
            rows = jax.lax.broadcasted_iota(jnp.int32, (ys[0].shape[0], 1), 0) + i * tm
            ym = jnp.where(rows < m_total, ys[0], 0.0)

            @pl.when(i == 0)
            def _():
                stats_ref[...] = jnp.zeros_like(stats_ref)

            stats_ref[0:1, :] += jnp.sum(ym, axis=0, keepdims=True)
            stats_ref[1:2, :] += jnp.sum(ym * ym, axis=0, keepdims=True)

    return kernel


def pallas_matmul(x, ws, bn=None, bias=None, residual=None, activation=None,
                  emit_stats=False, out_dtypes=None):
    """x: [M, K]; ws: list of [K, Ni].  Returns a tuple of outputs (plus a
    [2, N0] stats array when emit_stats)."""
    M, K = x.shape
    ws = [w.astype(_MXU_DTYPE) for w in ws]
    n_w = len(ws)
    n_outs = [w.shape[1] for w in ws]
    if out_dtypes is None:
        out_dtypes = [jnp.float32] * n_w
    assert (bias is None and residual is None and activation is None
            and not emit_stats) or n_w == 1

    tm = M if M <= _MATMUL_TM else _MATMUL_TM
    grid = (pl.cdiv(M, tm),)

    in_specs = [pl.BlockSpec((tm, K), lambda i: (i, 0))]
    args = [x]
    for w in ws:
        in_specs.append(pl.BlockSpec(w.shape, lambda i: (0, 0)))
        args.append(w)
    if bn is not None:
        stats, gamma, beta = bn
        in_specs += [pl.BlockSpec((2, K), lambda i: (0, 0)),
                     pl.BlockSpec((1, K), lambda i: (0, 0)),
                     pl.BlockSpec((1, K), lambda i: (0, 0))]
        args += [stats, gamma.reshape(1, K).astype(jnp.float32),
                 beta.reshape(1, K).astype(jnp.float32)]
    if bias is not None:
        in_specs.append(pl.BlockSpec((1, n_outs[0]), lambda i: (0, 0)))
        args.append(bias.reshape(1, n_outs[0]).astype(jnp.float32))
    if residual is not None:
        in_specs.append(pl.BlockSpec((tm, n_outs[0]), lambda i: (i, 0)))
        args.append(residual)

    out_shapes = [jax.ShapeDtypeStruct((M, n), dt)
                  for n, dt in zip(n_outs, out_dtypes)]
    out_specs = [pl.BlockSpec((tm, n), lambda i: (i, 0)) for n in n_outs]
    if emit_stats:
        out_shapes.append(jax.ShapeDtypeStruct((2, n_outs[0]), jnp.float32))
        out_specs.append(pl.BlockSpec((2, n_outs[0]), lambda i: (0, 0)))

    # stats accumulation across the M axis requires "arbitrary" semantics
    sem = ("arbitrary",) if emit_stats else ("parallel",)
    return pl.pallas_call(
        _make_matmul_kernel(n_w, bn is not None, bias is not None,
                            residual is not None, activation, emit_stats,
                            float(M), tm, _BN_EPS),
        out_shape=tuple(out_shapes),
        grid=grid,
        in_specs=in_specs,
        out_specs=tuple(out_specs),
        compiler_params=_cparams(sem),
    )(*args)


# ----------------------------------------------------------------------------
# Standalone BN statistics (only needed for the very first block's input):
# emits raw per-channel [sum; sum^2] accumulated over all rows.
# ----------------------------------------------------------------------------
def _bn_stats_kernel(x_ref, o_ref, *, m_total, tm):
    i = pl.program_id(0)

    @pl.when(i == 0)
    def _():
        o_ref[...] = jnp.zeros_like(o_ref)

    x = x_ref[...].astype(jnp.float32)
    rows = jax.lax.broadcasted_iota(jnp.int32, (x.shape[0], 1), 0) + i * tm
    x = jnp.where(rows < m_total, x, 0.0)
    o_ref[0:1, :] += jnp.sum(x, axis=0, keepdims=True)
    o_ref[1:2, :] += jnp.sum(x * x, axis=0, keepdims=True)


def pallas_bn_stats(x_flat):
    M, C = x_flat.shape
    tm = M if M <= _STATS_TM else _STATS_TM
    return pl.pallas_call(
        functools.partial(_bn_stats_kernel, m_total=M, tm=tm),
        out_shape=jax.ShapeDtypeStruct((2, C), jnp.float32),
        grid=(pl.cdiv(M, tm),),
        in_specs=[pl.BlockSpec((tm, C), lambda i: (i, 0))],
        out_specs=pl.BlockSpec((2, C), lambda i: (0, 0)),
        compiler_params=_cparams(("arbitrary",)),
    )(x_flat)


# ----------------------------------------------------------------------------
# IGMSA pass 1: N-tiled Gram accumulation + block-diagonal softmax + proj fold.
#   G[i, j]   = sum_n k[n, i] * q[n, j]          (one inner-wide dot_general)
#   P         = softmax_rows( G / (|k_i||q_j|) * rescale  masked to head blocks)
#   M_b[j, c] = sum_i P[i, j] * Wproj[i, c]      (proj folded per batch)
# ----------------------------------------------------------------------------
def _make_attn_gram_kernel(heads, dim_head, n_total, tn):
    inner = heads * dim_head
    eps_sq = 1e-24  # (F.normalize eps=1e-12)**2

    def kernel(qk_ref, wproj_ref, rescale_ref, maskb_ref, m_ref,
               gram_ref, nrm_ref):
        n_idx = pl.program_id(1)

        @pl.when(n_idx == 0)
        def _():
            gram_ref[...] = jnp.zeros_like(gram_ref)
            nrm_ref[...] = jnp.zeros_like(nrm_ref)

        qk = qk_ref[...]                                         # [tn, 2*inner]
        rows = jax.lax.broadcasted_iota(jnp.int32, (qk.shape[0], 1), 0) + n_idx * tn
        qk = jnp.where(rows < n_total, qk, jnp.zeros_like(qk))   # ragged N tile
        q = qk[:, :inner]
        k = qk[:, inner:]
        gram_ref[...] += jax.lax.dot_general(
            k, q, (((0,), (0,)), ((), ())), preferred_element_type=jnp.float32)
        qf = q.astype(jnp.float32)
        kf = k.astype(jnp.float32)
        nrm_ref[0:1, :] += jnp.sum(qf * qf, axis=0, keepdims=True)
        nrm_ref[1:2, :] += jnp.sum(kf * kf, axis=0, keepdims=True)

        @pl.when(n_idx == pl.num_programs(1) - 1)
        def _():
            inv_q = jax.lax.rsqrt(jnp.maximum(nrm_ref[0:1, :], eps_sq))
            inv_k = jax.lax.rsqrt(jnp.maximum(nrm_ref[1:2, :], eps_sq))
            # row-scale the Gram by inv_k via a diagonal matmul (no transposes)
            ii = jax.lax.broadcasted_iota(jnp.int32, (inner, inner), 0)
            jj = jax.lax.broadcasted_iota(jnp.int32, (inner, inner), 1)
            diag_invk = jnp.where(ii == jj, inv_k, 0.0)          # [inner, inner]
            g = jnp.dot(diag_invk, gram_ref[...],
                        preferred_element_type=jnp.float32) * inv_q
            # per-head rescale (column form is equivalent on diagonal blocks)
            a = g * rescale_ref[...] + maskb_ref[...]            # mask = -1e30 off-block
            a = a - jnp.max(a, axis=-1, keepdims=True)
            e = jnp.exp(a)
            p = e * pl.reciprocal(jnp.sum(e, axis=-1, keepdims=True), approx=True)
            # fold the output projection: M_b = P^T @ Wproj
            m_ref[...] = jax.lax.dot_general(
                p, wproj_ref[...], (((0,), (0,)), ((), ())),
                preferred_element_type=jnp.float32).astype(m_ref.dtype)

    return kernel


def pallas_attn_gram(qk, wproj, rescale, heads, dim_head):
    """qk: [B, N, 2*inner] -> per-batch folded matrices M [B, inner, C]."""
    B, N, two_inner = qk.shape
    inner = heads * dim_head
    assert two_inner == 2 * inner
    C = wproj.shape[1]
    tn = N if N <= _ATTN_TN else _ATTN_TN
    nt = pl.cdiv(N, tn)
    rvec = jnp.repeat(rescale.astype(jnp.float32).reshape(-1),
                      dim_head).reshape(1, inner)
    hid = jnp.arange(inner, dtype=jnp.int32) // dim_head
    maskb = jnp.where(hid[:, None] == hid[None, :], 0.0, -1e30).astype(jnp.float32)
    return pl.pallas_call(
        _make_attn_gram_kernel(heads, dim_head, N, tn),
        out_shape=jax.ShapeDtypeStruct((B, inner, C), jnp.float32),
        grid=(B, nt),
        in_specs=[pl.BlockSpec((None, tn, two_inner), lambda b, n: (b, n, 0)),
                  pl.BlockSpec((inner, C), lambda b, n: (0, 0)),
                  pl.BlockSpec((1, inner), lambda b, n: (0, 0)),
                  pl.BlockSpec((inner, inner), lambda b, n: (0, 0))],
        out_specs=pl.BlockSpec((None, inner, C), lambda b, n: (b, 0, 0)),
        scratch_shapes=[pltpu.VMEM((inner, inner), jnp.float32),
                        pltpu.VMEM((2, inner), jnp.float32)],
        compiler_params=_cparams(("parallel", "arbitrary")),
    )(qk, wproj.astype(jnp.float32), rvec, maskb)


# ----------------------------------------------------------------------------
# IGMSA pass 2: N-tiled   x = (v*illu) @ M_b + bproj + (out_p + x_skip)
# (attention output, output projection and both residuals in one matmul).
# Also emits per-batch BN2 statistics (sum, sum^2) of the produced x.
# ----------------------------------------------------------------------------
def _make_attn_out_kernel(n_total, tn):
    def kernel(v_ref, illu_ref, m_ref, bias_ref, res_ref, o_ref, st_ref):
        n_idx = pl.program_id(1)
        vi = v_ref[...].astype(jnp.float32) * illu_ref[...].astype(jnp.float32)
        y = jnp.dot(vi.astype(_MXU_DTYPE), m_ref[...].astype(_MXU_DTYPE),
                    preferred_element_type=jnp.float32)
        y = y + bias_ref[...] + res_ref[...].astype(jnp.float32)
        o_ref[...] = y.astype(o_ref.dtype)

        rows = jax.lax.broadcasted_iota(jnp.int32, (y.shape[0], 1), 0) + n_idx * tn
        ym = jnp.where(rows < n_total, y, 0.0)

        @pl.when(n_idx == 0)
        def _():
            st_ref[...] = jnp.zeros_like(st_ref)

        st_ref[0:1, :] += jnp.sum(ym, axis=0, keepdims=True)
        st_ref[1:2, :] += jnp.sum(ym * ym, axis=0, keepdims=True)

    return kernel


def pallas_attn_out(v, illu, m_proj, bias, res):
    """v, illu: [B, N, inner]; m_proj: [B, inner, C]; res: [B, N, C].
    Returns (x [B, N, C] f32, per-batch stats [B, 2, C] f32)."""
    B, N, inner = v.shape
    C = m_proj.shape[2]
    tn = N if N <= _ATTN_TN else _ATTN_TN
    nt = pl.cdiv(N, tn)
    return pl.pallas_call(
        _make_attn_out_kernel(N, tn),
        out_shape=(jax.ShapeDtypeStruct((B, N, C), jnp.float32),
                   jax.ShapeDtypeStruct((B, 2, C), jnp.float32)),
        grid=(B, nt),
        in_specs=[pl.BlockSpec((None, tn, inner), lambda b, n: (b, n, 0)),
                  pl.BlockSpec((None, tn, inner), lambda b, n: (b, n, 0)),
                  pl.BlockSpec((None, inner, C), lambda b, n: (b, 0, 0)),
                  pl.BlockSpec((1, C), lambda b, n: (0, 0)),
                  pl.BlockSpec((None, tn, C), lambda b, n: (b, n, 0))],
        out_specs=(pl.BlockSpec((None, tn, C), lambda b, n: (b, n, 0)),
                   pl.BlockSpec((None, 2, C), lambda b, n: (b, 0, 0))),
        compiler_params=_cparams(("parallel", "arbitrary")),
    )(v, illu, m_proj, bias.reshape(1, C).astype(jnp.float32), res)


# ----------------------------------------------------------------------------
# Depthwise 3x3 conv (pad=1, no bias): halo rows via index_map, horizontal
# shifts via XLU rolls + boundary masks, ragged H strips, fused GELU / residual.
# ----------------------------------------------------------------------------
def _make_dwconv_kernel(th, w_dim, h_total, activation, has_res):
    def kernel(*refs):
        if has_res:
            c_ref, t_ref, bt_ref, w_ref, r_ref, o_ref = refs
        else:
            c_ref, t_ref, bt_ref, w_ref, o_ref = refs
            r_ref = None
        i = pl.program_id(1)
        nst = pl.num_programs(1)

        x = c_ref[...].astype(jnp.float32)                        # [th, W, C]
        rows = jax.lax.broadcasted_iota(jnp.int32, (th, 1, 1), 0) + i * th
        x = jnp.where(rows < h_total, x, 0.0)                     # ragged bottom strip
        top = t_ref[...].astype(jnp.float32) * (i > 0).astype(jnp.float32)
        bot = bt_ref[...].astype(jnp.float32) * (i + 1 < nst).astype(jnp.float32)
        wgt = w_ref[...].astype(jnp.float32)                      # [3, 3, C]

        xv = jnp.concatenate([top, x, bot], axis=0)               # [th+2, W, C]
        # +/-1 shifts along W on the XLU (rolls) instead of sliced VMEM copies
        col = jax.lax.broadcasted_iota(jnp.int32, (1, w_dim, 1), 1)
        xl = pltpu.roll(xv, shift=1, axis=1) * (col > 0).astype(jnp.float32)
        xr = pltpu.roll(xv, shift=w_dim - 1, axis=1) * (col < w_dim - 1).astype(jnp.float32)

        acc = (xl[0:th] * wgt[0, 0] + xv[0:th] * wgt[0, 1] + xr[0:th] * wgt[0, 2]
               + xl[1:th + 1] * wgt[1, 0] + xv[1:th + 1] * wgt[1, 1]
               + xr[1:th + 1] * wgt[1, 2]
               + xl[2:th + 2] * wgt[2, 0] + xv[2:th + 2] * wgt[2, 1]
               + xr[2:th + 2] * wgt[2, 2])
        if activation == "gelu":
            acc = _gelu(acc)
        if has_res:
            acc = acc + r_ref[...].astype(jnp.float32)
        o_ref[...] = acc.astype(o_ref.dtype)

    return kernel


def pallas_dwconv3x3(x_nhwc, w, activation=None, residual=None, out_dtype=None):
    """x: [B, H, W, C], w: [3, 3, C] -> [B, H, W, C] (depthwise, pad=1)."""
    B, H, W, C = x_nhwc.shape
    if out_dtype is None:
        out_dtype = x_nhwc.dtype
    th = _pick_th(H, W, C)
    nh = pl.cdiv(H, th)
    in_specs = [
        pl.BlockSpec((None, th, W, C), lambda b, i: (b, i, 0, 0)),
        # one-row halos above/below (clamped; zeroed in-kernel at boundaries)
        pl.BlockSpec((None, 1, W, C),
                     lambda b, i: (b, jnp.maximum(i * th - 1, 0), 0, 0)),
        pl.BlockSpec((None, 1, W, C),
                     lambda b, i: (b, jnp.minimum(i * th + th, H - 1), 0, 0)),
        pl.BlockSpec((3, 3, C), lambda b, i: (0, 0, 0)),
    ]
    args = [x_nhwc, x_nhwc, x_nhwc, w]
    if residual is not None:
        in_specs.append(pl.BlockSpec((None, th, W, C), lambda b, i: (b, i, 0, 0)))
        args.append(residual)
    return pl.pallas_call(
        _make_dwconv_kernel(th, W, H, activation, residual is not None),
        out_shape=jax.ShapeDtypeStruct((B, H, W, C), out_dtype),
        grid=(B, nh),
        in_specs=in_specs,
        out_specs=pl.BlockSpec((None, th, W, C), lambda b, i: (b, i, 0, 0)),
        compiler_params=_cparams(("parallel", "parallel")),
    )(*args)


# ----------------------------------------------------------------------------
# Module wiring (plain JAX glue: free reshapes, tiny [2,C]/weight-slice ops,
# and the NCHW<->NHWC boundary).
# ----------------------------------------------------------------------------
def igab_forward(x_nchw, illu_nchw, params, heads, dim_head):
    x = jnp.transpose(x_nchw, (0, 2, 3, 1)).astype(jnp.float32)   # NHWC f32 state
    illu = jnp.transpose(illu_nchw, (0, 2, 3, 1))
    B, H, W, C = x.shape
    N = H * W
    inner = heads * dim_head
    assert inner == C, "pos_emb reshape requires heads*dim_head == dim"
    illu_flat = illu.reshape(B, N, C).astype(_STORE_DTYPE)

    # BN1 stats of the module input (first block only); later blocks get them
    # fused from the producing kernels.
    stats1 = pallas_bn_stats(x.reshape(B * N, C))

    blocks = params["blocks"]
    for bi, p in enumerate(blocks):
        xf = x.reshape(B * N, C)
        msa = p["msa"]

        # ---------------- IGMSA + residual ----------------
        wqkv = msa["wqkv"]
        qk, v = pallas_matmul(
            xf, [wqkv[:, :2 * inner], wqkv[:, 2 * inner:]],
            bn=(stats1, p["bn1_g"], p["bn1_b"]),
            out_dtypes=[_STORE_DTYPE, _STORE_DTYPE])
        pos = pallas_dwconv3x3(v.reshape(B, H, W, C), msa["pos_w1"],
                               activation="gelu", out_dtype=_STORE_DTYPE)
        pos = pallas_dwconv3x3(pos, msa["pos_w2"], residual=x,
                               out_dtype=jnp.float32)             # out_p + x_skip
        m_proj = pallas_attn_gram(qk.reshape(B, N, 2 * inner), msa["wproj"],
                                  msa["rescale"], heads, dim_head)
        x3, stats2_part = pallas_attn_out(v.reshape(B, N, inner), illu_flat,
                                          m_proj, msa["bproj"],
                                          pos.reshape(B, N, C))
        x = x3.reshape(B, H, W, C)
        stats2 = jnp.sum(stats2_part, axis=0)      # tiny per-batch combine

        # ---------------- FFN + residual ----------------
        xf = x.reshape(B * N, C)
        (h1,) = pallas_matmul(xf, [p["ffn"]["w1"]],
                              bn=(stats2, p["bn2_g"], p["bn2_b"]),
                              activation="gelu", out_dtypes=[_STORE_DTYPE])
        h2 = pallas_dwconv3x3(h1.reshape(B, H, W, 2 * C), p["ffn"]["dw"],
                              activation="gelu", out_dtype=_STORE_DTYPE)
        emit = bi + 1 < len(blocks)
        outs = pallas_matmul(h2.reshape(B * N, 2 * C), [p["ffn"]["w2"]],
                             residual=xf, emit_stats=emit,
                             out_dtypes=[jnp.float32])
        x = outs[0].reshape(B, H, W, C)
        if emit:
            stats1 = outs[1]                       # BN1 stats for next block

    return jnp.transpose(x, (0, 3, 1, 2))


# ----------------------------------------------------------------------------
# deterministic synthetic parameter init (shapes follow the PyTorch __init__)
# ----------------------------------------------------------------------------
def init_params(key, dim, num_blocks, heads, dim_head):
    assert heads * dim_head == dim, "pos_emb reshape requires heads*dim_head == dim"
    inner = heads * dim_head

    def nrm(k, shape, scale=0.1):
        return scale * jax.random.normal(k, shape, jnp.float32)

    blocks = []
    for _ in range(num_blocks):
        key, *ks = jax.random.split(key, 13)
        blocks.append({
            "bn1_g": 1.0 + nrm(ks[0], (dim,)),
            "bn1_b": nrm(ks[1], (dim,)),
            "bn2_g": 1.0 + nrm(ks[2], (dim,)),
            "bn2_b": nrm(ks[3], (dim,)),
            "msa": {
                "wqkv": nrm(ks[4], (dim, 3 * inner)),   # [wq | wk | wv] fused
                "rescale": jnp.ones((heads,), jnp.float32),
                "wproj": nrm(ks[5], (inner, dim)),
                "bproj": nrm(ks[6], (dim,)),
                "pos_w1": nrm(ks[7], (3, 3, dim)),      # depthwise 3x3
                "pos_w2": nrm(ks[8], (3, 3, dim)),
            },
            "ffn": {
                "w1": nrm(ks[9], (dim, 2 * dim)),       # 1x1 conv, no bias
                "dw": nrm(ks[10], (3, 3, 2 * dim)),     # depthwise 3x3
                "w2": nrm(ks[11], (2 * dim, dim)),      # 1x1 conv, no bias
            },
        })
    return {"blocks": blocks}


if __name__ == "__main__":
    B, dim, H, W = 2, 16, 8, 8
    heads, dim_head, num_blocks = 2, 8, 2

    key = jax.random.PRNGKey(0)
    kx, ki, kp = jax.random.split(key, 3)
    x = jax.random.normal(kx, (B, dim, H, W), jnp.float32)
    illu_feat = jax.random.normal(ki, (B, dim, H, W), jnp.float32)
    params = init_params(kp, dim, num_blocks, heads, dim_head)

    fwd = jax.jit(functools.partial(igab_forward, heads=heads, dim_head=dim_head))
    out = jax.block_until_ready(fwd(x, illu_feat, params))
    assert out.shape == (B, dim, H, W)
    print("KERNEL_OK")
</pallas_src>

<mosaic_0001>
module attributes {stable_mosaic.version = 11 : i64} {
  func.func @kernel(%arg0: i32, %arg1: memref<128x16xf32, #tpu.memory_space<vmem>>, %arg2: memref<16x32xbf16, #tpu.memory_space<vmem>>, %arg3: memref<16x16xbf16, #tpu.memory_space<vmem>>, %arg4: memref<2x16xf32, #tpu.memory_space<vmem>>, %arg5: memref<1x16xf32, #tpu.memory_space<vmem>>, %arg6: memref<1x16xf32, #tpu.memory_space<vmem>>, %arg7: memref<128x32xbf16, #tpu.memory_space<vmem>>, %arg8: memref<128x16xbf16, #tpu.memory_space<vmem>>) attributes {dimension_semantics = [#tpu.dimension_semantics<parallel>], iteration_bounds = array<i64: 1>, scalar_prefetch = 0 : i64, scratch_operands = 0 : i64, tpu.core_type = #tpu.core_type<tc>, window_params = [{transform_indices = @transform_0, window_bounds = array<i64: 128, 16>}, {pipeline_mode = #tpu.pipeline_mode<synchronous>, transform_indices = @transform_1, window_bounds = array<i64: 16, 32>}, {pipeline_mode = #tpu.pipeline_mode<synchronous>, transform_indices = @transform_2, window_bounds = array<i64: 16, 16>}, {pipeline_mode = #tpu.pipeline_mode<synchronous>, transform_indices = @transform_3, window_bounds = array<i64: 2, 16>}, {pipeline_mode = #tpu.pipeline_mode<synchronous>, transform_indices = @transform_4, window_bounds = array<i64: 1, 16>}, {pipeline_mode = #tpu.pipeline_mode<synchronous>, transform_indices = @transform_5, window_bounds = array<i64: 1, 16>}, {transform_indices = @transform_6, window_bounds = array<i64: 128, 32>}, {transform_indices = @transform_7, window_bounds = array<i64: 128, 16>}]} {
    %c0 = arith.constant 0 : index
    %c0_0 = arith.constant 0 : index
    %0 = vector.load %arg1[%c0, %c0_0] : memref<128x16xf32, #tpu.memory_space<vmem>>, vector<128x16xf32>
    %c0_1 = arith.constant 0 : index
    %c0_2 = arith.constant 0 : index
    %1 = vector.load %arg4[%c0_1, %c0_2] : memref<2x16xf32, #tpu.memory_space<vmem>>, vector<1x16xf32>
    %cst = arith.constant 7.812500e-03 : f32
    %2 = vector.broadcast %cst : f32 to vector<1x16xf32>
    %3 = arith.mulf %1, %2 : vector<1x16xf32>
    %c1 = arith.constant 1 : index
    %c0_3 = arith.constant 0 : index
    %4 = vector.load %arg4[%c1, %c0_3] : memref<2x16xf32, #tpu.memory_space<vmem>>, vector<1x16xf32>
    %cst_4 = arith.constant 7.812500e-03 : f32
    %5 = vector.broadcast %cst_4 : f32 to vector<1x16xf32>
    %6 = arith.mulf %4, %5 : vector<1x16xf32>
    %7 = arith.mulf %3, %3 : vector<1x16xf32>
    %8 = arith.subf %6, %7 : vector<1x16xf32>
    %cst_5 = arith.constant 0.000000e+00 : f32
    %9 = vector.broadcast %cst_5 : f32 to vector<1x16xf32>
    %10 = arith.maximumf %8, %9 : vector<1x16xf32>
    %c0_6 = arith.constant 0 : index
    %c0_7 = arith.constant 0 : index
    %11 = vector.load %arg5[%c0_6, %c0_7] : memref<1x16xf32, #tpu.memory_space<vmem>>, vector<1x16xf32>
    %cst_8 = arith.constant 9.99999974E-6 : f32
    %12 = vector.broadcast %cst_8 : f32 to vector<1x16xf32>
    %13 = arith.addf %10, %12 : vector<1x16xf32>
    %14 = math.rsqrt %13 : vector<1x16xf32>
    %15 = arith.mulf %11, %14 : vector<1x16xf32>
    %c0_9 = arith.constant 0 : index
    %c0_10 = arith.constant 0 : index
    %16 = vector.load %arg6[%c0_9, %c0_10] : memref<1x16xf32, #tpu.memory_space<vmem>>, vector<1x16xf32>
    %17 = arith.mulf %3, %15 : vector<1x16xf32>
    %18 = arith.subf %16, %17 : vector<1x16xf32>
    %19 = vector.broadcast %15 : vector<1x16xf32> to vector<128x16xf32>
    %20 = arith.mulf %0, %19 : vector<128x16xf32>
    %21 = vector.broadcast %18 : vector<1x16xf32> to vector<128x16xf32>
    %22 = arith.addf %20, %21 : vector<128x16xf32>
    %23 = arith.truncf %22 : vector<128x16xf32> to vector<128x16xbf16>
    %c0_11 = arith.constant 0 : index
    %c0_12 = arith.constant 0 : index
    %24 = vector.load %arg2[%c0_11, %c0_12] : memref<16x32xbf16, #tpu.memory_space<vmem>>, vector<16x32xbf16>
    %cst_13 = arith.constant dense<0.000000e+00> : vector<128x32xf32>
    %25 = tpu.matmul %23, %24, %cst_13 {dimension_numbers = #tpu.dot_dimension_numbers<[1], [0], [0], [1], [0, 0, 1, 1], [], []>} : vector<128x16xbf16>, vector<16x32xbf16>, vector<128x32xf32> -> vector<128x32xf32>
    %c0_14 = arith.constant 0 : index
    %c0_15 = arith.constant 0 : index
    %26 = vector.load %arg3[%c0_14, %c0_15] : memref<16x16xbf16, #tpu.memory_space<vmem>>, vector<16x16xbf16>
    %cst_16 = arith.constant dense<0.000000e+00> : vector<128x16xf32>
    %27 = tpu.matmul %23, %26, %cst_16 {dimension_numbers = #tpu.dot_dimension_numbers<[1], [0], [0], [1], [0, 0, 1, 1], [], []>} : vector<128x16xbf16>, vector<16x16xbf16>, vector<128x16xf32> -> vector<128x16xf32>
    %28 = arith.truncf %25 : vector<128x32xf32> to vector<128x32xbf16>
    %c0_17 = arith.constant 0 : index
    %c0_18 = arith.constant 0 : index
    %29 = vector.load %arg7[%c0_17, %c0_18] : memref<128x32xbf16, #tpu.memory_space<vmem>>, vector<128x32xbf16>
    tpu.vector_store %arg7[%c0_17, %c0_18], %28 {strides = array<i32>} : memref<128x32xbf16, #tpu.memory_space<vmem>>, vector<128x32xbf16>,
    %30 = arith.truncf %27 : vector<128x16xf32> to vector<128x16xbf16>
    %c0_19 = arith.constant 0 : index
    %c0_20 = arith.constant 0 : index
    %31 = vector.load %arg8[%c0_19, %c0_20] : memref<128x16xbf16, #tpu.memory_space<vmem>>, vector<128x16xbf16>
    tpu.vector_store %arg8[%c0_19, %c0_20], %30 {strides = array<i32>} : memref<128x16xbf16, #tpu.memory_space<vmem>>, vector<128x16xbf16>,
    return
  }
  func.func @transform_0(%arg0: i32) -> (i32, i32) {
    %c0_i32 = arith.constant 0 : i32
    %c0_i32_0 = arith.constant 0 : i32
    return %arg0, %c0_i32 : i32, i32
  }
  func.func @transform_1(%arg0: i32) -> (i32, i32) {
    %c0_i32 = arith.constant 0 : i32
    %c0_i32_0 = arith.constant 0 : i32
    %c0_i32_1 = arith.constant 0 : i32
    return %c0_i32, %c0_i32_0 : i32, i32
  }
  func.func @transform_2(%arg0: i32) -> (i32, i32) {
    %c0_i32 = arith.constant 0 : i32
    %c0_i32_0 = arith.constant 0 : i32
    %c0_i32_1 = arith.constant 0 : i32
    return %c0_i32, %c0_i32_0 : i32, i32
  }
  func.func @transform_3(%arg0: i32) -> (i32, i32) {
    %c0_i32 = arith.constant 0 : i32
    %c0_i32_0 = arith.constant 0 : i32
    %c0_i32_1 = arith.constant 0 : i32
    return %c0_i32, %c0_i32_0 : i32, i32
  }
  func.func @transform_4(%arg0: i32) -> (i32, i32) {
    %c0_i32 = arith.constant 0 : i32
    %c0_i32_0 = arith.constant 0 : i32
    %c0_i32_1 = arith.constant 0 : i32
    return %c0_i32, %c0_i32_0 : i32, i32
  }
  func.func @transform_5(%arg0: i32) -> (i32, i32) {
    %c0_i32 = arith.constant 0 : i32
    %c0_i32_0 = arith.constant 0 : i32
    %c0_i32_1 = arith.constant 0 : i32
    return %c0_i32, %c0_i32_0 : i32, i32
  }
  func.func @transform_6(%arg0: i32) -> (i32, i32) {
    %c0_i32 = arith.constant 0 : i32
    %c0_i32_0 = arith.constant 0 : i32
    return %arg0, %c0_i32 : i32, i32
  }
  func.func @transform_7(%arg0: i32) -> (i32, i32) {
    %c0_i32 = arith.constant 0 : i32
    %c0_i32_0 = arith.constant 0 : i32
    return %arg0, %c0_i32 : i32, i32
  }
}

module attributes {stable_mosaic.version = 11 : i64} {
  func.func @_bn_stats_kernel(%arg0: i32, %arg1: memref<128x16xf32, #tpu.memory_space<vmem>>, %arg2: memref<2x16xf32, #tpu.memory_space<vmem>>) attributes {dimension_semantics = [#tpu.dimension_semantics<arbitrary>], iteration_bounds = array<i64: 1>, scalar_prefetch = 0 : i64, scratch_operands = 0 : i64, tpu.core_type = #tpu.core_type<tc>, window_params = [{transform_indices = @transform_0, window_bounds = array<i64: 128, 16>}, {pipeline_mode = #tpu.pipeline_mode<synchronous>, transform_indices = @transform_1, window_bounds = array<i64: 2, 16>}]} {
    %c0_i32 = arith.constant 0 : i32
    %0 = arith.cmpi eq, %arg0, %c0_i32 : i32
    %1 = arith.extui %0 : i1 to i32
    %c0_i32_0 = arith.constant 0 : i32
    %2 = arith.cmpi ne, %1, %c0_i32_0 : i32
    scf.if %2 {
      %cst_12 = arith.constant 0.000000e+00 : f32
      %25 = vector.broadcast %cst_12 : f32 to vector<2x16xf32>
      %c0_13 = arith.constant 0 : index
      %c0_14 = arith.constant 0 : index
      %26 = vector.load %arg2[%c0_13, %c0_14] : memref<2x16xf32, #tpu.memory_space<vmem>>, vector<2x16xf32>
      tpu.vector_store %arg2[%c0_13, %c0_14], %25 {strides = array<i32>} : memref<2x16xf32, #tpu.memory_space<vmem>>, vector<2x16xf32>,
    } else {
    }
    %c0 = arith.constant 0 : index
    %c0_1 = arith.constant 0 : index
    %3 = vector.load %arg1[%c0, %c0_1] : memref<128x16xf32, #tpu.memory_space<vmem>>, vector<128x16xf32>
    %4 = tpu.iota {dimensions = array<i32: 0>} : vector<128x1xi32>
    %c128_i32 = arith.constant 128 : i32
    %5 = arith.muli %arg0, %c128_i32 : i32
    %6 = vector.broadcast %5 : i32 to vector<128x1xi32>
    %7 = arith.addi %4, %6 : vector<128x1xi32>
    %c128_i32_2 = arith.constant 128 : i32
    %8 = vector.broadcast %c128_i32_2 : i32 to vector<128x1xi32>
    %9 = arith.cmpi slt, %7, %8 : vector<128x1xi32>
    %cst = arith.constant 0.000000e+00 : f32
    %10 = vector.shape_cast %9 : vector<128x1xi1> to vector<128x1xi1>
    %11 = vector.broadcast %10 : vector<128x1xi1> to vector<128x16xi1>
    %12 = vector.broadcast %cst : f32 to vector<128x16xf32>
    %13 = arith.select %11, %3, %12 : vector<128x16xi1>, vector<128x16xf32>
    %c0_3 = arith.constant 0 : index
    %c0_4 = arith.constant 0 : index
    %14 = vector.load %arg2[%c0_3, %c0_4] : memref<2x16xf32, #tpu.memory_space<vmem>>, vector<1x16xf32>
    %cst_5 = arith.constant dense<0.000000e+00> : vector<16xf32>
    %15 = vector.multi_reduction <add>, %13, %cst_5 [0] : vector<128x16xf32> to vector<16xf32>
    %16 = vector.shape_cast %15 : vector<16xf32> to vector<1x16xf32>
    %17 = arith.addf %14, %16 : vector<1x16xf32>
    %c0_6 = arith.constant 0 : index
    %c0_7 = arith.constant 0 : index
    %18 = vector.load %arg2[%c0_6, %c0_7] : memref<2x16xf32, #tpu.memory_space<vmem>>, vector<1x16xf32>
    tpu.vector_store %arg2[%c0_6, %c0_7], %17 {strides = array<i32>} : memref<2x16xf32, #tpu.memory_space<vmem>>, vector<1x16xf32>,
    %c1 = arith.constant 1 : index
    %c0_8 = arith.constant 0 : index
    %19 = vector.load %arg2[%c1, %c0_8] : memref<2x16xf32, #tpu.memory_space<vmem>>, vector<1x16xf32>
    %20 = arith.mulf %13, %13 : vector<128x16xf32>
    %cst_9 = arith.constant dense<0.000000e+00> : vector<16xf32>
    %21 = vector.multi_reduction <add>, %20, %cst_9 [0] : vector<128x16xf32> to vector<16xf32>
    %22 = vector.shape_cast %21 : vector<16xf32> to vector<1x16xf32>
    %23 = arith.addf %19, %22 : vector<1x16xf32>
    %c1_10 = arith.constant 1 : index
    %c0_11 = arith.constant 0 : index
    %24 = vector.load %arg2[%c1_10, %c0_11] : memref<2x16xf32, #tpu.memory_space<vmem>>, vector<1x16xf32>
    tpu.vector_store %arg2[%c1_10, %c0_11], %23 {strides = array<i32>} : memref<2x16xf32, #tpu.memory_space<vmem>>, vector<1x16xf32>,
    return
  }
  func.func @transform_0(%arg0: i32) -> (i32, i32) {
    %c0_i32 = arith.constant 0 : i32
    %c0_i32_0 = arith.constant 0 : i32
    return %arg0, %c0_i32 : i32, i32
  }
  func.func @transform_1(%arg0: i32) -> (i32, i32) {
    %c0_i32 = arith.constant 0 : i32
    %c0_i32_0 = arith.constant 0 : i32
    %c0_i32_1 = arith.constant 0 : i32
    return %c0_i32, %c0_i32_0 : i32, i32
  }
}

module attributes {stable_mosaic.version = 11 : i64} {
  func.func @kernel(%arg0: i32, %arg1: i32, %arg2: memref<1x64x32xbf16, #tpu.memory_space<vmem>>, %arg3: memref<16x16xf32, #tpu.memory_space<vmem>>, %arg4: memref<1x16xf32, #tpu.memory_space<vmem>>, %arg5: memref<16x16xf32, #tpu.memory_space<vmem>>, %arg6: memref<1x16x16xf32, #tpu.memory_space<vmem>>, %arg7: memref<16x16xf32, #tpu.memory_space<vmem>>, %arg8: memref<2x16xf32, #tpu.memory_space<vmem>>) attributes {dimension_semantics = [#tpu.dimension_semantics<parallel>, #tpu.dimension_semantics<arbitrary>], iteration_bounds = array<i64: 2, 1>, scalar_prefetch = 0 : i64, scratch_operands = 2 : i64, tpu.core_type = #tpu.core_type<tc>, window_params = [{transform_indices = @transform_0, window_bounds = array<i64: 1, 64, 32>}, {pipeline_mode = #tpu.pipeline_mode<synchronous>, transform_indices = @transform_1, window_bounds = array<i64: 16, 16>}, {pipeline_mode = #tpu.pipeline_mode<synchronous>, transform_indices = @transform_2, window_bounds = array<i64: 1, 16>}, {pipeline_mode = #tpu.pipeline_mode<synchronous>, transform_indices = @transform_3, window_bounds = array<i64: 16, 16>}, {transform_indices = @transform_4, window_bounds = array<i64: 1, 16, 16>}]} {
    %c0_i32 = arith.constant 0 : i32
    %0 = arith.cmpi eq, %arg1, %c0_i32 : i32
    %1 = arith.extui %0 : i1 to i32
    %c0_i32_0 = arith.constant 0 : i32
    %2 = arith.cmpi ne, %1, %c0_i32_0 : i32
    scf.if %2 {
      %cst_20 = arith.constant 0.000000e+00 : f32
      %38 = vector.broadcast %cst_20 : f32 to vector<16x16xf32>
      %c0_21 = arith.constant 0 : index
      %c0_22 = arith.constant 0 : index
      %39 = vector.load %arg7[%c0_21, %c0_22] : memref<16x16xf32, #tpu.memory_space<vmem>>, vector<16x16xf32>
      tpu.vector_store %arg7[%c0_21, %c0_22], %38 {strides = array<i32>} : memref<16x16xf32, #tpu.memory_space<vmem>>, vector<16x16xf32>,
      %cst_23 = arith.constant 0.000000e+00 : f32
      %40 = vector.broadcast %cst_23 : f32 to vector<2x16xf32>
      %c0_24 = arith.constant 0 : index
      %c0_25 = arith.constant 0 : index
      %41 = vector.load %arg8[%c0_24, %c0_25] : memref<2x16xf32, #tpu.memory_space<vmem>>, vector<2x16xf32>
      tpu.vector_store %arg8[%c0_24, %c0_25], %40 {strides = array<i32>} : memref<2x16xf32, #tpu.memory_space<vmem>>, vector<2x16xf32>,
    } else {
    }
    %c0 = arith.constant 0 : index
    %c0_1 = arith.constant 0 : index
    %c0_2 = arith.constant 0 : index
    %3 = vector.load %arg2[%c0, %c0_1, %c0_2] : memref<1x64x32xbf16, #tpu.memory_space<vmem>>, vector<1x64x32xbf16>
    %4 = vector.shape_cast %3 : vector<1x64x32xbf16> to vector<64x32xbf16>
    %5 = tpu.iota {dimensions = array<i32: 0>} : vector<64x1xi32>
    %c64_i32 = arith.constant 64 : i32
    %6 = arith.muli %arg1, %c64_i32 : i32
    %7 = vector.broadcast %6 : i32 to vector<64x1xi32>
    %8 = arith.addi %5, %7 : vector<64x1xi32>
    %c64_i32_3 = arith.constant 64 : i32
    %9 = vector.broadcast %c64_i32_3 : i32 to vector<64x1xi32>
    %10 = arith.cmpi slt, %8, %9 : vector<64x1xi32>
    %cst = arith.constant 0.000000e+00 : bf16
    %11 = vector.broadcast %cst : bf16 to vector<64x32xbf16>
    %12 = vector.shape_cast %10 : vector<64x1xi1> to vector<64x1xi1>
    %13 = vector.broadcast %12 : vector<64x1xi1> to vector<64x32xi1>
    %14 = arith.select %13, %4, %11 : vector<64x32xi1>, vector<64x32xbf16>
    %15 = vector.extract_strided_slice %14 {offsets = [0, 0], sizes = [64, 16], strides = [1, 1]} : vector<64x32xbf16> to vector<64x16xbf16>
    %16 = vector.extract_strided_slice %14 {offsets = [0, 16], sizes = [64, 16], strides = [1, 1]} : vector<64x32xbf16> to vector<64x16xbf16>
    %c0_4 = arith.constant 0 : index
    %c0_5 = arith.constant 0 : index
    %17 = vector.load %arg7[%c0_4, %c0_5] : memref<16x16xf32, #tpu.memory_space<vmem>>, vector<16x16xf32>
    %cst_6 = arith.constant dense<0.000000e+00> : vector<16x16xf32>
    %18 = tpu.matmul %16, %15, %cst_6 {dimension_numbers = #tpu.dot_dimension_numbers<[0], [0], [1], [1], [0, 1, 1, 1], [], []>} : vector<64x16xbf16>, vector<64x16xbf16>, vector<16x16xf32> -> vector<16x16xf32>
    %19 = arith.addf %17, %18 : vector<16x16xf32>
    %c0_7 = arith.constant 0 : index
    %c0_8 = arith.constant 0 : index
    %20 = vector.load %arg7[%c0_7, %c0_8] : memref<16x16xf32, #tpu.memory_space<vmem>>, vector<16x16xf32>
    tpu.vector_store %arg7[%c0_7, %c0_8], %19 {strides = array<i32>} : memref<16x16xf32, #tpu.memory_space<vmem>>, vector<16x16xf32>,
    %21 = arith.extf %15 : vector<64x16xbf16> to vector<64x16xf32>
    %22 = arith.extf %16 : vector<64x16xbf16> to vector<64x16xf32>
    %c0_9 = arith.constant 0 : index
    %c0_10 = arith.constant 0 : index
    %23 = vector.load %arg8[%c0_9, %c0_10] : memref<2x16xf32, #tpu.memory_space<vmem>>, vector<1x16xf32>
    %24 = arith.mulf %21, %21 : vector<64x16xf32>
    %cst_11 = arith.constant dense<0.000000e+00> : vector<16xf32>
    %25 = vector.multi_reduction <add>, %24, %cst_11 [0] : vector<64x16xf32> to vector<16xf32>
    %26 = vector.shape_cast %25 : vector<16xf32> to vector<1x16xf32>
    %27 = arith.addf %23, %26 : vector<1x16xf32>
    %c0_12 = arith.constant 0 : index
    %c0_13 = arith.constant 0 : index
    %28 = vector.load %arg8[%c0_12, %c0_13] : memref<2x16xf32, #tpu.memory_space<vmem>>, vector<1x16xf32>
    tpu.vector_store %arg8[%c0_12, %c0_13], %27 {strides = array<i32>} : memref<2x16xf32, #tpu.memory_space<vmem>>, vector<1x16xf32>,
    %c1 = arith.constant 1 : index
    %c0_14 = arith.constant 0 : index
    %29 = vector.load %arg8[%c1, %c0_14] : memref<2x16xf32, #tpu.memory_space<vmem>>, vector<1x16xf32>
    %30 = arith.mulf %22, %22 : vector<64x16xf32>
    %cst_15 = arith.constant dense<0.000000e+00> : vector<16xf32>
    %31 = vector.multi_reduction <add>, %30, %cst_15 [0] : vector<64x16xf32> to vector<16xf32>
    %32 = vector.shape_cast %31 : vector<16xf32> to vector<1x16xf32>
    %33 = arith.addf %29, %32 : vector<1x16xf32>
    %c1_16 = arith.constant 1 : index
    %c0_17 = arith.constant 0 : index
    %34 = vector.load %arg8[%c1_16, %c0_17] : memref<2x16xf32, #tpu.memory_space<vmem>>, vector<1x16xf32>
    tpu.vector_store %arg8[%c1_16, %c0_17], %33 {strides = array<i32>} : memref<2x16xf32, #tpu.memory_space<vmem>>, vector<1x16xf32>,
    %c0_i32_18 = arith.constant 0 : i32
    %35 = arith.cmpi eq, %arg1, %c0_i32_18 : i32
    %36 = arith.extui %35 : i1 to i32
    %c0_i32_19 = arith.constant 0 : i32
    %37 = arith.cmpi ne, %36, %c0_i32_19 : i32
    scf.if %37 {
      %c0_20 = arith.constant 0 : index
      %c0_21 = arith.constant 0 : index
      %38 = vector.load %arg8[%c0_20, %c0_21] : memref<2x16xf32, #tpu.memory_space<vmem>>, vector<1x16xf32>
      %cst_22 = arith.constant 1.000000e-24 : f32
      %39 = vector.broadcast %cst_22 : f32 to vector<1x16xf32>
      %40 = arith.maximumf %38, %39 : vector<1x16xf32>
      %41 = math.rsqrt %40 : vector<1x16xf32>
      %c1_23 = arith.constant 1 : index
      %c0_24 = arith.constant 0 : index
      %42 = vector.load %arg8[%c1_23, %c0_24] : memref<2x16xf32, #tpu.memory_space<vmem>>, vector<1x16xf32>
      %cst_25 = arith.constant 1.000000e-24 : f32
      %43 = vector.broadcast %cst_25 : f32 to vector<1x16xf32>
      %44 = arith.maximumf %42, %43 : vector<1x16xf32>
      %45 = math.rsqrt %44 : vector<1x16xf32>
      %46 = tpu.iota {dimensions = array<i32: 0>} : vector<16x16xi32>
      %47 = tpu.iota {dimensions = array<i32: 1>} : vector<16x16xi32>
      %48 = arith.cmpi eq, %46, %47 : vector<16x16xi32>
      %cst_26 = arith.constant 0.000000e+00 : f32
      %49 = vector.shape_cast %45 : vector<1x16xf32> to vector<1x16xf32>
      %50 = vector.broadcast %49 : vector<1x16xf32> to vector<16x16xf32>
      %51 = vector.broadcast %cst_26 : f32 to vector<16x16xf32>
      %52 = arith.select %48, %50, %51 : vector<16x16xi1>, vector<16x16xf32>
      %c0_27 = arith.constant 0 : index
      %c0_28 = arith.constant 0 : index
      %53 = vector.load %arg7[%c0_27, %c0_28] : memref<16x16xf32, #tpu.memory_space<vmem>>, vector<16x16xf32>
      %cst_29 = arith.constant dense<0.000000e+00> : vector<16x16xf32>
      %54 = tpu.matmul %52, %53, %cst_29 {dimension_numbers = #tpu.dot_dimension_numbers<[1], [0], [0], [1], [0, 0, 1, 1], [], []>} : vector<16x16xf32>, vector<16x16xf32>, vector<16x16xf32> -> vector<16x16xf32>
      %55 = vector.broadcast %41 : vector<1x16xf32> to vector<16x16xf32>
      %56 = arith.mulf %54, %55 : vector<16x16xf32>
      %c0_30 = arith.constant 0 : index
      %c0_31 = arith.constant 0 : index
      %57 = vector.load %arg4[%c0_30, %c0_31] : memref<1x16xf32, #tpu.memory_space<vmem>>, vector<1x16xf32>
      %58 = vector.broadcast %57 : vector<1x16xf32> to vector<16x16xf32>
      %59 = arith.mulf %56, %58 : vector<16x16xf32>
      %c0_32 = arith.constant 0 : index
      %c0_33 = arith.constant 0 : index
      %60 = vector.load %arg5[%c0_32, %c0_33] : memref<16x16xf32, #tpu.memory_space<vmem>>, vector<16x16xf32>
      %61 = arith.addf %59, %60 : vector<16x16xf32>
      %cst_34 = arith.constant dense<0xFF800000> : vector<16xf32>
      %62 = vector.multi_reduction <maximumf>, %61, %cst_34 [1] : vector<16x16xf32> to vector<16xf32>
      %63 = vector.shape_cast %62 : vector<16xf32> to vector<16x1xf32>
      %64 = vector.broadcast %63 : vector<16x1xf32> to vector<16x16xf32>
      %65 = arith.subf %61, %64 : vector<16x16xf32>
      %66 = math.exp %65 : vector<16x16xf32>
      %cst_35 = arith.constant dense<0.000000e+00> : vector<16xf32>
      %67 = vector.multi_reduction <add>, %66, %cst_35 [1] : vector<16x16xf32> to vector<16xf32>
      %68 = vector.shape_cast %67 : vector<16xf32> to vector<16x1xf32>
      %69 = tpu.reciprocal %68 {approx = true} : vector<16x1xf32> -> vector<16x1xf32>
      %70 = vector.broadcast %69 : vector<16x1xf32> to vector<16x16xf32>
      %71 = arith.mulf %66, %70 : vector<16x16xf32>
      %c0_36 = arith.constant 0 : index
      %c0_37 = arith.constant 0 : index
      %72 = vector.load %arg3[%c0_36, %c0_37] : memref<16x16xf32, #tpu.memory_space<vmem>>, vector<16x16xf32>
      %cst_38 = arith.constant dense<0.000000e+00> : vector<16x16xf32>
      %73 = tpu.matmul %71, %72, %cst_38 {dimension_numbers = #tpu.dot_dimension_numbers<[0], [0], [1], [1], [0, 1, 1, 1], [], []>} : vector<16x16xf32>, vector<16x16xf32>, vector<16x16xf32> -> vector<16x16xf32>
      %c0_39 = arith.constant 0 : index
      %c0_40 = arith.constant 0 : index
      %c0_41 = arith.constant 0 : index
      %74 = vector.load %arg6[%c0_39, %c0_40, %c0_41] : memref<1x16x16xf32, #tpu.memory_space<vmem>>, vector<1x16x16xf32>
      %75 = vector.shape_cast %74 : vector<1x16x16xf32> to vector<16x16xf32>
      %76 = vector.shape_cast %73 : vector<16x16xf32> to vector<1x16x16xf32>
      tpu.vector_store %arg6[%c0_39, %c0_40, %c0_41], %76 {strides = array<i32>} : memref<1x16x16xf32, #tpu.memory_space<vmem>>, vector<1x16x16xf32>,
    } else {
    }
    return
  }
  func.func @transform_0(%arg0: i32, %arg1: i32) -> (i32, i32, i32) {
    %c0_i32 = arith.constant 0 : i32
    %c0_i32_0 = arith.constant 0 : i32
    return %arg0, %arg1, %c0_i32 : i32, i32, i32
  }
  func.func @transform_1(%arg0: i32, %arg1: i32) -> (i32, i32) {
    %c0_i32 = arith.constant 0 : i32
    %c0_i32_0 = arith.constant 0 : i32
    %c0_i32_1 = arith.constant 0 : i32
    return %c0_i32, %c0_i32_0 : i32, i32
  }
  func.func @transform_2(%arg0: i32, %arg1: i32) -> (i32, i32) {
    %c0_i32 = arith.constant 0 : i32
    %c0_i32_0 = arith.constant 0 : i32
    %c0_i32_1 = arith.constant 0 : i32
    return %c0_i32, %c0_i32_0 : i32, i32
  }
  func.func @transform_3(%arg0: i32, %arg1: i32) -> (i32, i32) {
    %c0_i32 = arith.constant 0 : i32
    %c0_i32_0 = arith.constant 0 : i32
    %c0_i32_1 = arith.constant 0 : i32
    return %c0_i32, %c0_i32_0 : i32, i32
  }
  func.func @transform_4(%arg0: i32, %arg1: i32) -> (i32, i32, i32) {
    %c0_i32 = arith.constant 0 : i32
    %c0_i32_0 = arith.constant 0 : i32
    %c0_i32_1 = arith.constant 0 : i32
    return %arg0, %c0_i32, %c0_i32_0 : i32, i32, i32
  }
}

module attributes {stable_mosaic.version = 11 : i64} {
  func.func @kernel(%arg0: i32, %arg1: i32, %arg2: memref<1x8x8x16xbf16, #tpu.memory_space<vmem>>, %arg3: memref<1x1x8x16xbf16, #tpu.memory_space<vmem>>, %arg4: memref<1x1x8x16xbf16, #tpu.memory_space<vmem>>, %arg5: memref<3x3x16xf32, #tpu.memory_space<vmem>>, %arg6: memref<1x8x8x16xbf16, #tpu.memory_space<vmem>>) attributes {dimension_semantics = [#tpu.dimension_semantics<parallel>, #tpu.dimension_semantics<parallel>], iteration_bounds = array<i64: 2, 1>, scalar_prefetch = 0 : i64, scratch_operands = 0 : i64, tpu.core_type = #tpu.core_type<tc>, window_params = [{transform_indices = @transform_0, window_bounds = array<i64: 1, 8, 8, 16>}, {transform_indices = @transform_1, window_bounds = array<i64: 1, 1, 8, 16>}, {transform_indices = @transform_2, window_bounds = array<i64: 1, 1, 8, 16>}, {pipeline_mode = #tpu.pipeline_mode<synchronous>, transform_indices = @transform_3, window_bounds = array<i64: 3, 3, 16>}, {transform_indices = @transform_4, window_bounds = array<i64: 1, 8, 8, 16>}]} {
    %c0 = arith.constant 0 : index
    %c0_0 = arith.constant 0 : index
    %c0_1 = arith.constant 0 : index
    %c0_2 = arith.constant 0 : index
    %0 = vector.load %arg2[%c0, %c0_0, %c0_1, %c0_2] : memref<1x8x8x16xbf16, #tpu.memory_space<vmem>>, vector<1x8x8x16xbf16>
    %1 = vector.shape_cast %0 : vector<1x8x8x16xbf16> to vector<8x8x16xbf16>
    %2 = arith.extf %1 : vector<8x8x16xbf16> to vector<8x8x16xf32>
    %3 = tpu.iota {dimensions = array<i32: 0>} : vector<8x1x1xi32>
    %c8_i32 = arith.constant 8 : i32
    %4 = arith.muli %arg1, %c8_i32 : i32
    %5 = vector.broadcast %4 : i32 to vector<8x1x1xi32>
    %6 = arith.addi %3, %5 : vector<8x1x1xi32>
    %c8_i32_3 = arith.constant 8 : i32
    %7 = vector.broadcast %c8_i32_3 : i32 to vector<8x1x1xi32>
    %8 = arith.cmpi slt, %6, %7 : vector<8x1x1xi32>
    %cst = arith.constant 0.000000e+00 : f32
    %9 = vector.shape_cast %8 : vector<8x1x1xi1> to vector<8x1x1xi1>
    %10 = vector.broadcast %9 : vector<8x1x1xi1> to vector<8x8x16xi1>
    %11 = vector.broadcast %cst : f32 to vector<8x8x16xf32>
    %12 = arith.select %10, %2, %11 : vector<8x8x16xi1>, vector<8x8x16xf32>
    %c0_4 = arith.constant 0 : index
    %c0_5 = arith.constant 0 : index
    %c0_6 = arith.constant 0 : index
    %c0_7 = arith.constant 0 : index
    %13 = vector.load %arg3[%c0_4, %c0_5, %c0_6, %c0_7] : memref<1x1x8x16xbf16, #tpu.memory_space<vmem>>, vector<1x1x8x16xbf16>
    %14 = vector.shape_cast %13 : vector<1x1x8x16xbf16> to vector<1x8x16xbf16>
    %15 = arith.extf %14 : vector<1x8x16xbf16> to vector<1x8x16xf32>
    %c0_i32 = arith.constant 0 : i32
    %16 = arith.cmpi sgt, %arg1, %c0_i32 : i32
    %17 = arith.extui %16 : i1 to i32
    %18 = arith.sitofp %17 : i32 to f32
    %19 = vector.broadcast %18 : f32 to vector<1x8x16xf32>
    %20 = arith.mulf %15, %19 : vector<1x8x16xf32>
    %c0_8 = arith.constant 0 : index
    %c0_9 = arith.constant 0 : index
    %c0_10 = arith.constant 0 : index
    %c0_11 = arith.constant 0 : index
    %21 = vector.load %arg4[%c0_8, %c0_9, %c0_10, %c0_11] : memref<1x1x8x16xbf16, #tpu.memory_space<vmem>>, vector<1x1x8x16xbf16>
    %22 = vector.shape_cast %21 : vector<1x1x8x16xbf16> to vector<1x8x16xbf16>
    %23 = arith.extf %22 : vector<1x8x16xbf16> to vector<1x8x16xf32>
    %c1_i32 = arith.constant 1 : i32
    %24 = arith.addi %arg1, %c1_i32 : i32
    %c1_i32_12 = arith.constant 1 : i32
    %25 = arith.cmpi slt, %24, %c1_i32_12 : i32
    %26 = arith.extui %25 : i1 to i32
    %27 = arith.sitofp %26 : i32 to f32
    %28 = vector.broadcast %27 : f32 to vector<1x8x16xf32>
    %29 = arith.mulf %23, %28 : vector<1x8x16xf32>
    %c0_13 = arith.constant 0 : index
    %c0_14 = arith.constant 0 : index
    %c0_15 = arith.constant 0 : index
    %30 = vector.load %arg5[%c0_13, %c0_14, %c0_15] : memref<3x3x16xf32, #tpu.memory_space<vmem>>, vector<3x3x16xf32>
    %31 = tpu.concatenate %20, %12, %29 in 0 : vector<1x8x16xf32>, vector<8x8x16xf32>, vector<1x8x16xf32> -> vector<10x8x16xf32>
    %32 = tpu.iota {dimensions = array<i32: 1>} : vector<1x8x1xi32>
    %c1_i32_16 = arith.constant 1 : i32
    %33 = tpu.dynamic_rotate %31 by %c1_i32_16 dim 1 : vector<10x8x16xf32>, i32 -> vector<10x8x16xf32>
    %c0_i32_17 = arith.constant 0 : i32
    %34 = vector.broadcast %c0_i32_17 : i32 to vector<1x8x1xi32>
    %35 = arith.cmpi sgt, %32, %34 : vector<1x8x1xi32>
    %36 = arith.extui %35 : vector<1x8x1xi1> to vector<1x8x1xi32>
    %37 = arith.sitofp %36 : vector<1x8x1xi32> to vector<1x8x1xf32>
    %38 = vector.broadcast %37 : vector<1x8x1xf32> to vector<10x8x16xf32>
    %39 = arith.mulf %33, %38 : vector<10x8x16xf32>
    %c7_i32 = arith.constant 7 : i32
    %40 = tpu.dynamic_rotate %31 by %c7_i32 dim 1 : vector<10x8x16xf32>, i32 -> vector<10x8x16xf32>
    %c7_i32_18 = arith.constant 7 : i32
    %41 = vector.broadcast %c7_i32_18 : i32 to vector<1x8x1xi32>
    %42 = arith.cmpi slt, %32, %41 : vector<1x8x1xi32>
    %43 = arith.extui %42 : vector<1x8x1xi1> to vector<1x8x1xi32>
    %44 = arith.sitofp %43 : vector<1x8x1xi32> to vector<1x8x1xf32>
    %45 = vector.broadcast %44 : vector<1x8x1xf32> to vector<10x8x16xf32>
    %46 = arith.mulf %40, %45 : vector<10x8x16xf32>
    %47 = vector.extract_strided_slice %39 {offsets = [0, 0, 0], sizes = [8, 8, 16], strides = [1, 1, 1]} : vector<10x8x16xf32> to vector<8x8x16xf32>
    %48 = vector.extract_strided_slice %30 {offsets = [0, 0, 0], sizes = [1, 1, 16], strides = [1, 1, 1]} : vector<3x3x16xf32> to vector<1x1x16xf32>
    %49 = vector.shape_cast %48 : vector<1x1x16xf32> to vector<16xf32>
    %50 = vector.shape_cast %49 : vector<16xf32> to vector<1x1x16xf32>
    %51 = vector.broadcast %50 : vector<1x1x16xf32> to vector<8x8x16xf32>
    %52 = arith.mulf %47, %51 : vector<8x8x16xf32>
    %53 = vector.extract_strided_slice %31 {offsets = [0, 0, 0], sizes = [8, 8, 16], strides = [1, 1, 1]} : vector<10x8x16xf32> to vector<8x8x16xf32>
    %54 = vector.extract_strided_slice %30 {offsets = [0, 1, 0], sizes = [1, 1, 16], strides = [1, 1, 1]} : vector<3x3x16xf32> to vector<1x1x16xf32>
    %55 = vector.shape_cast %54 : vector<1x1x16xf32> to vector<16xf32>
    %56 = vector.shape_cast %55 : vector<16xf32> to vector<1x1x16xf32>
    %57 = vector.broadcast %56 : vector<1x1x16xf32> to vector<8x8x16xf32>
    %58 = arith.mulf %53, %57 : vector<8x8x16xf32>
    %59 = arith.addf %52, %58 : vector<8x8x16xf32>
    %60 = vector.extract_strided_slice %46 {offsets = [0, 0, 0], sizes = [8, 8, 16], strides = [1, 1, 1]} : vector<10x8x16xf32> to vector<8x8x16xf32>
    %61 = vector.extract_strided_slice %30 {offsets = [0, 2, 0], sizes = [1, 1, 16], strides = [1, 1, 1]} : vector<3x3x16xf32> to vector<1x1x16xf32>
    %62 = vector.shape_cast %61 : vector<1x1x16xf32> to vector<16xf32>
    %63 = vector.shape_cast %62 : vector<16xf32> to vector<1x1x16xf32>
    %64 = vector.broadcast %63 : vector<1x1x16xf32> to vector<8x8x16xf32>
    %65 = arith.mulf %60, %64 : vector<8x8x16xf32>
    %66 = arith.addf %59, %65 : vector<8x8x16xf32>
    %67 = vector.extract_strided_slice %39 {offsets = [1, 0, 0], sizes = [8, 8, 16], strides = [1, 1, 1]} : vector<10x8x16xf32> to vector<8x8x16xf32>
    %68 = vector.extract_strided_slice %30 {offsets = [1, 0, 0], sizes = [1, 1, 16], strides = [1, 1, 1]} : vector<3x3x16xf32> to vector<1x1x16xf32>
    %69 = vector.shape_cast %68 : vector<1x1x16xf32> to vector<16xf32>
    %70 = vector.shape_cast %69 : vector<16xf32> to vector<1x1x16xf32>
    %71 = vector.broadcast %70 : vector<1x1x16xf32> to vector<8x8x16xf32>
    %72 = arith.mulf %67, %71 : vector<8x8x16xf32>
    %73 = arith.addf %66, %72 : vector<8x8x16xf32>
    %74 = vector.extract_strided_slice %31 {offsets = [1, 0, 0], sizes = [8, 8, 16], strides = [1, 1, 1]} : vector<10x8x16xf32> to vector<8x8x16xf32>
    %75 = vector.extract_strided_slice %30 {offsets = [1, 1, 0], sizes = [1, 1, 16], strides = [1, 1, 1]} : vector<3x3x16xf32> to vector<1x1x16xf32>
    %76 = vector.shape_cast %75 : vector<1x1x16xf32> to vector<16xf32>
    %77 = vector.shape_cast %76 : vector<16xf32> to vector<1x1x16xf32>
    %78 = vector.broadcast %77 : vector<1x1x16xf32> to vector<8x8x16xf32>
    %79 = arith.mulf %74, %78 : vector<8x8x16xf32>
    %80 = arith.addf %73, %79 : vector<8x8x16xf32>
    %81 = vector.extract_strided_slice %46 {offsets = [1, 0, 0], sizes = [8, 8, 16], strides = [1, 1, 1]} : vector<10x8x16xf32> to vector<8x8x16xf32>
    %82 = vector.extract_strided_slice %30 {offsets = [1, 2, 0], sizes = [1, 1, 16], strides = [1, 1, 1]} : vector<3x3x16xf32> to vector<1x1x16xf32>
    %83 = vector.shape_cast %82 : vector<1x1x16xf32> to vector<16xf32>
    %84 = vector.shape_cast %83 : vector<16xf32> to vector<1x1x16xf32>
    %85 = vector.broadcast %84 : vector<1x1x16xf32> to vector<8x8x16xf32>
    %86 = arith.mulf %81, %85 : vector<8x8x16xf32>
    %87 = arith.addf %80, %86 : vector<8x8x16xf32>
    %88 = vector.extract_strided_slice %39 {offsets = [2, 0, 0], sizes = [8, 8, 16], strides = [1, 1, 1]} : vector<10x8x16xf32> to vector<8x8x16xf32>
    %89 = vector.extract_strided_slice %30 {offsets = [2, 0, 0], sizes = [1, 1, 16], strides = [1, 1, 1]} : vector<3x3x16xf32> to vector<1x1x16xf32>
    %90 = vector.shape_cast %89 : vector<1x1x16xf32> to vector<16xf32>
    %91 = vector.shape_cast %90 : vector<16xf32> to vector<1x1x16xf32>
    %92 = vector.broadcast %91 : vector<1x1x16xf32> to vector<8x8x16xf32>
    %93 = arith.mulf %88, %92 : vector<8x8x16xf32>
    %94 = arith.addf %87, %93 : vector<8x8x16xf32>
    %95 = vector.extract_strided_slice %31 {offsets = [2, 0, 0], sizes = [8, 8, 16], strides = [1, 1, 1]} : vector<10x8x16xf32> to vector<8x8x16xf32>
    %96 = vector.extract_strided_slice %30 {offsets = [2, 1, 0], sizes = [1, 1, 16], strides = [1, 1, 1]} : vector<3x3x16xf32> to vector<1x1x16xf32>
    %97 = vector.shape_cast %96 : vector<1x1x16xf32> to vector<16xf32>
    %98 = vector.shape_cast %97 : vector<16xf32> to vector<1x1x16xf32>
    %99 = vector.broadcast %98 : vector<1x1x16xf32> to vector<8x8x16xf32>
    %100 = arith.mulf %95, %99 : vector<8x8x16xf32>
    %101 = arith.addf %94, %100 : vector<8x8x16xf32>
    %102 = vector.extract_strided_slice %46 {offsets = [2, 0, 0], sizes = [8, 8, 16], strides = [1, 1, 1]} : vector<10x8x16xf32> to vector<8x8x16xf32>
    %103 = vector.extract_strided_slice %30 {offsets = [2, 2, 0], sizes = [1, 1, 16], strides = [1, 1, 1]} : vector<3x3x16xf32> to vector<1x1x16xf32>
    %104 = vector.shape_cast %103 : vector<1x1x16xf32> to vector<16xf32>
    %105 = vector.shape_cast %104 : vector<16xf32> to vector<1x1x16xf32>
    %106 = vector.broadcast %105 : vector<1x1x16xf32> to vector<8x8x16xf32>
    %107 = arith.mulf %102, %106 : vector<8x8x16xf32>
    %108 = arith.addf %101, %107 : vector<8x8x16xf32>
    %cst_19 = arith.constant 5.000000e-01 : f32
    %109 = vector.broadcast %cst_19 : f32 to vector<8x8x16xf32>
    %110 = arith.mulf %109, %108 : vector<8x8x16xf32>
    %cst_20 = arith.constant 0.707106769 : f32
    %111 = vector.broadcast %cst_20 : f32 to vector<8x8x16xf32>
    %112 = arith.mulf %108, %111 : vector<8x8x16xf32>
    %113 = math.erf %112 : vector<8x8x16xf32>
    %cst_21 = arith.constant 1.000000e+00 : f32
    %114 = vector.broadcast %cst_21 : f32 to vector<8x8x16xf32>
    %115 = arith.addf %114, %113 : vector<8x8x16xf32>
    %116 = arith.mulf %110, %115 : vector<8x8x16xf32>
    %117 = arith.truncf %116 : vector<8x8x16xf32> to vector<8x8x16xbf16>
    %c0_22 = arith.constant 0 : index
    %c0_23 = arith.constant 0 : index
    %c0_24 = arith.constant 0 : index
    %c0_25 = arith.constant 0 : index
    %118 = vector.load %arg6[%c0_22, %c0_23, %c0_24, %c0_25] : memref<1x8x8x16xbf16, #tpu.memory_space<vmem>>, vector<1x8x8x16xbf16>
    %119 = vector.shape_cast %118 : vector<1x8x8x16xbf16> to vector<8x8x16xbf16>
    %120 = vector.shape_cast %117 : vector<8x8x16xbf16> to vector<1x8x8x16xbf16>
    tpu.vector_store %arg6[%c0_22, %c0_23, %c0_24, %c0_25], %120 {strides = array<i32>} : memref<1x8x8x16xbf16, #tpu.memory_space<vmem>>, vector<1x8x8x16xbf16>,
    return
  }
  func.func @transform_0(%arg0: i32, %arg1: i32) -> (i32, i32, i32, i32) {
    %c0_i32 = arith.constant 0 : i32
    %c0_i32_0 = arith.constant 0 : i32
    %c0_i32_1 = arith.constant 0 : i32
    return %arg0, %arg1, %c0_i32, %c0_i32_0 : i32, i32, i32, i32
  }
  func.func @transform_1(%arg0: i32, %arg1: i32) -> (i32, i32, i32, i32) {
    %c8_i32 = arith.constant 8 : i32
    %0 = arith.muli %arg1, %c8_i32 : i32
    %c1_i32 = arith.constant 1 : i32
    %1 = arith.subi %0, %c1_i32 : i32
    %c0_i32 = arith.constant 0 : i32
    %2 = arith.maxsi %1, %c0_i32 : i32
    %c0_i32_0 = arith.constant 0 : i32
    %c0_i32_1 = arith.constant 0 : i32
    %c0_i32_2 = arith.constant 0 : i32
    return %arg0, %2, %c0_i32_0, %c0_i32_1 : i32, i32, i32, i32
  }
  func.func @transform_2(%arg0: i32, %arg1: i32) -> (i32, i32, i32, i32) {
    %c8_i32 = arith.constant 8 : i32
    %0 = arith.muli %arg1, %c8_i32 : i32
    %c8_i32_0 = arith.constant 8 : i32
    %1 = arith.addi %0, %c8_i32_0 : i32
    %c7_i32 = arith.constant 7 : i32
    %2 = arith.minsi %1, %c7_i32 : i32
    %c0_i32 = arith.constant 0 : i32
    %c0_i32_1 = arith.constant 0 : i32
    %c0_i32_2 = arith.constant 0 : i32
    return %arg0, %2, %c0_i32, %c0_i32_1 : i32, i32, i32, i32
  }
  func.func @transform_3(%arg0: i32, %arg1: i32) -> (i32, i32, i32) {
    %c0_i32 = arith.constant 0 : i32
    %c0_i32_0 = arith.constant 0 : i32
    %c0_i32_1 = arith.constant 0 : i32
    %c0_i32_2 = arith.constant 0 : i32
    return %c0_i32, %c0_i32_0, %c0_i32_1 : i32, i32, i32
  }
  func.func @transform_4(%arg0: i32, %arg1: i32) -> (i32, i32, i32, i32) {
    %c0_i32 = arith.constant 0 : i32
    %c0_i32_0 = arith.constant 0 : i32
    %c0_i32_1 = arith.constant 0 : i32
    return %arg0, %arg1, %c0_i32, %c0_i32_0 : i32, i32, i32, i32
  }
}

module attributes {stable_mosaic.version = 11 : i64} {
  func.func @kernel(%arg0: i32, %arg1: i32, %arg2: memref<1x64x16xbf16, #tpu.memory_space<vmem>>, %arg3: memref<1x64x16xbf16, #tpu.memory_space<vmem>>, %arg4: memref<1x16x16xf32, #tpu.memory_space<vmem>>, %arg5: memref<1x16xf32, #tpu.memory_space<vmem>>, %arg6: memref<1x64x16xf32, #tpu.memory_space<vmem>>, %arg7: memref<1x64x16xf32, #tpu.memory_space<vmem>>, %arg8: memref<1x2x16xf32, #tpu.memory_space<vmem>>) attributes {dimension_semantics = [#tpu.dimension_semantics<parallel>, #tpu.dimension_semantics<arbitrary>], iteration_bounds = array<i64: 2, 1>, scalar_prefetch = 0 : i64, scratch_operands = 0 : i64, tpu.core_type = #tpu.core_type<tc>, window_params = [{transform_indices = @transform_0, window_bounds = array<i64: 1, 64, 16>}, {transform_indices = @transform_1, window_bounds = array<i64: 1, 64, 16>}, {transform_indices = @transform_2, window_bounds = array<i64: 1, 16, 16>}, {pipeline_mode = #tpu.pipeline_mode<synchronous>, transform_indices = @transform_3, window_bounds = array<i64: 1, 16>}, {transform_indices = @transform_4, window_bounds = array<i64: 1, 64, 16>}, {transform_indices = @transform_5, window_bounds = array<i64: 1, 64, 16>}, {transform_indices = @transform_6, window_bounds = array<i64: 1, 2, 16>}]} {
    %c0 = arith.constant 0 : index
    %c0_0 = arith.constant 0 : index
    %c0_1 = arith.constant 0 : index
    %0 = vector.load %arg2[%c0, %c0_0, %c0_1] : memref<1x64x16xbf16, #tpu.memory_space<vmem>>, vector<1x64x16xbf16>
    %1 = vector.shape_cast %0 : vector<1x64x16xbf16> to vector<64x16xbf16>
    %2 = arith.extf %1 : vector<64x16xbf16> to vector<64x16xf32>
    %c0_2 = arith.constant 0 : index
    %c0_3 = arith.constant 0 : index
    %c0_4 = arith.constant 0 : index
    %3 = vector.load %arg3[%c0_2, %c0_3, %c0_4] : memref<1x64x16xbf16, #tpu.memory_space<vmem>>, vector<1x64x16xbf16>
    %4 = vector.shape_cast %3 : vector<1x64x16xbf16> to vector<64x16xbf16>
    %5 = arith.extf %4 : vector<64x16xbf16> to vector<64x16xf32>
    %6 = arith.mulf %2, %5 : vector<64x16xf32>
    %7 = arith.truncf %6 : vector<64x16xf32> to vector<64x16xbf16>
    %c0_5 = arith.constant 0 : index
    %c0_6 = arith.constant 0 : index
    %c0_7 = arith.constant 0 : index
    %8 = vector.load %arg4[%c0_5, %c0_6, %c0_7] : memref<1x16x16xf32, #tpu.memory_space<vmem>>, vector<1x16x16xf32>
    %9 = vector.shape_cast %8 : vector<1x16x16xf32> to vector<16x16xf32>
    %10 = arith.truncf %9 : vector<16x16xf32> to vector<16x16xbf16>
    %cst = arith.constant dense<0.000000e+00> : vector<64x16xf32>
    %11 = tpu.matmul %7, %10, %cst {dimension_numbers = #tpu.dot_dimension_numbers<[1], [0], [0], [1], [0, 0, 1, 1], [], []>} : vector<64x16xbf16>, vector<16x16xbf16>, vector<64x16xf32> -> vector<64x16xf32>
    %c0_8 = arith.constant 0 : index
    %c0_9 = arith.constant 0 : index
    %12 = vector.load %arg5[%c0_8, %c0_9] : memref<1x16xf32, #tpu.memory_space<vmem>>, vector<1x16xf32>
    %13 = vector.broadcast %12 : vector<1x16xf32> to vector<64x16xf32>
    %14 = arith.addf %11, %13 : vector<64x16xf32>
    %c0_10 = arith.constant 0 : index
    %c0_11 = arith.constant 0 : index
    %c0_12 = arith.constant 0 : index
    %15 = vector.load %arg6[%c0_10, %c0_11, %c0_12] : memref<1x64x16xf32, #tpu.memory_space<vmem>>, vector<1x64x16xf32>
    %16 = vector.shape_cast %15 : vector<1x64x16xf32> to vector<64x16xf32>
    %17 = arith.addf %14, %16 : vector<64x16xf32>
    %c0_13 = arith.constant 0 : index
    %c0_14 = arith.constant 0 : index
    %c0_15 = arith.constant 0 : index
    %18 = vector.load %arg7[%c0_13, %c0_14, %c0_15] : memref<1x64x16xf32, #tpu.memory_space<vmem>>, vector<1x64x16xf32>
    %19 = vector.shape_cast %18 : vector<1x64x16xf32> to vector<64x16xf32>
    %20 = vector.shape_cast %17 : vector<64x16xf32> to vector<1x64x16xf32>
    tpu.vector_store %arg7[%c0_13, %c0_14, %c0_15], %20 {strides = array<i32>} : memref<1x64x16xf32, #tpu.memory_space<vmem>>, vector<1x64x16xf32>,
    %21 = tpu.iota {dimensions = array<i32: 0>} : vector<64x1xi32>
    %c64_i32 = arith.constant 64 : i32
    %22 = arith.muli %arg1, %c64_i32 : i32
    %23 = vector.broadcast %22 : i32 to vector<64x1xi32>
    %24 = arith.addi %21, %23 : vector<64x1xi32>
    %c64_i32_16 = arith.constant 64 : i32
    %25 = vector.broadcast %c64_i32_16 : i32 to vector<64x1xi32>
    %26 = arith.cmpi slt, %24, %25 : vector<64x1xi32>
    %cst_17 = arith.constant 0.000000e+00 : f32
    %27 = vector.shape_cast %26 : vector<64x1xi1> to vector<64x1xi1>
    %28 = vector.broadcast %27 : vector<64x1xi1> to vector<64x16xi1>
    %29 = vector.broadcast %cst_17 : f32 to vector<64x16xf32>
    %30 = arith.select %28, %17, %29 : vector<64x16xi1>, vector<64x16xf32>
    %c0_i32 = arith.constant 0 : i32
    %31 = arith.cmpi eq, %arg1, %c0_i32 : i32
    %32 = arith.extui %31 : i1 to i32
    %c0_i32_18 = arith.constant 0 : i32
    %33 = arith.cmpi ne, %32, %c0_i32_18 : i32
    scf.if %33 {
      %cst_32 = arith.constant 0.000000e+00 : f32
      %51 = vector.broadcast %cst_32 : f32 to vector<2x16xf32>
      %c0_33 = arith.constant 0 : index
      %c0_34 = arith.constant 0 : index
      %c0_35 = arith.constant 0 : index
      %52 = vector.load %arg8[%c0_33, %c0_34, %c0_35] : memref<1x2x16xf32, #tpu.memory_space<vmem>>, vector<1x2x16xf32>
      %53 = vector.shape_cast %52 : vector<1x2x16xf32> to vector<2x16xf32>
      %54 = vector.shape_cast %51 : vector<2x16xf32> to vector<1x2x16xf32>
      tpu.vector_store %arg8[%c0_33, %c0_34, %c0_35], %54 {strides = array<i32>} : memref<1x2x16xf32, #tpu.memory_space<vmem>>, vector<1x2x16xf32>,
    } else {
    }
    %c0_19 = arith.constant 0 : index
    %c0_20 = arith.constant 0 : index
    %c0_21 = arith.constant 0 : index
    %34 = vector.load %arg8[%c0_19, %c0_20, %c0_21] : memref<1x2x16xf32, #tpu.memory_space<vmem>>, vector<1x1x16xf32>
    %35 = vector.shape_cast %34 : vector<1x1x16xf32> to vector<1x16xf32>
    %cst_22 = arith.constant dense<0.000000e+00> : vector<16xf32>
    %36 = vector.multi_reduction <add>, %30, %cst_22 [0] : vector<64x16xf32> to vector<16xf32>
    %37 = vector.shape_cast %36 : vector<16xf32> to vector<1x16xf32>
    %38 = arith.addf %35, %37 : vector<1x16xf32>
    %c0_23 = arith.constant 0 : index
    %c0_24 = arith.constant 0 : index
    %c0_25 = arith.constant 0 : index
    %39 = vector.load %arg8[%c0_23, %c0_24, %c0_25] : memref<1x2x16xf32, #tpu.memory_space<vmem>>, vector<1x1x16xf32>
    %40 = vector.shape_cast %39 : vector<1x1x16xf32> to vector<1x16xf32>
    %41 = vector.shape_cast %38 : vector<1x16xf32> to vector<1x1x16xf32>
    tpu.vector_store %arg8[%c0_23, %c0_24, %c0_25], %41 {strides = array<i32>} : memref<1x2x16xf32, #tpu.memory_space<vmem>>, vector<1x1x16xf32>,
    %c0_26 = arith.constant 0 : index
    %c1 = arith.constant 1 : index
    %c0_27 = arith.constant 0 : index
    %42 = vector.load %arg8[%c0_26, %c1, %c0_27] : memref<1x2x16xf32, #tpu.memory_space<vmem>>, vector<1x1x16xf32>
    %43 = vector.shape_cast %42 : vector<1x1x16xf32> to vector<1x16xf32>
    %44 = arith.mulf %30, %30 : vector<64x16xf32>
    %cst_28 = arith.constant dense<0.000000e+00> : vector<16xf32>
    %45 = vector.multi_reduction <add>, %44, %cst_28 [0] : vector<64x16xf32> to vector<16xf32>
    %46 = vector.shape_cast %45 : vector<16xf32> to vector<1x16xf32>
    %47 = arith.addf %43, %46 : vector<1x16xf32>
    %c0_29 = arith.constant 0 : index
    %c1_30 = arith.constant 1 : index
    %c0_31 = arith.constant 0 : index
    %48 = vector.load %arg8[%c0_29, %c1_30, %c0_31] : memref<1x2x16xf32, #tpu.memory_space<vmem>>, vector<1x1x16xf32>
    %49 = vector.shape_cast %48 : vector<1x1x16xf32> to vector<1x16xf32>
    %50 = vector.shape_cast %47 : vector<1x16xf32> to vector<1x1x16xf32>
    tpu.vector_store %arg8[%c0_29, %c1_30, %c0_31], %50 {strides = array<i32>} : memref<1x2x16xf32, #tpu.memory_space<vmem>>, vector<1x1x16xf32>,
    return
  }
  func.func @transform_0(%arg0: i32, %arg1: i32) -> (i32, i32, i32) {
    %c0_i32 = arith.constant 0 : i32
    %c0_i32_0 = arith.constant 0 : i32
    return %arg0, %arg1, %c0_i32 : i32, i32, i32
  }
  func.func @transform_1(%arg0: i32, %arg1: i32) -> (i32, i32, i32) {
    %c0_i32 = arith.constant 0 : i32
    %c0_i32_0 = arith.constant 0 : i32
    return %arg0, %arg1, %c0_i32 : i32, i32, i32
  }
  func.func @transform_2(%arg0: i32, %arg1: i32) -> (i32, i32, i32) {
    %c0_i32 = arith.constant 0 : i32
    %c0_i32_0 = arith.constant 0 : i32
    %c0_i32_1 = arith.constant 0 : i32
    return %arg0, %c0_i32, %c0_i32_0 : i32, i32, i32
  }
  func.func @transform_3(%arg0: i32, %arg1: i32) -> (i32, i32) {
    %c0_i32 = arith.constant 0 : i32
    %c0_i32_0 = arith.constant 0 : i32
    %c0_i32_1 = arith.constant 0 : i32
    return %c0_i32, %c0_i32_0 : i32, i32
  }
  func.func @transform_4(%arg0: i32, %arg1: i32) -> (i32, i32, i32) {
    %c0_i32 = arith.constant 0 : i32
    %c0_i32_0 = arith.constant 0 : i32
    return %arg0, %arg1, %c0_i32 : i32, i32, i32
  }
  func.func @transform_5(%arg0: i32, %arg1: i32) -> (i32, i32, i32) {
    %c0_i32 = arith.constant 0 : i32
    %c0_i32_0 = arith.constant 0 : i32
    return %arg0, %arg1, %c0_i32 : i32, i32, i32
  }
  func.func @transform_6(%arg0: i32, %arg1: i32) -> (i32, i32, i32) {
    %c0_i32 = arith.constant 0 : i32
    %c0_i32_0 = arith.constant 0 : i32
    %c0_i32_1 = arith.constant 0 : i32
    return %arg0, %c0_i32, %c0_i32_0 : i32, i32, i32
  }
}

module attributes {stable_mosaic.version = 11 : i64} {
  func.func @kernel(%arg0: i32, %arg1: i32, %arg2: memref<1x8x8x16xbf16, #tpu.memory_space<vmem>>, %arg3: memref<1x1x8x16xbf16, #tpu.memory_space<vmem>>, %arg4: memref<1x1x8x16xbf16, #tpu.memory_space<vmem>>, %arg5: memref<3x3x16xf32, #tpu.memory_space<vmem>>, %arg6: memref<1x8x8x16xf32, #tpu.memory_space<vmem>>, %arg7: memref<1x8x8x16xf32, #tpu.memory_space<vmem>>) attributes {dimension_semantics = [#tpu.dimension_semantics<parallel>, #tpu.dimension_semantics<parallel>], iteration_bounds = array<i64: 2, 1>, scalar_prefetch = 0 : i64, scratch_operands = 0 : i64, tpu.core_type = #tpu.core_type<tc>, window_params = [{transform_indices = @transform_0, window_bounds = array<i64: 1, 8, 8, 16>}, {transform_indices = @transform_1, window_bounds = array<i64: 1, 1, 8, 16>}, {transform_indices = @transform_2, window_bounds = array<i64: 1, 1, 8, 16>}, {pipeline_mode = #tpu.pipeline_mode<synchronous>, transform_indices = @transform_3, window_bounds = array<i64: 3, 3, 16>}, {transform_indices = @transform_4, window_bounds = array<i64: 1, 8, 8, 16>}, {transform_indices = @transform_5, window_bounds = array<i64: 1, 8, 8, 16>}]} {
    %c0 = arith.constant 0 : index
    %c0_0 = arith.constant 0 : index
    %c0_1 = arith.constant 0 : index
    %c0_2 = arith.constant 0 : index
    %0 = vector.load %arg2[%c0, %c0_0, %c0_1, %c0_2] : memref<1x8x8x16xbf16, #tpu.memory_space<vmem>>, vector<1x8x8x16xbf16>
    %1 = vector.shape_cast %0 : vector<1x8x8x16xbf16> to vector<8x8x16xbf16>
    %2 = arith.extf %1 : vector<8x8x16xbf16> to vector<8x8x16xf32>
    %3 = tpu.iota {dimensions = array<i32: 0>} : vector<8x1x1xi32>
    %c8_i32 = arith.constant 8 : i32
    %4 = arith.muli %arg1, %c8_i32 : i32
    %5 = vector.broadcast %4 : i32 to vector<8x1x1xi32>
    %6 = arith.addi %3, %5 : vector<8x1x1xi32>
    %c8_i32_3 = arith.constant 8 : i32
    %7 = vector.broadcast %c8_i32_3 : i32 to vector<8x1x1xi32>
    %8 = arith.cmpi slt, %6, %7 : vector<8x1x1xi32>
    %cst = arith.constant 0.000000e+00 : f32
    %9 = vector.shape_cast %8 : vector<8x1x1xi1> to vector<8x1x1xi1>
    %10 = vector.broadcast %9 : vector<8x1x1xi1> to vector<8x8x16xi1>
    %11 = vector.broadcast %cst : f32 to vector<8x8x16xf32>
    %12 = arith.select %10, %2, %11 : vector<8x8x16xi1>, vector<8x8x16xf32>
    %c0_4 = arith.constant 0 : index
    %c0_5 = arith.constant 0 : index
    %c0_6 = arith.constant 0 : index
    %c0_7 = arith.constant 0 : index
    %13 = vector.load %arg3[%c0_4, %c0_5, %c0_6, %c0_7] : memref<1x1x8x16xbf16, #tpu.memory_space<vmem>>, vector<1x1x8x16xbf16>
    %14 = vector.shape_cast %13 : vector<1x1x8x16xbf16> to vector<1x8x16xbf16>
    %15 = arith.extf %14 : vector<1x8x16xbf16> to vector<1x8x16xf32>
    %c0_i32 = arith.constant 0 : i32
    %16 = arith.cmpi sgt, %arg1, %c0_i32 : i32
    %17 = arith.extui %16 : i1 to i32
    %18 = arith.sitofp %17 : i32 to f32
    %19 = vector.broadcast %18 : f32 to vector<1x8x16xf32>
    %20 = arith.mulf %15, %19 : vector<1x8x16xf32>
    %c0_8 = arith.constant 0 : index
    %c0_9 = arith.constant 0 : index
    %c0_10 = arith.constant 0 : index
    %c0_11 = arith.constant 0 : index
    %21 = vector.load %arg4[%c0_8, %c0_9, %c0_10, %c0_11] : memref<1x1x8x16xbf16, #tpu.memory_space<vmem>>, vector<1x1x8x16xbf16>
    %22 = vector.shape_cast %21 : vector<1x1x8x16xbf16> to vector<1x8x16xbf16>
    %23 = arith.extf %22 : vector<1x8x16xbf16> to vector<1x8x16xf32>
    %c1_i32 = arith.constant 1 : i32
    %24 = arith.addi %arg1, %c1_i32 : i32
    %c1_i32_12 = arith.constant 1 : i32
    %25 = arith.cmpi slt, %24, %c1_i32_12 : i32
    %26 = arith.extui %25 : i1 to i32
    %27 = arith.sitofp %26 : i32 to f32
    %28 = vector.broadcast %27 : f32 to vector<1x8x16xf32>
    %29 = arith.mulf %23, %28 : vector<1x8x16xf32>
    %c0_13 = arith.constant 0 : index
    %c0_14 = arith.constant 0 : index
    %c0_15 = arith.constant 0 : index
    %30 = vector.load %arg5[%c0_13, %c0_14, %c0_15] : memref<3x3x16xf32, #tpu.memory_space<vmem>>, vector<3x3x16xf32>
    %31 = tpu.concatenate %20, %12, %29 in 0 : vector<1x8x16xf32>, vector<8x8x16xf32>, vector<1x8x16xf32> -> vector<10x8x16xf32>
    %32 = tpu.iota {dimensions = array<i32: 1>} : vector<1x8x1xi32>
    %c1_i32_16 = arith.constant 1 : i32
    %33 = tpu.dynamic_rotate %31 by %c1_i32_16 dim 1 : vector<10x8x16xf32>, i32 -> vector<10x8x16xf32>
    %c0_i32_17 = arith.constant 0 : i32
    %34 = vector.broadcast %c0_i32_17 : i32 to vector<1x8x1xi32>
    %35 = arith.cmpi sgt, %32, %34 : vector<1x8x1xi32>
    %36 = arith.extui %35 : vector<1x8x1xi1> to vector<1x8x1xi32>
    %37 = arith.sitofp %36 : vector<1x8x1xi32> to vector<1x8x1xf32>
    %38 = vector.broadcast %37 : vector<1x8x1xf32> to vector<10x8x16xf32>
    %39 = arith.mulf %33, %38 : vector<10x8x16xf32>
    %c7_i32 = arith.constant 7 : i32
    %40 = tpu.dynamic_rotate %31 by %c7_i32 dim 1 : vector<10x8x16xf32>, i32 -> vector<10x8x16xf32>
    %c7_i32_18 = arith.constant 7 : i32
    %41 = vector.broadcast %c7_i32_18 : i32 to vector<1x8x1xi32>
    %42 = arith.cmpi slt, %32, %41 : vector<1x8x1xi32>
    %43 = arith.extui %42 : vector<1x8x1xi1> to vector<1x8x1xi32>
    %44 = arith.sitofp %43 : vector<1x8x1xi32> to vector<1x8x1xf32>
    %45 = vector.broadcast %44 : vector<1x8x1xf32> to vector<10x8x16xf32>
    %46 = arith.mulf %40, %45 : vector<10x8x16xf32>
    %47 = vector.extract_strided_slice %39 {offsets = [0, 0, 0], sizes = [8, 8, 16], strides = [1, 1, 1]} : vector<10x8x16xf32> to vector<8x8x16xf32>
    %48 = vector.extract_strided_slice %30 {offsets = [0, 0, 0], sizes = [1, 1, 16], strides = [1, 1, 1]} : vector<3x3x16xf32> to vector<1x1x16xf32>
    %49 = vector.shape_cast %48 : vector<1x1x16xf32> to vector<16xf32>
    %50 = vector.shape_cast %49 : vector<16xf32> to vector<1x1x16xf32>
    %51 = vector.broadcast %50 : vector<1x1x16xf32> to vector<8x8x16xf32>
    %52 = arith.mulf %47, %51 : vector<8x8x16xf32>
    %53 = vector.extract_strided_slice %31 {offsets = [0, 0, 0], sizes = [8, 8, 16], strides = [1, 1, 1]} : vector<10x8x16xf32> to vector<8x8x16xf32>
    %54 = vector.extract_strided_slice %30 {offsets = [0, 1, 0], sizes = [1, 1, 16], strides = [1, 1, 1]} : vector<3x3x16xf32> to vector<1x1x16xf32>
    %55 = vector.shape_cast %54 : vector<1x1x16xf32> to vector<16xf32>
    %56 = vector.shape_cast %55 : vector<16xf32> to vector<1x1x16xf32>
    %57 = vector.broadcast %56 : vector<1x1x16xf32> to vector<8x8x16xf32>
    %58 = arith.mulf %53, %57 : vector<8x8x16xf32>
    %59 = arith.addf %52, %58 : vector<8x8x16xf32>
    %60 = vector.extract_strided_slice %46 {offsets = [0, 0, 0], sizes = [8, 8, 16], strides = [1, 1, 1]} : vector<10x8x16xf32> to vector<8x8x16xf32>
    %61 = vector.extract_strided_slice %30 {offsets = [0, 2, 0], sizes = [1, 1, 16], strides = [1, 1, 1]} : vector<3x3x16xf32> to vector<1x1x16xf32>
    %62 = vector.shape_cast %61 : vector<1x1x16xf32> to vector<16xf32>
    %63 = vector.shape_cast %62 : vector<16xf32> to vector<1x1x16xf32>
    %64 = vector.broadcast %63 : vector<1x1x16xf32> to vector<8x8x16xf32>
    %65 = arith.mulf %60, %64 : vector<8x8x16xf32>
    %66 = arith.addf %59, %65 : vector<8x8x16xf32>
    %67 = vector.extract_strided_slice %39 {offsets = [1, 0, 0], sizes = [8, 8, 16], strides = [1, 1, 1]} : vector<10x8x16xf32> to vector<8x8x16xf32>
    %68 = vector.extract_strided_slice %30 {offsets = [1, 0, 0], sizes = [1, 1, 16], strides = [1, 1, 1]} : vector<3x3x16xf32> to vector<1x1x16xf32>
    %69 = vector.shape_cast %68 : vector<1x1x16xf32> to vector<16xf32>
    %70 = vector.shape_cast %69 : vector<16xf32> to vector<1x1x16xf32>
    %71 = vector.broadcast %70 : vector<1x1x16xf32> to vector<8x8x16xf32>
    %72 = arith.mulf %67, %71 : vector<8x8x16xf32>
    %73 = arith.addf %66, %72 : vector<8x8x16xf32>
    %74 = vector.extract_strided_slice %31 {offsets = [1, 0, 0], sizes = [8, 8, 16], strides = [1, 1, 1]} : vector<10x8x16xf32> to vector<8x8x16xf32>
    %75 = vector.extract_strided_slice %30 {offsets = [1, 1, 0], sizes = [1, 1, 16], strides = [1, 1, 1]} : vector<3x3x16xf32> to vector<1x1x16xf32>
    %76 = vector.shape_cast %75 : vector<1x1x16xf32> to vector<16xf32>
    %77 = vector.shape_cast %76 : vector<16xf32> to vector<1x1x16xf32>
    %78 = vector.broadcast %77 : vector<1x1x16xf32> to vector<8x8x16xf32>
    %79 = arith.mulf %74, %78 : vector<8x8x16xf32>
    %80 = arith.addf %73, %79 : vector<8x8x16xf32>
    %81 = vector.extract_strided_slice %46 {offsets = [1, 0, 0], sizes = [8, 8, 16], strides = [1, 1, 1]} : vector<10x8x16xf32> to vector<8x8x16xf32>
    %82 = vector.extract_strided_slice %30 {offsets = [1, 2, 0], sizes = [1, 1, 16], strides = [1, 1, 1]} : vector<3x3x16xf32> to vector<1x1x16xf32>
    %83 = vector.shape_cast %82 : vector<1x1x16xf32> to vector<16xf32>
    %84 = vector.shape_cast %83 : vector<16xf32> to vector<1x1x16xf32>
    %85 = vector.broadcast %84 : vector<1x1x16xf32> to vector<8x8x16xf32>
    %86 = arith.mulf %81, %85 : vector<8x8x16xf32>
    %87 = arith.addf %80, %86 : vector<8x8x16xf32>
    %88 = vector.extract_strided_slice %39 {offsets = [2, 0, 0], sizes = [8, 8, 16], strides = [1, 1, 1]} : vector<10x8x16xf32> to vector<8x8x16xf32>
    %89 = vector.extract_strided_slice %30 {offsets = [2, 0, 0], sizes = [1, 1, 16], strides = [1, 1, 1]} : vector<3x3x16xf32> to vector<1x1x16xf32>
    %90 = vector.shape_cast %89 : vector<1x1x16xf32> to vector<16xf32>
    %91 = vector.shape_cast %90 : vector<16xf32> to vector<1x1x16xf32>
    %92 = vector.broadcast %91 : vector<1x1x16xf32> to vector<8x8x16xf32>
    %93 = arith.mulf %88, %92 : vector<8x8x16xf32>
    %94 = arith.addf %87, %93 : vector<8x8x16xf32>
    %95 = vector.extract_strided_slice %31 {offsets = [2, 0, 0], sizes = [8, 8, 16], strides = [1, 1, 1]} : vector<10x8x16xf32> to vector<8x8x16xf32>
    %96 = vector.extract_strided_slice %30 {offsets = [2, 1, 0], sizes = [1, 1, 16], strides = [1, 1, 1]} : vector<3x3x16xf32> to vector<1x1x16xf32>
    %97 = vector.shape_cast %96 : vector<1x1x16xf32> to vector<16xf32>
    %98 = vector.shape_cast %97 : vector<16xf32> to vector<1x1x16xf32>
    %99 = vector.broadcast %98 : vector<1x1x16xf32> to vector<8x8x16xf32>
    %100 = arith.mulf %95, %99 : vector<8x8x16xf32>
    %101 = arith.addf %94, %100 : vector<8x8x16xf32>
    %102 = vector.extract_strided_slice %46 {offsets = [2, 0, 0], sizes = [8, 8, 16], strides = [1, 1, 1]} : vector<10x8x16xf32> to vector<8x8x16xf32>
    %103 = vector.extract_strided_slice %30 {offsets = [2, 2, 0], sizes = [1, 1, 16], strides = [1, 1, 1]} : vector<3x3x16xf32> to vector<1x1x16xf32>
    %104 = vector.shape_cast %103 : vector<1x1x16xf32> to vector<16xf32>
    %105 = vector.shape_cast %104 : vector<16xf32> to vector<1x1x16xf32>
    %106 = vector.broadcast %105 : vector<1x1x16xf32> to vector<8x8x16xf32>
    %107 = arith.mulf %102, %106 : vector<8x8x16xf32>
    %108 = arith.addf %101, %107 : vector<8x8x16xf32>
    %c0_19 = arith.constant 0 : index
    %c0_20 = arith.constant 0 : index
    %c0_21 = arith.constant 0 : index
    %c0_22 = arith.constant 0 : index
    %109 = vector.load %arg6[%c0_19, %c0_20, %c0_21, %c0_22] : memref<1x8x8x16xf32, #tpu.memory_space<vmem>>, vector<1x8x8x16xf32>
    %110 = vector.shape_cast %109 : vector<1x8x8x16xf32> to vector<8x8x16xf32>
    %111 = arith.addf %108, %110 : vector<8x8x16xf32>
    %c0_23 = arith.constant 0 : index
    %c0_24 = arith.constant 0 : index
    %c0_25 = arith.constant 0 : index
    %c0_26 = arith.constant 0 : index
    %112 = vector.load %arg7[%c0_23, %c0_24, %c0_25, %c0_26] : memref<1x8x8x16xf32, #tpu.memory_space<vmem>>, vector<1x8x8x16xf32>
    %113 = vector.shape_cast %112 : vector<1x8x8x16xf32> to vector<8x8x16xf32>
    %114 = vector.shape_cast %111 : vector<8x8x16xf32> to vector<1x8x8x16xf32>
    tpu.vector_store %arg7[%c0_23, %c0_24, %c0_25, %c0_26], %114 {strides = array<i32>} : memref<1x8x8x16xf32, #tpu.memory_space<vmem>>, vector<1x8x8x16xf32>,
    return
  }
  func.func @transform_0(%arg0: i32, %arg1: i32) -> (i32, i32, i32, i32) {
    %c0_i32 = arith.constant 0 : i32
    %c0_i32_0 = arith.constant 0 : i32
    %c0_i32_1 = arith.constant 0 : i32
    return %arg0, %arg1, %c0_i32, %c0_i32_0 : i32, i32, i32, i32
  }
  func.func @transform_1(%arg0: i32, %arg1: i32) -> (i32, i32, i32, i32) {
    %c8_i32 = arith.constant 8 : i32
    %0 = arith.muli %arg1, %c8_i32 : i32
    %c1_i32 = arith.constant 1 : i32
    %1 = arith.subi %0, %c1_i32 : i32
    %c0_i32 = arith.constant 0 : i32
    %2 = arith.maxsi %1, %c0_i32 : i32
    %c0_i32_0 = arith.constant 0 : i32
    %c0_i32_1 = arith.constant 0 : i32
    %c0_i32_2 = arith.constant 0 : i32
    return %arg0, %2, %c0_i32_0, %c0_i32_1 : i32, i32, i32, i32
  }
  func.func @transform_2(%arg0: i32, %arg1: i32) -> (i32, i32, i32, i32) {
    %c8_i32 = arith.constant 8 : i32
    %0 = arith.muli %arg1, %c8_i32 : i32
    %c8_i32_0 = arith.constant 8 : i32
    %1 = arith.addi %0, %c8_i32_0 : i32
    %c7_i32 = arith.constant 7 : i32
    %2 = arith.minsi %1, %c7_i32 : i32
    %c0_i32 = arith.constant 0 : i32
    %c0_i32_1 = arith.constant 0 : i32
    %c0_i32_2 = arith.constant 0 : i32
    return %arg0, %2, %c0_i32, %c0_i32_1 : i32, i32, i32, i32
  }
  func.func @transform_3(%arg0: i32, %arg1: i32) -> (i32, i32, i32) {
    %c0_i32 = arith.constant 0 : i32
    %c0_i32_0 = arith.constant 0 : i32
    %c0_i32_1 = arith.constant 0 : i32
    %c0_i32_2 = arith.constant 0 : i32
    return %c0_i32, %c0_i32_0, %c0_i32_1 : i32, i32, i32
  }
  func.func @transform_4(%arg0: i32, %arg1: i32) -> (i32, i32, i32, i32) {
    %c0_i32 = arith.constant 0 : i32
    %c0_i32_0 = arith.constant 0 : i32
    %c0_i32_1 = arith.constant 0 : i32
    return %arg0, %arg1, %c0_i32, %c0_i32_0 : i32, i32, i32, i32
  }
  func.func @transform_5(%arg0: i32, %arg1: i32) -> (i32, i32, i32, i32) {
    %c0_i32 = arith.constant 0 : i32
    %c0_i32_0 = arith.constant 0 : i32
    %c0_i32_1 = arith.constant 0 : i32
    return %arg0, %arg1, %c0_i32, %c0_i32_0 : i32, i32, i32, i32
  }
}

module attributes {stable_mosaic.version = 11 : i64} {
  func.func @kernel(%arg0: i32, %arg1: memref<128x16xf32, #tpu.memory_space<vmem>>, %arg2: memref<16x32xbf16, #tpu.memory_space<vmem>>, %arg3: memref<2x16xf32, #tpu.memory_space<vmem>>, %arg4: memref<1x16xf32, #tpu.memory_space<vmem>>, %arg5: memref<1x16xf32, #tpu.memory_space<vmem>>, %arg6: memref<128x32xbf16, #tpu.memory_space<vmem>>) attributes {dimension_semantics = [#tpu.dimension_semantics<parallel>], iteration_bounds = array<i64: 1>, scalar_prefetch = 0 : i64, scratch_operands = 0 : i64, tpu.core_type = #tpu.core_type<tc>, window_params = [{transform_indices = @transform_0, window_bounds = array<i64: 128, 16>}, {pipeline_mode = #tpu.pipeline_mode<synchronous>, transform_indices = @transform_1, window_bounds = array<i64: 16, 32>}, {pipeline_mode = #tpu.pipeline_mode<synchronous>, transform_indices = @transform_2, window_bounds = array<i64: 2, 16>}, {pipeline_mode = #tpu.pipeline_mode<synchronous>, transform_indices = @transform_3, window_bounds = array<i64: 1, 16>}, {pipeline_mode = #tpu.pipeline_mode<synchronous>, transform_indices = @transform_4, window_bounds = array<i64: 1, 16>}, {transform_indices = @transform_5, window_bounds = array<i64: 128, 32>}]} {
    %c0 = arith.constant 0 : index
    %c0_0 = arith.constant 0 : index
    %0 = vector.load %arg1[%c0, %c0_0] : memref<128x16xf32, #tpu.memory_space<vmem>>, vector<128x16xf32>
    %c0_1 = arith.constant 0 : index
    %c0_2 = arith.constant 0 : index
    %1 = vector.load %arg3[%c0_1, %c0_2] : memref<2x16xf32, #tpu.memory_space<vmem>>, vector<1x16xf32>
    %cst = arith.constant 7.812500e-03 : f32
    %2 = vector.broadcast %cst : f32 to vector<1x16xf32>
    %3 = arith.mulf %1, %2 : vector<1x16xf32>
    %c1 = arith.constant 1 : index
    %c0_3 = arith.constant 0 : index
    %4 = vector.load %arg3[%c1, %c0_3] : memref<2x16xf32, #tpu.memory_space<vmem>>, vector<1x16xf32>
    %cst_4 = arith.constant 7.812500e-03 : f32
    %5 = vector.broadcast %cst_4 : f32 to vector<1x16xf32>
    %6 = arith.mulf %4, %5 : vector<1x16xf32>
    %7 = arith.mulf %3, %3 : vector<1x16xf32>
    %8 = arith.subf %6, %7 : vector<1x16xf32>
    %cst_5 = arith.constant 0.000000e+00 : f32
    %9 = vector.broadcast %cst_5 : f32 to vector<1x16xf32>
    %10 = arith.maximumf %8, %9 : vector<1x16xf32>
    %c0_6 = arith.constant 0 : index
    %c0_7 = arith.constant 0 : index
    %11 = vector.load %arg4[%c0_6, %c0_7] : memref<1x16xf32, #tpu.memory_space<vmem>>, vector<1x16xf32>
    %cst_8 = arith.constant 9.99999974E-6 : f32
    %12 = vector.broadcast %cst_8 : f32 to vector<1x16xf32>
    %13 = arith.addf %10, %12 : vector<1x16xf32>
    %14 = math.rsqrt %13 : vector<1x16xf32>
    %15 = arith.mulf %11, %14 : vector<1x16xf32>
    %c0_9 = arith.constant 0 : index
    %c0_10 = arith.constant 0 : index
    %16 = vector.load %arg5[%c0_9, %c0_10] : memref<1x16xf32, #tpu.memory_space<vmem>>, vector<1x16xf32>
    %17 = arith.mulf %3, %15 : vector<1x16xf32>
    %18 = arith.subf %16, %17 : vector<1x16xf32>
    %19 = vector.broadcast %15 : vector<1x16xf32> to vector<128x16xf32>
    %20 = arith.mulf %0, %19 : vector<128x16xf32>
    %21 = vector.broadcast %18 : vector<1x16xf32> to vector<128x16xf32>
    %22 = arith.addf %20, %21 : vector<128x16xf32>
    %23 = arith.truncf %22 : vector<128x16xf32> to vector<128x16xbf16>
    %c0_11 = arith.constant 0 : index
    %c0_12 = arith.constant 0 : index
    %24 = vector.load %arg2[%c0_11, %c0_12] : memref<16x32xbf16, #tpu.memory_space<vmem>>, vector<16x32xbf16>
    %cst_13 = arith.constant dense<0.000000e+00> : vector<128x32xf32>
    %25 = tpu.matmul %23, %24, %cst_13 {dimension_numbers = #tpu.dot_dimension_numbers<[1], [0], [0], [1], [0, 0, 1, 1], [], []>} : vector<128x16xbf16>, vector<16x32xbf16>, vector<128x32xf32> -> vector<128x32xf32>
    %cst_14 = arith.constant 5.000000e-01 : f32
    %26 = vector.broadcast %cst_14 : f32 to vector<128x32xf32>
    %27 = arith.mulf %26, %25 : vector<128x32xf32>
    %cst_15 = arith.constant 0.707106769 : f32
    %28 = vector.broadcast %cst_15 : f32 to vector<128x32xf32>
    %29 = arith.mulf %25, %28 : vector<128x32xf32>
    %30 = math.erf %29 : vector<128x32xf32>
    %cst_16 = arith.constant 1.000000e+00 : f32
    %31 = vector.broadcast %cst_16 : f32 to vector<128x32xf32>
    %32 = arith.addf %31, %30 : vector<128x32xf32>
    %33 = arith.mulf %27, %32 : vector<128x32xf32>
    %34 = arith.truncf %33 : vector<128x32xf32> to vector<128x32xbf16>
    %c0_17 = arith.constant 0 : index
    %c0_18 = arith.constant 0 : index
    %35 = vector.load %arg6[%c0_17, %c0_18] : memref<128x32xbf16, #tpu.memory_space<vmem>>, vector<128x32xbf16>
    tpu.vector_store %arg6[%c0_17, %c0_18], %34 {strides = array<i32>} : memref<128x32xbf16, #tpu.memory_space<vmem>>, vector<128x32xbf16>,
    return
  }
  func.func @transform_0(%arg0: i32) -> (i32, i32) {
    %c0_i32 = arith.constant 0 : i32
    %c0_i32_0 = arith.constant 0 : i32
    return %arg0, %c0_i32 : i32, i32
  }
  func.func @transform_1(%arg0: i32) -> (i32, i32) {
    %c0_i32 = arith.constant 0 : i32
    %c0_i32_0 = arith.constant 0 : i32
    %c0_i32_1 = arith.constant 0 : i32
    return %c0_i32, %c0_i32_0 : i32, i32
  }
  func.func @transform_2(%arg0: i32) -> (i32, i32) {
    %c0_i32 = arith.constant 0 : i32
    %c0_i32_0 = arith.constant 0 : i32
    %c0_i32_1 = arith.constant 0 : i32
    return %c0_i32, %c0_i32_0 : i32, i32
  }
  func.func @transform_3(%arg0: i32) -> (i32, i32) {
    %c0_i32 = arith.constant 0 : i32
    %c0_i32_0 = arith.constant 0 : i32
    %c0_i32_1 = arith.constant 0 : i32
    return %c0_i32, %c0_i32_0 : i32, i32
  }
  func.func @transform_4(%arg0: i32) -> (i32, i32) {
    %c0_i32 = arith.constant 0 : i32
    %c0_i32_0 = arith.constant 0 : i32
    %c0_i32_1 = arith.constant 0 : i32
    return %c0_i32, %c0_i32_0 : i32, i32
  }
  func.func @transform_5(%arg0: i32) -> (i32, i32) {
    %c0_i32 = arith.constant 0 : i32
    %c0_i32_0 = arith.constant 0 : i32
    return %arg0, %c0_i32 : i32, i32
  }
}

module attributes {stable_mosaic.version = 11 : i64} {
  func.func @kernel(%arg0: i32, %arg1: i32, %arg2: memref<1x8x8x32xbf16, #tpu.memory_space<vmem>>, %arg3: memref<1x1x8x32xbf16, #tpu.memory_space<vmem>>, %arg4: memref<1x1x8x32xbf16, #tpu.memory_space<vmem>>, %arg5: memref<3x3x32xf32, #tpu.memory_space<vmem>>, %arg6: memref<1x8x8x32xbf16, #tpu.memory_space<vmem>>) attributes {dimension_semantics = [#tpu.dimension_semantics<parallel>, #tpu.dimension_semantics<parallel>], iteration_bounds = array<i64: 2, 1>, scalar_prefetch = 0 : i64, scratch_operands = 0 : i64, tpu.core_type = #tpu.core_type<tc>, window_params = [{transform_indices = @transform_0, window_bounds = array<i64: 1, 8, 8, 32>}, {transform_indices = @transform_1, window_bounds = array<i64: 1, 1, 8, 32>}, {transform_indices = @transform_2, window_bounds = array<i64: 1, 1, 8, 32>}, {pipeline_mode = #tpu.pipeline_mode<synchronous>, transform_indices = @transform_3, window_bounds = array<i64: 3, 3, 32>}, {transform_indices = @transform_4, window_bounds = array<i64: 1, 8, 8, 32>}]} {
    %c0 = arith.constant 0 : index
    %c0_0 = arith.constant 0 : index
    %c0_1 = arith.constant 0 : index
    %c0_2 = arith.constant 0 : index
    %0 = vector.load %arg2[%c0, %c0_0, %c0_1, %c0_2] : memref<1x8x8x32xbf16, #tpu.memory_space<vmem>>, vector<1x8x8x32xbf16>
    %1 = vector.shape_cast %0 : vector<1x8x8x32xbf16> to vector<8x8x32xbf16>
    %2 = arith.extf %1 : vector<8x8x32xbf16> to vector<8x8x32xf32>
    %3 = tpu.iota {dimensions = array<i32: 0>} : vector<8x1x1xi32>
    %c8_i32 = arith.constant 8 : i32
    %4 = arith.muli %arg1, %c8_i32 : i32
    %5 = vector.broadcast %4 : i32 to vector<8x1x1xi32>
    %6 = arith.addi %3, %5 : vector<8x1x1xi32>
    %c8_i32_3 = arith.constant 8 : i32
    %7 = vector.broadcast %c8_i32_3 : i32 to vector<8x1x1xi32>
    %8 = arith.cmpi slt, %6, %7 : vector<8x1x1xi32>
    %cst = arith.constant 0.000000e+00 : f32
    %9 = vector.shape_cast %8 : vector<8x1x1xi1> to vector<8x1x1xi1>
    %10 = vector.broadcast %9 : vector<8x1x1xi1> to vector<8x8x32xi1>
    %11 = vector.broadcast %cst : f32 to vector<8x8x32xf32>
    %12 = arith.select %10, %2, %11 : vector<8x8x32xi1>, vector<8x8x32xf32>
    %c0_4 = arith.constant 0 : index
    %c0_5 = arith.constant 0 : index
    %c0_6 = arith.constant 0 : index
    %c0_7 = arith.constant 0 : index
    %13 = vector.load %arg3[%c0_4, %c0_5, %c0_6, %c0_7] : memref<1x1x8x32xbf16, #tpu.memory_space<vmem>>, vector<1x1x8x32xbf16>
    %14 = vector.shape_cast %13 : vector<1x1x8x32xbf16> to vector<1x8x32xbf16>
    %15 = arith.extf %14 : vector<1x8x32xbf16> to vector<1x8x32xf32>
    %c0_i32 = arith.constant 0 : i32
    %16 = arith.cmpi sgt, %arg1, %c0_i32 : i32
    %17 = arith.extui %16 : i1 to i32
    %18 = arith.sitofp %17 : i32 to f32
    %19 = vector.broadcast %18 : f32 to vector<1x8x32xf32>
    %20 = arith.mulf %15, %19 : vector<1x8x32xf32>
    %c0_8 = arith.constant 0 : index
    %c0_9 = arith.constant 0 : index
    %c0_10 = arith.constant 0 : index
    %c0_11 = arith.constant 0 : index
    %21 = vector.load %arg4[%c0_8, %c0_9, %c0_10, %c0_11] : memref<1x1x8x32xbf16, #tpu.memory_space<vmem>>, vector<1x1x8x32xbf16>
    %22 = vector.shape_cast %21 : vector<1x1x8x32xbf16> to vector<1x8x32xbf16>
    %23 = arith.extf %22 : vector<1x8x32xbf16> to vector<1x8x32xf32>
    %c1_i32 = arith.constant 1 : i32
    %24 = arith.addi %arg1, %c1_i32 : i32
    %c1_i32_12 = arith.constant 1 : i32
    %25 = arith.cmpi slt, %24, %c1_i32_12 : i32
    %26 = arith.extui %25 : i1 to i32
    %27 = arith.sitofp %26 : i32 to f32
    %28 = vector.broadcast %27 : f32 to vector<1x8x32xf32>
    %29 = arith.mulf %23, %28 : vector<1x8x32xf32>
    %c0_13 = arith.constant 0 : index
    %c0_14 = arith.constant 0 : index
    %c0_15 = arith.constant 0 : index
    %30 = vector.load %arg5[%c0_13, %c0_14, %c0_15] : memref<3x3x32xf32, #tpu.memory_space<vmem>>, vector<3x3x32xf32>
    %31 = tpu.concatenate %20, %12, %29 in 0 : vector<1x8x32xf32>, vector<8x8x32xf32>, vector<1x8x32xf32> -> vector<10x8x32xf32>
    %32 = tpu.iota {dimensions = array<i32: 1>} : vector<1x8x1xi32>
    %c1_i32_16 = arith.constant 1 : i32
    %33 = tpu.dynamic_rotate %31 by %c1_i32_16 dim 1 : vector<10x8x32xf32>, i32 -> vector<10x8x32xf32>
    %c0_i32_17 = arith.constant 0 : i32
    %34 = vector.broadcast %c0_i32_17 : i32 to vector<1x8x1xi32>
    %35 = arith.cmpi sgt, %32, %34 : vector<1x8x1xi32>
    %36 = arith.extui %35 : vector<1x8x1xi1> to vector<1x8x1xi32>
    %37 = arith.sitofp %36 : vector<1x8x1xi32> to vector<1x8x1xf32>
    %38 = vector.broadcast %37 : vector<1x8x1xf32> to vector<10x8x32xf32>
    %39 = arith.mulf %33, %38 : vector<10x8x32xf32>
    %c7_i32 = arith.constant 7 : i32
    %40 = tpu.dynamic_rotate %31 by %c7_i32 dim 1 : vector<10x8x32xf32>, i32 -> vector<10x8x32xf32>
    %c7_i32_18 = arith.constant 7 : i32
    %41 = vector.broadcast %c7_i32_18 : i32 to vector<1x8x1xi32>
    %42 = arith.cmpi slt, %32, %41 : vector<1x8x1xi32>
    %43 = arith.extui %42 : vector<1x8x1xi1> to vector<1x8x1xi32>
    %44 = arith.sitofp %43 : vector<1x8x1xi32> to vector<1x8x1xf32>
    %45 = vector.broadcast %44 : vector<1x8x1xf32> to vector<10x8x32xf32>
    %46 = arith.mulf %40, %45 : vector<10x8x32xf32>
    %47 = vector.extract_strided_slice %39 {offsets = [0, 0, 0], sizes = [8, 8, 32], strides = [1, 1, 1]} : vector<10x8x32xf32> to vector<8x8x32xf32>
    %48 = vector.extract_strided_slice %30 {offsets = [0, 0, 0], sizes = [1, 1, 32], strides = [1, 1, 1]} : vector<3x3x32xf32> to vector<1x1x32xf32>
    %49 = vector.shape_cast %48 : vector<1x1x32xf32> to vector<32xf32>
    %50 = vector.shape_cast %49 : vector<32xf32> to vector<1x1x32xf32>
    %51 = vector.broadcast %50 : vector<1x1x32xf32> to vector<8x8x32xf32>
    %52 = arith.mulf %47, %51 : vector<8x8x32xf32>
    %53 = vector.extract_strided_slice %31 {offsets = [0, 0, 0], sizes = [8, 8, 32], strides = [1, 1, 1]} : vector<10x8x32xf32> to vector<8x8x32xf32>
    %54 = vector.extract_strided_slice %30 {offsets = [0, 1, 0], sizes = [1, 1, 32], strides = [1, 1, 1]} : vector<3x3x32xf32> to vector<1x1x32xf32>
    %55 = vector.shape_cast %54 : vector<1x1x32xf32> to vector<32xf32>
    %56 = vector.shape_cast %55 : vector<32xf32> to vector<1x1x32xf32>
    %57 = vector.broadcast %56 : vector<1x1x32xf32> to vector<8x8x32xf32>
    %58 = arith.mulf %53, %57 : vector<8x8x32xf32>
    %59 = arith.addf %52, %58 : vector<8x8x32xf32>
    %60 = vector.extract_strided_slice %46 {offsets = [0, 0, 0], sizes = [8, 8, 32], strides = [1, 1, 1]} : vector<10x8x32xf32> to vector<8x8x32xf32>
    %61 = vector.extract_strided_slice %30 {offsets = [0, 2, 0], sizes = [1, 1, 32], strides = [1, 1, 1]} : vector<3x3x32xf32> to vector<1x1x32xf32>
    %62 = vector.shape_cast %61 : vector<1x1x32xf32> to vector<32xf32>
    %63 = vector.shape_cast %62 : vector<32xf32> to vector<1x1x32xf32>
    %64 = vector.broadcast %63 : vector<1x1x32xf32> to vector<8x8x32xf32>
    %65 = arith.mulf %60, %64 : vector<8x8x32xf32>
    %66 = arith.addf %59, %65 : vector<8x8x32xf32>
    %67 = vector.extract_strided_slice %39 {offsets = [1, 0, 0], sizes = [8, 8, 32], strides = [1, 1, 1]} : vector<10x8x32xf32> to vector<8x8x32xf32>
    %68 = vector.extract_strided_slice %30 {offsets = [1, 0, 0], sizes = [1, 1, 32], strides = [1, 1, 1]} : vector<3x3x32xf32> to vector<1x1x32xf32>
    %69 = vector.shape_cast %68 : vector<1x1x32xf32> to vector<32xf32>
    %70 = vector.shape_cast %69 : vector<32xf32> to vector<1x1x32xf32>
    %71 = vector.broadcast %70 : vector<1x1x32xf32> to vector<8x8x32xf32>
    %72 = arith.mulf %67, %71 : vector<8x8x32xf32>
    %73 = arith.addf %66, %72 : vector<8x8x32xf32>
    %74 = vector.extract_strided_slice %31 {offsets = [1, 0, 0], sizes = [8, 8, 32], strides = [1, 1, 1]} : vector<10x8x32xf32> to vector<8x8x32xf32>
    %75 = vector.extract_strided_slice %30 {offsets = [1, 1, 0], sizes = [1, 1, 32], strides = [1, 1, 1]} : vector<3x3x32xf32> to vector<1x1x32xf32>
    %76 = vector.shape_cast %75 : vector<1x1x32xf32> to vector<32xf32>
    %77 = vector.shape_cast %76 : vector<32xf32> to vector<1x1x32xf32>
    %78 = vector.broadcast %77 : vector<1x1x32xf32> to vector<8x8x32xf32>
    %79 = arith.mulf %74, %78 : vector<8x8x32xf32>
    %80 = arith.addf %73, %79 : vector<8x8x32xf32>
    %81 = vector.extract_strided_slice %46 {offsets = [1, 0, 0], sizes = [8, 8, 32], strides = [1, 1, 1]} : vector<10x8x32xf32> to vector<8x8x32xf32>
    %82 = vector.extract_strided_slice %30 {offsets = [1, 2, 0], sizes = [1, 1, 32], strides = [1, 1, 1]} : vector<3x3x32xf32> to vector<1x1x32xf32>
    %83 = vector.shape_cast %82 : vector<1x1x32xf32> to vector<32xf32>
    %84 = vector.shape_cast %83 : vector<32xf32> to vector<1x1x32xf32>
    %85 = vector.broadcast %84 : vector<1x1x32xf32> to vector<8x8x32xf32>
    %86 = arith.mulf %81, %85 : vector<8x8x32xf32>
    %87 = arith.addf %80, %86 : vector<8x8x32xf32>
    %88 = vector.extract_strided_slice %39 {offsets = [2, 0, 0], sizes = [8, 8, 32], strides = [1, 1, 1]} : vector<10x8x32xf32> to vector<8x8x32xf32>
    %89 = vector.extract_strided_slice %30 {offsets = [2, 0, 0], sizes = [1, 1, 32], strides = [1, 1, 1]} : vector<3x3x32xf32> to vector<1x1x32xf32>
    %90 = vector.shape_cast %89 : vector<1x1x32xf32> to vector<32xf32>
    %91 = vector.shape_cast %90 : vector<32xf32> to vector<1x1x32xf32>
    %92 = vector.broadcast %91 : vector<1x1x32xf32> to vector<8x8x32xf32>
    %93 = arith.mulf %88, %92 : vector<8x8x32xf32>
    %94 = arith.addf %87, %93 : vector<8x8x32xf32>
    %95 = vector.extract_strided_slice %31 {offsets = [2, 0, 0], sizes = [8, 8, 32], strides = [1, 1, 1]} : vector<10x8x32xf32> to vector<8x8x32xf32>
    %96 = vector.extract_strided_slice %30 {offsets = [2, 1, 0], sizes = [1, 1, 32], strides = [1, 1, 1]} : vector<3x3x32xf32> to vector<1x1x32xf32>
    %97 = vector.shape_cast %96 : vector<1x1x32xf32> to vector<32xf32>
    %98 = vector.shape_cast %97 : vector<32xf32> to vector<1x1x32xf32>
    %99 = vector.broadcast %98 : vector<1x1x32xf32> to vector<8x8x32xf32>
    %100 = arith.mulf %95, %99 : vector<8x8x32xf32>
    %101 = arith.addf %94, %100 : vector<8x8x32xf32>
    %102 = vector.extract_strided_slice %46 {offsets = [2, 0, 0], sizes = [8, 8, 32], strides = [1, 1, 1]} : vector<10x8x32xf32> to vector<8x8x32xf32>
    %103 = vector.extract_strided_slice %30 {offsets = [2, 2, 0], sizes = [1, 1, 32], strides = [1, 1, 1]} : vector<3x3x32xf32> to vector<1x1x32xf32>
    %104 = vector.shape_cast %103 : vector<1x1x32xf32> to vector<32xf32>
    %105 = vector.shape_cast %104 : vector<32xf32> to vector<1x1x32xf32>
    %106 = vector.broadcast %105 : vector<1x1x32xf32> to vector<8x8x32xf32>
    %107 = arith.mulf %102, %106 : vector<8x8x32xf32>
    %108 = arith.addf %101, %107 : vector<8x8x32xf32>
    %cst_19 = arith.constant 5.000000e-01 : f32
    %109 = vector.broadcast %cst_19 : f32 to vector<8x8x32xf32>
    %110 = arith.mulf %109, %108 : vector<8x8x32xf32>
    %cst_20 = arith.constant 0.707106769 : f32
    %111 = vector.broadcast %cst_20 : f32 to vector<8x8x32xf32>
    %112 = arith.mulf %108, %111 : vector<8x8x32xf32>
    %113 = math.erf %112 : vector<8x8x32xf32>
    %cst_21 = arith.constant 1.000000e+00 : f32
    %114 = vector.broadcast %cst_21 : f32 to vector<8x8x32xf32>
    %115 = arith.addf %114, %113 : vector<8x8x32xf32>
    %116 = arith.mulf %110, %115 : vector<8x8x32xf32>
    %117 = arith.truncf %116 : vector<8x8x32xf32> to vector<8x8x32xbf16>
    %c0_22 = arith.constant 0 : index
    %c0_23 = arith.constant 0 : index
    %c0_24 = arith.constant 0 : index
    %c0_25 = arith.constant 0 : index
    %118 = vector.load %arg6[%c0_22, %c0_23, %c0_24, %c0_25] : memref<1x8x8x32xbf16, #tpu.memory_space<vmem>>, vector<1x8x8x32xbf16>
    %119 = vector.shape_cast %118 : vector<1x8x8x32xbf16> to vector<8x8x32xbf16>
    %120 = vector.shape_cast %117 : vector<8x8x32xbf16> to vector<1x8x8x32xbf16>
    tpu.vector_store %arg6[%c0_22, %c0_23, %c0_24, %c0_25], %120 {strides = array<i32>} : memref<1x8x8x32xbf16, #tpu.memory_space<vmem>>, vector<1x8x8x32xbf16>,
    return
  }
  func.func @transform_0(%arg0: i32, %arg1: i32) -> (i32, i32, i32, i32) {
    %c0_i32 = arith.constant 0 : i32
    %c0_i32_0 = arith.constant 0 : i32
    %c0_i32_1 = arith.constant 0 : i32
    return %arg0, %arg1, %c0_i32, %c0_i32_0 : i32, i32, i32, i32
  }
  func.func @transform_1(%arg0: i32, %arg1: i32) -> (i32, i32, i32, i32) {
    %c8_i32 = arith.constant 8 : i32
    %0 = arith.muli %arg1, %c8_i32 : i32
    %c1_i32 = arith.constant 1 : i32
    %1 = arith.subi %0, %c1_i32 : i32
    %c0_i32 = arith.constant 0 : i32
    %2 = arith.maxsi %1, %c0_i32 : i32
    %c0_i32_0 = arith.constant 0 : i32
    %c0_i32_1 = arith.constant 0 : i32
    %c0_i32_2 = arith.constant 0 : i32
    return %arg0, %2, %c0_i32_0, %c0_i32_1 : i32, i32, i32, i32
  }
  func.func @transform_2(%arg0: i32, %arg1: i32) -> (i32, i32, i32, i32) {
    %c8_i32 = arith.constant 8 : i32
    %0 = arith.muli %arg1, %c8_i32 : i32
    %c8_i32_0 = arith.constant 8 : i32
    %1 = arith.addi %0, %c8_i32_0 : i32
    %c7_i32 = arith.constant 7 : i32
    %2 = arith.minsi %1, %c7_i32 : i32
    %c0_i32 = arith.constant 0 : i32
    %c0_i32_1 = arith.constant 0 : i32
    %c0_i32_2 = arith.constant 0 : i32
    return %arg0, %2, %c0_i32, %c0_i32_1 : i32, i32, i32, i32
  }
  func.func @transform_3(%arg0: i32, %arg1: i32) -> (i32, i32, i32) {
    %c0_i32 = arith.constant 0 : i32
    %c0_i32_0 = arith.constant 0 : i32
    %c0_i32_1 = arith.constant 0 : i32
    %c0_i32_2 = arith.constant 0 : i32
    return %c0_i32, %c0_i32_0, %c0_i32_1 : i32, i32, i32
  }
  func.func @transform_4(%arg0: i32, %arg1: i32) -> (i32, i32, i32, i32) {
    %c0_i32 = arith.constant 0 : i32
    %c0_i32_0 = arith.constant 0 : i32
    %c0_i32_1 = arith.constant 0 : i32
    return %arg0, %arg1, %c0_i32, %c0_i32_0 : i32, i32, i32, i32
  }
}

module attributes {stable_mosaic.version = 11 : i64} {
  func.func @kernel(%arg0: i32, %arg1: memref<128x32xbf16, #tpu.memory_space<vmem>>, %arg2: memref<32x16xbf16, #tpu.memory_space<vmem>>, %arg3: memref<128x16xf32, #tpu.memory_space<vmem>>, %arg4: memref<128x16xf32, #tpu.memory_space<vmem>>, %arg5: memref<2x16xf32, #tpu.memory_space<vmem>>) attributes {dimension_semantics = [#tpu.dimension_semantics<arbitrary>], iteration_bounds = array<i64: 1>, scalar_prefetch = 0 : i64, scratch_operands = 0 : i64, tpu.core_type = #tpu.core_type<tc>, window_params = [{transform_indices = @transform_0, window_bounds = array<i64: 128, 32>}, {pipeline_mode = #tpu.pipeline_mode<synchronous>, transform_indices = @transform_1, window_bounds = array<i64: 32, 16>}, {transform_indices = @transform_2, window_bounds = array<i64: 128, 16>}, {transform_indices = @transform_3, window_bounds = array<i64: 128, 16>}, {pipeline_mode = #tpu.pipeline_mode<synchronous>, transform_indices = @transform_4, window_bounds = array<i64: 2, 16>}]} {
    %c0 = arith.constant 0 : index
    %c0_0 = arith.constant 0 : index
    %0 = vector.load %arg1[%c0, %c0_0] : memref<128x32xbf16, #tpu.memory_space<vmem>>, vector<128x32xbf16>
    %1 = arith.extf %0 : vector<128x32xbf16> to vector<128x32xf32>
    %2 = arith.truncf %1 : vector<128x32xf32> to vector<128x32xbf16>
    %c0_1 = arith.constant 0 : index
    %c0_2 = arith.constant 0 : index
    %3 = vector.load %arg2[%c0_1, %c0_2] : memref<32x16xbf16, #tpu.memory_space<vmem>>, vector<32x16xbf16>
    %cst = arith.constant dense<0.000000e+00> : vector<128x16xf32>
    %4 = tpu.matmul %2, %3, %cst {dimension_numbers = #tpu.dot_dimension_numbers<[1], [0], [0], [1], [0, 0, 1, 1], [], []>} : vector<128x32xbf16>, vector<32x16xbf16>, vector<128x16xf32> -> vector<128x16xf32>
    %c0_3 = arith.constant 0 : index
    %c0_4 = arith.constant 0 : index
    %5 = vector.load %arg3[%c0_3, %c0_4] : memref<128x16xf32, #tpu.memory_space<vmem>>, vector<128x16xf32>
    %6 = arith.addf %4, %5 : vector<128x16xf32>
    %c0_5 = arith.constant 0 : index
    %c0_6 = arith.constant 0 : index
    %7 = vector.load %arg4[%c0_5, %c0_6] : memref<128x16xf32, #tpu.memory_space<vmem>>, vector<128x16xf32>
    tpu.vector_store %arg4[%c0_5, %c0_6], %6 {strides = array<i32>} : memref<128x16xf32, #tpu.memory_space<vmem>>, vector<128x16xf32>,
    %8 = tpu.iota {dimensions = array<i32: 0>} : vector<128x1xi32>
    %c128_i32 = arith.constant 128 : i32
    %9 = arith.muli %arg0, %c128_i32 : i32
    %10 = vector.broadcast %9 : i32 to vector<128x1xi32>
    %11 = arith.addi %8, %10 : vector<128x1xi32>
    %12 = arith.sitofp %11 : vector<128x1xi32> to vector<128x1xf32>
    %cst_7 = arith.constant 1.280000e+02 : f32
    %13 = vector.broadcast %cst_7 : f32 to vector<128x1xf32>
    %14 = arith.cmpf olt, %12, %13 : vector<128x1xf32>
    %cst_8 = arith.constant 0.000000e+00 : f32
    %15 = vector.shape_cast %14 : vector<128x1xi1> to vector<128x1xi1>
    %16 = vector.broadcast %15 : vector<128x1xi1> to vector<128x16xi1>
    %17 = vector.broadcast %cst_8 : f32 to vector<128x16xf32>
    %18 = arith.select %16, %6, %17 : vector<128x16xi1>, vector<128x16xf32>
    %c0_i32 = arith.constant 0 : i32
    %19 = arith.cmpi eq, %arg0, %c0_i32 : i32
    %20 = arith.extui %19 : i1 to i32
    %c0_i32_9 = arith.constant 0 : i32
    %21 = arith.cmpi ne, %20, %c0_i32_9 : i32
    scf.if %21 {
      %cst_19 = arith.constant 0.000000e+00 : f32
      %33 = vector.broadcast %cst_19 : f32 to vector<2x16xf32>
      %c0_20 = arith.constant 0 : index
      %c0_21 = arith.constant 0 : index
      %34 = vector.load %arg5[%c0_20, %c0_21] : memref<2x16xf32, #tpu.memory_space<vmem>>, vector<2x16xf32>
      tpu.vector_store %arg5[%c0_20, %c0_21], %33 {strides = array<i32>} : memref<2x16xf32, #tpu.memory_space<vmem>>, vector<2x16xf32>,
    } else {
    }
    %c0_10 = arith.constant 0 : index
    %c0_11 = arith.constant 0 : index
    %22 = vector.load %arg5[%c0_10, %c0_11] : memref<2x16xf32, #tpu.memory_space<vmem>>, vector<1x16xf32>
    %cst_12 = arith.constant dense<0.000000e+00> : vector<16xf32>
    %23 = vector.multi_reduction <add>, %18, %cst_12 [0] : vector<128x16xf32> to vector<16xf32>
    %24 = vector.shape_cast %23 : vector<16xf32> to vector<1x16xf32>
    %25 = arith.addf %22, %24 : vector<1x16xf32>
    %c0_13 = arith.constant 0 : index
    %c0_14 = arith.constant 0 : index
    %26 = vector.load %arg5[%c0_13, %c0_14] : memref<2x16xf32, #tpu.memory_space<vmem>>, vector<1x16xf32>
    tpu.vector_store %arg5[%c0_13, %c0_14], %25 {strides = array<i32>} : memref<2x16xf32, #tpu.memory_space<vmem>>, vector<1x16xf32>,
    %c1 = arith.constant 1 : index
    %c0_15 = arith.constant 0 : index
    %27 = vector.load %arg5[%c1, %c0_15] : memref<2x16xf32, #tpu.memory_space<vmem>>, vector<1x16xf32>
    %28 = arith.mulf %18, %18 : vector<128x16xf32>
    %cst_16 = arith.constant dense<0.000000e+00> : vector<16xf32>
    %29 = vector.multi_reduction <add>, %28, %cst_16 [0] : vector<128x16xf32> to vector<16xf32>
    %30 = vector.shape_cast %29 : vector<16xf32> to vector<1x16xf32>
    %31 = arith.addf %27, %30 : vector<1x16xf32>
    %c1_17 = arith.constant 1 : index
    %c0_18 = arith.constant 0 : index
    %32 = vector.load %arg5[%c1_17, %c0_18] : memref<2x16xf32, #tpu.memory_space<vmem>>, vector<1x16xf32>
    tpu.vector_store %arg5[%c1_17, %c0_18], %31 {strides = array<i32>} : memref<2x16xf32, #tpu.memory_space<vmem>>, vector<1x16xf32>,
    return
  }
  func.func @transform_0(%arg0: i32) -> (i32, i32) {
    %c0_i32 = arith.constant 0 : i32
    %c0_i32_0 = arith.constant 0 : i32
    return %arg0, %c0_i32 : i32, i32
  }
  func.func @transform_1(%arg0: i32) -> (i32, i32) {
    %c0_i32 = arith.constant 0 : i32
    %c0_i32_0 = arith.constant 0 : i32
    %c0_i32_1 = arith.constant 0 : i32
    return %c0_i32, %c0_i32_0 : i32, i32
  }
  func.func @transform_2(%arg0: i32) -> (i32, i32) {
    %c0_i32 = arith.constant 0 : i32
    %c0_i32_0 = arith.constant 0 : i32
    return %arg0, %c0_i32 : i32, i32
  }
  func.func @transform_3(%arg0: i32) -> (i32, i32) {
    %c0_i32 = arith.constant 0 : i32
    %c0_i32_0 = arith.constant 0 : i32
    return %arg0, %c0_i32 : i32, i32
  }
  func.func @transform_4(%arg0: i32) -> (i32, i32) {
    %c0_i32 = arith.constant 0 : i32
    %c0_i32_0 = arith.constant 0 : i32
    %c0_i32_1 = arith.constant 0 : i32
    return %c0_i32, %c0_i32_0 : i32, i32
  }
}

module attributes {stable_mosaic.version = 11 : i64} {
  func.func @kernel(%arg0: i32, %arg1: memref<128x32xbf16, #tpu.memory_space<vmem>>, %arg2: memref<32x16xbf16, #tpu.memory_space<vmem>>, %arg3: memref<128x16xf32, #tpu.memory_space<vmem>>, %arg4: memref<128x16xf32, #tpu.memory_space<vmem>>) attributes {dimension_semantics = [#tpu.dimension_semantics<parallel>], iteration_bounds = array<i64: 1>, scalar_prefetch = 0 : i64, scratch_operands = 0 : i64, tpu.core_type = #tpu.core_type<tc>, window_params = [{transform_indices = @transform_0, window_bounds = array<i64: 128, 32>}, {pipeline_mode = #tpu.pipeline_mode<synchronous>, transform_indices = @transform_1, window_bounds = array<i64: 32, 16>}, {transform_indices = @transform_2, window_bounds = array<i64: 128, 16>}, {transform_indices = @transform_3, window_bounds = array<i64: 128, 16>}]} {
    %c0 = arith.constant 0 : index
    %c0_0 = arith.constant 0 : index
    %0 = vector.load %arg1[%c0, %c0_0] : memref<128x32xbf16, #tpu.memory_space<vmem>>, vector<128x32xbf16>
    %1 = arith.extf %0 : vector<128x32xbf16> to vector<128x32xf32>
    %2 = arith.truncf %1 : vector<128x32xf32> to vector<128x32xbf16>
    %c0_1 = arith.constant 0 : index
    %c0_2 = arith.constant 0 : index
    %3 = vector.load %arg2[%c0_1, %c0_2] : memref<32x16xbf16, #tpu.memory_space<vmem>>, vector<32x16xbf16>
    %cst = arith.constant dense<0.000000e+00> : vector<128x16xf32>
    %4 = tpu.matmul %2, %3, %cst {dimension_numbers = #tpu.dot_dimension_numbers<[1], [0], [0], [1], [0, 0, 1, 1], [], []>} : vector<128x32xbf16>, vector<32x16xbf16>, vector<128x16xf32> -> vector<128x16xf32>
    %c0_3 = arith.constant 0 : index
    %c0_4 = arith.constant 0 : index
    %5 = vector.load %arg3[%c0_3, %c0_4] : memref<128x16xf32, #tpu.memory_space<vmem>>, vector<128x16xf32>
    %6 = arith.addf %4, %5 : vector<128x16xf32>
    %c0_5 = arith.constant 0 : index
    %c0_6 = arith.constant 0 : index
    %7 = vector.load %arg4[%c0_5, %c0_6] : memref<128x16xf32, #tpu.memory_space<vmem>>, vector<128x16xf32>
    tpu.vector_store %arg4[%c0_5, %c0_6], %6 {strides = array<i32>} : memref<128x16xf32, #tpu.memory_space<vmem>>, vector<128x16xf32>,
    return
  }
  func.func @transform_0(%arg0: i32) -> (i32, i32) {
    %c0_i32 = arith.constant 0 : i32
    %c0_i32_0 = arith.constant 0 : i32
    return %arg0, %c0_i32 : i32, i32
  }
  func.func @transform_1(%arg0: i32) -> (i32, i32) {
    %c0_i32 = arith.constant 0 : i32
    %c0_i32_0 = arith.constant 0 : i32
    %c0_i32_1 = arith.constant 0 : i32
    return %c0_i32, %c0_i32_0 : i32, i32
  }
  func.func @transform_2(%arg0: i32) -> (i32, i32) {
    %c0_i32 = arith.constant 0 : i32
    %c0_i32_0 = arith.constant 0 : i32
    return %arg0, %c0_i32 : i32, i32
  }
  func.func @transform_3(%arg0: i32) -> (i32, i32) {
    %c0_i32 = arith.constant 0 : i32
    %c0_i32_0 = arith.constant 0 : i32
    return %arg0, %c0_i32 : i32, i32
  }
}

</mosaic_0001>

<llo_original>
// kernel: igab_forward.17
$region0: #{igab_forward.17}
  #allocation0 [shape = 'u32[]', space=smem, size = 0x4, offset = 0x4, fixed_abs, tag = 'smem constant byte address 0x4 - core index']
  #allocation1 [shape = 'u32[144,128]{1,0:T(1,128)}', space=vmem, size = 0x12000, scoped, tag = 'internal scratch']
  %s0 = inlined_call_operand.vmem [shape: f32[128,16], index: 0, kind: input, shape index: {}]
  %s1 = inlined_call_operand.vmem [shape: f32[2,16], index: 1, kind: output, shape index: {}]
  %s2 = sld [smem:[#allocation0]]
  $region18: #{igab_forward.17} parent=0
    _
  %s4 = ssub.s32 1, %s2
  %s5 = scalar_select 0, %s4, %s2
  // Predicated region
  $region2: #{igab_forward.17} parent=0 // pred_check
    _
  $region3: #{igab_forward.17} parent=0 // pred_check_branch
    %7 = sbr.rel (0) target = $region5
  $region4: #{igab_forward.17} parent=0 // pred_region
    _
  $region5: #{igab_forward.17} parent=0 // pred_fallthru
    _
  %p8 = scmp.eq.s32.totalorder 0, 0
  // Predicated region
  $region6: #{igab_forward.17} parent=0 // pred_check
    %p9 = pneg %p8
  $region7: #{igab_forward.17} parent=0 // pred_check_branch
    %11 = sbr.rel (%p9) target = $region9
  $region8: #{igab_forward.17} parent=0 // pred_region
    %vm12 = vcmask 123904
    %13 = vst.msk [vmem:[%s1] sm:$0x3] %vm12, 0.0
  $region9: #{igab_forward.17} parent=0 // pred_fallthru
    _
  %v14 = vld [vmem:[%s0] sm:$0xff]
  %v15 = vld [vmem:[%s0 + $0x8] sm:$0xff]
  %v16 = vld [vmem:[%s0 + $0x10] sm:$0xff]
  %v17 = vld [vmem:[%s0 + $0x18] sm:$0xff]
  %v18 = vld [vmem:[%s0 + $0x20] sm:$0xff]
  %v19 = vld [vmem:[%s0 + $0x28] sm:$0xff]
  %v20 = vld [vmem:[%s0 + $0x30] sm:$0xff]
  %v21 = vld [vmem:[%s0 + $0x38] sm:$0xff]
  %v22 = vld [vmem:[%s0 + $0x40] sm:$0xff]
  %v23 = vld [vmem:[%s0 + $0x48] sm:$0xff]
  %v24 = vld [vmem:[%s0 + $0x50] sm:$0xff]
  %v25 = vld [vmem:[%s0 + $0x58] sm:$0xff]
  %v26 = vld [vmem:[%s0 + $0x60] sm:$0xff]
  %v27 = vld [vmem:[%s0 + $0x68] sm:$0xff]
  %v28 = vld [vmem:[%s0 + $0x70] sm:$0xff]
  %v29 = vld [vmem:[%s0 + $0x78] sm:$0xff]
  %v30 = vlaneseq
  %v31 = vshrl.u32 %v30, 7
  %v32 = vadd.s32 %v31, 8
  %v33 = vadd.s32 %v31, 16
  %v34 = vadd.s32 %v31, 24
  %v35 = vadd.s32 %v31, 32
  %v36 = vadd.s32 %v31, 40
  %v37 = vadd.s32 %v31, 48
  %v38 = vadd.s32 %v31, 56
  %v39 = vadd.s32 %v31, 64
  %v40 = vadd.s32 %v31, 72
  %v41 = vadd.s32 %v31, 80
  %v42 = vadd.s32 %v31, 88
  %v43 = vadd.s32 %v31, 96
  %v44 = vadd.s32 %v31, 104
  %v45 = vadd.s32 %v31, 112
  %v46 = vadd.s32 %v31, 120
  %s47 = smul.u32 0, 128
  %v48 = vstv %s47
  %v49 = vadd.s32 %v31, %v48
  %v50 = vadd.s32 %v32, %v48
  %v51 = vadd.s32 %v33, %v48
  %v52 = vadd.s32 %v34, %v48
  %v53 = vadd.s32 %v35, %v48
  %v54 = vadd.s32 %v36, %v48
  %v55 = vadd.s32 %v37, %v48
  %v56 = vadd.s32 %v38, %v48
  %v57 = vadd.s32 %v39, %v48
  %v58 = vadd.s32 %v40, %v48
  %v59 = vadd.s32 %v41, %v48
  %v60 = vadd.s32 %v42, %v48
  %v61 = vadd.s32 %v43, %v48
  %v62 = vadd.s32 %v44, %v48
  %v63 = vadd.s32 %v45, %v48
  %v64 = vadd.s32 %v46, %v48
  %vm65 = vcmp.lt.s32.totalorder %v49, 128
  %vm66 = vcmp.lt.s32.totalorder %v50, 128
  %vm67 = vcmp.lt.s32.totalorder %v51, 128
  %vm68 = vcmp.lt.s32.totalorder %v52, 128
  %vm69 = vcmp.lt.s32.totalorder %v53, 128
  %vm70 = vcmp.lt.s32.totalorder %v54, 128
  %vm71 = vcmp.lt.s32.totalorder %v55, 128
  %vm72 = vcmp.lt.s32.totalorder %v56, 128
  %vm73 = vcmp.lt.s32.totalorder %v57, 128
  %vm74 = vcmp.lt.s32.totalorder %v58, 128
  %vm75 = vcmp.lt.s32.totalorder %v59, 128
  %vm76 = vcmp.lt.s32.totalorder %v60, 128
  %vm77 = vcmp.lt.s32.totalorder %v61, 128
  %vm78 = vcmp.lt.s32.totalorder %v62, 128
  %vm79 = vcmp.lt.s32.totalorder %v63, 128
  %vm80 = vcmp.lt.s32.totalorder %v64, 128
  %v81 = vsel %vm65, 1, 0
  %v82 = vsel %vm66, 1, 0
  %v83 = vsel %vm67, 1, 0
  %v84 = vsel %vm68, 1, 0
  %v85 = vsel %vm69, 1, 0
  %v86 = vsel %vm70, 1, 0
  %v87 = vsel %vm71, 1, 0
  %v88 = vsel %vm72, 1, 0
  %v89 = vsel %vm73, 1, 0
  %v90 = vsel %vm74, 1, 0
  %v91 = vsel %vm75, 1, 0
  %v92 = vsel %vm76, 1, 0
  %v93 = vsel %vm77, 1, 0
  %v94 = vsel %vm78, 1, 0
  %v95 = vsel %vm79, 1, 0
  %v96 = vsel %vm80, 1, 0
  %vm97 = vcmp.eq.s32.totalorder %v81, 1
  %vm98 = vcmp.eq.s32.totalorder %v82, 1
  %vm99 = vcmp.eq.s32.totalorder %v83, 1
  %vm100 = vcmp.eq.s32.totalorder %v84, 1
  %vm101 = vcmp.eq.s32.totalorder %v85, 1
  %vm102 = vcmp.eq.s32.totalorder %v86, 1
  %vm103 = vcmp.eq.s32.totalorder %v87, 1
  %vm104 = vcmp.eq.s32.totalorder %v88, 1
  %vm105 = vcmp.eq.s32.totalorder %v89, 1
  %vm106 = vcmp.eq.s32.totalorder %v90, 1
  %vm107 = vcmp.eq.s32.totalorder %v91, 1
  %vm108 = vcmp.eq.s32.totalorder %v92, 1
  %vm109 = vcmp.eq.s32.totalorder %v93, 1
  %vm110 = vcmp.eq.s32.totalorder %v94, 1
  %vm111 = vcmp.eq.s32.totalorder %v95, 1
  %vm112 = vcmp.eq.s32.totalorder %v96, 1
  %v113 = vsel %vm97, %v14, 0.0
  %v114 = vsel %vm98, %v15, 0.0
  %v115 = vsel %vm99, %v16, 0.0
  %v116 = vsel %vm100, %v17, 0.0
  %v117 = vsel %vm101, %v18, 0.0
  %v118 = vsel %vm102, %v19, 0.0
  %v119 = vsel %vm103, %v20, 0.0
  %v120 = vsel %vm104, %v21, 0.0
  %v121 = vsel %vm105, %v22, 0.0
  %v122 = vsel %vm106, %v23, 0.0
  %v123 = vsel %vm107, %v24, 0.0
  %v124 = vsel %vm108, %v25, 0.0
  %v125 = vsel %vm109, %v26, 0.0
  %v126 = vsel %vm110, %v27, 0.0
  %v127 = vsel %vm111, %v28, 0.0
  %v128 = vsel %vm112, %v29, 0.0
  %v129 = vld [vmem:[%s1] sm:$0x1]
  %vm130 = vcmask 130048
  %v131 = vsel %vm130, %v113, 0.0
  %v132 = vsel %vm130, %v114, 0.0
  %v133 = vadd.f32 %v131, %v132
  %v134 = vsel %vm130, %v115, 0.0
  %v135 = vadd.f32 %v133, %v134
  %v136 = vsel %vm130, %v116, 0.0
  %v137 = vadd.f32 %v135, %v136
  %v138 = vsel %vm130, %v117, 0.0
  %v139 = vadd.f32 %v137, %v138
  %v140 = vsel %vm130, %v118, 0.0
  %v141 = vadd.f32 %v139, %v140
  %v142 = vsel %vm130, %v119, 0.0
  %v143 = vadd.f32 %v141, %v142
  %v144 = vsel %vm130, %v120, 0.0
  %v145 = vadd.f32 %v143, %v144
  %v146 = vsel %vm130, %v121, 0.0
  %v147 = vadd.f32 %v145, %v146
  %v148 = vsel %vm130, %v122, 0.0
  %v149 = vadd.f32 %v147, %v148
  %v150 = vsel %vm130, %v123, 0.0
  %v151 = vadd.f32 %v149, %v150
  %v152 = vsel %vm130, %v124, 0.0
  %v153 = vadd.f32 %v151, %v152
  %v154 = vsel %vm130, %v125, 0.0
  %v155 = vadd.f32 %v153, %v154
  %v156 = vsel %vm130, %v126, 0.0
  %v157 = vadd.f32 %v155, %v156
  %v158 = vsel %vm130, %v127, 0.0
  %v159 = vadd.f32 %v157, %v158
  %v160 = vsel %vm130, %v128, 0.0
  %v161 = vadd.f32 %v159, %v160
  %v162 = vrot.slane %v161, 4
  %v163 = vadd.f32 %v161, %v162
  %v164 = vrot.slane %v163, 2
  %v165 = vadd.f32 %v163, %v164
  %v166 = vrot.slane %v165, 1
  %v167 = vadd.f32 %v165, %v166
  %v168 = vadd.f32 %v129, %v167
  %vm169 = vcmask 122880
  %170 = vst.msk [vmem:[%s1] sm:$0x1] %vm169, %v168
  %v171 = vld [vmem:[%s1 + $0x1] sm:$0x1]
  %v172 = vmul.f32 %v113, %v113
  %v173 = vmul.f32 %v114, %v114
  %v174 = vmul.f32 %v115, %v115
  %v175 = vmul.f32 %v116, %v116
  %v176 = vmul.f32 %v117, %v117
  %v177 = vmul.f32 %v118, %v118
  %v178 = vmul.f32 %v119, %v119
  %v179 = vmul.f32 %v120, %v120
  %v180 = vmul.f32 %v121, %v121
  %v181 = vmul.f32 %v122, %v122
  %v182 = vmul.f32 %v123, %v123
  %v183 = vmul.f32 %v124, %v124
  %v184 = vmul.f32 %v125, %v125
  %v185 = vmul.f32 %v126, %v126
  %v186 = vmul.f32 %v127, %v127
  %v187 = vmul.f32 %v128, %v128
  %v188 = vsel %vm130, %v172, 0.0
  %v189 = vsel %vm130, %v173, 0.0
  %v190 = vadd.f32 %v188, %v189
  %v191 = vsel %vm130, %v174, 0.0
  %v192 = vadd.f32 %v190, %v191
  %v193 = vsel %vm130, %v175, 0.0
  %v194 = vadd.f32 %v192, %v193
  %v195 = vsel %vm130, %v176, 0.0
  %v196 = vadd.f32 %v194, %v195
  %v197 = vsel %vm130, %v177, 0.0
  %v198 = vadd.f32 %v196, %v197
  %v199 = vsel %vm130, %v178, 0.0
  %v200 = vadd.f32 %v198, %v199
  %v201 = vsel %vm130, %v179, 0.0
  %v202 = vadd.f32 %v200, %v201
  %v203 = vsel %vm130, %v180, 0.0
  %v204 = vadd.f32 %v202, %v203
  %v205 = vsel %vm130, %v181, 0.0
  %v206 = vadd.f32 %v204, %v205
  %v207 = vsel %vm130, %v182, 0.0
  %v208 = vadd.f32 %v206, %v207
  %v209 = vsel %vm130, %v183, 0.0
  %v210 = vadd.f32 %v208, %v209
  %v211 = vsel %vm130, %v184, 0.0
  %v212 = vadd.f32 %v210, %v211
  %v213 = vsel %vm130, %v185, 0.0
  %v214 = vadd.f32 %v212, %v213
  %v215 = vsel %vm130, %v186, 0.0
  %v216 = vadd.f32 %v214, %v215
  %v217 = vsel %vm130, %v187, 0.0
  %v218 = vadd.f32 %v216, %v217
  %v219 = vrot.slane %v218, 4
  %v220 = vadd.f32 %v218, %v219
  %v221 = vrot.slane %v220, 2
  %v222 = vadd.f32 %v220, %v221
  %v223 = vrot.slane %v222, 1
  %v224 = vadd.f32 %v222, %v223
  %v225 = vadd.f32 %v171, %v224
  %226 = vst.msk [vmem:[%s1 + $0x1] sm:$0x1] %vm169, %v225
  // Predicated region
  $region10: #{igab_forward.17} parent=0 // pred_check
    _
  $region11: #{igab_forward.17} parent=0 // pred_check_branch
    %228 = sbr.rel (0) target = $region13
  $region12: #{igab_forward.17} parent=0 // pred_region
    _
  $region13: #{igab_forward.17} parent=0 // pred_fallthru
    _
  // Predicated region
  $region14: #{igab_forward.17} parent=0 // pred_check
    _
  $region15: #{igab_forward.17} parent=0 // pred_check_branch
    %230 = sbr.rel (0) target = $region17
  $region16: #{igab_forward.17} parent=0 // pred_region
    _
  $region17: #{igab_forward.17} parent=0 // pred_fallthru
    _

// kernel: igab_forward.18
$region0: #{igab_forward.18}
  #allocation0 [shape = 'u32[]', space=smem, size = 0x4, offset = 0x4, fixed_abs, tag = 'smem constant byte address 0x4 - core index']
  #allocation1 [shape = 'u32[144,128]{1,0:T(1,128)}', space=vmem, size = 0x12000, scoped, tag = 'internal scratch']
  %s0 = inlined_call_operand.vmem [shape: f32[128,16], index: 0, kind: input, shape index: {}]
  %s1 = inlined_call_operand.vmem [shape: bf16[16,32], index: 1, kind: input, shape index: {}]
  %s2 = inlined_call_operand.vmem [shape: bf16[16,16], index: 2, kind: input, shape index: {}]
  %s3 = inlined_call_operand.vmem [shape: f32[2,16], index: 3, kind: input, shape index: {}]
  %s4 = inlined_call_operand.vmem [shape: f32[1,16], index: 4, kind: input, shape index: {}]
  %s5 = inlined_call_operand.vmem [shape: f32[1,16], index: 5, kind: input, shape index: {}]
  %s6 = inlined_call_operand.vmem [shape: bf16[128,32], index: 6, kind: output, shape index: {0}]
  %s7 = inlined_call_operand.vmem [shape: bf16[128,16], index: 7, kind: output, shape index: {1}]
  %8 = xla_tuple %s6, %s7
  %s9 = sld [smem:[#allocation0]]
  $region42: #{igab_forward.18} parent=0
    _
  %s11 = ssub.s32 1, %s9
  %s12 = scalar_select 0, %s11, %s9
  // Predicated region
  $region2: #{igab_forward.18} parent=0 // pred_check
    _
  $region3: #{igab_forward.18} parent=0 // pred_check_branch
    %14 = sbr.rel (0) target = $region5
  $region4: #{igab_forward.18} parent=0 // pred_region
    _
  $region5: #{igab_forward.18} parent=0 // pred_fallthru
    _
  // Predicated region
  $region6: #{igab_forward.18} parent=0 // pred_check
    _
  $region7: #{igab_forward.18} parent=0 // pred_check_branch
    %16 = sbr.rel (0) target = $region9
  $region8: #{igab_forward.18} parent=0 // pred_region
    _
  $region9: #{igab_forward.18} parent=0 // pred_fallthru
    _
  // Predicated region
  $region10: #{igab_forward.18} parent=0 // pred_check
    _
  $region11: #{igab_forward.18} parent=0 // pred_check_branch
    %18 = sbr.rel (0) target = $region13
  $region12: #{igab_forward.18} parent=0 // pred_region
    _
  $region13: #{igab_forward.18} parent=0 // pred_fallthru
    _
  // Predicated region
  $region14: #{igab_forward.18} parent=0 // pred_check
    _
  $region15: #{igab_forward.18} parent=0 // pred_check_branch
    %20 = sbr.rel (0) target = $region17
  $region16: #{igab_forward.18} parent=0 // pred_region
    _
  $region17: #{igab_forward.18} parent=0 // pred_fallthru
    _
  // Predicated region
  $region18: #{igab_forward.18} parent=0 // pred_check
    _
  $region19: #{igab_forward.18} parent=0 // pred_check_branch
    %22 = sbr.rel (0) target = $region21
  $region20: #{igab_forward.18} parent=0 // pred_region
    _
  $region21: #{igab_forward.18} parent=0 // pred_fallthru
    _
  // Predicated region
  $region22: #{igab_forward.18} parent=0 // pred_check
    _
  $region23: #{igab_forward.18} parent=0 // pred_check_branch
    %24 = sbr.rel (0) target = $region25
  $region24: #{igab_forward.18} parent=0 // pred_region
    _
  $region25: #{igab_forward.18} parent=0 // pred_fallthru
    _
  %v26 = vld [vmem:[%s0] sm:$0xff]
  %v27 = vld [vmem:[%s0 + $0x8] sm:$0xff]
  %v28 = vld [vmem:[%s0 + $0x10] sm:$0xff]
  %v29 = vld [vmem:[%s0 + $0x18] sm:$0xff]
  %v30 = vld [vmem:[%s0 + $0x20] sm:$0xff]
  %v31 = vld [vmem:[%s0 + $0x28] sm:$0xff]
  %v32 = vld [vmem:[%s0 + $0x30] sm:$0xff]
  %v33 = vld [vmem:[%s0 + $0x38] sm:$0xff]
  %v34 = vld [vmem:[%s0 + $0x40] sm:$0xff]
  %v35 = vld [vmem:[%s0 + $0x48] sm:$0xff]
  %v36 = vld [vmem:[%s0 + $0x50] sm:$0xff]
  %v37 = vld [vmem:[%s0 + $0x58] sm:$0xff]
  %v38 = vld [vmem:[%s0 + $0x60] sm:$0xff]
  %v39 = vld [vmem:[%s0 + $0x68] sm:$0xff]
  %v40 = vld [vmem:[%s0 + $0x70] sm:$0xff]
  %v41 = vld [vmem:[%s0 + $0x78] sm:$0xff]
  %v42 = vld [vmem:[%s3] sm:$0x1]
  %v43 = vmul.f32 %v42, 0.0078125
  %v44 = vld [vmem:[%s3 + $0x1] sm:$0x1]
  %v45 = vmul.f32 %v44, 0.0078125
  %v46 = vmul.f32 %v43, %v43
  %v47 = vsub.f32 %v45, %v46
  %v48 = vmax.f32 %v47, 0.0
  %v49 = vld [vmem:[%s4] sm:$0x1]
  %v50 = vadd.f32 %v48, 1e-05
  %v51 = vrsqrt.pop %v50
  %v52 = vmul.f32 %v49, %v51
  %v53 = vld [vmem:[%s5] sm:$0x1]
  %v54 = vmul.f32 %v43, %v52
  %v55 = vsub.f32 %v53, %v54
  %v57 = vlaneseq
  %v58 = vshrl.u32 %v57, 7
  %v59 = vsub.s32 0, %v58
  %v60 = vrot.slane %v52, %v59
  %v62 = vmul.f32 %v26, %v60
  %v63 = vmul.f32 %v27, %v60
  %v64 = vmul.f32 %v28, %v60
  %v65 = vmul.f32 %v29, %v60
  %v66 = vmul.f32 %v30, %v60
  %v67 = vmul.f32 %v31, %v60
  %v68 = vmul.f32 %v32, %v60
  %v69 = vmul.f32 %v33, %v60
  %v70 = vmul.f32 %v34, %v60
  %v71 = vmul.f32 %v35, %v60
  %v72 = vmul.f32 %v36, %v60
  %v73 = vmul.f32 %v37, %v60
  %v74 = vmul.f32 %v38, %v60
  %v75 = vmul.f32 %v39, %v60
  %v76 = vmul.f32 %v40, %v60
  %v77 = vmul.f32 %v41, %v60
  %v79 = vlaneseq
  %v80 = vshrl.u32 %v79, 7
  %v81 = vsub.s32 0, %v80
  %v82 = vrot.slane %v55, %v81
  %v84 = vadd.f32 %v62, %v82
  %v85 = vadd.f32 %v63, %v82
  %v86 = vadd.f32 %v64, %v82
  %v87 = vadd.f32 %v65, %v82
  %v88 = vadd.f32 %v66, %v82
  %v89 = vadd.f32 %v67, %v82
  %v90 = vadd.f32 %v68, %v82
  %v91 = vadd.f32 %v69, %v82
  %v92 = vadd.f32 %v70, %v82
  %v93 = vadd.f32 %v71, %v82
  %v94 = vadd.f32 %v72, %v82
  %v95 = vadd.f32 %v73, %v82
  %v96 = vadd.f32 %v74, %v82
  %v97 = vadd.f32 %v75, %v82
  %v98 = vadd.f32 %v76, %v82
  %v99 = vadd.f32 %v77, %v82
  %v100 = vpack.c.bf16 %v85, %v84
  %v101 = vpack.c.bf16 %v87, %v86
  %v102 = vpack.c.bf16 %v89, %v88
  %v103 = vpack.c.bf16 %v91, %v90
  %v104 = vpack.c.bf16 %v93, %v92
  %v105 = vpack.c.bf16 %v95, %v94
  %v106 = vpack.c.bf16 %v97, %v96
  %v107 = vpack.c.bf16 %v99, %v98
  %v108 = vld [vmem:[%s1] sm:$0xf]
  %v109 = vld [vmem:[%s1 + $0x4] sm:$0xf]
  %v112 = vunpack.c.l.b16 %v108
  %v113 = vunpack.c.l.b16 %v109
  %v114 = vpack.c.b16 %v113, %v112
  %vm116 = vcmask 130048
  %v118 = vsel %vm116, %v100, 0
  %v121 = vsel %vm116, %v101, 0
  %v124 = vsel %vm116, %v102, 0
  %v127 = vsel %vm116, %v103, 0
  %v130 = vsel %vm116, %v104, 0
  %v133 = vsel %vm116, %v105, 0
  %v136 = vsel %vm116, %v106, 0
  %v139 = vsel %vm116, %v107, 0
  %141 = vmatprep.subr.bf16.mxu0 0
  %142 = vmatpush1.bf16.msra.mxu0 %v114
  %143 = vmatprep.subr.bf16.mxu0 0
  %144 = vmatpush1.bf16.msra.mxu0 0
  %145 = vmatprep.subr.bf16.mxu0 0
  %146 = vmatpush1.bf16.msra.mxu0 0
  %147 = vmatprep.subr.bf16.mxu0 0
  %148 = vmatpush1.bf16.msra.mxu0 0
  %149 = vmatprep.subr.bf16.mxu0 0
  %150 = vmatpush1.bf16.msra.mxu0 0
  %151 = vmatprep.subr.bf16.mxu0 0
  %152 = vmatpush1.bf16.msra.mxu0 0
  %153 = vmatprep.subr.bf16.mxu0 0
  %154 = vmatpush1.bf16.msra.mxu0 0
  %155 = vmatprep.subr.bf16.mxu0 0
  %156 = vmatpush1.bf16.msra.mxu0 0
  %157 = vmatprep.subr.bf16.mxu0 0
  %158 = vmatpush1.bf16.msra.mxu0 0
  %159 = vmatprep.subr.bf16.mxu0 0
  %160 = vmatpush1.bf16.msra.mxu0 0
  %161 = vmatprep.subr.bf16.mxu0 0
  %162 = vmatpush1.bf16.msra.mxu0 0
  %163 = vmatprep.subr.bf16.mxu0 0
  %164 = vmatpush1.bf16.msra.mxu0 0
  %165 = vmatprep.subr.bf16.mxu0 0
  %166 = vmatpush1.bf16.msra.mxu0 0
  %167 = vmatprep.subr.bf16.mxu0 0
  %168 = vmatpush1.bf16.msra.mxu0 0
  %169 = vmatprep.subr.bf16.mxu0 0
  %170 = vmatpush1.bf16.msra.mxu0 0
  %171 = vmatprep.subr.bf16.mxu0 0
  %172 = vmatpush1.bf16.msra.mxu0 0
  %173 = vmatprep.mubr.bf16.mxu0 0
  %174 = vmatmul.mubr.bf16.gmra.mrb[0].mxu0 %v118
  %v175 = vpop.f32.mrb[0].mxu0
  %v176 = vadd.f32 0.0, %v175
  %v177 = vpop.f32.mrb[0].mxu0
  %v178 = vpop.f32.mrb[0].mxu0
  %v179 = vadd.f32 0.0, %v178
  %v180 = vpop.f32.mrb[0].mxu0
  %181 = vmatprep.mubr.bf16.mxu0 0
  %182 = vmatmul.mubr.bf16.gmra.mrb[0].mxu0 %v121
  %v183 = vpop.f32.mrb[0].mxu0
  %v184 = vadd.f32 0.0, %v183
  %v185 = vpop.f32.mrb[0].mxu0
  %v186 = vpop.f32.mrb[0].mxu0
  %v187 = vadd.f32 0.0, %v186
  %v188 = vpop.f32.mrb[0].mxu0
  %189 = vmatprep.mubr.bf16.mxu0 0
  %190 = vmatmul.mubr.bf16.gmra.mrb[0].mxu0 %v124
  %v191 = vpop.f32.mrb[0].mxu0
  %v192 = vadd.f32 0.0, %v191
  %v193 = vpop.f32.mrb[0].mxu0
  %v194 = vpop.f32.mrb[0].mxu0
  %v195 = vadd.f32 0.0, %v194
  %v196 = vpop.f32.mrb[0].mxu0
  %197 = vmatprep.mubr.bf16.mxu0 0
  %198 = vmatmul.mubr.bf16.gmra.mrb[0].mxu0 %v127
  %v199 = vpop.f32.mrb[0].mxu0
  %v200 = vadd.f32 0.0, %v199
  %v201 = vpop.f32.mrb[0].mxu0
  %v202 = vpop.f32.mrb[0].mxu0
  %v203 = vadd.f32 0.0, %v202
  %v204 = vpop.f32.mrb[0].mxu0
  %205 = vmatprep.mubr.bf16.mxu0 0
  %206 = vmatmul.mubr.bf16.gmra.mrb[0].mxu0 %v130
  %v207 = vpop.f32.mrb[0].mxu0
  %v208 = vadd.f32 0.0, %v207
  %v209 = vpop.f32.mrb[0].mxu0
  %v210 = vpop.f32.mrb[0].mxu0
  %v211 = vadd.f32 0.0, %v210
  %v212 = vpop.f32.mrb[0].mxu0
  %213 = vmatprep.mubr.bf16.mxu0 0
  %214 = vmatmul.mubr.bf16.gmra.mrb[0].mxu0 %v133
  %v215 = vpop.f32.mrb[0].mxu0
  %v216 = vadd.f32 0.0, %v215
  %v217 = vpop.f32.mrb[0].mxu0
  %v218 = vpop.f32.mrb[0].mxu0
  %v219 = vadd.f32 0.0, %v218
  %v220 = vpop.f32.mrb[0].mxu0
  %221 = vmatprep.mubr.bf16.mxu0 0
  %222 = vmatmul.mubr.bf16.gmra.mrb[0].mxu0 %v136
  %v223 = vpop.f32.mrb[0].mxu0
  %v224 = vadd.f32 0.0, %v223
  %v225 = vpop.f32.mrb[0].mxu0
  %v226 = vpop.f32.mrb[0].mxu0
  %v227 = vadd.f32 0.0, %v226
  %v228 = vpop.f32.mrb[0].mxu0
  %229 = vmatprep.mubr.bf16.mxu0 0
  %230 = vmatmul.mubr.bf16.gmra.mrb[0].mxu0 %v139
  %v231 = vpop.f32.mrb[0].mxu0
  %v232 = vadd.f32 0.0, %v231
  %v233 = vpop.f32.mrb[0].mxu0
  %v234 = vpop.f32.mrb[0].mxu0
  %v235 = vadd.f32 0.0, %v234
  %v236 = vpop.f32.mrb[0].mxu0
  %237 = vdwg.mxu0
  %v238 = vld [vmem:[%s2] sm:$0xf]
  %v239 = vld [vmem:[%s2 + $0x4] sm:$0xf]
  %v242 = vunpack.c.l.b16 %v238
  %v243 = vunpack.c.l.b16 %v239
  %v244 = vpack.c.b16 %v243, %v242
  %246 = vmatprep.subr.bf16.mxu0 0
  %247 = vmatpush1.bf16.msra.mxu0 %v244
  %248 = vmatprep.subr.bf16.mxu0 0
  %249 = vmatpush1.bf16.msra.mxu0 0
  %250 = vmatprep.subr.bf16.mxu0 0
  %251 = vmatpush1.bf16.msra.mxu0 0
  %252 = vmatprep.subr.bf16.mxu0 0
  %253 = vmatpush1.bf16.msra.mxu0 0
  %254 = vmatprep.subr.bf16.mxu0 0
  %255 = vmatpush1.bf16.msra.mxu0 0
  %256 = vmatprep.subr.bf16.mxu0 0
  %257 = vmatpush1.bf16.msra.mxu0 0
  %258 = vmatprep.subr.bf16.mxu0 0
  %259 = vmatpush1.bf16.msra.mxu0 0
  %260 = vmatprep.subr.bf16.mxu0 0
  %261 = vmatpush1.bf16.msra.mxu0 0
  %262 = vmatprep.subr.bf16.mxu0 0
  %263 = vmatpush1.bf16.msra.mxu0 0
  %264 = vmatprep.subr.bf16.mxu0 0
  %265 = vmatpush1.bf16.msra.mxu0 0
  %266 = vmatprep.subr.bf16.mxu0 0
  %267 = vmatpush1.bf16.msra.mxu0 0
  %268 = vmatprep.subr.bf16.mxu0 0
  %269 = vmatpush1.bf16.msra.mxu0 0
  %270 = vmatprep.subr.bf16.mxu0 0
  %271 = vmatpush1.bf16.msra.mxu0 0
  %272 = vmatprep.subr.bf16.mxu0 0
  %273 = vmatpush1.bf16.msra.mxu0 0
  %274 = vmatprep.subr.bf16.mxu0 0
  %275 = vmatpush1.bf16.msra.mxu0 0
  %276 = vmatprep.subr.bf16.mxu0 0
  %277 = vmatpush1.bf16.msra.mxu0 0
  %278 = vmatprep.mubr.bf16.mxu0 0
  %279 = vmatmul.mubr.bf16.gmra.mrb[0].mxu0 %v118
  %v280 = vpop.f32.mrb[0].mxu0
  %v281 = vadd.f32 0.0, %v280
  %v282 = vpop.f32.mrb[0].mxu0
  %v283 = vpop.f32.mrb[0].mxu0
  %v284 = vadd.f32 0.0, %v283
  %v285 = vpop.f32.mrb[0].mxu0
  %286 = vmatprep.mubr.bf16.mxu0 0
  %287 = vmatmul.mubr.bf16.gmra.mrb[0].mxu0 %v121
  %v288 = vpop.f32.mrb[0].mxu0
  %v289 = vadd.f32 0.0, %v288
  %v290 = vpop.f32.mrb[0].mxu0
  %v291 = vpop.f32.mrb[0].mxu0
  %v292 = vadd.f32 0.0, %v291
  %v293 = vpop.f32.mrb[0].mxu0
  %294 = vmatprep.mubr.bf16.mxu0 0
  %295 = vmatmul.mubr.bf16.gmra.mrb[0].mxu0 %v124
  %v296 = vpop.f32.mrb[0].mxu0
  %v297 = vadd.f32 0.0, %v296
  %v298 = vpop.f32.mrb[0].mxu0
  %v299 = vpop.f32.mrb[0].mxu0
  %v300 = vadd.f32 0.0, %v299
  %v301 = vpop.f32.mrb[0].mxu0
  %302 = vmatprep.mubr.bf16.mxu0 0
  %303 = vmatmul.mubr.bf16.gmra.mrb[0].mxu0 %v127
  %v304 = vpop.f32.mrb[0].mxu0
  %v305 = vadd.f32 0.0, %v304
  %v306 = vpop.f32.mrb[0].mxu0
  %v307 = vpop.f32.mrb[0].mxu0
  %v308 = vadd.f32 0.0, %v307
  %v309 = vpop.f32.mrb[0].mxu0
  %310 = vmatprep.mubr.bf16.mxu0 0
  %311 = vmatmul.mubr.bf16.gmra.mrb[0].mxu0 %v130
  %v312 = vpop.f32.mrb[0].mxu0
  %v313 = vadd.f32 0.0, %v312
  %v314 = vpop.f32.mrb[0].mxu0
  %v315 = vpop.f32.mrb[0].mxu0
  %v316 = vadd.f32 0.0, %v315
  %v317 = vpop.f32.mrb[0].mxu0
  %318 = vmatprep.mubr.bf16.mxu0 0
  %319 = vmatmul.mubr.bf16.gmra.mrb[0].mxu0 %v133
  %v320 = vpop.f32.mrb[0].mxu0
  %v321 = vadd.f32 0.0, %v320
  %v322 = vpop.f32.mrb[0].mxu0
  %v323 = vpop.f32.mrb[0].mxu0
  %v324 = vadd.f32 0.0, %v323
  %v325 = vpop.f32.mrb[0].mxu0
  %326 = vmatprep.mubr.bf16.mxu0 0
  %327 = vmatmul.mubr.bf16.gmra.mrb[0].mxu0 %v136
  %v328 = vpop.f32.mrb[0].mxu0
  %v329 = vadd.f32 0.0, %v328
  %v330 = vpop.f32.mrb[0].mxu0
  %v331 = vpop.f32.mrb[0].mxu0
  %v332 = vadd.f32 0.0, %v331
  %v333 = vpop.f32.mrb[0].mxu0
  %334 = vmatprep.mubr.bf16.mxu0 0
  %335 = vmatmul.mubr.bf16.gmra.mrb[0].mxu0 %v139
  %v336 = vpop.f32.mrb[0].mxu0
  %v337 = vadd.f32 0.0, %v336
  %v338 = vpop.f32.mrb[0].mxu0
  %v339 = vpop.f32.mrb[0].mxu0
  %v340 = vadd.f32 0.0, %v339
  %v341 = vpop.f32.mrb[0].mxu0
  %342 = vdwg.mxu0
  %v343 = vpack.c.bf16 %v179, %v176
  %v344 = vpack.c.bf16 %v187, %v184
  %v345 = vpack.c.bf16 %v195, %v192
  %v346 = vpack.c.bf16 %v203, %v200
  %v347 = vpack.c.bf16 %v211, %v208
  %v348 = vpack.c.bf16 %v219, %v216
  %v349 = vpack.c.bf16 %v227, %v224
  %v350 = vpack.c.bf16 %v235, %v232
  %v359 = vunpack.c.l.b16 %v343
  %v360 = vunpack.c.h.b16 %v343
  %v361 = vunpack.c.l.b16 %v344
  %v362 = vunpack.c.h.b16 %v344
  %v363 = vunpack.c.l.b16 %v345
  %v364 = vunpack.c.h.b16 %v345
  %v365 = vunpack.c.l.b16 %v346
  %v366 = vunpack.c.h.b16 %v346
  %v367 = vunpack.c.l.b16 %v347
  %v368 = vunpack.c.h.b16 %v347
  %v369 = vunpack.c.l.b16 %v348
  %v370 = vunpack.c.h.b16 %v348
  %v371 = vunpack.c.l.b16 %v349
  %v372 = vunpack.c.h.b16 %v349
  %v373 = vunpack.c.l.b16 %v350
  %v374 = vunpack.c.h.b16 %v350
  %v375 = vpack.c.b16 %v359, %v359
  %v376 = vpack.c.b16 %v360, %v360
  %v377 = vpack.c.b16 %v361, %v361
  %v378 = vpack.c.b16 %v362, %v362
  %v379 = vpack.c.b16 %v363, %v363
  %v380 = vpack.c.b16 %v364, %v364
  %v381 = vpack.c.b16 %v365, %v365
  %v382 = vpack.c.b16 %v366, %v366
  %v383 = vpack.c.b16 %v367, %v367
  %v384 = vpack.c.b16 %v368, %v368
  %v385 = vpack.c.b16 %v369, %v369
  %v386 = vpack.c.b16 %v370, %v370
  %v387 = vpack.c.b16 %v371, %v371
  %v388 = vpack.c.b16 %v372, %v372
  %v389 = vpack.c.b16 %v373, %v373
  %v390 = vpack.c.b16 %v374, %v374
  %vm407 = vcmask 257024
  %408 = vst.msk [vmem:[%s6] sm:$0xf] %vm407, %v375
  %409 = vst.msk [vmem:[%s6 + $0x4] sm:$0xf] %vm407, %v376
  %410 = vst.msk [vmem:[%s6 + $0x8] sm:$0xf] %vm407, %v377
  %411 = vst.msk [vmem:[%s6 + $0xc] sm:$0xf] %vm407, %v378
  %412 = vst.msk [vmem:[%s6 + $0x10] sm:$0xf] %vm407, %v379
  %413 = vst.msk [vmem:[%s6 + $0x14] sm:$0xf] %vm407, %v380
  %414 = vst.msk [vmem:[%s6 + $0x18] sm:$0xf] %vm407, %v381
  %415 = vst.msk [vmem:[%s6 + $0x1c] sm:$0xf] %vm407, %v382
  %416 = vst.msk [vmem:[%s6 + $0x20] sm:$0xf] %vm407, %v383
  %417 = vst.msk [vmem:[%s6 + $0x24] sm:$0xf] %vm407, %v384
  %418 = vst.msk [vmem:[%s6 + $0x28] sm:$0xf] %vm407, %v385
  %419 = vst.msk [vmem:[%s6 + $0x2c] sm:$0xf] %vm407, %v386
  %420 = vst.msk [vmem:[%s6 + $0x30] sm:$0xf] %vm407, %v387
  %421 = vst.msk [vmem:[%s6 + $0x34] sm:$0xf] %vm407, %v388
  %422 = vst.msk [vmem:[%s6 + $0x38] sm:$0xf] %vm407, %v389
  %423 = vst.msk [vmem:[%s6 + $0x3c] sm:$0xf] %vm407, %v390
  %v424 = vpack.c.bf16 %v284, %v281
  %v425 = vpack.c.bf16 %v292, %v289
  %v426 = vpack.c.bf16 %v300, %v297
  %v427 = vpack.c.bf16 %v308, %v305
  %v428 = vpack.c.bf16 %v316, %v313
  %v429 = vpack.c.bf16 %v324, %v321
  %v430 = vpack.c.bf16 %v332, %v329
  %v431 = vpack.c.bf16 %v340, %v337
  %v440 = vunpack.c.l.b16 %v424
  %v441 = vunpack.c.h.b16 %v424
  %v442 = vunpack.c.l.b16 %v425
  %v443 = vunpack.c.h.b16 %v425
  %v444 = vunpack.c.l.b16 %v426
  %v445 = vunpack.c.h.b16 %v426
  %v446 = vunpack.c.l.b16 %v427
  %v447 = vunpack.c.h.b16 %v427
  %v448 = vunpack.c.l.b16 %v428
  %v449 = vunpack.c.h.b16 %v428
  %v450 = vunpack.c.l.b16 %v429
  %v451 = vunpack.c.h.b16 %v429
  %v452 = vunpack.c.l.b16 %v430
  %v453 = vunpack.c.h.b16 %v430
  %v454 = vunpack.c.l.b16 %v431
  %v455 = vunpack.c.h.b16 %v431
  %v456 = vpack.c.b16 %v440, %v440
  %v457 = vpack.c.b16 %v441, %v441
  %v458 = vpack.c.b16 %v442, %v442
  %v459 = vpack.c.b16 %v443, %v443
  %v460 = vpack.c.b16 %v444, %v444
  %v461 = vpack.c.b16 %v445, %v445
  %v462 = vpack.c.b16 %v446, %v446
  %v463 = vpack.c.b16 %v447, %v447
  %v464 = vpack.c.b16 %v448, %v448
  %v465 = vpack.c.b16 %v449, %v449
  %v466 = vpack.c.b16 %v450, %v450
  %v467 = vpack.c.b16 %v451, %v451
  %v468 = vpack.c.b16 %v452, %v452
  %v469 = vpack.c.b16 %v453, %v453
  %v470 = vpack.c.b16 %v454, %v454
  %v471 = vpack.c.b16 %v455, %v455
  %vm488 = vcmask 125952
  %489 = vst.msk [vmem:[%s7] sm:$0xf] %vm488, %v456
  %490 = vst.msk [vmem:[%s7 + $0x4] sm:$0xf] %vm488, %v457
  %491 = vst.msk [vmem:[%s7 + $0x8] sm:$0xf] %vm488, %v458
  %492 = vst.msk [vmem:[%s7 + $0xc] sm:$0xf] %vm488, %v459
  %493 = vst.msk [vmem:[%s7 + $0x10] sm:$0xf] %vm488, %v460
  %494 = vst.msk [vmem:[%s7 + $0x14] sm:$0xf] %vm488, %v461
  %495 = vst.msk [vmem:[%s7 + $0x18] sm:$0xf] %vm488, %v462
  %496 = vst.msk [vmem:[%s7 + $0x1c] sm:$0xf] %vm488, %v463
  %497 = vst.msk [vmem:[%s7 + $0x20] sm:$0xf] %vm488, %v464
  %498 = vst.msk [vmem:[%s7 + $0x24] sm:$0xf] %vm488, %v465
  %499 = vst.msk [vmem:[%s7 + $0x28] sm:$0xf] %vm488, %v466
  %500 = vst.msk [vmem:[%s7 + $0x2c] sm:$0xf] %vm488, %v467
  %501 = vst.msk [vmem:[%s7 + $0x30] sm:$0xf] %vm488, %v468
  %502 = vst.msk [vmem:[%s7 + $0x34] sm:$0xf] %vm488, %v469
  %503 = vst.msk [vmem:[%s7 + $0x38] sm:$0xf] %vm488, %v470
  %504 = vst.msk [vmem:[%s7 + $0x3c] sm:$0xf] %vm488, %v471
  // Predicated region
  $region26: #{igab_forward.18} parent=0 // pred_check
    _
  $region27: #{igab_forward.18} parent=0 // pred_check_branch
    %506 = sbr.rel (0) target = $region29
  $region28: #{igab_forward.18} parent=0 // pred_region
    _
  $region29: #{igab_forward.18} parent=0 // pred_fallthru
    _
  // Predicated region
  $region30: #{igab_forward.18} parent=0 // pred_check
    _
  $region31: #{igab_forward.18} parent=0 // pred_check_branch
    %508 = sbr.rel (0) target = $region33
  $region32: #{igab_forward.18} parent=0 // pred_region
    _
  $region33: #{igab_forward.18} parent=0 // pred_fallthru
    _
  // Predicated region
  $region34: #{igab_forward.18} parent=0 // pred_check
    _
  $region35: #{igab_forward.18} parent=0 // pred_check_branch
    %510 = sbr.rel (0) target = $region37
  $region36: #{igab_forward.18} parent=0 // pred_region
    _
  $region37: #{igab_forward.18} parent=0 // pred_fallthru
    _
  // Predicated region
  $region38: #{igab_forward.18} parent=0 // pred_check
    _
  $region39: #{igab_forward.18} parent=0 // pred_check_branch
    %512 = sbr.rel (0) target = $region41
  $region40: #{igab_forward.18} parent=0 // pred_region
    _
  $region41: #{igab_forward.18} parent=0 // pred_fallthru
    _

// kernel: igab_forward.21
$region0: #{igab_forward.21}
  #allocation0 [shape = 'u32[]', space=smem, size = 0x4, offset = 0x4, fixed_abs, tag = 'smem constant byte address 0x4 - core index']
  #allocation1 [shape = 'u32[144,128]{1,0:T(1,128)}', space=vmem, size = 0x12000, scoped, tag = 'internal scratch']
  #allocation2 [shape = 'f32[16,16]{1,0:T(8,128)}', space=vmem, size = 0x2000, scoped, tag = 'scratch operand']
  #allocation3 [shape = 'f32[2,16]{1,0:T(2,128)}', space=vmem, size = 0x400, scoped, tag = 'scratch operand']
  %s0 = inlined_call_operand.vmem [shape: bf16[2,64,32], index: 0, kind: input, shape index: {}]
  %s1 = inlined_call_operand.vmem [shape: f32[16,16], index: 1, kind: input, shape index: {}]
  %s2 = inlined_call_operand.vmem [shape: f32[1,16], index: 2, kind: input, shape index: {}]
  %s3 = inlined_call_operand.vmem [shape: f32[16,16], index: 3, kind: input, shape index: {}]
  %s4 = inlined_call_operand.vmem [shape: f32[2,16,16], index: 4, kind: output, shape index: {}]
  %s5 = sld [smem:[#allocation0]]
  $region57: #{igab_forward.21} parent=0
    _
  %s7 = ssub.s32 1, %s5
  %s8 = scalar_select 0, %s7, %s5
  loop: start=0, step=1, limit=4
  $region2: #{igab_forward.21} parent=0 // loop_pre_header
    _
  $region3: #{igab_forward.21} parent=0 // loop_header
    %s10 = sphi 0, %s14
    %p11 = scmp.ge.s32.totalorder %s10, 4
    %s17 = sphi 0, %s29
    %s18 = sphi 0, %s25
    %s19 = sphi 0, %s17
    %s20 = sphi 0, %s18
    %s21 = sphi 0, %s19
    %s22 = sphi 0, %s20
    %s34 = sphi 0, %s36
    %s37 = sphi 0, %s34
    %s38 = sphi 0, %s37
    %s54 = sphi 0, %s38
    %s58 = sphi 0, %s58
    %s60 = sphi 0, %s58
    %s61 = sphi 0, %s60
    %s75 = sphi 0, %s61
    %s79 = sphi 0, %s79
    %s81 = sphi 0, %s79
    %s82 = sphi 0, %s81
    %s96 = sphi 0, %s82
    %s100 = sphi 0, %s100
    %s102 = sphi 0, %s100
    %s103 = sphi 0, %s102
    %s117 = sphi 0, %s103
    %s123 = sphi 0, %s125
    %s126 = sphi 0, %s123
    %s127 = sphi 0, %s126
    %s143 = sphi 0, %s127
  $region4: #{igab_forward.21} parent=0 // loop_header_branch
    %13 = sbr.rel (%p11) target = $region8
  $region5: #{igab_forward.21} parent=0 // loop_body
    %s15 = ssub.s32 %s10, 1
    %s16 = ssub.s32 %s10, 2
    %s23 = sadd.s32 1, %s18
    %p24 = scmp.ge.s32.totalorder %s23, 1
    %s25 = scalar_select %p24, 0, %s23
    %s26 = sadd.s32 1, %s17
    %s27 = scalar_select %p24, %s26, %s17
    %p28 = scmp.ge.s32.totalorder %s27, 2
    %s29 = scalar_select %p28, 0, %s27
    %s30 = ssub.s32 %s17, %s29
    %s31 = ssub.s32 %s18, %s25
    %s32 = sor.u32 %s30, %s31
    %p33 = scmp.eq.s32.totalorder %s32, 0
    %s35 = sadd.s32 %s34, 1
    %s36 = scalar_select %p33, %s34, %s35
    %p39 = pneg %p33
    %p40 = scmp.eq.s32.totalorder %s10, 1
    %p41 = por %p39, %p40
    %p42 = scmp.ne.s32.totalorder %s34, %s37
    %p43 = scmp.eq.s32.totalorder %s10, 0
    %p44 = por %p42, %p43
    %p45 = scmp.ne.s32.totalorder %s34, %s37
    %p46 = scmp.eq.s32.totalorder %s15, 1
    %p47 = por %p45, %p46
    %p48 = scmp.ne.s32.totalorder %s37, %s38
    %p49 = scmp.eq.s32.totalorder %s15, 0
    %p50 = por %p48, %p49
    %p51 = scmp.ne.s32.totalorder %s37, %s38
    %p52 = scmp.eq.s32.totalorder %s16, 1
    %p53 = por %p51, %p52
    %p55 = scmp.ne.s32.totalorder %s38, %s54
    %p56 = scmp.eq.s32.totalorder %s16, 0
    %p57 = por %p55, %p56
    %s59 = sadd.s32 %s58, 1
    %p62 = scmp.eq.s32.totalorder %s10, 1
    %p63 = scmp.ne.s32.totalorder %s58, %s60
    %p64 = scmp.eq.s32.totalorder %s10, 0
    %p65 = por %p63, %p64
    %p66 = scmp.ne.s32.totalorder %s58, %s60
    %p67 = scmp.eq.s32.totalorder %s15, 1
    %p68 = por %p66, %p67
    %p69 = scmp.ne.s32.totalorder %s60, %s61
    %p70 = scmp.eq.s32.totalorder %s15, 0
    %p71 = por %p69, %p70
    %p72 = scmp.ne.s32.totalorder %s60, %s61
    %p73 = scmp.eq.s32.totalorder %s16, 1
    %p74 = por %p72, %p73
    %p76 = scmp.ne.s32.totalorder %s61, %s75
    %p77 = scmp.eq.s32.totalorder %s16, 0
    %p78 = por %p76, %p77
    %s80 = sadd.s32 %s79, 1
    %p83 = scmp.eq.s32.totalorder %s10, 1
    %p84 = scmp.ne.s32.totalorder %s79, %s81
    %p85 = scmp.eq.s32.totalorder %s10, 0
    %p86 = por %p84, %p85
    %p87 = scmp.ne.s32.totalorder %s79, %s81
    %p88 = scmp.eq.s32.totalorder %s15, 1
    %p89 = por %p87, %p88
    %p90 = scmp.ne.s32.totalorder %s81, %s82
    %p91 = scmp.eq.s32.totalorder %s15, 0
    %p92 = por %p90, %p91
    %p93 = scmp.ne.s32.totalorder %s81, %s82
    %p94 = scmp.eq.s32.totalorder %s16, 1
    %p95 = por %p93, %p94
    %p97 = scmp.ne.s32.totalorder %s82, %s96
    %p98 = scmp.eq.s32.totalorder %s16, 0
    %p99 = por %p97, %p98
    %s101 = sadd.s32 %s100, 1
    %p104 = scmp.eq.s32.totalorder %s10, 1
    %p105 = scmp.ne.s32.totalorder %s100, %s102
    %p106 = scmp.eq.s32.totalorder %s10, 0
    %p107 = por %p105, %p106
    %p108 = scmp.ne.s32.totalorder %s100, %s102
    %p109 = scmp.eq.s32.totalorder %s15, 1
    %p110 = por %p108, %p109
    %p111 = scmp.ne.s32.totalorder %s102, %s103
    %p112 = scmp.eq.s32.totalorder %s15, 0
    %p113 = por %p111, %p112
    %p114 = scmp.ne.s32.totalorder %s102, %s103
    %p115 = scmp.eq.s32.totalorder %s16, 1
    %p116 = por %p114, %p115
    %p118 = scmp.ne.s32.totalorder %s103, %s117
    %p119 = scmp.eq.s32.totalorder %s16, 0
    %p120 = por %p118, %p119
    %s121 = ssub.s32 %s17, %s29
    %p122 = scmp.eq.s32.totalorder %s121, 0
    %s124 = sadd.s32 %s123, 1
    %s125 = scalar_select %p122, %s123, %s124
    %p128 = pneg %p122
    %p129 = scmp.eq.s32.totalorder %s10, 1
    %p130 = por %p128, %p129
    %p131 = scmp.ne.s32.totalorder %s123, %s126
    %p132 = scmp.eq.s32.totalorder %s10, 0
    %p133 = por %p131, %p132
    %p134 = scmp.ne.s32.totalorder %s123, %s126
    %p135 = scmp.eq.s32.totalorder %s15, 1
    %p136 = por %p134, %p135
    %p137 = scmp.ne.s32.totalorder %s126, %s127
    %p138 = scmp.eq.s32.totalorder %s15, 0
    %p139 = por %p137, %p138
    %p140 = scmp.ne.s32.totalorder %s126, %s127
    %p141 = scmp.eq.s32.totalorder %s16, 1
    %p142 = por %p140, %p141
    %p144 = scmp.ne.s32.totalorder %s127, %s143
    %p145 = scmp.eq.s32.totalorder %s16, 0
    %p146 = por %p144, %p145
    %p147 = scmp.le.s32.totalorder 1, %s10
    %p148 = scmp.lt.s32.totalorder %s10, 3
    %p149 = pnand %p147, %p148
    %p150 = pneg %p149
    // Predicated region
    $region9: #{igab_forward.21} parent=5 // pred_check
      _
    $region10: #{igab_forward.21} parent=5 // pred_check_branch
      %152 = sbr.rel (%p149) target = $region12
    $region11: #{igab_forward.21} parent=5 // pred_region
      %s153 = ssub.s32 %s10, 1
      // Predicated region
      $region13: #{igab_forward.21} parent=11 // pred_check
        %p154 = pneg %p71
      $region14: #{igab_forward.21} parent=11 // pred_check_branch
        %156 = sbr.rel (%p154) target = $region16
      $region15: #{igab_forward.21} parent=11 // pred_region
        _
      $region16: #{igab_forward.21} parent=11 // pred_fallthru
        _
      // Predicated region
      $region17: #{igab_forward.21} parent=11 // pred_check
        %p157 = pneg %p92
      $region18: #{igab_forward.21} parent=11 // pred_check_branch
        %159 = sbr.rel (%p157) target = $region20
      $region19: #{igab_forward.21} parent=11 // pred_region
        _
      $region20: #{igab_forward.21} parent=11 // pred_fallthru
        _
      // Predicated region
      $region21: #{igab_forward.21} parent=11 // pred_check
        %p160 = pneg %p113
      $region22: #{igab_forward.21} parent=11 // pred_check_branch
        %162 = sbr.rel (%p160) target = $region24
      $region23: #{igab_forward.21} parent=11 // pred_region
        _
      $region24: #{igab_forward.21} parent=11 // pred_fallthru
        _
    $region12: #{igab_forward.21} parent=5 // pred_fallthru
      _
    %p163 = scmp.lt.s32.totalorder %s10, 2
    // Predicated region
    $region25: #{igab_forward.21} parent=5 // pred_check
      %p164 = pneg %p163
    $region26: #{igab_forward.21} parent=5 // pred_check_branch
      %166 = sbr.rel (%p164) target = $region28
    $region27: #{igab_forward.21} parent=5 // pred_region
      // Predicated region
      $region29: #{igab_forward.21} parent=27 // pred_check
        %p167 = pneg %p44
      $region30: #{igab_forward.21} parent=27 // pred_check_branch
        %169 = sbr.rel (%p167) target = $region32
      $region31: #{igab_forward.21} parent=27 // pred_region
        %s170 = smul.u32 8, %s18
        %p171 = scmp.lt.s32.totalorder %s17, 1
        %s172 = scalar_select %p171, %s17, 1
        %p173 = scmp.lt.s32.totalorder %s170, 7
        %s174 = scalar_select %p173, %s170, 7
        %s175 = smul.addr %s172, 8
        %s176 = sadd.s32 %s174, %s175
        %s177 = smul.addr %s176, 4
        %s178 = scalar_lea.vmem %s0, %s177
        %s179 = smul.u32 8, %s18
      $region32: #{igab_forward.21} parent=27 // pred_fallthru
        _
    $region28: #{igab_forward.21} parent=5 // pred_fallthru
      _
    %p180 = scmp.le.s32.totalorder 1, %s10
    %p181 = scmp.lt.s32.totalorder %s10, 3
    %p182 = pnand %p180, %p181
    %p183 = pneg %p182
    // Predicated region
    $region33: #{igab_forward.21} parent=5 // pred_check
      _
    $region34: #{igab_forward.21} parent=5 // pred_check_branch
      %185 = sbr.rel (%p182) target = $region36
    $region35: #{igab_forward.21} parent=5 // pred_region
      %s186 = ssub.s32 %s10, 1
      %s187 = smul.u32 8, %s20
      %p188 = scmp.lt.s32.totalorder %s19, 1
      %s189 = scalar_select %p188, %s19, 1
      %p190 = scmp.lt.s32.totalorder %s187, 7
      %s191 = scalar_select %p190, %s187, 7
      %s192 = smul.addr %s189, 8
      %s193 = sadd.s32 %s191, %s192
      %s194 = smul.addr %s193, 4
      %s195 = scalar_lea.vmem %s0, %s194
      %p196 = pneg %p50
      %p197 = pneg %p47
      %p198 = pneg %p71
      %p199 = pneg %p68
      %p200 = pneg %p92
      %p201 = pneg %p89
      %p202 = pneg %p113
      %p203 = pneg %p110
      %p204 = pneg %p139
      %p205 = pneg %p136
      %p206 = scmp.lt.s32.totalorder %s19, 1
      %s207 = scalar_select %p206, %s19, 1
      %s208 = smul.addr %s207, 2
      %s209 = smul.addr %s208, 8
      %s210 = scalar_lea.vmem %s4, %s209
      %s211 = smul.u32 8, %s20
      %p212 = scmp.lt.s32.totalorder %s19, 1
      %s213 = scalar_select %p212, %s19, 1
      %p214 = scmp.lt.s32.totalorder %s211, 7
      %s215 = scalar_select %p214, %s211, 7
      %s216 = smul.addr %s213, 8
      %s217 = sadd.s32 %s215, %s216
      %s218 = smul.addr %s217, 4
      %s219 = scalar_lea.vmem %s0, %s218
      %s220 = smul.u32 8, %s20
      %p221 = scmp.lt.s32.totalorder %s19, 1
      %s222 = scalar_select %p221, %s19, 1
      %s223 = smul.addr %s222, 2
      %s224 = smul.addr %s223, 8
      %s225 = scalar_lea.vmem %s4, %s224
      %p227 = scmp.eq.s32.totalorder %s20, 0
      // Predicated region
      $region37: #{igab_forward.21} parent=35 // pred_check
        %p228 = pneg %p227
      $region38: #{igab_forward.21} parent=35 // pred_check_branch
        %230 = sbr.rel (%p228) target = $region40
      $region39: #{igab_forward.21} parent=35 // pred_region
        %vm231 = vcmask 130048
        %232 = vst.msk [vmem:[#allocation2] sm:$0xff] %vm231, 0.0
        %233 = vst.msk [vmem:[#allocation2 + $0x8] sm:$0xff] %vm231, 0.0
        %vm234 = vcmask 123904
        %235 = vst.msk [vmem:[#allocation3] sm:$0x3] %vm234, 0.0
      $region40: #{igab_forward.21} parent=35 // pred_fallthru
        _
      %v236 = vld [vmem:[%s219] sm:$0xf]
      %v237 = vld [vmem:[%s219 + $0x4] sm:$0xf]
      %v238 = vld [vmem:[%s219 + $0x8] sm:$0xf]
      %v239 = vld [vmem:[%s219 + $0xc] sm:$0xf]
      %v240 = vld [vmem:[%s219 + $0x10] sm:$0xf]
      %v241 = vld [vmem:[%s219 + $0x14] sm:$0xf]
      %v242 = vld [vmem:[%s219 + $0x18] sm:$0xf]
      %v243 = vld [vmem:[%s219 + $0x1c] sm:$0xf]
      %v244 = vlaneseq
      %v245 = vshrl.u32 %v244, 7
      %v246 = vadd.s32 %v245, 8
      %v247 = vadd.s32 %v245, 16
      %v248 = vadd.s32 %v245, 24
      %v249 = vadd.s32 %v245, 32
      %v250 = vadd.s32 %v245, 40
      %v251 = vadd.s32 %v245, 48
      %v252 = vadd.s32 %v245, 56
      %s253 = smul.u32 %s20, 64
      %v254 = vstv %s253
      %v255 = vadd.s32 %v245, %v254
      %v256 = vadd.s32 %v246, %v254
      %v257 = vadd.s32 %v247, %v254
      %v258 = vadd.s32 %v248, %v254
      %v259 = vadd.s32 %v249, %v254
      %v260 = vadd.s32 %v250, %v254
      %v261 = vadd.s32 %v251, %v254
      %v262 = vadd.s32 %v252, %v254
      %vm263 = vcmp.lt.s32.totalorder %v255, 64
      %vm264 = vcmp.lt.s32.totalorder %v256, 64
      %vm265 = vcmp.lt.s32.totalorder %v257, 64
      %vm266 = vcmp.lt.s32.totalorder %v258, 64
      %vm267 = vcmp.lt.s32.totalorder %v259, 64
      %vm268 = vcmp.lt.s32.totalorder %v260, 64
      %vm269 = vcmp.lt.s32.totalorder %v261, 64
      %vm270 = vcmp.lt.s32.totalorder %v262, 64
      %v271 = vsel %vm263, 1, 0
      %v272 = vsel %vm264, 1, 0
      %v273 = vsel %vm265, 1, 0
      %v274 = vsel %vm266, 1, 0
      %v275 = vsel %vm267, 1, 0
      %v276 = vsel %vm268, 1, 0
      %v277 = vsel %vm269, 1, 0
      %v278 = vsel %vm270, 1, 0
      %vm279 = vcmp.eq.s32.totalorder %v271, 1
      %vm280 = vcmp.eq.s32.totalorder %v272, 1
      %vm281 = vcmp.eq.s32.totalorder %v273, 1
      %vm282 = vcmp.eq.s32.totalorder %v274, 1
      %vm283 = vcmp.eq.s32.totalorder %v275, 1
      %vm284 = vcmp.eq.s32.totalorder %v276, 1
      %vm285 = vcmp.eq.s32.totalorder %v277, 1
      %vm286 = vcmp.eq.s32.totalorder %v278, 1
      %vm287 = vmpackc.low %vm279, %vm279
      %vm288 = vmpackc.low %vm280, %vm280
      %vm289 = vmpackc.low %vm281, %vm281
      %vm290 = vmpackc.low %vm282, %vm282
      %vm291 = vmpackc.low %vm283, %vm283
      %vm292 = vmpackc.low %vm284, %vm284
      %vm293 = vmpackc.low %vm285, %vm285
      %vm294 = vmpackc.low %vm286, %vm286
      %v295 = vsel %vm287, %v236, 0
      %v296 = vsel %vm288, %v237, 0
      %v297 = vsel %vm289, %v238, 0
      %v298 = vsel %vm290, %v239, 0
      %v299 = vsel %vm291, %v240, 0
      %v300 = vsel %vm292, %v241, 0
      %v301 = vsel %vm293, %v242, 0
      %v302 = vsel %vm294, %v243, 0
      %v303 = vld [vmem:[#allocation2] sm:$0xff]
      %v304 = vld [vmem:[#allocation2 + $0x8] sm:$0xff]
      %v313 = vunpack.c.l.b16 %v295
      %v314 = vunpack.c.l.b16 %v296
      %v315 = vunpack.c.l.b16 %v297
      %v316 = vunpack.c.l.b16 %v298
      %v317 = vunpack.c.l.b16 %v299
      %v318 = vunpack.c.l.b16 %v300
      %v319 = vunpack.c.l.b16 %v301
      %v320 = vunpack.c.l.b16 %v302
      %v321 = vpack.c.b16 %v314, %v313
      %v322 = vpack.c.b16 %v316, %v315
      %v323 = vpack.c.b16 %v318, %v317
      %v324 = vpack.c.b16 %v320, %v319
      %325 = vrot.lane.b32.xlu0 %v321, 112
      %v326 = vpop.permute.xlu0 %325
      %327 = vrot.lane.b32.xlu0 %v322, 112
      %v328 = vpop.permute.xlu0 %327
      %329 = vrot.lane.b32.xlu0 %v323, 112
      %v330 = vpop.permute.xlu0 %329
      %331 = vrot.lane.b32.xlu0 %v324, 112
      %v332 = vpop.permute.xlu0 %331
      %337 = vxpose.xlu0.c.b16.start [1/8] %v326, 128
      %338 = vxpose.xlu0.c.b16.cont [2/8] %v328, 128
      %339 = vxpose.xlu0.c.b16.cont [3/8] %v330, 128
      %340 = vxpose.xlu0.c.b16.cont [4/8] %v332, 128
      %341 = vxpose.xlu0.c.b16.cont [5/8] 0, 128
      %342 = vxpose.xlu0.c.b16.cont [6/8] 0, 128
      %343 = vxpose.xlu0.c.b16.cont [7/8] 0, 128
      %344 = vxpose.xlu0.c.b16.end [8/8] 0, 128
      %v345 = vpop.trf.xlu0
      %v346 = vpop.trf.xlu0
      %v347 = vpop.trf.xlu0
      %v348 = vpop.trf.xlu0
      %v349 = vpop.trf.xlu0
      %v350 = vpop.trf.xlu0
      %v351 = vpop.trf.xlu0
      %v352 = vpop.trf.xlu0
      %vm357 = vcmask 523264
      %v359 = vsel %vm357, %v345, 0
      %361 = vmatprep.subr.bf16.mxu0 0
      %362 = vmatpush1.bf16.msra.mxu0 %v321
      %363 = vmatprep.subr.bf16.mxu0 0
      %364 = vmatpush1.bf16.msra.mxu0 %v322
      %365 = vmatprep.subr.bf16.mxu0 0
      %366 = vmatpush1.bf16.msra.mxu0 %v323
      %367 = vmatprep.subr.bf16.mxu0 0
      %368 = vmatpush1.bf16.msra.mxu0 %v324
      %369 = vmatprep.subr.bf16.mxu0 0
      %370 = vmatpush1.bf16.msra.mxu0 0
      %371 = vmatprep.subr.bf16.mxu0 0
      %372 = vmatpush1.bf16.msra.mxu0 0
      %373 = vmatprep.subr.bf16.mxu0 0
      %374 = vmatpush1.bf16.msra.mxu0 0
      %375 = vmatprep.subr.bf16.mxu0 0
      %376 = vmatpush1.bf16.msra.mxu0 0
      %377 = vmatprep.subr.bf16.mxu0 0
      %378 = vmatpush1.bf16.msra.mxu0 0
      %379 = vmatprep.subr.bf16.mxu0 0
      %380 = vmatpush1.bf16.msra.mxu0 0
      %381 = vmatprep.subr.bf16.mxu0 0
      %382 = vmatpush1.bf16.msra.mxu0 0
      %383 = vmatprep.subr.bf16.mxu0 0
      %384 = vmatpush1.bf16.msra.mxu0 0
      %385 = vmatprep.subr.bf16.mxu0 0
      %386 = vmatpush1.bf16.msra.mxu0 0
      %387 = vmatprep.subr.bf16.mxu0 0
      %388 = vmatpush1.bf16.msra.mxu0 0
      %389 = vmatprep.subr.bf16.mxu0 0
      %390 = vmatpush1.bf16.msra.mxu0 0
      %391 = vmatprep.subr.bf16.mxu0 0
      %392 = vmatpush1.bf16.msra.mxu0 0
      %393 = vmatprep.mubr.bf16.mxu0 0
      %394 = vmatmul.mubr.bf16.gmra.mrb[0].mxu0 %v359
      %v395 = vpop.f32.mrb[0].mxu0
      %v396 = vadd.f32 0.0, %v395
      %v397 = vpop.f32.mrb[0].mxu0
      %v398 = vpop.f32.mrb[0].mxu0
      %v399 = vadd.f32 0.0, %v398
      %v400 = vpop.f32.mrb[0].mxu0
      %401 = vdwg.mxu0
      %v402 = vadd.f32 %v303, %v396
      %v403 = vadd.f32 %v304, %v399
      %vm404 = vcmask 130048
      %405 = vst.msk [vmem:[#allocation2] sm:$0xff] %vm404, %v402
      %406 = vst.msk [vmem:[#allocation2 + $0x8] sm:$0xff] %vm404, %v403
      %v407 = vunpack.c.l.bf16 %v295
      %v408 = vunpack.c.l.bf16 %v296
      %v409 = vunpack.c.l.bf16 %v297
      %v410 = vunpack.c.l.bf16 %v298
      %v411 = vunpack.c.l.bf16 %v299
      %v412 = vunpack.c.l.bf16 %v300
      %v413 = vunpack.c.l.bf16 %v301
      %v414 = vunpack.c.l.bf16 %v302
      %v415 = vld [vmem:[#allocation3] sm:$0x1]
      %v416 = vmul.f32 %v407, %v407
      %v417 = vmul.f32 %v408, %v408
      %v418 = vmul.f32 %v409, %v409
      %v419 = vmul.f32 %v410, %v410
      %v420 = vmul.f32 %v411, %v411
      %v421 = vmul.f32 %v412, %v412
      %v422 = vmul.f32 %v413, %v413
      %v423 = vmul.f32 %v414, %v414
      %v424 = vsel %vm404, %v416, 0.0
      %v425 = vsel %vm404, %v417, 0.0
      %v426 = vadd.f32 %v424, %v425
      %v427 = vsel %vm404, %v418, 0.0
      %v428 = vadd.f32 %v426, %v427
      %v429 = vsel %vm404, %v419, 0.0
      %v430 = vadd.f32 %v428, %v429
      %v431 = vsel %vm404, %v420, 0.0
      %v432 = vadd.f32 %v430, %v431
      %v433 = vsel %vm404, %v421, 0.0
      %v434 = vadd.f32 %v432, %v433
      %v435 = vsel %vm404, %v422, 0.0
      %v436 = vadd.f32 %v434, %v435
      %v437 = vsel %vm404, %v423, 0.0
      %v438 = vadd.f32 %v436, %v437
      %v439 = vrot.slane %v438, 4
      %v440 = vadd.f32 %v438, %v439
      %v441 = vrot.slane %v440, 2
      %v442 = vadd.f32 %v440, %v441
      %v443 = vrot.slane %v442, 1
      %v444 = vadd.f32 %v442, %v443
      %v445 = vadd.f32 %v415, %v444
      %vm446 = vcmask 122880
      %447 = vst.msk [vmem:[#allocation3] sm:$0x1] %vm446, %v445
      %v448 = vld [vmem:[#allocation3 + $0x1] sm:$0x1]
      %vm449 = vcmask 261248
      %v450 = vsel %vm449, %v416, 0.0
      %v451 = vsel %vm449, %v417, 0.0
      %v452 = vadd.f32 %v450, %v451
      %v453 = vsel %vm449, %v418, 0.0
      %v454 = vadd.f32 %v452, %v453
      %v455 = vsel %vm449, %v419, 0.0
      %v456 = vadd.f32 %v454, %v455
      %v457 = vsel %vm449, %v420, 0.0
      %v458 = vadd.f32 %v456, %v457
      %v459 = vsel %vm449, %v421, 0.0
      %v460 = vadd.f32 %v458, %v459
      %v461 = vsel %vm449, %v422, 0.0
      %v462 = vadd.f32 %v460, %v461
      %v463 = vsel %vm449, %v423, 0.0
      %v464 = vadd.f32 %v462, %v463
      %v465 = vrot.slane %v464, 4
      %v466 = vadd.f32 %v464, %v465
      %v467 = vrot.slane %v466, 2
      %v468 = vadd.f32 %v466, %v467
      %v469 = vrot.slane %v468, 1
      %v470 = vadd.f32 %v468, %v469
      %472 = vrot.lane.b32.xlu0 %v470, 112
      %v473 = vpop.permute.xlu0 %472
      %v475 = vadd.f32 %v448, %v473
      %476 = vst.msk [vmem:[#allocation3 + $0x1] sm:$0x1] %vm446, %v475
      // Predicated region
      $region41: #{igab_forward.21} parent=35 // pred_check
        %p477 = pneg %p227
      $region42: #{igab_forward.21} parent=35 // pred_check_branch
        %479 = sbr.rel (%p477) target = $region44
      $region43: #{igab_forward.21} parent=35 // pred_region
        %v480 = vld [vmem:[#allocation3] sm:$0x1]
        %v481 = vmax.f32 %v480, 1e-24
        %v482 = vrsqrt.pop %v481
        %v483 = vld [vmem:[#allocation3 + $0x1] sm:$0x1]
        %v484 = vmax.f32 %v483, 1e-24
        %v485 = vrsqrt.pop %v484
        %v486 = vlaneseq
        %v487 = vand.u32 %v486, 127
        %vm488 = vcmp.eq.s32.totalorder %v245, %v487
        %vm489 = vcmp.eq.s32.totalorder %v246, %v487
        %v490 = vlaneseq
        %v491 = vshrl.u32 %v490, 7
        %v492 = vsub.s32 0, %v491
        %v493 = vrot.slane %v485, %v492
        %v494 = vsel %vm488, %v493, 0.0
        %v495 = vsel %vm489, %v493, 0.0
        %v496 = vld [vmem:[#allocation2] sm:$0xff]
        %v497 = vld [vmem:[#allocation2 + $0x8] sm:$0xff]
        %v499 = vsel %vm404, %v494, 0
        %v502 = vsel %vm404, %v495, 0
        %504 = vmatprep.subr.mxu0 0.0
        %505 = vmatpush1.msra.mxu0 %v496
        %506 = vmatprep.subr.mxu0 0.0
        %507 = vmatpush1.msra.mxu0 %v497
        %508 = vmatprep.subr.mxu0 0.0
        %509 = vmatpush1.msra.mxu0 0.0
        %510 = vmatprep.subr.mxu0 0.0
        %511 = vmatpush1.msra.mxu0 0.0
        %512 = vmatprep.subr.mxu0 0.0
        %513 = vmatpush1.msra.mxu0 0.0
        %514 = vmatprep.subr.mxu0 0.0
        %515 = vmatpush1.msra.mxu0 0.0
        %516 = vmatprep.subr.mxu0 0.0
        %517 = vmatpush1.msra.mxu0 0.0
        %518 = vmatprep.subr.mxu0 0.0
        %519 = vmatpush1.msra.mxu0 0.0
        %520 = vmatprep.subr.mxu0 0.0
        %521 = vmatpush1.msra.mxu0 0.0
        %522 = vmatprep.subr.mxu0 0.0
        %523 = vmatpush1.msra.mxu0 0.0
        %524 = vmatprep.subr.mxu0 0.0
        %525 = vmatpush1.msra.mxu0 0.0
        %526 = vmatprep.subr.mxu0 0.0
        %527 = vmatpush1.msra.mxu0 0.0
        %528 = vmatprep.subr.mxu0 0.0
        %529 = vmatpush1.msra.mxu0 0.0
        %530 = vmatprep.subr.mxu0 0.0
        %531 = vmatpush1.msra.mxu0 0.0
        %532 = vmatprep.subr.mxu0 0.0
        %533 = vmatpush1.msra.mxu0 0.0
        %534 = vmatprep.subr.mxu0 0.0
        %535 = vmatpush1.msra.mxu0 0.0
        %536 = vmatprep.subr.mxu0 0.0
        %537 = vmatpush1.msra.mxu0 0.0
        %538 = vmatprep.subr.mxu0 0.0
        %539 = vmatpush1.msra.mxu0 0.0
        %540 = vmatprep.subr.mxu0 0.0
        %541 = vmatpush1.msra.mxu0 0.0
        %542 = vmatprep.subr.mxu0 0.0
        %543 = vmatpush1.msra.mxu0 0.0
        %544 = vmatprep.subr.mxu0 0.0
        %545 = vmatpush1.msra.mxu0 0.0
        %546 = vmatprep.subr.mxu0 0.0
        %547 = vmatpush1.msra.mxu0 0.0
        %548 = vmatprep.subr.mxu0 0.0
        %549 = vmatpush1.msra.mxu0 0.0
        %550 = vmatprep.subr.mxu0 0.0
        %551 = vmatpush1.msra.mxu0 0.0
        %552 = vmatprep.subr.mxu0 0.0
        %553 = vmatpush1.msra.mxu0 0.0
        %554 = vmatprep.subr.mxu0 0.0
        %555 = vmatpush1.msra.mxu0 0.0
        %556 = vmatprep.subr.mxu0 0.0
        %557 = vmatpush1.msra.mxu0 0.0
        %558 = vmatprep.subr.mxu0 0.0
        %559 = vmatpush1.msra.mxu0 0.0
        %560 = vmatprep.subr.mxu0 0.0
        %561 = vmatpush1.msra.mxu0 0.0
        %562 = vmatprep.subr.mxu0 0.0
        %563 = vmatpush1.msra.mxu0 0.0
        %564 = vmatprep.subr.mxu0 0.0
        %565 = vmatpush1.msra.mxu0 0.0
        %566 = vmatprep.subr.mxu0 0.0
        %567 = vmatpush1.msra.mxu0 0.0
        %568 = vmatprep.mubr.f32.mxu0 0.0
        %569 = vmatmul.mubr.f32.gmra.mrb[0].mxu0 %v499
        %v570 = vpop.f32.mrb[0].mxu0
        %v571 = vadd.f32 0.0, %v570
        %v572 = vpop.f32.mrb[0].mxu0
        %573 = vmatprep.mubr.f32.mxu0 0.0
        %574 = vmatmul.mubr.f32.gmra.mrb[0].mxu0 %v502
        %v575 = vpop.f32.mrb[0].mxu0
        %v576 = vadd.f32 0.0, %v575
        %v577 = vpop.f32.mrb[0].mxu0
        %578 = vdwg.mxu0
        %v579 = vlaneseq
        %v580 = vshrl.u32 %v579, 7
        %v581 = vsub.s32 0, %v580
        %v582 = vrot.slane %v482, %v581
        %v583 = vmul.f32 %v571, %v582
        %v584 = vmul.f32 %v576, %v582
        %v585 = vld [vmem:[%s2] sm:$0x1]
        %v587 = vlaneseq
        %v588 = vshrl.u32 %v587, 7
        %v589 = vsub.s32 0, %v588
        %v590 = vrot.slane %v585, %v589
        %v592 = vmul.f32 %v583, %v590
        %v593 = vmul.f32 %v584, %v590
        %v594 = vld [vmem:[%s3] sm:$0xff]
        %v595 = vld [vmem:[%s3 + $0x8] sm:$0xff]
        %v596 = vadd.f32 %v592, %v594
        %v597 = vadd.f32 %v593, %v595
        %v598 = vsel %vm404, %v596, -inf
        %599 = vmax.xlane.f32.xlu0 %v598
        %v600 = vpop.xlane.xlu0 %599
        %v601 = vsel %vm404, %v597, -inf
        %602 = vmax.xlane.f32.xlu0 %v601
        %v603 = vpop.xlane.xlu0 %602
        %v604 = vsub.f32 %v596, %v600
        %v605 = vsub.f32 %v597, %v603
        %v606 = vmul.f32 %v604, 1.442695
        %v607 = vpow.pop %v606
        %v608 = vmul.f32 %v605, 1.442695
        %v609 = vpow.pop %v608
        %v610 = vsel %vm404, %v607, 0.0
        %611 = vadd.xlane.f32.xlu0 %v610
        %v612 = vpop.xlane.xlu0 %611
        %v613 = vsel %vm404, %v609, 0.0
        %614 = vadd.xlane.f32.xlu0 %v613
        %v615 = vpop.xlane.xlu0 %614
        %v616 = vrcp.pop %v612
        %v617 = vrcp.pop %v615
        %v618 = vmul.f32 %v607, %v616
        %v619 = vmul.f32 %v609, %v617
        %v620 = vld [vmem:[%s1] sm:$0xff]
        %v621 = vld [vmem:[%s1 + $0x8] sm:$0xff]
        %622 = vxpose.xlu0.b32.start [1/16] %v618, 128
        %623 = vxpose.xlu0.b32.cont [2/16] %v619, 128
        %624 = vxpose.xlu0.b32.cont [3/16] 0.0, 128
        %625 = vxpose.xlu0.b32.cont [4/16] 0.0, 128
        %626 = vxpose.xlu0.b32.cont [5/16] 0.0, 128
        %627 = vxpose.xlu0.b32.cont [6/16] 0.0, 128
        %628 = vxpose.xlu0.b32.cont [7/16] 0.0, 128
        %629 = vxpose.xlu0.b32.cont [8/16] 0.0, 128
        %630 = vxpose.xlu0.b32.cont [9/16] 0.0, 128
        %631 = vxpose.xlu0.b32.cont [10/16] 0.0, 128
        %632 = vxpose.xlu0.b32.cont [11/16] 0.0, 128
        %633 = vxpose.xlu0.b32.cont [12/16] 0.0, 128
        %634 = vxpose.xlu0.b32.cont [13/16] 0.0, 128
        %635 = vxpose.xlu0.b32.cont [14/16] 0.0, 128
        %636 = vxpose.xlu0.b32.cont [15/16] 0.0, 128
        %637 = vxpose.xlu0.b32.end [16/16] 0.0, 128
        %v638 = vpop.trf.xlu0
        %v639 = vpop.trf.xlu0
        %v640 = vpop.trf.xlu0
        %v641 = vpop.trf.xlu0
        %v642 = vpop.trf.xlu0
        %v643 = vpop.trf.xlu0
        %v644 = vpop.trf.xlu0
        %v645 = vpop.trf.xlu0
        %v646 = vpop.trf.xlu0
        %v647 = vpop.trf.xlu0
        %v648 = vpop.trf.xlu0
        %v649 = vpop.trf.xlu0
        %v650 = vpop.trf.xlu0
        %v651 = vpop.trf.xlu0
        %v652 = vpop.trf.xlu0
        %v653 = vpop.trf.xlu0
        %v655 = vsel %vm404, %v638, 0
        %v658 = vsel %vm404, %v639, 0
        %660 = vmatprep.subr.mxu0 0.0
        %661 = vmatpush1.msra.mxu0 %v620
        %662 = vmatprep.subr.mxu0 0.0
        %663 = vmatpush1.msra.mxu0 %v621
        %664 = vmatprep.subr.mxu0 0.0
        %665 = vmatpush1.msra.mxu0 0.0
        %666 = vmatprep.subr.mxu0 0.0
        %667 = vmatpush1.msra.mxu0 0.0
        %668 = vmatprep.subr.mxu0 0.0
        %669 = vmatpush1.msra.mxu0 0.0
        %670 = vmatprep.subr.mxu0 0.0
        %671 = vmatpush1.msra.mxu0 0.0
        %672 = vmatprep.subr.mxu0 0.0
        %673 = vmatpush1.msra.mxu0 0.0
        %674 = vmatprep.subr.mxu0 0.0
        %675 = vmatpush1.msra.mxu0 0.0
        %676 = vmatprep.subr.mxu0 0.0
        %677 = vmatpush1.msra.mxu0 0.0
        %678 = vmatprep.subr.mxu0 0.0
        %679 = vmatpush1.msra.mxu0 0.0
        %680 = vmatprep.subr.mxu0 0.0
        %681 = vmatpush1.msra.mxu0 0.0
        %682 = vmatprep.subr.mxu0 0.0
        %683 = vmatpush1.msra.mxu0 0.0
        %684 = vmatprep.subr.mxu0 0.0
        %685 = vmatpush1.msra.mxu0 0.0
        %686 = vmatprep.subr.mxu0 0.0
        %687 = vmatpush1.msra.mxu0 0.0
        %688 = vmatprep.subr.mxu0 0.0
        %689 = vmatpush1.msra.mxu0 0.0
        %690 = vmatprep.subr.mxu0 0.0
        %691 = vmatpush1.msra.mxu0 0.0
        %692 = vmatprep.subr.mxu0 0.0
        %693 = vmatpush1.msra.mxu0 0.0
        %694 = vmatprep.subr.mxu0 0.0
        %695 = vmatpush1.msra.mxu0 0.0
        %696 = vmatprep.subr.mxu0 0.0
        %697 = vmatpush1.msra.mxu0 0.0
        %698 = vmatprep.subr.mxu0 0.0
        %699 = vmatpush1.msra.mxu0 0.0
        %700 = vmatprep.subr.mxu0 0.0
        %701 = vmatpush1.msra.mxu0 0.0
        %702 = vmatprep.subr.mxu0 0.0
        %703 = vmatpush1.msra.mxu0 0.0
        %704 = vmatprep.subr.mxu0 0.0
        %705 = vmatpush1.msra.mxu0 0.0
        %706 = vmatprep.subr.mxu0 0.0
        %707 = vmatpush1.msra.mxu0 0.0
        %708 = vmatprep.subr.mxu0 0.0
        %709 = vmatpush1.msra.mxu0 0.0
        %710 = vmatprep.subr.mxu0 0.0
        %711 = vmatpush1.msra.mxu0 0.0
        %712 = vmatprep.subr.mxu0 0.0
        %713 = vmatpush1.msra.mxu0 0.0
        %714 = vmatprep.subr.mxu0 0.0
        %715 = vmatpush1.msra.mxu0 0.0
        %716 = vmatprep.subr.mxu0 0.0
        %717 = vmatpush1.msra.mxu0 0.0
        %718 = vmatprep.subr.mxu0 0.0
        %719 = vmatpush1.msra.mxu0 0.0
        %720 = vmatprep.subr.mxu0 0.0
        %721 = vmatpush1.msra.mxu0 0.0
        %722 = vmatprep.subr.mxu0 0.0
        %723 = vmatpush1.msra.mxu0 0.0
        %724 = vmatprep.mubr.f32.mxu0 0.0
        %725 = vmatmul.mubr.f32.gmra.mrb[0].mxu0 %v655
        %v726 = vpop.f32.mrb[0].mxu0
        %v727 = vadd.f32 0.0, %v726
        %v728 = vpop.f32.mrb[0].mxu0
        %729 = vmatprep.mubr.f32.mxu0 0.0
        %730 = vmatmul.mubr.f32.gmra.mrb[0].mxu0 %v658
        %v731 = vpop.f32.mrb[0].mxu0
        %v732 = vadd.f32 0.0, %v731
        %v733 = vpop.f32.mrb[0].mxu0
        %734 = vdwg.mxu0
        %735 = vst.msk [vmem:[%s225] sm:$0xff] %vm404, %v727
        %736 = vst.msk [vmem:[%s225 + $0x8] sm:$0xff] %vm404, %v732
      $region44: #{igab_forward.21} parent=35 // pred_fallthru
        _
      %p737 = scmp.lt.s32.totalorder %s19, 1
      %s738 = scalar_select %p737, %s19, 1
      %s739 = smul.addr %s738, 2
      %s740 = smul.addr %s739, 8
      %s741 = scalar_lea.vmem %s4, %s740
      // Predicated region
      $region45: #{igab_forward.21} parent=35 // pred_check
        %p742 = pneg %p136
      $region46: #{igab_forward.21} parent=35 // pred_check_branch
        %744 = sbr.rel (%p742) target = $region48
      $region47: #{igab_forward.21} parent=35 // pred_region
        _
      $region48: #{igab_forward.21} parent=35 // pred_fallthru
        _
    $region36: #{igab_forward.21} parent=5 // pred_fallthru
      _
    %p745 = scmp.le.s32.totalorder 2, %s10
    // Predicated region
    $region49: #{igab_forward.21} parent=5 // pred_check
      %p746 = pneg %p745
    $region50: #{igab_forward.21} parent=5 // pred_check_branch
      %748 = sbr.rel (%p746) target = $region52
    $region51: #{igab_forward.21} parent=5 // pred_region
      %s749 = ssub.s32 %s10, 2
      // Predicated region
      $region53: #{igab_forward.21} parent=51 // pred_check
        %p750 = pneg %p142
      $region54: #{igab_forward.21} parent=51 // pred_check_branch
        %752 = sbr.rel (%p750) target = $region56
      $region55: #{igab_forward.21} parent=51 // pred_region
        %p753 = scmp.lt.s32.totalorder %s21, 1
        %s754 = scalar_select %p753, %s21, 1
        %s755 = smul.addr %s754, 2
        %s756 = smul.addr %s755, 8
        %s757 = scalar_lea.vmem %s4, %s756
      $region56: #{igab_forward.21} parent=51 // pred_fallthru
        _
    $region52: #{igab_forward.21} parent=5 // pred_fallthru
      _
  $region6: #{igab_forward.21} parent=0 // loop_footer
    %s14 = sadd.s32 1, %s10
  $region7: #{igab_forward.21} parent=0 // loop_footer_branch
    %9 = sbr.rel target = $region3
  $region8: #{igab_forward.21} parent=0 // loop_exit
    _

// kernel: igab_forward.19
$region0: #{igab_forward.19}
  #allocation0 [shape = 'u32[]', space=smem, size = 0x4, offset = 0x4, fixed_abs, tag = 'smem constant byte address 0x4 - core index']
  #allocation1 [shape = 'u32[144,128]{1,0:T(1,128)}', space=vmem, size = 0x12000, scoped, tag = 'internal scratch']
  %s0 = inlined_call_operand.vmem [shape: bf16[2,8,8,16], index: 0, kind: input, shape index: {}, may-alias: {0,1,2}]
  %s1 = inlined_call_operand.vmem [shape: bf16[2,8,8,16], index: 1, kind: input, shape index: {}, may-alias: {0,1,2}]
  %s2 = inlined_call_operand.vmem [shape: bf16[2,8,8,16], index: 2, kind: input, shape index: {}, may-alias: {0,1,2}]
  %s3 = inlined_call_operand.vmem [shape: f32[3,3,16], index: 3, kind: input, shape index: {}]
  %s4 = inlined_call_operand.vmem [shape: bf16[2,8,8,16], index: 4, kind: output, shape index: {}]
  %s5 = sld [smem:[#allocation0]]
  $region49: #{igab_forward.19} parent=0
    _
  %s7 = ssub.s32 1, %s5
  %s8 = scalar_select 0, %s7, %s5
  loop: start=0, step=1, limit=4
  $region2: #{igab_forward.19} parent=0 // loop_pre_header
    _
  $region3: #{igab_forward.19} parent=0 // loop_header
    %s10 = sphi 0, %s14
    %p11 = scmp.ge.s32.totalorder %s10, 4
    %s17 = sphi 0, %s29
    %s18 = sphi 0, %s25
    %s19 = sphi 0, %s17
    %s20 = sphi 0, %s18
    %s21 = sphi 0, %s19
    %s22 = sphi 0, %s20
    %s34 = sphi 0, %s36
    %s37 = sphi 0, %s34
    %s38 = sphi 0, %s37
    %s54 = sphi 0, %s38
    %s70 = sphi 0, %s72
    %s73 = sphi 0, %s70
    %s74 = sphi 0, %s73
    %s90 = sphi 0, %s74
    %s106 = sphi 0, %s108
    %s109 = sphi 0, %s106
    %s110 = sphi 0, %s109
    %s126 = sphi 0, %s110
    %s130 = sphi 0, %s130
    %s132 = sphi 0, %s130
    %s133 = sphi 0, %s132
    %s147 = sphi 0, %s133
    %s155 = sphi 0, %s157
    %s158 = sphi 0, %s155
    %s159 = sphi 0, %s158
    %s175 = sphi 0, %s159
  $region4: #{igab_forward.19} parent=0 // loop_header_branch
    %13 = sbr.rel (%p11) target = $region8
  $region5: #{igab_forward.19} parent=0 // loop_body
    %s15 = ssub.s32 %s10, 1
    %s16 = ssub.s32 %s10, 2
    %s23 = sadd.s32 1, %s18
    %p24 = scmp.ge.s32.totalorder %s23, 1
    %s25 = scalar_select %p24, 0, %s23
    %s26 = sadd.s32 1, %s17
    %s27 = scalar_select %p24, %s26, %s17
    %p28 = scmp.ge.s32.totalorder %s27, 2
    %s29 = scalar_select %p28, 0, %s27
    %s30 = ssub.s32 %s17, %s29
    %s31 = ssub.s32 %s18, %s25
    %s32 = sor.u32 %s30, %s31
    %p33 = scmp.eq.s32.totalorder %s32, 0
    %s35 = sadd.s32 %s34, 1
    %s36 = scalar_select %p33, %s34, %s35
    %p39 = pneg %p33
    %p40 = scmp.eq.s32.totalorder %s10, 1
    %p41 = por %p39, %p40
    %p42 = scmp.ne.s32.totalorder %s34, %s37
    %p43 = scmp.eq.s32.totalorder %s10, 0
    %p44 = por %p42, %p43
    %p45 = scmp.ne.s32.totalorder %s34, %s37
    %p46 = scmp.eq.s32.totalorder %s15, 1
    %p47 = por %p45, %p46
    %p48 = scmp.ne.s32.totalorder %s37, %s38
    %p49 = scmp.eq.s32.totalorder %s15, 0
    %p50 = por %p48, %p49
    %p51 = scmp.ne.s32.totalorder %s37, %s38
    %p52 = scmp.eq.s32.totalorder %s16, 1
    %p53 = por %p51, %p52
    %p55 = scmp.ne.s32.totalorder %s38, %s54
    %p56 = scmp.eq.s32.totalorder %s16, 0
    %p57 = por %p55, %p56
    %s58 = smul.u32 %s18, 8
    %s59 = ssub.s32 %s58, 1
    %p60 = scmp.gt.s32.totalorder %s59, 0
    %s61 = scalar_select %p60, %s59, 0
    %s62 = smul.u32 %s25, 8
    %s63 = ssub.s32 %s62, 1
    %p64 = scmp.gt.s32.totalorder %s63, 0
    %s65 = scalar_select %p64, %s63, 0
    %s66 = ssub.s32 %s17, %s29
    %s67 = ssub.s32 %s61, %s65
    %s68 = sor.u32 %s66, %s67
    %p69 = scmp.eq.s32.totalorder %s68, 0
    %s71 = sadd.s32 %s70, 1
    %s72 = scalar_select %p69, %s70, %s71
    %p75 = pneg %p69
    %p76 = scmp.eq.s32.totalorder %s10, 1
    %p77 = por %p75, %p76
    %p78 = scmp.ne.s32.totalorder %s70, %s73
    %p79 = scmp.eq.s32.totalorder %s10, 0
    %p80 = por %p78, %p79
    %p81 = scmp.ne.s32.totalorder %s70, %s73
    %p82 = scmp.eq.s32.totalorder %s15, 1
    %p83 = por %p81, %p82
    %p84 = scmp.ne.s32.totalorder %s73, %s74
    %p85 = scmp.eq.s32.totalorder %s15, 0
    %p86 = por %p84, %p85
    %p87 = scmp.ne.s32.totalorder %s73, %s74
    %p88 = scmp.eq.s32.totalorder %s16, 1
    %p89 = por %p87, %p88
    %p91 = scmp.ne.s32.totalorder %s74, %s90
    %p92 = scmp.eq.s32.totalorder %s16, 0
    %p93 = por %p91, %p92
    %s94 = smul.u32 %s18, 8
    %s95 = sadd.s32 %s94, 8
    %p96 = scmp.lt.s32.totalorder %s95, 7
    %s97 = scalar_select %p96, %s95, 7
    %s98 = smul.u32 %s25, 8
    %s99 = sadd.s32 %s98, 8
    %p100 = scmp.lt.s32.totalorder %s99, 7
    %s101 = scalar_select %p100, %s99, 7
    %s102 = ssub.s32 %s17, %s29
    %s103 = ssub.s32 %s97, %s101
    %s104 = sor.u32 %s102, %s103
    %p105 = scmp.eq.s32.totalorder %s104, 0
    %s107 = sadd.s32 %s106, 1
    %s108 = scalar_select %p105, %s106, %s107
    %p111 = pneg %p105
    %p112 = scmp.eq.s32.totalorder %s10, 1
    %p113 = por %p111, %p112
    %p114 = scmp.ne.s32.totalorder %s106, %s109
    %p115 = scmp.eq.s32.totalorder %s10, 0
    %p116 = por %p114, %p115
    %p117 = scmp.ne.s32.totalorder %s106, %s109
    %p118 = scmp.eq.s32.totalorder %s15, 1
    %p119 = por %p117, %p118
    %p120 = scmp.ne.s32.totalorder %s109, %s110
    %p121 = scmp.eq.s32.totalorder %s15, 0
    %p122 = por %p120, %p121
    %p123 = scmp.ne.s32.totalorder %s109, %s110
    %p124 = scmp.eq.s32.totalorder %s16, 1
    %p125 = por %p123, %p124
    %p127 = scmp.ne.s32.totalorder %s110, %s126
    %p128 = scmp.eq.s32.totalorder %s16, 0
    %p129 = por %p127, %p128
    %s131 = sadd.s32 %s130, 1
    %p134 = scmp.eq.s32.totalorder %s10, 1
    %p135 = scmp.ne.s32.totalorder %s130, %s132
    %p136 = scmp.eq.s32.totalorder %s10, 0
    %p137 = por %p135, %p136
    %p138 = scmp.ne.s32.totalorder %s130, %s132
    %p139 = scmp.eq.s32.totalorder %s15, 1
    %p140 = por %p138, %p139
    %p141 = scmp.ne.s32.totalorder %s132, %s133
    %p142 = scmp.eq.s32.totalorder %s15, 0
    %p143 = por %p141, %p142
    %p144 = scmp.ne.s32.totalorder %s132, %s133
    %p145 = scmp.eq.s32.totalorder %s16, 1
    %p146 = por %p144, %p145
    %p148 = scmp.ne.s32.totalorder %s133, %s147
    %p149 = scmp.eq.s32.totalorder %s16, 0
    %p150 = por %p148, %p149
    %s151 = ssub.s32 %s17, %s29
    %s152 = ssub.s32 %s18, %s25
    %s153 = sor.u32 %s151, %s152
    %p154 = scmp.eq.s32.totalorder %s153, 0
    %s156 = sadd.s32 %s155, 1
    %s157 = scalar_select %p154, %s155, %s156
    %p160 = pneg %p154
    %p161 = scmp.eq.s32.totalorder %s10, 1
    %p162 = por %p160, %p161
    %p163 = scmp.ne.s32.totalorder %s155, %s158
    %p164 = scmp.eq.s32.totalorder %s10, 0
    %p165 = por %p163, %p164
    %p166 = scmp.ne.s32.totalorder %s155, %s158
    %p167 = scmp.eq.s32.totalorder %s15, 1
    %p168 = por %p166, %p167
    %p169 = scmp.ne.s32.totalorder %s158, %s159
    %p170 = scmp.eq.s32.totalorder %s15, 0
    %p171 = por %p169, %p170
    %p172 = scmp.ne.s32.totalorder %s158, %s159
    %p173 = scmp.eq.s32.totalorder %s16, 1
    %p174 = por %p172, %p173
    %p176 = scmp.ne.s32.totalorder %s159, %s175
    %p177 = scmp.eq.s32.totalorder %s16, 0
    %p178 = por %p176, %p177
    %p179 = scmp.le.s32.totalorder 1, %s10
    %p180 = scmp.lt.s32.totalorder %s10, 3
    %p181 = pnand %p179, %p180
    %p182 = pneg %p181
    // Predicated region
    $region9: #{igab_forward.19} parent=5 // pred_check
      _
    $region10: #{igab_forward.19} parent=5 // pred_check_branch
      %184 = sbr.rel (%p181) target = $region12
    $region11: #{igab_forward.19} parent=5 // pred_region
      %s185 = ssub.s32 %s10, 1
      // Predicated region
      $region13: #{igab_forward.19} parent=11 // pred_check
        %p186 = pneg %p143
      $region14: #{igab_forward.19} parent=11 // pred_check_branch
        %188 = sbr.rel (%p186) target = $region16
      $region15: #{igab_forward.19} parent=11 // pred_region
        _
      $region16: #{igab_forward.19} parent=11 // pred_fallthru
        _
    $region12: #{igab_forward.19} parent=5 // pred_fallthru
      _
    %p189 = scmp.lt.s32.totalorder %s10, 2
    // Predicated region
    $region17: #{igab_forward.19} parent=5 // pred_check
      %p190 = pneg %p189
    $region18: #{igab_forward.19} parent=5 // pred_check_branch
      %192 = sbr.rel (%p190) target = $region20
    $region19: #{igab_forward.19} parent=5 // pred_region
      // Predicated region
      $region21: #{igab_forward.19} parent=19 // pred_check
        %p193 = pneg %p44
      $region22: #{igab_forward.19} parent=19 // pred_check_branch
        %195 = sbr.rel (%p193) target = $region24
      $region23: #{igab_forward.19} parent=19 // pred_region
        %s196 = smul.u32 8, %s18
        %p197 = scmp.lt.s32.totalorder %s17, 1
        %s198 = scalar_select %p197, %s17, 1
        %p199 = scmp.lt.s32.totalorder %s196, 7
        %s200 = scalar_select %p199, %s196, 7
        %s201 = smul.addr %s198, 8
        %s202 = sadd.s32 %s200, %s201
        %s203 = smul.addr %s202, 4
        %s204 = scalar_lea.vmem %s0, %s203
        %s205 = smul.u32 8, %s18
      $region24: #{igab_forward.19} parent=19 // pred_fallthru
        _
      // Predicated region
      $region25: #{igab_forward.19} parent=19 // pred_check
        %p206 = pneg %p80
      $region26: #{igab_forward.19} parent=19 // pred_check_branch
        %208 = sbr.rel (%p206) target = $region28
      $region27: #{igab_forward.19} parent=19 // pred_region
        %s209 = smul.u32 %s18, 8
        %s210 = ssub.s32 %s209, 1
        %p211 = scmp.gt.s32.totalorder %s210, 0
        %s212 = scalar_select %p211, %s210, 0
        %p213 = scmp.lt.s32.totalorder %s17, 1
        %s214 = scalar_select %p213, %s17, 1
        %p215 = scmp.lt.s32.totalorder %s212, 7
        %s216 = scalar_select %p215, %s212, 7
        %s217 = smul.addr %s214, 8
        %s218 = sadd.s32 %s216, %s217
        %s219 = smul.addr %s218, 4
        %s220 = scalar_lea.vmem %s1, %s219
        %s221 = smul.u32 %s18, 8
        %s222 = ssub.s32 %s221, 1
        %p223 = scmp.gt.s32.totalorder %s222, 0
        %s224 = scalar_select %p223, %s222, 0
      $region28: #{igab_forward.19} parent=19 // pred_fallthru
        _
      // Predicated region
      $region29: #{igab_forward.19} parent=19 // pred_check
        %p225 = pneg %p116
      $region30: #{igab_forward.19} parent=19 // pred_check_branch
        %227 = sbr.rel (%p225) target = $region32
      $region31: #{igab_forward.19} parent=19 // pred_region
        %s228 = smul.u32 %s18, 8
        %s229 = sadd.s32 %s228, 8
        %p230 = scmp.lt.s32.totalorder %s229, 7
        %s231 = scalar_select %p230, %s229, 7
        %p232 = scmp.lt.s32.totalorder %s17, 1
        %s233 = scalar_select %p232, %s17, 1
        %p234 = scmp.lt.s32.totalorder %s231, 7
        %s235 = scalar_select %p234, %s231, 7
        %s236 = smul.addr %s233, 8
        %s237 = sadd.s32 %s235, %s236
        %s238 = smul.addr %s237, 4
        %s239 = scalar_lea.vmem %s2, %s238
        %s240 = smul.u32 %s18, 8
        %s241 = sadd.s32 %s240, 8
        %p242 = scmp.lt.s32.totalorder %s241, 7
        %s243 = scalar_select %p242, %s241, 7
      $region32: #{igab_forward.19} parent=19 // pred_fallthru
        _
    $region20: #{igab_forward.19} parent=5 // pred_fallthru
      _
    %p244 = scmp.le.s32.totalorder 1, %s10
    %p245 = scmp.lt.s32.totalorder %s10, 3
    %p246 = pnand %p244, %p245
    %p247 = pneg %p246
    // Predicated region
    $region33: #{igab_forward.19} parent=5 // pred_check
      _
    $region34: #{igab_forward.19} parent=5 // pred_check_branch
      %249 = sbr.rel (%p246) target = $region36
    $region35: #{igab_forward.19} parent=5 // pred_region
      %s250 = ssub.s32 %s10, 1
      %s251 = smul.u32 8, %s20
      %p252 = scmp.lt.s32.totalorder %s19, 1
      %s253 = scalar_select %p252, %s19, 1
      %p254 = scmp.lt.s32.totalorder %s251, 7
      %s255 = scalar_select %p254, %s251, 7
      %s256 = smul.addr %s253, 8
      %s257 = sadd.s32 %s255, %s256
      %s258 = smul.addr %s257, 4
      %s259 = scalar_lea.vmem %s0, %s258
      %p260 = pneg %p50
      %p261 = pneg %p47
      %s262 = smul.u32 %s20, 8
      %s263 = ssub.s32 %s262, 1
      %p264 = scmp.gt.s32.totalorder %s263, 0
      %s265 = scalar_select %p264, %s263, 0
      %p266 = scmp.lt.s32.totalorder %s19, 1
      %s267 = scalar_select %p266, %s19, 1
      %p268 = scmp.lt.s32.totalorder %s265, 7
      %s269 = scalar_select %p268, %s265, 7
      %s270 = smul.addr %s267, 8
      %s271 = sadd.s32 %s269, %s270
      %s272 = smul.addr %s271, 4
      %s273 = scalar_lea.vmem %s1, %s272
      %p274 = pneg %p86
      %p275 = pneg %p83
      %s276 = smul.u32 %s20, 8
      %s277 = sadd.s32 %s276, 8
      %p278 = scmp.lt.s32.totalorder %s277, 7
      %s279 = scalar_select %p278, %s277, 7
      %p280 = scmp.lt.s32.totalorder %s19, 1
      %s281 = scalar_select %p280, %s19, 1
      %p282 = scmp.lt.s32.totalorder %s279, 7
      %s283 = scalar_select %p282, %s279, 7
      %s284 = smul.addr %s281, 8
      %s285 = sadd.s32 %s283, %s284
      %s286 = smul.addr %s285, 4
      %s287 = scalar_lea.vmem %s2, %s286
      %p288 = pneg %p122
      %p289 = pneg %p119
      %p290 = pneg %p143
      %p291 = pneg %p140
      %p292 = pneg %p171
      %p293 = pneg %p168
      %s294 = smul.u32 8, %s20
      %p295 = scmp.lt.s32.totalorder %s19, 1
      %s296 = scalar_select %p295, %s19, 1
      %p297 = scmp.lt.s32.totalorder %s294, 7
      %s298 = scalar_select %p297, %s294, 7
      %s299 = smul.addr %s296, 8
      %s300 = sadd.s32 %s298, %s299
      %s301 = smul.addr %s300, 4
      %s302 = scalar_lea.vmem %s4, %s301
      %s303 = smul.u32 8, %s20
      %p304 = scmp.lt.s32.totalorder %s19, 1
      %s305 = scalar_select %p304, %s19, 1
      %p306 = scmp.lt.s32.totalorder %s303, 7
      %s307 = scalar_select %p306, %s303, 7
      %s308 = smul.addr %s305, 8
      %s309 = sadd.s32 %s307, %s308
      %s310 = smul.addr %s309, 4
      %s311 = scalar_lea.vmem %s0, %s310
      %s312 = smul.u32 8, %s20
      %s313 = smul.u32 %s20, 8
      %s314 = ssub.s32 %s313, 1
      %p315 = scmp.gt.s32.totalorder %s314, 0
      %s316 = scalar_select %p315, %s314, 0
      %p317 = scmp.lt.s32.totalorder %s19, 1
      %s318 = scalar_select %p317, %s19, 1
      %p319 = scmp.lt.s32.totalorder %s316, 7
      %s320 = scalar_select %p319, %s316, 7
      %s321 = smul.addr %s318, 8
      %s322 = sadd.s32 %s320, %s321
      %s323 = smul.addr %s322, 4
      %s324 = scalar_lea.vmem %s1, %s323
      %s325 = smul.u32 %s20, 8
      %s326 = ssub.s32 %s325, 1
      %p327 = scmp.gt.s32.totalorder %s326, 0
      %s328 = scalar_select %p327, %s326, 0
      %s329 = smul.u32 %s20, 8
      %s330 = sadd.s32 %s329, 8
      %p331 = scmp.lt.s32.totalorder %s330, 7
      %s332 = scalar_select %p331, %s330, 7
      %p333 = scmp.lt.s32.totalorder %s19, 1
      %s334 = scalar_select %p333, %s19, 1
      %p335 = scmp.lt.s32.totalorder %s332, 7
      %s336 = scalar_select %p335, %s332, 7
      %s337 = smul.addr %s334, 8
      %s338 = sadd.s32 %s336, %s337
      %s339 = smul.addr %s338, 4
      %s340 = scalar_lea.vmem %s2, %s339
      %s341 = smul.u32 %s20, 8
      %s342 = sadd.s32 %s341, 8
      %p343 = scmp.lt.s32.totalorder %s342, 7
      %s344 = scalar_select %p343, %s342, 7
      %s345 = smul.u32 8, %s20
      %p346 = scmp.lt.s32.totalorder %s19, 1
      %s347 = scalar_select %p346, %s19, 1
      %p348 = scmp.lt.s32.totalorder %s345, 7
      %s349 = scalar_select %p348, %s345, 7
      %s350 = smul.addr %s347, 8
      %s351 = sadd.s32 %s349, %s350
      %s352 = smul.addr %s351, 4
      %s353 = scalar_lea.vmem %s4, %s352
      %s354 = smul.u32 8, %s20
      %v355 = vld [vmem:[%s311] sm:$0xf]
      %v356 = vld [vmem:[%s311 + $0x4] sm:$0xf]
      %v357 = vld [vmem:[%s311 + $0x8] sm:$0xf]
      %v358 = vld [vmem:[%s311 + $0xc] sm:$0xf]
      %v359 = vld [vmem:[%s311 + $0x10] sm:$0xf]
      %v360 = vld [vmem:[%s311 + $0x14] sm:$0xf]
      %v361 = vld [vmem:[%s311 + $0x18] sm:$0xf]
      %v362 = vld [vmem:[%s311 + $0x1c] sm:$0xf]
      %v363 = vunpack.c.l.bf16 %v355
      %v364 = vunpack.c.l.bf16 %v356
      %v365 = vunpack.c.l.bf16 %v357
      %v366 = vunpack.c.l.bf16 %v358
      %v367 = vunpack.c.l.bf16 %v359
      %v368 = vunpack.c.l.bf16 %v360
      %v369 = vunpack.c.l.bf16 %v361
      %v370 = vunpack.c.l.bf16 %v362
      %s371 = smul.u32 %s20, 8
      %v372 = vstv %s371
      %v373 = vadd.s32 %v372, 1
      %v374 = vadd.s32 %v372, 2
      %v375 = vadd.s32 %v372, 3
      %v376 = vadd.s32 %v372, 4
      %v377 = vadd.s32 %v372, 5
      %v378 = vadd.s32 %v372, 6
      %v379 = vadd.s32 %v372, 7
      %vm380 = vcmp.lt.s32.totalorder %v372, 8
      %vm381 = vcmp.lt.s32.totalorder %v373, 8
      %vm382 = vcmp.lt.s32.totalorder %v374, 8
      %vm383 = vcmp.lt.s32.totalorder %v375, 8
      %vm384 = vcmp.lt.s32.totalorder %v376, 8
      %vm385 = vcmp.lt.s32.totalorder %v377, 8
      %vm386 = vcmp.lt.s32.totalorder %v378, 8
      %vm387 = vcmp.lt.s32.totalorder %v379, 8
      %v388 = vsel %vm380, 1, 0
      %v389 = vsel %vm381, 1, 0
      %v390 = vsel %vm382, 1, 0
      %v391 = vsel %vm383, 1, 0
      %v392 = vsel %vm384, 1, 0
      %v393 = vsel %vm385, 1, 0
      %v394 = vsel %vm386, 1, 0
      %v395 = vsel %vm387, 1, 0
      %vm396 = vcmp.eq.s32.totalorder %v388, 1
      %vm397 = vcmp.eq.s32.totalorder %v389, 1
      %vm398 = vcmp.eq.s32.totalorder %v390, 1
      %vm399 = vcmp.eq.s32.totalorder %v391, 1
      %vm400 = vcmp.eq.s32.totalorder %v392, 1
      %vm401 = vcmp.eq.s32.totalorder %v393, 1
      %vm402 = vcmp.eq.s32.totalorder %v394, 1
      %vm403 = vcmp.eq.s32.totalorder %v395, 1
      %v404 = vsel %vm396, %v363, 0.0
      %v405 = vsel %vm397, %v364, 0.0
      %v406 = vsel %vm398, %v365, 0.0
      %v407 = vsel %vm399, %v366, 0.0
      %v408 = vsel %vm400, %v367, 0.0
      %v409 = vsel %vm401, %v368, 0.0
      %v410 = vsel %vm402, %v369, 0.0
      %v411 = vsel %vm403, %v370, 0.0
      %v412 = vld [vmem:[%s324] sm:$0xf]
      %v413 = vunpack.c.l.bf16 %v412
      %p414 = scmp.gt.s32.totalorder %s20, 0
      %s415 = scalar_select %p414, 1, 0
      %s416 = scvt.s32.f32 %s415
      %v417 = vstv %s416
      %v418 = vmul.f32 %v413, %v417
      %v419 = vld [vmem:[%s340] sm:$0xf]
      %v420 = vunpack.c.l.bf16 %v419
      %s421 = sadd.s32 %s20, 1
      %p422 = scmp.lt.s32.totalorder %s421, 1
      %s423 = scalar_select %p422, 1, 0
      %s424 = scvt.s32.f32 %s423
      %v425 = vstv %s424
      %v426 = vmul.f32 %v420, %v425
      %v427 = vld [vmem:[%s3] sm:$0x7]
      %v428 = vld [vmem:[%s3 + $0x4] sm:$0x7]
      %v429 = vld [vmem:[%s3 + $0x8] sm:$0x7]
      %v430 = vlaneseq
      %v431 = vshrl.u32 %v430, 7
      %v432 = vrot.slane %v418, 7
      %v433 = vrot.slane %v404, 7
      %v434 = vrot.slane %v405, 7
      %v435 = vrot.slane %v406, 7
      %v436 = vrot.slane %v407, 7
      %v437 = vrot.slane %v408, 7
      %v438 = vrot.slane %v409, 7
      %v439 = vrot.slane %v410, 7
      %v440 = vrot.slane %v411, 7
      %v441 = vrot.slane %v426, 7
      %vm442 = vcmp.gt.s32.totalorder %v431, 0
      %v443 = vsel %vm442, 1, 0
      %v444 = vcvt.s32.f32 %v443
      %v445 = vmul.f32 %v432, %v444
      %v446 = vmul.f32 %v433, %v444
      %v447 = vmul.f32 %v434, %v444
      %v448 = vmul.f32 %v435, %v444
      %v449 = vmul.f32 %v436, %v444
      %v450 = vmul.f32 %v437, %v444
      %v451 = vmul.f32 %v438, %v444
      %v452 = vmul.f32 %v439, %v444
      %v453 = vmul.f32 %v440, %v444
      %v454 = vmul.f32 %v441, %v444
      %v455 = vrot.slane %v418, 1
      %v456 = vrot.slane %v404, 1
      %v457 = vrot.slane %v405, 1
      %v458 = vrot.slane %v406, 1
      %v459 = vrot.slane %v407, 1
      %v460 = vrot.slane %v408, 1
      %v461 = vrot.slane %v409, 1
      %v462 = vrot.slane %v410, 1
      %v463 = vrot.slane %v411, 1
      %v464 = vrot.slane %v426, 1
      %vm465 = vcmp.lt.s32.totalorder %v431, 7
      %v466 = vsel %vm465, 1, 0
      %v467 = vcvt.s32.f32 %v466
      %v468 = vmul.f32 %v455, %v467
      %v469 = vmul.f32 %v456, %v467
      %v470 = vmul.f32 %v457, %v467
      %v471 = vmul.f32 %v458, %v467
      %v472 = vmul.f32 %v459, %v467
      %v473 = vmul.f32 %v460, %v467
      %v474 = vmul.f32 %v461, %v467
      %v475 = vmul.f32 %v462, %v467
      %v476 = vmul.f32 %v463, %v467
      %v477 = vmul.f32 %v464, %v467
      %v478 = vlaneseq
      %v479 = vshrl.u32 %v478, 7
      %v480 = vsub.s32 0, %v479
      %v481 = vrot.slane %v427, %v480
      %v482 = vmul.f32 %v445, %v481
      %v483 = vmul.f32 %v446, %v481
      %v484 = vmul.f32 %v447, %v481
      %v485 = vmul.f32 %v448, %v481
      %v486 = vmul.f32 %v449, %v481
      %v487 = vmul.f32 %v450, %v481
      %v488 = vmul.f32 %v451, %v481
      %v489 = vmul.f32 %v452, %v481
      %v490 = vlaneseq
      %v491 = vshrl.u32 %v490, 7
      %v492 = vsub.s32 1, %v491
      %v493 = vrot.slane %v427, %v492
      %v494 = vmul.f32 %v418, %v493
      %v495 = vmul.f32 %v404, %v493
      %v496 = vmul.f32 %v405, %v493
      %v497 = vmul.f32 %v406, %v493
      %v498 = vmul.f32 %v407, %v493
      %v499 = vmul.f32 %v408, %v493
      %v500 = vmul.f32 %v409, %v493
      %v501 = vmul.f32 %v410, %v493
      %v502 = vadd.f32 %v482, %v494
      %v503 = vadd.f32 %v483, %v495
      %v504 = vadd.f32 %v484, %v496
      %v505 = vadd.f32 %v485, %v497
      %v506 = vadd.f32 %v486, %v498
      %v507 = vadd.f32 %v487, %v499
      %v508 = vadd.f32 %v488, %v500
      %v509 = vadd.f32 %v489, %v501
      %v510 = vlaneseq
      %v511 = vshrl.u32 %v510, 7
      %v512 = vsub.s32 2, %v511
      %v513 = vrot.slane %v427, %v512
      %v514 = vmul.f32 %v468, %v513
      %v515 = vmul.f32 %v469, %v513
      %v516 = vmul.f32 %v470, %v513
      %v517 = vmul.f32 %v471, %v513
      %v518 = vmul.f32 %v472, %v513
      %v519 = vmul.f32 %v473, %v513
      %v520 = vmul.f32 %v474, %v513
      %v521 = vmul.f32 %v475, %v513
      %v522 = vadd.f32 %v502, %v514
      %v523 = vadd.f32 %v503, %v515
      %v524 = vadd.f32 %v504, %v516
      %v525 = vadd.f32 %v505, %v517
      %v526 = vadd.f32 %v506, %v518
      %v527 = vadd.f32 %v507, %v519
      %v528 = vadd.f32 %v508, %v520
      %v529 = vadd.f32 %v509, %v521
      %v530 = vlaneseq
      %v531 = vshrl.u32 %v530, 7
      %v532 = vsub.s32 0, %v531
      %v533 = vrot.slane %v428, %v532
      %v534 = vmul.f32 %v446, %v533
      %v535 = vmul.f32 %v447, %v533
      %v536 = vmul.f32 %v448, %v533
      %v537 = vmul.f32 %v449, %v533
      %v538 = vmul.f32 %v450, %v533
      %v539 = vmul.f32 %v451, %v533
      %v540 = vmul.f32 %v452, %v533
      %v541 = vmul.f32 %v453, %v533
      %v542 = vadd.f32 %v522, %v534
      %v543 = vadd.f32 %v523, %v535
      %v544 = vadd.f32 %v524, %v536
      %v545 = vadd.f32 %v525, %v537
      %v546 = vadd.f32 %v526, %v538
      %v547 = vadd.f32 %v527, %v539
      %v548 = vadd.f32 %v528, %v540
      %v549 = vadd.f32 %v529, %v541
      %v550 = vlaneseq
      %v551 = vshrl.u32 %v550, 7
      %v552 = vsub.s32 1, %v551
      %v553 = vrot.slane %v428, %v552
      %v554 = vmul.f32 %v404, %v553
      %v555 = vmul.f32 %v405, %v553
      %v556 = vmul.f32 %v406, %v553
      %v557 = vmul.f32 %v407, %v553
      %v558 = vmul.f32 %v408, %v553
      %v559 = vmul.f32 %v409, %v553
      %v560 = vmul.f32 %v410, %v553
      %v561 = vmul.f32 %v411, %v553
      %v562 = vadd.f32 %v542, %v554
      %v563 = vadd.f32 %v543, %v555
      %v564 = vadd.f32 %v544, %v556
      %v565 = vadd.f32 %v545, %v557
      %v566 = vadd.f32 %v546, %v558
      %v567 = vadd.f32 %v547, %v559
      %v568 = vadd.f32 %v548, %v560
      %v569 = vadd.f32 %v549, %v561
      %v570 = vlaneseq
      %v571 = vshrl.u32 %v570, 7
      %v572 = vsub.s32 2, %v571
      %v573 = vrot.slane %v428, %v572
      %v574 = vmul.f32 %v469, %v573
      %v575 = vmul.f32 %v470, %v573
      %v576 = vmul.f32 %v471, %v573
      %v577 = vmul.f32 %v472, %v573
      %v578 = vmul.f32 %v473, %v573
      %v579 = vmul.f32 %v474, %v573
      %v580 = vmul.f32 %v475, %v573
      %v581 = vmul.f32 %v476, %v573
      %v582 = vadd.f32 %v562, %v574
      %v583 = vadd.f32 %v563, %v575
      %v584 = vadd.f32 %v564, %v576
      %v585 = vadd.f32 %v565, %v577
      %v586 = vadd.f32 %v566, %v578
      %v587 = vadd.f32 %v567, %v579
      %v588 = vadd.f32 %v568, %v580
      %v589 = vadd.f32 %v569, %v581
      %v590 = vlaneseq
      %v591 = vshrl.u32 %v590, 7
      %v592 = vsub.s32 0, %v591
      %v593 = vrot.slane %v429, %v592
      %v594 = vmul.f32 %v447, %v593
      %v595 = vmul.f32 %v448, %v593
      %v596 = vmul.f32 %v449, %v593
      %v597 = vmul.f32 %v450, %v593
      %v598 = vmul.f32 %v451, %v593
      %v599 = vmul.f32 %v452, %v593
      %v600 = vmul.f32 %v453, %v593
      %v601 = vmul.f32 %v454, %v593
      %v602 = vadd.f32 %v582, %v594
      %v603 = vadd.f32 %v583, %v595
      %v604 = vadd.f32 %v584, %v596
      %v605 = vadd.f32 %v585, %v597
      %v606 = vadd.f32 %v586, %v598
      %v607 = vadd.f32 %v587, %v599
      %v608 = vadd.f32 %v588, %v600
      %v609 = vadd.f32 %v589, %v601
      %v610 = vlaneseq
      %v611 = vshrl.u32 %v610, 7
      %v612 = vsub.s32 1, %v611
      %v613 = vrot.slane %v429, %v612
      %v614 = vmul.f32 %v405, %v613
      %v615 = vmul.f32 %v406, %v613
      %v616 = vmul.f32 %v407, %v613
      %v617 = vmul.f32 %v408, %v613
      %v618 = vmul.f32 %v409, %v613
      %v619 = vmul.f32 %v410, %v613
      %v620 = vmul.f32 %v411, %v613
      %v621 = vmul.f32 %v426, %v613
      %v622 = vadd.f32 %v602, %v614
      %v623 = vadd.f32 %v603, %v615
      %v624 = vadd.f32 %v604, %v616
      %v625 = vadd.f32 %v605, %v617
      %v626 = vadd.f32 %v606, %v618
      %v627 = vadd.f32 %v607, %v619
      %v628 = vadd.f32 %v608, %v620
      %v629 = vadd.f32 %v609, %v621
      %v630 = vlaneseq
      %v631 = vshrl.u32 %v630, 7
      %v632 = vsub.s32 2, %v631
      %v633 = vrot.slane %v429, %v632
      %v634 = vmul.f32 %v470, %v633
      %v635 = vmul.f32 %v471, %v633
      %v636 = vmul.f32 %v472, %v633
      %v637 = vmul.f32 %v473, %v633
      %v638 = vmul.f32 %v474, %v633
      %v639 = vmul.f32 %v475, %v633
      %v640 = vmul.f32 %v476, %v633
      %v641 = vmul.f32 %v477, %v633
      %v642 = vadd.f32 %v622, %v634
      %v643 = vadd.f32 %v623, %v635
      %v644 = vadd.f32 %v624, %v636
      %v645 = vadd.f32 %v625, %v637
      %v646 = vadd.f32 %v626, %v638
      %v647 = vadd.f32 %v627, %v639
      %v648 = vadd.f32 %v628, %v640
      %v649 = vadd.f32 %v629, %v641
      %v650 = vmul.f32 %v642, 0.5
      %v651 = vmul.f32 %v643, 0.5
      %v652 = vmul.f32 %v644, 0.5
      %v653 = vmul.f32 %v645, 0.5
      %v654 = vmul.f32 %v646, 0.5
      %v655 = vmul.f32 %v647, 0.5
      %v656 = vmul.f32 %v648, 0.5
      %v657 = vmul.f32 %v649, 0.5
      %v658 = vmul.f32 %v642, 0.70710677
      %v659 = vmul.f32 %v643, 0.70710677
      %v660 = vmul.f32 %v644, 0.70710677
      %v661 = vmul.f32 %v645, 0.70710677
      %v662 = vmul.f32 %v646, 0.70710677
      %v663 = vmul.f32 %v647, 0.70710677
      %v664 = vmul.f32 %v648, 0.70710677
      %v665 = vmul.f32 %v649, 0.70710677
      %v666 = verf.f32.pop %v658
      %v667 = verf.f32.pop %v659
      %v668 = verf.f32.pop %v660
      %v669 = verf.f32.pop %v661
      %v670 = verf.f32.pop %v662
      %v671 = verf.f32.pop %v663
      %v672 = verf.f32.pop %v664
      %v673 = verf.f32.pop %v665
      %v674 = vadd.f32 %v666, 1.0
      %v675 = vadd.f32 %v667, 1.0
      %v676 = vadd.f32 %v668, 1.0
      %v677 = vadd.f32 %v669, 1.0
      %v678 = vadd.f32 %v670, 1.0
      %v679 = vadd.f32 %v671, 1.0
      %v680 = vadd.f32 %v672, 1.0
      %v681 = vadd.f32 %v673, 1.0
      %v682 = vmul.f32 %v650, %v674
      %v683 = vmul.f32 %v651, %v675
      %v684 = vmul.f32 %v652, %v676
      %v685 = vmul.f32 %v653, %v677
      %v686 = vmul.f32 %v654, %v678
      %v687 = vmul.f32 %v655, %v679
      %v688 = vmul.f32 %v656, %v680
      %v689 = vmul.f32 %v657, %v681
      %v690 = vpack.c.bf16 %v682, %v682
      %v691 = vpack.c.bf16 %v683, %v683
      %v692 = vpack.c.bf16 %v684, %v684
      %v693 = vpack.c.bf16 %v685, %v685
      %v694 = vpack.c.bf16 %v686, %v686
      %v695 = vpack.c.bf16 %v687, %v687
      %v696 = vpack.c.bf16 %v688, %v688
      %v697 = vpack.c.bf16 %v689, %v689
      %vm698 = vcmask 125952
      %699 = vst.msk [vmem:[%s353] sm:$0xf] %vm698, %v690
      %700 = vst.msk [vmem:[%s353 + $0x4] sm:$0xf] %vm698, %v691
      %701 = vst.msk [vmem:[%s353 + $0x8] sm:$0xf] %vm698, %v692
      %702 = vst.msk [vmem:[%s353 + $0xc] sm:$0xf] %vm698, %v693
      %703 = vst.msk [vmem:[%s353 + $0x10] sm:$0xf] %vm698, %v694
      %704 = vst.msk [vmem:[%s353 + $0x14] sm:$0xf] %vm698, %v695
      %705 = vst.msk [vmem:[%s353 + $0x18] sm:$0xf] %vm698, %v696
      %706 = vst.msk [vmem:[%s353 + $0x1c] sm:$0xf] %vm698, %v697
      %s707 = smul.u32 8, %s20
      %p708 = scmp.lt.s32.totalorder %s19, 1
      %s709 = scalar_select %p708, %s19, 1
      %p710 = scmp.lt.s32.totalorder %s707, 7
      %s711 = scalar_select %p710, %s707, 7
      %s712 = smul.addr %s709, 8
      %s713 = sadd.s32 %s711, %s712
      %s714 = smul.addr %s713, 4
      %s715 = scalar_lea.vmem %s4, %s714
      // Predicated region
      $region37: #{igab_forward.19} parent=35 // pred_check
        %p716 = pneg %p168
      $region38: #{igab_forward.19} parent=35 // pred_check_branch
        %718 = sbr.rel (%p716) target = $region40
      $region39: #{igab_forward.19} parent=35 // pred_region
        %s719 = smul.u32 8, %s20
      $region40: #{igab_forward.19} parent=35 // pred_fallthru
        _
    $region36: #{igab_forward.19} parent=5 // pred_fallthru
      _
    %p720 = scmp.le.s32.totalorder 2, %s10
    // Predicated region
    $region41: #{igab_forward.19} parent=5 // pred_check
      %p721 = pneg %p720
    $region42: #{igab_forward.19} parent=5 // pred_check_branch
      %723 = sbr.rel (%p721) target = $region44
    $region43: #{igab_forward.19} parent=5 // pred_region
      %s724 = ssub.s32 %s10, 2
      // Predicated region
      $region45: #{igab_forward.19} parent=43 // pred_check
        %p725 = pneg %p174
      $region46: #{igab_forward.19} parent=43 // pred_check_branch
        %727 = sbr.rel (%p725) target = $region48
      $region47: #{igab_forward.19} parent=43 // pred_region
        %s728 = smul.u32 8, %s22
        %p729 = scmp.lt.s32.totalorder %s21, 1
        %s730 = scalar_select %p729, %s21, 1
        %p731 = scmp.lt.s32.totalorder %s728, 7
        %s732 = scalar_select %p731, %s728, 7
        %s733 = smul.addr %s730, 8
        %s734 = sadd.s32 %s732, %s733
        %s735 = smul.addr %s734, 4
        %s736 = scalar_lea.vmem %s4, %s735
      $region48: #{igab_forward.19} parent=43 // pred_fallthru
        _
    $region44: #{igab_forward.19} parent=5 // pred_fallthru
      _
  $region6: #{igab_forward.19} parent=0 // loop_footer
    %s14 = sadd.s32 1, %s10
  $region7: #{igab_forward.19} parent=0 // loop_footer_branch
    %9 = sbr.rel target = $region3
  $region8: #{igab_forward.19} parent=0 // loop_exit
    _

// kernel: igab_forward.22
$region0: #{igab_forward.22}
  #allocation0 [shape = 'u32[]', space=smem, size = 0x4, offset = 0x4, fixed_abs, tag = 'smem constant byte address 0x4 - core index']
  #allocation1 [shape = 'u32[144,128]{1,0:T(1,128)}', space=vmem, size = 0x12000, scoped, tag = 'internal scratch']
  %s0 = inlined_call_operand.vmem [shape: bf16[2,64,16], index: 0, kind: input, shape index: {}]
  %s1 = inlined_call_operand.vmem [shape: bf16[2,64,16], index: 1, kind: input, shape index: {}]
  %s2 = inlined_call_operand.vmem [shape: f32[2,16,16], index: 2, kind: input, shape index: {}]
  %s3 = inlined_call_operand.vmem [shape: f32[1,16], index: 3, kind: input, shape index: {}]
  %s4 = inlined_call_operand.vmem [shape: f32[2,64,16], index: 4, kind: input, shape index: {}]
  %s5 = inlined_call_operand.vmem [shape: f32[2,64,16], index: 5, kind: output, shape index: {0}]
  %s6 = inlined_call_operand.vmem [shape: f32[2,2,16], index: 6, kind: output, shape index: {1}]
  %7 = xla_tuple %s5, %s6
  %s8 = sld [smem:[#allocation0]]
  $region65: #{igab_forward.22} parent=0
    _
  %s10 = ssub.s32 1, %s8
  %s11 = scalar_select 0, %s10, %s8
  loop: start=0, step=1, limit=4
  $region2: #{igab_forward.22} parent=0 // loop_pre_header
    _
  $region3: #{igab_forward.22} parent=0 // loop_header
    %s13 = sphi 0, %s17
    %p14 = scmp.ge.s32.totalorder %s13, 4
    %s20 = sphi 0, %s32
    %s21 = sphi 0, %s28
    %s22 = sphi 0, %s20
    %s23 = sphi 0, %s21
    %s24 = sphi 0, %s22
    %s25 = sphi 0, %s23
    %s37 = sphi 0, %s39
    %s40 = sphi 0, %s37
    %s41 = sphi 0, %s40
    %s57 = sphi 0, %s41
    %s65 = sphi 0, %s67
    %s68 = sphi 0, %s65
    %s69 = sphi 0, %s68
    %s85 = sphi 0, %s69
    %s91 = sphi 0, %s93
    %s94 = sphi 0, %s91
    %s95 = sphi 0, %s94
    %s111 = sphi 0, %s95
    %s115 = sphi 0, %s115
    %s117 = sphi 0, %s115
    %s118 = sphi 0, %s117
    %s132 = sphi 0, %s118
    %s140 = sphi 0, %s142
    %s143 = sphi 0, %s140
    %s144 = sphi 0, %s143
    %s160 = sphi 0, %s144
    %s168 = sphi 0, %s170
    %s171 = sphi 0, %s168
    %s172 = sphi 0, %s171
    %s188 = sphi 0, %s172
    %s194 = sphi 0, %s196
    %s197 = sphi 0, %s194
    %s198 = sphi 0, %s197
    %s214 = sphi 0, %s198
  $region4: #{igab_forward.22} parent=0 // loop_header_branch
    %16 = sbr.rel (%p14) target = $region8
  $region5: #{igab_forward.22} parent=0 // loop_body
    %s18 = ssub.s32 %s13, 1
    %s19 = ssub.s32 %s13, 2
    %s26 = sadd.s32 1, %s21
    %p27 = scmp.ge.s32.totalorder %s26, 1
    %s28 = scalar_select %p27, 0, %s26
    %s29 = sadd.s32 1, %s20
    %s30 = scalar_select %p27, %s29, %s20
    %p31 = scmp.ge.s32.totalorder %s30, 2
    %s32 = scalar_select %p31, 0, %s30
    %s33 = ssub.s32 %s20, %s32
    %s34 = ssub.s32 %s21, %s28
    %s35 = sor.u32 %s33, %s34
    %p36 = scmp.eq.s32.totalorder %s35, 0
    %s38 = sadd.s32 %s37, 1
    %s39 = scalar_select %p36, %s37, %s38
    %p42 = pneg %p36
    %p43 = scmp.eq.s32.totalorder %s13, 1
    %p44 = por %p42, %p43
    %p45 = scmp.ne.s32.totalorder %s37, %s40
    %p46 = scmp.eq.s32.totalorder %s13, 0
    %p47 = por %p45, %p46
    %p48 = scmp.ne.s32.totalorder %s37, %s40
    %p49 = scmp.eq.s32.totalorder %s18, 1
    %p50 = por %p48, %p49
    %p51 = scmp.ne.s32.totalorder %s40, %s41
    %p52 = scmp.eq.s32.totalorder %s18, 0
    %p53 = por %p51, %p52
    %p54 = scmp.ne.s32.totalorder %s40, %s41
    %p55 = scmp.eq.s32.totalorder %s19, 1
    %p56 = por %p54, %p55
    %p58 = scmp.ne.s32.totalorder %s41, %s57
    %p59 = scmp.eq.s32.totalorder %s19, 0
    %p60 = por %p58, %p59
    %s61 = ssub.s32 %s20, %s32
    %s62 = ssub.s32 %s21, %s28
    %s63 = sor.u32 %s61, %s62
    %p64 = scmp.eq.s32.totalorder %s63, 0
    %s66 = sadd.s32 %s65, 1
    %s67 = scalar_select %p64, %s65, %s66
    %p70 = pneg %p64
    %p71 = scmp.eq.s32.totalorder %s13, 1
    %p72 = por %p70, %p71
    %p73 = scmp.ne.s32.totalorder %s65, %s68
    %p74 = scmp.eq.s32.totalorder %s13, 0
    %p75 = por %p73, %p74
    %p76 = scmp.ne.s32.totalorder %s65, %s68
    %p77 = scmp.eq.s32.totalorder %s18, 1
    %p78 = por %p76, %p77
    %p79 = scmp.ne.s32.totalorder %s68, %s69
    %p80 = scmp.eq.s32.totalorder %s18, 0
    %p81 = por %p79, %p80
    %p82 = scmp.ne.s32.totalorder %s68, %s69
    %p83 = scmp.eq.s32.totalorder %s19, 1
    %p84 = por %p82, %p83
    %p86 = scmp.ne.s32.totalorder %s69, %s85
    %p87 = scmp.eq.s32.totalorder %s19, 0
    %p88 = por %p86, %p87
    %s89 = ssub.s32 %s20, %s32
    %p90 = scmp.eq.s32.totalorder %s89, 0
    %s92 = sadd.s32 %s91, 1
    %s93 = scalar_select %p90, %s91, %s92
    %p96 = pneg %p90
    %p97 = scmp.eq.s32.totalorder %s13, 1
    %p98 = por %p96, %p97
    %p99 = scmp.ne.s32.totalorder %s91, %s94
    %p100 = scmp.eq.s32.totalorder %s13, 0
    %p101 = por %p99, %p100
    %p102 = scmp.ne.s32.totalorder %s91, %s94
    %p103 = scmp.eq.s32.totalorder %s18, 1
    %p104 = por %p102, %p103
    %p105 = scmp.ne.s32.totalorder %s94, %s95
    %p106 = scmp.eq.s32.totalorder %s18, 0
    %p107 = por %p105, %p106
    %p108 = scmp.ne.s32.totalorder %s94, %s95
    %p109 = scmp.eq.s32.totalorder %s19, 1
    %p110 = por %p108, %p109
    %p112 = scmp.ne.s32.totalorder %s95, %s111
    %p113 = scmp.eq.s32.totalorder %s19, 0
    %p114 = por %p112, %p113
    %s116 = sadd.s32 %s115, 1
    %p119 = scmp.eq.s32.totalorder %s13, 1
    %p120 = scmp.ne.s32.totalorder %s115, %s117
    %p121 = scmp.eq.s32.totalorder %s13, 0
    %p122 = por %p120, %p121
    %p123 = scmp.ne.s32.totalorder %s115, %s117
    %p124 = scmp.eq.s32.totalorder %s18, 1
    %p125 = por %p123, %p124
    %p126 = scmp.ne.s32.totalorder %s117, %s118
    %p127 = scmp.eq.s32.totalorder %s18, 0
    %p128 = por %p126, %p127
    %p129 = scmp.ne.s32.totalorder %s117, %s118
    %p130 = scmp.eq.s32.totalorder %s19, 1
    %p131 = por %p129, %p130
    %p133 = scmp.ne.s32.totalorder %s118, %s132
    %p134 = scmp.eq.s32.totalorder %s19, 0
    %p135 = por %p133, %p134
    %s136 = ssub.s32 %s20, %s32
    %s137 = ssub.s32 %s21, %s28
    %s138 = sor.u32 %s136, %s137
    %p139 = scmp.eq.s32.totalorder %s138, 0
    %s141 = sadd.s32 %s140, 1
    %s142 = scalar_select %p139, %s140, %s141
    %p145 = pneg %p139
    %p146 = scmp.eq.s32.totalorder %s13, 1
    %p147 = por %p145, %p146
    %p148 = scmp.ne.s32.totalorder %s140, %s143
    %p149 = scmp.eq.s32.totalorder %s13, 0
    %p150 = por %p148, %p149
    %p151 = scmp.ne.s32.totalorder %s140, %s143
    %p152 = scmp.eq.s32.totalorder %s18, 1
    %p153 = por %p151, %p152
    %p154 = scmp.ne.s32.totalorder %s143, %s144
    %p155 = scmp.eq.s32.totalorder %s18, 0
    %p156 = por %p154, %p155
    %p157 = scmp.ne.s32.totalorder %s143, %s144
    %p158 = scmp.eq.s32.totalorder %s19, 1
    %p159 = por %p157, %p158
    %p161 = scmp.ne.s32.totalorder %s144, %s160
    %p162 = scmp.eq.s32.totalorder %s19, 0
    %p163 = por %p161, %p162
    %s164 = ssub.s32 %s20, %s32
    %s165 = ssub.s32 %s21, %s28
    %s166 = sor.u32 %s164, %s165
    %p167 = scmp.eq.s32.totalorder %s166, 0
    %s169 = sadd.s32 %s168, 1
    %s170 = scalar_select %p167, %s168, %s169
    %p173 = pneg %p167
    %p174 = scmp.eq.s32.totalorder %s13, 1
    %p175 = por %p173, %p174
    %p176 = scmp.ne.s32.totalorder %s168, %s171
    %p177 = scmp.eq.s32.totalorder %s13, 0
    %p178 = por %p176, %p177
    %p179 = scmp.ne.s32.totalorder %s168, %s171
    %p180 = scmp.eq.s32.totalorder %s18, 1
    %p181 = por %p179, %p180
    %p182 = scmp.ne.s32.totalorder %s171, %s172
    %p183 = scmp.eq.s32.totalorder %s18, 0
    %p184 = por %p182, %p183
    %p185 = scmp.ne.s32.totalorder %s171, %s172
    %p186 = scmp.eq.s32.totalorder %s19, 1
    %p187 = por %p185, %p186
    %p189 = scmp.ne.s32.totalorder %s172, %s188
    %p190 = scmp.eq.s32.totalorder %s19, 0
    %p191 = por %p189, %p190
    %s192 = ssub.s32 %s20, %s32
    %p193 = scmp.eq.s32.totalorder %s192, 0
    %s195 = sadd.s32 %s194, 1
    %s196 = scalar_select %p193, %s194, %s195
    %p199 = pneg %p193
    %p200 = scmp.eq.s32.totalorder %s13, 1
    %p201 = por %p199, %p200
    %p202 = scmp.ne.s32.totalorder %s194, %s197
    %p203 = scmp.eq.s32.totalorder %s13, 0
    %p204 = por %p202, %p203
    %p205 = scmp.ne.s32.totalorder %s194, %s197
    %p206 = scmp.eq.s32.totalorder %s18, 1
    %p207 = por %p205, %p206
    %p208 = scmp.ne.s32.totalorder %s197, %s198
    %p209 = scmp.eq.s32.totalorder %s18, 0
    %p210 = por %p208, %p209
    %p211 = scmp.ne.s32.totalorder %s197, %s198
    %p212 = scmp.eq.s32.totalorder %s19, 1
    %p213 = por %p211, %p212
    %p215 = scmp.ne.s32.totalorder %s198, %s214
    %p216 = scmp.eq.s32.totalorder %s19, 0
    %p217 = por %p215, %p216
    %p218 = scmp.le.s32.totalorder 1, %s13
    %p219 = scmp.lt.s32.totalorder %s13, 3
    %p220 = pnand %p218, %p219
    %p221 = pneg %p220
    // Predicated region
    $region9: #{igab_forward.22} parent=5 // pred_check
      _
    $region10: #{igab_forward.22} parent=5 // pred_check_branch
      %223 = sbr.rel (%p220) target = $region12
    $region11: #{igab_forward.22} parent=5 // pred_region
      %s224 = ssub.s32 %s13, 1
      // Predicated region
      $region13: #{igab_forward.22} parent=11 // pred_check
        %p225 = pneg %p128
      $region14: #{igab_forward.22} parent=11 // pred_check_branch
        %227 = sbr.rel (%p225) target = $region16
      $region15: #{igab_forward.22} parent=11 // pred_region
        _
      $region16: #{igab_forward.22} parent=11 // pred_fallthru
        _
    $region12: #{igab_forward.22} parent=5 // pred_fallthru
      _
    %p228 = scmp.lt.s32.totalorder %s13, 2
    // Predicated region
    $region17: #{igab_forward.22} parent=5 // pred_check
      %p229 = pneg %p228
    $region18: #{igab_forward.22} parent=5 // pred_check_branch
      %231 = sbr.rel (%p229) target = $region20
    $region19: #{igab_forward.22} parent=5 // pred_region
      // Predicated region
      $region21: #{igab_forward.22} parent=19 // pred_check
        %p232 = pneg %p47
      $region22: #{igab_forward.22} parent=19 // pred_check_branch
        %234 = sbr.rel (%p232) target = $region24
      $region23: #{igab_forward.22} parent=19 // pred_region
        %s235 = smul.u32 8, %s21
        %p236 = scmp.lt.s32.totalorder %s20, 1
        %s237 = scalar_select %p236, %s20, 1
        %p238 = scmp.lt.s32.totalorder %s235, 7
        %s239 = scalar_select %p238, %s235, 7
        %s240 = smul.addr %s237, 8
        %s241 = sadd.s32 %s239, %s240
        %s242 = smul.addr %s241, 4
        %s243 = scalar_lea.vmem %s0, %s242
        %s244 = smul.u32 8, %s21
      $region24: #{igab_forward.22} parent=19 // pred_fallthru
        _
      // Predicated region
      $region25: #{igab_forward.22} parent=19 // pred_check
        %p245 = pneg %p75
      $region26: #{igab_forward.22} parent=19 // pred_check_branch
        %247 = sbr.rel (%p245) target = $region28
      $region27: #{igab_forward.22} parent=19 // pred_region
        %s248 = smul.u32 8, %s21
        %p249 = scmp.lt.s32.totalorder %s20, 1
        %s250 = scalar_select %p249, %s20, 1
        %p251 = scmp.lt.s32.totalorder %s248, 7
        %s252 = scalar_select %p251, %s248, 7
        %s253 = smul.addr %s250, 8
        %s254 = sadd.s32 %s252, %s253
        %s255 = smul.addr %s254, 4
        %s256 = scalar_lea.vmem %s1, %s255
        %s257 = smul.u32 8, %s21
      $region28: #{igab_forward.22} parent=19 // pred_fallthru
        _
      // Predicated region
      $region29: #{igab_forward.22} parent=19 // pred_check
        %p258 = pneg %p101
      $region30: #{igab_forward.22} parent=19 // pred_check_branch
        %260 = sbr.rel (%p258) target = $region32
      $region31: #{igab_forward.22} parent=19 // pred_region
        %p261 = scmp.lt.s32.totalorder %s20, 1
        %s262 = scalar_select %p261, %s20, 1
        %s263 = smul.addr %s262, 2
        %s264 = smul.addr %s263, 8
        %s265 = scalar_lea.vmem %s2, %s264
      $region32: #{igab_forward.22} parent=19 // pred_fallthru
        _
      // Predicated region
      $region33: #{igab_forward.22} parent=19 // pred_check
        %p266 = pneg %p150
      $region34: #{igab_forward.22} parent=19 // pred_check_branch
        %268 = sbr.rel (%p266) target = $region36
      $region35: #{igab_forward.22} parent=19 // pred_region
        %s269 = smul.u32 8, %s21
        %p270 = scmp.lt.s32.totalorder %s20, 1
        %s271 = scalar_select %p270, %s20, 1
        %p272 = scmp.lt.s32.totalorder %s269, 7
        %s273 = scalar_select %p272, %s269, 7
        %s274 = smul.addr %s271, 8
        %s275 = sadd.s32 %s273, %s274
        %s276 = smul.addr %s275, 8
        %s277 = scalar_lea.vmem %s4, %s276
        %s278 = smul.u32 8, %s21
      $region36: #{igab_forward.22} parent=19 // pred_fallthru
        _
    $region20: #{igab_forward.22} parent=5 // pred_fallthru
      _
    %p279 = scmp.le.s32.totalorder 1, %s13
    %p280 = scmp.lt.s32.totalorder %s13, 3
    %p281 = pnand %p279, %p280
    %p282 = pneg %p281
    // Predicated region
    $region37: #{igab_forward.22} parent=5 // pred_check
      _
    $region38: #{igab_forward.22} parent=5 // pred_check_branch
      %284 = sbr.rel (%p281) target = $region40
    $region39: #{igab_forward.22} parent=5 // pred_region
      %s285 = ssub.s32 %s13, 1
      %s286 = smul.u32 8, %s23
      %p287 = scmp.lt.s32.totalorder %s22, 1
      %s288 = scalar_select %p287, %s22, 1
      %p289 = scmp.lt.s32.totalorder %s286, 7
      %s290 = scalar_select %p289, %s286, 7
      %s291 = smul.addr %s288, 8
      %s292 = sadd.s32 %s290, %s291
      %s293 = smul.addr %s292, 4
      %s294 = scalar_lea.vmem %s0, %s293
      %p295 = pneg %p53
      %p296 = pneg %p50
      %s297 = smul.u32 8, %s23
      %p298 = scmp.lt.s32.totalorder %s22, 1
      %s299 = scalar_select %p298, %s22, 1
      %p300 = scmp.lt.s32.totalorder %s297, 7
      %s301 = scalar_select %p300, %s297, 7
      %s302 = smul.addr %s299, 8
      %s303 = sadd.s32 %s301, %s302
      %s304 = smul.addr %s303, 4
      %s305 = scalar_lea.vmem %s1, %s304
      %p306 = pneg %p81
      %p307 = pneg %p78
      %p308 = scmp.lt.s32.totalorder %s22, 1
      %s309 = scalar_select %p308, %s22, 1
      %s310 = smul.addr %s309, 2
      %s311 = smul.addr %s310, 8
      %s312 = scalar_lea.vmem %s2, %s311
      %p313 = pneg %p107
      %p314 = pneg %p104
      %p315 = pneg %p128
      %p316 = pneg %p125
      %s317 = smul.u32 8, %s23
      %p318 = scmp.lt.s32.totalorder %s22, 1
      %s319 = scalar_select %p318, %s22, 1
      %p320 = scmp.lt.s32.totalorder %s317, 7
      %s321 = scalar_select %p320, %s317, 7
      %s322 = smul.addr %s319, 8
      %s323 = sadd.s32 %s321, %s322
      %s324 = smul.addr %s323, 8
      %s325 = scalar_lea.vmem %s4, %s324
      %p326 = pneg %p156
      %p327 = pneg %p153
      %p328 = pneg %p184
      %p329 = pneg %p181
      %s330 = smul.u32 8, %s23
      %p331 = scmp.lt.s32.totalorder %s22, 1
      %s332 = scalar_select %p331, %s22, 1
      %p333 = scmp.lt.s32.totalorder %s330, 7
      %s334 = scalar_select %p333, %s330, 7
      %s335 = smul.addr %s332, 8
      %s336 = sadd.s32 %s334, %s335
      %s337 = smul.addr %s336, 8
      %s338 = scalar_lea.vmem %s5, %s337
      %p339 = pneg %p210
      %p340 = pneg %p207
      %p341 = scmp.lt.s32.totalorder %s22, 1
      %s342 = scalar_select %p341, %s22, 1
      %s343 = smul.addr %s342, 2
      %s344 = scalar_lea.vmem %s6, %s343
      %s345 = smul.u32 8, %s23
      %p346 = scmp.lt.s32.totalorder %s22, 1
      %s347 = scalar_select %p346, %s22, 1
      %p348 = scmp.lt.s32.totalorder %s345, 7
      %s349 = scalar_select %p348, %s345, 7
      %s350 = smul.addr %s347, 8
      %s351 = sadd.s32 %s349, %s350
      %s352 = smul.addr %s351, 4
      %s353 = scalar_lea.vmem %s0, %s352
      %s354 = smul.u32 8, %s23
      %s355 = smul.u32 8, %s23
      %p356 = scmp.lt.s32.totalorder %s22, 1
      %s357 = scalar_select %p356, %s22, 1
      %p358 = scmp.lt.s32.totalorder %s355, 7
      %s359 = scalar_select %p358, %s355, 7
      %s360 = smul.addr %s357, 8
      %s361 = sadd.s32 %s359, %s360
      %s362 = smul.addr %s361, 4
      %s363 = scalar_lea.vmem %s1, %s362
      %s364 = smul.u32 8, %s23
      %p365 = scmp.lt.s32.totalorder %s22, 1
      %s366 = scalar_select %p365, %s22, 1
      %s367 = smul.addr %s366, 2
      %s368 = smul.addr %s367, 8
      %s369 = scalar_lea.vmem %s2, %s368
      %s370 = smul.u32 8, %s23
      %p371 = scmp.lt.s32.totalorder %s22, 1
      %s372 = scalar_select %p371, %s22, 1
      %p373 = scmp.lt.s32.totalorder %s370, 7
      %s374 = scalar_select %p373, %s370, 7
      %s375 = smul.addr %s372, 8
      %s376 = sadd.s32 %s374, %s375
      %s377 = smul.addr %s376, 8
      %s378 = scalar_lea.vmem %s4, %s377
      %s379 = smul.u32 8, %s23
      %s380 = smul.u32 8, %s23
      %p381 = scmp.lt.s32.totalorder %s22, 1
      %s382 = scalar_select %p381, %s22, 1
      %p383 = scmp.lt.s32.totalorder %s380, 7
      %s384 = scalar_select %p383, %s380, 7
      %s385 = smul.addr %s382, 8
      %s386 = sadd.s32 %s384, %s385
      %s387 = smul.addr %s386, 8
      %s388 = scalar_lea.vmem %s5, %s387
      %s389 = smul.u32 8, %s23
      %p390 = scmp.lt.s32.totalorder %s22, 1
      %s391 = scalar_select %p390, %s22, 1
      %s392 = smul.addr %s391, 2
      %s393 = scalar_lea.vmem %s6, %s392
      %v395 = vld [vmem:[%s353] sm:$0xf]
      %v396 = vld [vmem:[%s353 + $0x4] sm:$0xf]
      %v397 = vld [vmem:[%s353 + $0x8] sm:$0xf]
      %v398 = vld [vmem:[%s353 + $0xc] sm:$0xf]
      %v399 = vld [vmem:[%s353 + $0x10] sm:$0xf]
      %v400 = vld [vmem:[%s353 + $0x14] sm:$0xf]
      %v401 = vld [vmem:[%s353 + $0x18] sm:$0xf]
      %v402 = vld [vmem:[%s353 + $0x1c] sm:$0xf]
      %v403 = vunpack.c.l.bf16 %v395
      %v404 = vunpack.c.l.bf16 %v396
      %v405 = vunpack.c.l.bf16 %v397
      %v406 = vunpack.c.l.bf16 %v398
      %v407 = vunpack.c.l.bf16 %v399
      %v408 = vunpack.c.l.bf16 %v400
      %v409 = vunpack.c.l.bf16 %v401
      %v410 = vunpack.c.l.bf16 %v402
      %v411 = vld [vmem:[%s363] sm:$0xf]
      %v412 = vld [vmem:[%s363 + $0x4] sm:$0xf]
      %v413 = vld [vmem:[%s363 + $0x8] sm:$0xf]
      %v414 = vld [vmem:[%s363 + $0xc] sm:$0xf]
      %v415 = vld [vmem:[%s363 + $0x10] sm:$0xf]
      %v416 = vld [vmem:[%s363 + $0x14] sm:$0xf]
      %v417 = vld [vmem:[%s363 + $0x18] sm:$0xf]
      %v418 = vld [vmem:[%s363 + $0x1c] sm:$0xf]
      %v419 = vunpack.c.l.bf16 %v411
      %v420 = vunpack.c.l.bf16 %v412
      %v421 = vunpack.c.l.bf16 %v413
      %v422 = vunpack.c.l.bf16 %v414
      %v423 = vunpack.c.l.bf16 %v415
      %v424 = vunpack.c.l.bf16 %v416
      %v425 = vunpack.c.l.bf16 %v417
      %v426 = vunpack.c.l.bf16 %v418
      %v427 = vmul.f32 %v403, %v419
      %v428 = vmul.f32 %v404, %v420
      %v429 = vmul.f32 %v405, %v421
      %v430 = vmul.f32 %v406, %v422
      %v431 = vmul.f32 %v407, %v423
      %v432 = vmul.f32 %v408, %v424
      %v433 = vmul.f32 %v409, %v425
      %v434 = vmul.f32 %v410, %v426
      %v435 = vpack.c.bf16 %v428, %v427
      %v436 = vpack.c.bf16 %v430, %v429
      %v437 = vpack.c.bf16 %v432, %v431
      %v438 = vpack.c.bf16 %v434, %v433
      %v439 = vld [vmem:[%s369] sm:$0xff]
      %v440 = vld [vmem:[%s369 + $0x8] sm:$0xff]
      %v441 = vpack.c.bf16 %v440, %v439
      %v442 = vld [vmem:[%s3] sm:$0x1]
      %v444 = vlaneseq
      %v445 = vshrl.u32 %v444, 7
      %v446 = vsub.s32 0, %v445
      %v447 = vrot.slane %v442, %v446
      %vm449 = vcmask 130048
      %v451 = vsel %vm449, %v435, 0
      %v454 = vsel %vm449, %v436, 0
      %v457 = vsel %vm449, %v437, 0
      %v460 = vsel %vm449, %v438, 0
      %462 = vmatprep.subr.bf16.mxu0 0
      %463 = vmatpush1.bf16.msra.mxu0 %v441
      %464 = vmatprep.subr.bf16.mxu0 0
      %465 = vmatpush1.bf16.msra.mxu0 0
      %466 = vmatprep.subr.bf16.mxu0 0
      %467 = vmatpush1.bf16.msra.mxu0 0
      %468 = vmatprep.subr.bf16.mxu0 0
      %469 = vmatpush1.bf16.msra.mxu0 0
      %470 = vmatprep.subr.bf16.mxu0 0
      %471 = vmatpush1.bf16.msra.mxu0 0
      %472 = vmatprep.subr.bf16.mxu0 0
      %473 = vmatpush1.bf16.msra.mxu0 0
      %474 = vmatprep.subr.bf16.mxu0 0
      %475 = vmatpush1.bf16.msra.mxu0 0
      %476 = vmatprep.subr.bf16.mxu0 0
      %477 = vmatpush1.bf16.msra.mxu0 0
      %478 = vmatprep.subr.bf16.mxu0 0
      %479 = vmatpush1.bf16.msra.mxu0 0
      %480 = vmatprep.subr.bf16.mxu0 0
      %481 = vmatpush1.bf16.msra.mxu0 0
      %482 = vmatprep.subr.bf16.mxu0 0
      %483 = vmatpush1.bf16.msra.mxu0 0
      %484 = vmatprep.subr.bf16.mxu0 0
      %485 = vmatpush1.bf16.msra.mxu0 0
      %486 = vmatprep.subr.bf16.mxu0 0
      %487 = vmatpush1.bf16.msra.mxu0 0
      %488 = vmatprep.subr.bf16.mxu0 0
      %489 = vmatpush1.bf16.msra.mxu0 0
      %490 = vmatprep.subr.bf16.mxu0 0
      %491 = vmatpush1.bf16.msra.mxu0 0
      %492 = vmatprep.subr.bf16.mxu0 0
      %493 = vmatpush1.bf16.msra.mxu0 0
      %494 = vmatprep.mubr.bf16.mxu0 0
      %495 = vmatmul.mubr.bf16.gmra.mrb[0].mxu0 %v451
      %v496 = vpop.f32.mrb[0].mxu0
      %v497 = vadd.f32 %v447, %v496
      %v498 = vpop.f32.mrb[0].mxu0
      %v499 = vpop.f32.mrb[0].mxu0
      %v500 = vadd.f32 %v447, %v499
      %v501 = vpop.f32.mrb[0].mxu0
      %502 = vmatprep.mubr.bf16.mxu0 0
      %503 = vmatmul.mubr.bf16.gmra.mrb[0].mxu0 %v454
      %v504 = vpop.f32.mrb[0].mxu0
      %v505 = vadd.f32 %v447, %v504
      %v506 = vpop.f32.mrb[0].mxu0
      %v507 = vpop.f32.mrb[0].mxu0
      %v508 = vadd.f32 %v447, %v507
      %v509 = vpop.f32.mrb[0].mxu0
      %510 = vmatprep.mubr.bf16.mxu0 0
      %511 = vmatmul.mubr.bf16.gmra.mrb[0].mxu0 %v457
      %v512 = vpop.f32.mrb[0].mxu0
      %v513 = vadd.f32 %v447, %v512
      %v514 = vpop.f32.mrb[0].mxu0
      %v515 = vpop.f32.mrb[0].mxu0
      %v516 = vadd.f32 %v447, %v515
      %v517 = vpop.f32.mrb[0].mxu0
      %518 = vmatprep.mubr.bf16.mxu0 0
      %519 = vmatmul.mubr.bf16.gmra.mrb[0].mxu0 %v460
      %v520 = vpop.f32.mrb[0].mxu0
      %v521 = vadd.f32 %v447, %v520
      %v522 = vpop.f32.mrb[0].mxu0
      %v523 = vpop.f32.mrb[0].mxu0
      %v524 = vadd.f32 %v447, %v523
      %v525 = vpop.f32.mrb[0].mxu0
      %526 = vdwg.mxu0
      %v527 = vld [vmem:[%s378] sm:$0xff]
      %v528 = vld [vmem:[%s378 + $0x8] sm:$0xff]
      %v529 = vld [vmem:[%s378 + $0x10] sm:$0xff]
      %v530 = vld [vmem:[%s378 + $0x18] sm:$0xff]
      %v531 = vld [vmem:[%s378 + $0x20] sm:$0xff]
      %v532 = vld [vmem:[%s378 + $0x28] sm:$0xff]
      %v533 = vld [vmem:[%s378 + $0x30] sm:$0xff]
      %v534 = vld [vmem:[%s378 + $0x38] sm:$0xff]
      %v535 = vadd.f32 %v497, %v527
      %v536 = vadd.f32 %v500, %v528
      %v537 = vadd.f32 %v505, %v529
      %v538 = vadd.f32 %v508, %v530
      %v539 = vadd.f32 %v513, %v531
      %v540 = vadd.f32 %v516, %v532
      %v541 = vadd.f32 %v521, %v533
      %v542 = vadd.f32 %v524, %v534
      %543 = vst.msk [vmem:[%s388] sm:$0xff] %vm449, %v535
      %544 = vst.msk [vmem:[%s388 + $0x8] sm:$0xff] %vm449, %v536
      %545 = vst.msk [vmem:[%s388 + $0x10] sm:$0xff] %vm449, %v537
      %546 = vst.msk [vmem:[%s388 + $0x18] sm:$0xff] %vm449, %v538
      %547 = vst.msk [vmem:[%s388 + $0x20] sm:$0xff] %vm449, %v539
      %548 = vst.msk [vmem:[%s388 + $0x28] sm:$0xff] %vm449, %v540
      %549 = vst.msk [vmem:[%s388 + $0x30] sm:$0xff] %vm449, %v541
      %550 = vst.msk [vmem:[%s388 + $0x38] sm:$0xff] %vm449, %v542
      %v551 = vlaneseq
      %v552 = vshrl.u32 %v551, 7
      %v553 = vadd.s32 %v552, 8
      %v554 = vadd.s32 %v552, 16
      %v555 = vadd.s32 %v552, 24
      %v556 = vadd.s32 %v552, 32
      %v557 = vadd.s32 %v552, 40
      %v558 = vadd.s32 %v552, 48
      %v559 = vadd.s32 %v552, 56
      %s560 = smul.u32 %s23, 64
      %v561 = vstv %s560
      %v562 = vadd.s32 %v552, %v561
      %v563 = vadd.s32 %v553, %v561
      %v564 = vadd.s32 %v554, %v561
      %v565 = vadd.s32 %v555, %v561
      %v566 = vadd.s32 %v556, %v561
      %v567 = vadd.s32 %v557, %v561
      %v568 = vadd.s32 %v558, %v561
      %v569 = vadd.s32 %v559, %v561
      %vm570 = vcmp.lt.s32.totalorder %v562, 64
      %vm571 = vcmp.lt.s32.totalorder %v563, 64
      %vm572 = vcmp.lt.s32.totalorder %v564, 64
      %vm573 = vcmp.lt.s32.totalorder %v565, 64
      %vm574 = vcmp.lt.s32.totalorder %v566, 64
      %vm575 = vcmp.lt.s32.totalorder %v567, 64
      %vm576 = vcmp.lt.s32.totalorder %v568, 64
      %vm577 = vcmp.lt.s32.totalorder %v569, 64
      %v578 = vsel %vm570, 1, 0
      %v579 = vsel %vm571, 1, 0
      %v580 = vsel %vm572, 1, 0
      %v581 = vsel %vm573, 1, 0
      %v582 = vsel %vm574, 1, 0
      %v583 = vsel %vm575, 1, 0
      %v584 = vsel %vm576, 1, 0
      %v585 = vsel %vm577, 1, 0
      %vm586 = vcmp.eq.s32.totalorder %v578, 1
      %vm587 = vcmp.eq.s32.totalorder %v579, 1
      %vm588 = vcmp.eq.s32.totalorder %v580, 1
      %vm589 = vcmp.eq.s32.totalorder %v581, 1
      %vm590 = vcmp.eq.s32.totalorder %v582, 1
      %vm591 = vcmp.eq.s32.totalorder %v583, 1
      %vm592 = vcmp.eq.s32.totalorder %v584, 1
      %vm593 = vcmp.eq.s32.totalorder %v585, 1
      %v594 = vsel %vm586, %v535, 0.0
      %v595 = vsel %vm587, %v536, 0.0
      %v596 = vsel %vm588, %v537, 0.0
      %v597 = vsel %vm589, %v538, 0.0
      %v598 = vsel %vm590, %v539, 0.0
      %v599 = vsel %vm591, %v540, 0.0
      %v600 = vsel %vm592, %v541, 0.0
      %v601 = vsel %vm593, %v542, 0.0
      %p602 = scmp.eq.s32.totalorder %s23, 0
      // Predicated region
      $region41: #{igab_forward.22} parent=39 // pred_check
        %p603 = pneg %p602
      $region42: #{igab_forward.22} parent=39 // pred_check_branch
        %605 = sbr.rel (%p603) target = $region44
      $region43: #{igab_forward.22} parent=39 // pred_region
        %vm606 = vcmask 123904
        %607 = vst.msk [vmem:[%s393] sm:$0x3] %vm606, 0.0
      $region44: #{igab_forward.22} parent=39 // pred_fallthru
        _
      %v608 = vld [vmem:[%s393] sm:$0x1]
      %v609 = vsel %vm449, %v594, 0.0
      %v610 = vsel %vm449, %v595, 0.0
      %v611 = vadd.f32 %v609, %v610
      %v612 = vsel %vm449, %v596, 0.0
      %v613 = vadd.f32 %v611, %v612
      %v614 = vsel %vm449, %v597, 0.0
      %v615 = vadd.f32 %v613, %v614
      %v616 = vsel %vm449, %v598, 0.0
      %v617 = vadd.f32 %v615, %v616
      %v618 = vsel %vm449, %v599, 0.0
      %v619 = vadd.f32 %v617, %v618
      %v620 = vsel %vm449, %v600, 0.0
      %v621 = vadd.f32 %v619, %v620
      %v622 = vsel %vm449, %v601, 0.0
      %v623 = vadd.f32 %v621, %v622
      %v624 = vrot.slane %v623, 4
      %v625 = vadd.f32 %v623, %v624
      %v626 = vrot.slane %v625, 2
      %v627 = vadd.f32 %v625, %v626
      %v628 = vrot.slane %v627, 1
      %v629 = vadd.f32 %v627, %v628
      %v630 = vadd.f32 %v608, %v629
      %vm631 = vcmask 122880
      %632 = vst.msk [vmem:[%s393] sm:$0x1] %vm631, %v630
      %v633 = vld [vmem:[%s393 + $0x1] sm:$0x1]
      %v634 = vmul.f32 %v594, %v594
      %v635 = vmul.f32 %v595, %v595
      %v636 = vmul.f32 %v596, %v596
      %v637 = vmul.f32 %v597, %v597
      %v638 = vmul.f32 %v598, %v598
      %v639 = vmul.f32 %v599, %v599
      %v640 = vmul.f32 %v600, %v600
      %v641 = vmul.f32 %v601, %v601
      %v642 = vsel %vm449, %v634, 0.0
      %v643 = vsel %vm449, %v635, 0.0
      %v644 = vadd.f32 %v642, %v643
      %v645 = vsel %vm449, %v636, 0.0
      %v646 = vadd.f32 %v644, %v645
      %v647 = vsel %vm449, %v637, 0.0
      %v648 = vadd.f32 %v646, %v647
      %v649 = vsel %vm449, %v638, 0.0
      %v650 = vadd.f32 %v648, %v649
      %v651 = vsel %vm449, %v639, 0.0
      %v652 = vadd.f32 %v650, %v651
      %v653 = vsel %vm449, %v640, 0.0
      %v654 = vadd.f32 %v652, %v653
      %v655 = vsel %vm449, %v641, 0.0
      %v656 = vadd.f32 %v654, %v655
      %v657 = vrot.slane %v656, 4
      %v658 = vadd.f32 %v656, %v657
      %v659 = vrot.slane %v658, 2
      %v660 = vadd.f32 %v658, %v659
      %v661 = vrot.slane %v660, 1
      %v662 = vadd.f32 %v660, %v661
      %v663 = vadd.f32 %v633, %v662
      %664 = vst.msk [vmem:[%s393 + $0x1] sm:$0x1] %vm631, %v663
      %s665 = smul.u32 8, %s23
      %p666 = scmp.lt.s32.totalorder %s22, 1
      %s667 = scalar_select %p666, %s22, 1
      %p668 = scmp.lt.s32.totalorder %s665, 7
      %s669 = scalar_select %p668, %s665, 7
      %s670 = smul.addr %s667, 8
      %s671 = sadd.s32 %s669, %s670
      %s672 = smul.addr %s671, 8
      %s673 = scalar_lea.vmem %s5, %s672
      %p674 = scmp.lt.s32.totalorder %s22, 1
      %s675 = scalar_select %p674, %s22, 1
      %s676 = smul.addr %s675, 2
      %s677 = scalar_lea.vmem %s6, %s676
      // Predicated region
      $region45: #{igab_forward.22} parent=39 // pred_check
        %p678 = pneg %p181
      $region46: #{igab_forward.22} parent=39 // pred_check_branch
        %680 = sbr.rel (%p678) target = $region48
      $region47: #{igab_forward.22} parent=39 // pred_region
        %s681 = smul.u32 8, %s23
      $region48: #{igab_forward.22} parent=39 // pred_fallthru
        _
      // Predicated region
      $region49: #{igab_forward.22} parent=39 // pred_check
        %p682 = pneg %p207
      $region50: #{igab_forward.22} parent=39 // pred_check_branch
        %684 = sbr.rel (%p682) target = $region52
      $region51: #{igab_forward.22} parent=39 // pred_region
        _
      $region52: #{igab_forward.22} parent=39 // pred_fallthru
        _
    $region40: #{igab_forward.22} parent=5 // pred_fallthru
      _
    %p685 = scmp.le.s32.totalorder 2, %s13
    // Predicated region
    $region53: #{igab_forward.22} parent=5 // pred_check
      %p686 = pneg %p685
    $region54: #{igab_forward.22} parent=5 // pred_check_branch
      %688 = sbr.rel (%p686) target = $region56
    $region55: #{igab_forward.22} parent=5 // pred_region
      %s689 = ssub.s32 %s13, 2
      // Predicated region
      $region57: #{igab_forward.22} parent=55 // pred_check
        %p690 = pneg %p187
      $region58: #{igab_forward.22} parent=55 // pred_check_branch
        %692 = sbr.rel (%p690) target = $region60
      $region59: #{igab_forward.22} parent=55 // pred_region
        %s693 = smul.u32 8, %s25
        %p694 = scmp.lt.s32.totalorder %s24, 1
        %s695 = scalar_select %p694, %s24, 1
        %p696 = scmp.lt.s32.totalorder %s693, 7
        %s697 = scalar_select %p696, %s693, 7
        %s698 = smul.addr %s695, 8
        %s699 = sadd.s32 %s697, %s698
        %s700 = smul.addr %s699, 8
        %s701 = scalar_lea.vmem %s5, %s700
      $region60: #{igab_forward.22} parent=55 // pred_fallthru
        _
      // Predicated region
      $region61: #{igab_forward.22} parent=55 // pred_check
        %p702 = pneg %p213
      $region62: #{igab_forward.22} parent=55 // pred_check_branch
        %704 = sbr.rel (%p702) target = $region64
      $region63: #{igab_forward.22} parent=55 // pred_region
        %p705 = scmp.lt.s32.totalorder %s24, 1
        %s706 = scalar_select %p705, %s24, 1
        %s707 = smul.addr %s706, 2
        %s708 = scalar_lea.vmem %s6, %s707
      $region64: #{igab_forward.22} parent=55 // pred_fallthru
        _
    $region56: #{igab_forward.22} parent=5 // pred_fallthru
      _
  $region6: #{igab_forward.22} parent=0 // loop_footer
    %s17 = sadd.s32 1, %s13
  $region7: #{igab_forward.22} parent=0 // loop_footer_branch
    %12 = sbr.rel target = $region3
  $region8: #{igab_forward.22} parent=0 // loop_exit
    _

// kernel: igab_forward.20
$region0: #{igab_forward.20}
  #allocation0 [shape = 'u32[]', space=smem, size = 0x4, offset = 0x4, fixed_abs, tag = 'smem constant byte address 0x4 - core index']
  #allocation1 [shape = 'u32[144,128]{1,0:T(1,128)}', space=vmem, size = 0x12000, scoped, tag = 'internal scratch']
  %s0 = inlined_call_operand.vmem [shape: bf16[2,8,8,16], index: 0, kind: input, shape index: {}, may-alias: {0,1,2}]
  %s1 = inlined_call_operand.vmem [shape: bf16[2,8,8,16], index: 1, kind: input, shape index: {}, may-alias: {0,1,2}]
  %s2 = inlined_call_operand.vmem [shape: bf16[2,8,8,16], index: 2, kind: input, shape index: {}, may-alias: {0,1,2}]
  %s3 = inlined_call_operand.vmem [shape: f32[3,3,16], index: 3, kind: input, shape index: {}]
  %s4 = inlined_call_operand.vmem [shape: f32[2,8,8,16], index: 4, kind: input, shape index: {}]
  %s5 = inlined_call_operand.vmem [shape: f32[2,8,8,16], index: 5, kind: output, shape index: {}]
  %s6 = sld [smem:[#allocation0]]
  $region53: #{igab_forward.20} parent=0
    _
  %s8 = ssub.s32 1, %s6
  %s9 = scalar_select 0, %s8, %s6
  loop: start=0, step=1, limit=4
  $region2: #{igab_forward.20} parent=0 // loop_pre_header
    _
  $region3: #{igab_forward.20} parent=0 // loop_header
    %s11 = sphi 0, %s15
    %p12 = scmp.ge.s32.totalorder %s11, 4
    %s18 = sphi 0, %s30
    %s19 = sphi 0, %s26
    %s20 = sphi 0, %s18
    %s21 = sphi 0, %s19
    %s22 = sphi 0, %s20
    %s23 = sphi 0, %s21
    %s35 = sphi 0, %s37
    %s38 = sphi 0, %s35
    %s39 = sphi 0, %s38
    %s55 = sphi 0, %s39
    %s71 = sphi 0, %s73
    %s74 = sphi 0, %s71
    %s75 = sphi 0, %s74
    %s91 = sphi 0, %s75
    %s107 = sphi 0, %s109
    %s110 = sphi 0, %s107
    %s111 = sphi 0, %s110
    %s127 = sphi 0, %s111
    %s131 = sphi 0, %s131
    %s133 = sphi 0, %s131
    %s134 = sphi 0, %s133
    %s148 = sphi 0, %s134
    %s156 = sphi 0, %s158
    %s159 = sphi 0, %s156
    %s160 = sphi 0, %s159
    %s176 = sphi 0, %s160
    %s184 = sphi 0, %s186
    %s187 = sphi 0, %s184
    %s188 = sphi 0, %s187
    %s204 = sphi 0, %s188
  $region4: #{igab_forward.20} parent=0 // loop_header_branch
    %14 = sbr.rel (%p12) target = $region8
  $region5: #{igab_forward.20} parent=0 // loop_body
    %s16 = ssub.s32 %s11, 1
    %s17 = ssub.s32 %s11, 2
    %s24 = sadd.s32 1, %s19
    %p25 = scmp.ge.s32.totalorder %s24, 1
    %s26 = scalar_select %p25, 0, %s24
    %s27 = sadd.s32 1, %s18
    %s28 = scalar_select %p25, %s27, %s18
    %p29 = scmp.ge.s32.totalorder %s28, 2
    %s30 = scalar_select %p29, 0, %s28
    %s31 = ssub.s32 %s18, %s30
    %s32 = ssub.s32 %s19, %s26
    %s33 = sor.u32 %s31, %s32
    %p34 = scmp.eq.s32.totalorder %s33, 0
    %s36 = sadd.s32 %s35, 1
    %s37 = scalar_select %p34, %s35, %s36
    %p40 = pneg %p34
    %p41 = scmp.eq.s32.totalorder %s11, 1
    %p42 = por %p40, %p41
    %p43 = scmp.ne.s32.totalorder %s35, %s38
    %p44 = scmp.eq.s32.totalorder %s11, 0
    %p45 = por %p43, %p44
    %p46 = scmp.ne.s32.totalorder %s35, %s38
    %p47 = scmp.eq.s32.totalorder %s16, 1
    %p48 = por %p46, %p47
    %p49 = scmp.ne.s32.totalorder %s38, %s39
    %p50 = scmp.eq.s32.totalorder %s16, 0
    %p51 = por %p49, %p50
    %p52 = scmp.ne.s32.totalorder %s38, %s39
    %p53 = scmp.eq.s32.totalorder %s17, 1
    %p54 = por %p52, %p53
    %p56 = scmp.ne.s32.totalorder %s39, %s55
    %p57 = scmp.eq.s32.totalorder %s17, 0
    %p58 = por %p56, %p57
    %s59 = smul.u32 %s19, 8
    %s60 = ssub.s32 %s59, 1
    %p61 = scmp.gt.s32.totalorder %s60, 0
    %s62 = scalar_select %p61, %s60, 0
    %s63 = smul.u32 %s26, 8
    %s64 = ssub.s32 %s63, 1
    %p65 = scmp.gt.s32.totalorder %s64, 0
    %s66 = scalar_select %p65, %s64, 0
    %s67 = ssub.s32 %s18, %s30
    %s68 = ssub.s32 %s62, %s66
    %s69 = sor.u32 %s67, %s68
    %p70 = scmp.eq.s32.totalorder %s69, 0
    %s72 = sadd.s32 %s71, 1
    %s73 = scalar_select %p70, %s71, %s72
    %p76 = pneg %p70
    %p77 = scmp.eq.s32.totalorder %s11, 1
    %p78 = por %p76, %p77
    %p79 = scmp.ne.s32.totalorder %s71, %s74
    %p80 = scmp.eq.s32.totalorder %s11, 0
    %p81 = por %p79, %p80
    %p82 = scmp.ne.s32.totalorder %s71, %s74
    %p83 = scmp.eq.s32.totalorder %s16, 1
    %p84 = por %p82, %p83
    %p85 = scmp.ne.s32.totalorder %s74, %s75
    %p86 = scmp.eq.s32.totalorder %s16, 0
    %p87 = por %p85, %p86
    %p88 = scmp.ne.s32.totalorder %s74, %s75
    %p89 = scmp.eq.s32.totalorder %s17, 1
    %p90 = por %p88, %p89
    %p92 = scmp.ne.s32.totalorder %s75, %s91
    %p93 = scmp.eq.s32.totalorder %s17, 0
    %p94 = por %p92, %p93
    %s95 = smul.u32 %s19, 8
    %s96 = sadd.s32 %s95, 8
    %p97 = scmp.lt.s32.totalorder %s96, 7
    %s98 = scalar_select %p97, %s96, 7
    %s99 = smul.u32 %s26, 8
    %s100 = sadd.s32 %s99, 8
    %p101 = scmp.lt.s32.totalorder %s100, 7
    %s102 = scalar_select %p101, %s100, 7
    %s103 = ssub.s32 %s18, %s30
    %s104 = ssub.s32 %s98, %s102
    %s105 = sor.u32 %s103, %s104
    %p106 = scmp.eq.s32.totalorder %s105, 0
    %s108 = sadd.s32 %s107, 1
    %s109 = scalar_select %p106, %s107, %s108
    %p112 = pneg %p106
    %p113 = scmp.eq.s32.totalorder %s11, 1
    %p114 = por %p112, %p113
    %p115 = scmp.ne.s32.totalorder %s107, %s110
    %p116 = scmp.eq.s32.totalorder %s11, 0
    %p117 = por %p115, %p116
    %p118 = scmp.ne.s32.totalorder %s107, %s110
    %p119 = scmp.eq.s32.totalorder %s16, 1
    %p120 = por %p118, %p119
    %p121 = scmp.ne.s32.totalorder %s110, %s111
    %p122 = scmp.eq.s32.totalorder %s16, 0
    %p123 = por %p121, %p122
    %p124 = scmp.ne.s32.totalorder %s110, %s111
    %p125 = scmp.eq.s32.totalorder %s17, 1
    %p126 = por %p124, %p125
    %p128 = scmp.ne.s32.totalorder %s111, %s127
    %p129 = scmp.eq.s32.totalorder %s17, 0
    %p130 = por %p128, %p129
    %s132 = sadd.s32 %s131, 1
    %p135 = scmp.eq.s32.totalorder %s11, 1
    %p136 = scmp.ne.s32.totalorder %s131, %s133
    %p137 = scmp.eq.s32.totalorder %s11, 0
    %p138 = por %p136, %p137
    %p139 = scmp.ne.s32.totalorder %s131, %s133
    %p140 = scmp.eq.s32.totalorder %s16, 1
    %p141 = por %p139, %p140
    %p142 = scmp.ne.s32.totalorder %s133, %s134
    %p143 = scmp.eq.s32.totalorder %s16, 0
    %p144 = por %p142, %p143
    %p145 = scmp.ne.s32.totalorder %s133, %s134
    %p146 = scmp.eq.s32.totalorder %s17, 1
    %p147 = por %p145, %p146
    %p149 = scmp.ne.s32.totalorder %s134, %s148
    %p150 = scmp.eq.s32.totalorder %s17, 0
    %p151 = por %p149, %p150
    %s152 = ssub.s32 %s18, %s30
    %s153 = ssub.s32 %s19, %s26
    %s154 = sor.u32 %s152, %s153
    %p155 = scmp.eq.s32.totalorder %s154, 0
    %s157 = sadd.s32 %s156, 1
    %s158 = scalar_select %p155, %s156, %s157
    %p161 = pneg %p155
    %p162 = scmp.eq.s32.totalorder %s11, 1
    %p163 = por %p161, %p162
    %p164 = scmp.ne.s32.totalorder %s156, %s159
    %p165 = scmp.eq.s32.totalorder %s11, 0
    %p166 = por %p164, %p165
    %p167 = scmp.ne.s32.totalorder %s156, %s159
    %p168 = scmp.eq.s32.totalorder %s16, 1
    %p169 = por %p167, %p168
    %p170 = scmp.ne.s32.totalorder %s159, %s160
    %p171 = scmp.eq.s32.totalorder %s16, 0
    %p172 = por %p170, %p171
    %p173 = scmp.ne.s32.totalorder %s159, %s160
    %p174 = scmp.eq.s32.totalorder %s17, 1
    %p175 = por %p173, %p174
    %p177 = scmp.ne.s32.totalorder %s160, %s176
    %p178 = scmp.eq.s32.totalorder %s17, 0
    %p179 = por %p177, %p178
    %s180 = ssub.s32 %s18, %s30
    %s181 = ssub.s32 %s19, %s26
    %s182 = sor.u32 %s180, %s181
    %p183 = scmp.eq.s32.totalorder %s182, 0
    %s185 = sadd.s32 %s184, 1
    %s186 = scalar_select %p183, %s184, %s185
    %p189 = pneg %p183
    %p190 = scmp.eq.s32.totalorder %s11, 1
    %p191 = por %p189, %p190
    %p192 = scmp.ne.s32.totalorder %s184, %s187
    %p193 = scmp.eq.s32.totalorder %s11, 0
    %p194 = por %p192, %p193
    %p195 = scmp.ne.s32.totalorder %s184, %s187
    %p196 = scmp.eq.s32.totalorder %s16, 1
    %p197 = por %p195, %p196
    %p198 = scmp.ne.s32.totalorder %s187, %s188
    %p199 = scmp.eq.s32.totalorder %s16, 0
    %p200 = por %p198, %p199
    %p201 = scmp.ne.s32.totalorder %s187, %s188
    %p202 = scmp.eq.s32.totalorder %s17, 1
    %p203 = por %p201, %p202
    %p205 = scmp.ne.s32.totalorder %s188, %s204
    %p206 = scmp.eq.s32.totalorder %s17, 0
    %p207 = por %p205, %p206
    %p208 = scmp.le.s32.totalorder 1, %s11
    %p209 = scmp.lt.s32.totalorder %s11, 3
    %p210 = pnand %p208, %p209
    %p211 = pneg %p210
    // Predicated region
    $region9: #{igab_forward.20} parent=5 // pred_check
      _
    $region10: #{igab_forward.20} parent=5 // pred_check_branch
      %213 = sbr.rel (%p210) target = $region12
    $region11: #{igab_forward.20} parent=5 // pred_region
      %s214 = ssub.s32 %s11, 1
      // Predicated region
      $region13: #{igab_forward.20} parent=11 // pred_check
        %p215 = pneg %p144
      $region14: #{igab_forward.20} parent=11 // pred_check_branch
        %217 = sbr.rel (%p215) target = $region16
      $region15: #{igab_forward.20} parent=11 // pred_region
        _
      $region16: #{igab_forward.20} parent=11 // pred_fallthru
        _
    $region12: #{igab_forward.20} parent=5 // pred_fallthru
      _
    %p218 = scmp.lt.s32.totalorder %s11, 2
    // Predicated region
    $region17: #{igab_forward.20} parent=5 // pred_check
      %p219 = pneg %p218
    $region18: #{igab_forward.20} parent=5 // pred_check_branch
      %221 = sbr.rel (%p219) target = $region20
    $region19: #{igab_forward.20} parent=5 // pred_region
      // Predicated region
      $region21: #{igab_forward.20} parent=19 // pred_check
        %p222 = pneg %p45
      $region22: #{igab_forward.20} parent=19 // pred_check_branch
        %224 = sbr.rel (%p222) target = $region24
      $region23: #{igab_forward.20} parent=19 // pred_region
        %s225 = smul.u32 8, %s19
        %p226 = scmp.lt.s32.totalorder %s18, 1
        %s227 = scalar_select %p226, %s18, 1
        %p228 = scmp.lt.s32.totalorder %s225, 7
        %s229 = scalar_select %p228, %s225, 7
        %s230 = smul.addr %s227, 8
        %s231 = sadd.s32 %s229, %s230
        %s232 = smul.addr %s231, 4
        %s233 = scalar_lea.vmem %s0, %s232
        %s234 = smul.u32 8, %s19
      $region24: #{igab_forward.20} parent=19 // pred_fallthru
        _
      // Predicated region
      $region25: #{igab_forward.20} parent=19 // pred_check
        %p235 = pneg %p81
      $region26: #{igab_forward.20} parent=19 // pred_check_branch
        %237 = sbr.rel (%p235) target = $region28
      $region27: #{igab_forward.20} parent=19 // pred_region
        %s238 = smul.u32 %s19, 8
        %s239 = ssub.s32 %s238, 1
        %p240 = scmp.gt.s32.totalorder %s239, 0
        %s241 = scalar_select %p240, %s239, 0
        %p242 = scmp.lt.s32.totalorder %s18, 1
        %s243 = scalar_select %p242, %s18, 1
        %p244 = scmp.lt.s32.totalorder %s241, 7
        %s245 = scalar_select %p244, %s241, 7
        %s246 = smul.addr %s243, 8
        %s247 = sadd.s32 %s245, %s246
        %s248 = smul.addr %s247, 4
        %s249 = scalar_lea.vmem %s1, %s248
        %s250 = smul.u32 %s19, 8
        %s251 = ssub.s32 %s250, 1
        %p252 = scmp.gt.s32.totalorder %s251, 0
        %s253 = scalar_select %p252, %s251, 0
      $region28: #{igab_forward.20} parent=19 // pred_fallthru
        _
      // Predicated region
      $region29: #{igab_forward.20} parent=19 // pred_check
        %p254 = pneg %p117
      $region30: #{igab_forward.20} parent=19 // pred_check_branch
        %256 = sbr.rel (%p254) target = $region32
      $region31: #{igab_forward.20} parent=19 // pred_region
        %s257 = smul.u32 %s19, 8
        %s258 = sadd.s32 %s257, 8
        %p259 = scmp.lt.s32.totalorder %s258, 7
        %s260 = scalar_select %p259, %s258, 7
        %p261 = scmp.lt.s32.totalorder %s18, 1
        %s262 = scalar_select %p261, %s18, 1
        %p263 = scmp.lt.s32.totalorder %s260, 7
        %s264 = scalar_select %p263, %s260, 7
        %s265 = smul.addr %s262, 8
        %s266 = sadd.s32 %s264, %s265
        %s267 = smul.addr %s266, 4
        %s268 = scalar_lea.vmem %s2, %s267
        %s269 = smul.u32 %s19, 8
        %s270 = sadd.s32 %s269, 8
        %p271 = scmp.lt.s32.totalorder %s270, 7
        %s272 = scalar_select %p271, %s270, 7
      $region32: #{igab_forward.20} parent=19 // pred_fallthru
        _
      // Predicated region
      $region33: #{igab_forward.20} parent=19 // pred_check
        %p273 = pneg %p166
      $region34: #{igab_forward.20} parent=19 // pred_check_branch
        %275 = sbr.rel (%p273) target = $region36
      $region35: #{igab_forward.20} parent=19 // pred_region
        %s276 = smul.u32 8, %s19
        %p277 = scmp.lt.s32.totalorder %s18, 1
        %s278 = scalar_select %p277, %s18, 1
        %p279 = scmp.lt.s32.totalorder %s276, 7
        %s280 = scalar_select %p279, %s276, 7
        %s281 = smul.addr %s278, 8
        %s282 = sadd.s32 %s280, %s281
        %s283 = smul.addr %s282, 8
        %s284 = scalar_lea.vmem %s4, %s283
        %s285 = smul.u32 8, %s19
      $region36: #{igab_forward.20} parent=19 // pred_fallthru
        _
    $region20: #{igab_forward.20} parent=5 // pred_fallthru
      _
    %p286 = scmp.le.s32.totalorder 1, %s11
    %p287 = scmp.lt.s32.totalorder %s11, 3
    %p288 = pnand %p286, %p287
    %p289 = pneg %p288
    // Predicated region
    $region37: #{igab_forward.20} parent=5 // pred_check
      _
    $region38: #{igab_forward.20} parent=5 // pred_check_branch
      %291 = sbr.rel (%p288) target = $region40
    $region39: #{igab_forward.20} parent=5 // pred_region
      %s292 = ssub.s32 %s11, 1
      %s293 = smul.u32 8, %s21
      %p294 = scmp.lt.s32.totalorder %s20, 1
      %s295 = scalar_select %p294, %s20, 1
      %p296 = scmp.lt.s32.totalorder %s293, 7
      %s297 = scalar_select %p296, %s293, 7
      %s298 = smul.addr %s295, 8
      %s299 = sadd.s32 %s297, %s298
      %s300 = smul.addr %s299, 4
      %s301 = scalar_lea.vmem %s0, %s300
      %p302 = pneg %p51
      %p303 = pneg %p48
      %s304 = smul.u32 %s21, 8
      %s305 = ssub.s32 %s304, 1
      %p306 = scmp.gt.s32.totalorder %s305, 0
      %s307 = scalar_select %p306, %s305, 0
      %p308 = scmp.lt.s32.totalorder %s20, 1
      %s309 = scalar_select %p308, %s20, 1
      %p310 = scmp.lt.s32.totalorder %s307, 7
      %s311 = scalar_select %p310, %s307, 7
      %s312 = smul.addr %s309, 8
      %s313 = sadd.s32 %s311, %s312
      %s314 = smul.addr %s313, 4
      %s315 = scalar_lea.vmem %s1, %s314
      %p316 = pneg %p87
      %p317 = pneg %p84
      %s318 = smul.u32 %s21, 8
      %s319 = sadd.s32 %s318, 8
      %p320 = scmp.lt.s32.totalorder %s319, 7
      %s321 = scalar_select %p320, %s319, 7
      %p322 = scmp.lt.s32.totalorder %s20, 1
      %s323 = scalar_select %p322, %s20, 1
      %p324 = scmp.lt.s32.totalorder %s321, 7
      %s325 = scalar_select %p324, %s321, 7
      %s326 = smul.addr %s323, 8
      %s327 = sadd.s32 %s325, %s326
      %s328 = smul.addr %s327, 4
      %s329 = scalar_lea.vmem %s2, %s328
      %p330 = pneg %p123
      %p331 = pneg %p120
      %p332 = pneg %p144
      %p333 = pneg %p141
      %s334 = smul.u32 8, %s21
      %p335 = scmp.lt.s32.totalorder %s20, 1
      %s336 = scalar_select %p335, %s20, 1
      %p337 = scmp.lt.s32.totalorder %s334, 7
      %s338 = scalar_select %p337, %s334, 7
      %s339 = smul.addr %s336, 8
      %s340 = sadd.s32 %s338, %s339
      %s341 = smul.addr %s340, 8
      %s342 = scalar_lea.vmem %s4, %s341
      %p343 = pneg %p172
      %p344 = pneg %p169
      %p345 = pneg %p200
      %p346 = pneg %p197
      %s347 = smul.u32 8, %s21
      %p348 = scmp.lt.s32.totalorder %s20, 1
      %s349 = scalar_select %p348, %s20, 1
      %p350 = scmp.lt.s32.totalorder %s347, 7
      %s351 = scalar_select %p350, %s347, 7
      %s352 = smul.addr %s349, 8
      %s353 = sadd.s32 %s351, %s352
      %s354 = smul.addr %s353, 8
      %s355 = scalar_lea.vmem %s5, %s354
      %s356 = smul.u32 8, %s21
      %p357 = scmp.lt.s32.totalorder %s20, 1
      %s358 = scalar_select %p357, %s20, 1
      %p359 = scmp.lt.s32.totalorder %s356, 7
      %s360 = scalar_select %p359, %s356, 7
      %s361 = smul.addr %s358, 8
      %s362 = sadd.s32 %s360, %s361
      %s363 = smul.addr %s362, 4
      %s364 = scalar_lea.vmem %s0, %s363
      %s365 = smul.u32 8, %s21
      %s366 = smul.u32 %s21, 8
      %s367 = ssub.s32 %s366, 1
      %p368 = scmp.gt.s32.totalorder %s367, 0
      %s369 = scalar_select %p368, %s367, 0
      %p370 = scmp.lt.s32.totalorder %s20, 1
      %s371 = scalar_select %p370, %s20, 1
      %p372 = scmp.lt.s32.totalorder %s369, 7
      %s373 = scalar_select %p372, %s369, 7
      %s374 = smul.addr %s371, 8
      %s375 = sadd.s32 %s373, %s374
      %s376 = smul.addr %s375, 4
      %s377 = scalar_lea.vmem %s1, %s376
      %s378 = smul.u32 %s21, 8
      %s379 = ssub.s32 %s378, 1
      %p380 = scmp.gt.s32.totalorder %s379, 0
      %s381 = scalar_select %p380, %s379, 0
      %s382 = smul.u32 %s21, 8
      %s383 = sadd.s32 %s382, 8
      %p384 = scmp.lt.s32.totalorder %s383, 7
      %s385 = scalar_select %p384, %s383, 7
      %p386 = scmp.lt.s32.totalorder %s20, 1
      %s387 = scalar_select %p386, %s20, 1
      %p388 = scmp.lt.s32.totalorder %s385, 7
      %s389 = scalar_select %p388, %s385, 7
      %s390 = smul.addr %s387, 8
      %s391 = sadd.s32 %s389, %s390
      %s392 = smul.addr %s391, 4
      %s393 = scalar_lea.vmem %s2, %s392
      %s394 = smul.u32 %s21, 8
      %s395 = sadd.s32 %s394, 8
      %p396 = scmp.lt.s32.totalorder %s395, 7
      %s397 = scalar_select %p396, %s395, 7
      %s398 = smul.u32 8, %s21
      %p399 = scmp.lt.s32.totalorder %s20, 1
      %s400 = scalar_select %p399, %s20, 1
      %p401 = scmp.lt.s32.totalorder %s398, 7
      %s402 = scalar_select %p401, %s398, 7
      %s403 = smul.addr %s400, 8
      %s404 = sadd.s32 %s402, %s403
      %s405 = smul.addr %s404, 8
      %s406 = scalar_lea.vmem %s4, %s405
      %s407 = smul.u32 8, %s21
      %s408 = smul.u32 8, %s21
      %p409 = scmp.lt.s32.totalorder %s20, 1
      %s410 = scalar_select %p409, %s20, 1
      %p411 = scmp.lt.s32.totalorder %s408, 7
      %s412 = scalar_select %p411, %s408, 7
      %s413 = smul.addr %s410, 8
      %s414 = sadd.s32 %s412, %s413
      %s415 = smul.addr %s414, 8
      %s416 = scalar_lea.vmem %s5, %s415
      %s417 = smul.u32 8, %s21
      %v418 = vld [vmem:[%s364] sm:$0xf]
      %v419 = vld [vmem:[%s364 + $0x4] sm:$0xf]
      %v420 = vld [vmem:[%s364 + $0x8] sm:$0xf]
      %v421 = vld [vmem:[%s364 + $0xc] sm:$0xf]
      %v422 = vld [vmem:[%s364 + $0x10] sm:$0xf]
      %v423 = vld [vmem:[%s364 + $0x14] sm:$0xf]
      %v424 = vld [vmem:[%s364 + $0x18] sm:$0xf]
      %v425 = vld [vmem:[%s364 + $0x1c] sm:$0xf]
      %v426 = vunpack.c.l.bf16 %v418
      %v427 = vunpack.c.l.bf16 %v419
      %v428 = vunpack.c.l.bf16 %v420
      %v429 = vunpack.c.l.bf16 %v421
      %v430 = vunpack.c.l.bf16 %v422
      %v431 = vunpack.c.l.bf16 %v423
      %v432 = vunpack.c.l.bf16 %v424
      %v433 = vunpack.c.l.bf16 %v425
      %s434 = smul.u32 %s21, 8
      %v435 = vstv %s434
      %v436 = vadd.s32 %v435, 1
      %v437 = vadd.s32 %v435, 2
      %v438 = vadd.s32 %v435, 3
      %v439 = vadd.s32 %v435, 4
      %v440 = vadd.s32 %v435, 5
      %v441 = vadd.s32 %v435, 6
      %v442 = vadd.s32 %v435, 7
      %vm443 = vcmp.lt.s32.totalorder %v435, 8
      %vm444 = vcmp.lt.s32.totalorder %v436, 8
      %vm445 = vcmp.lt.s32.totalorder %v437, 8
      %vm446 = vcmp.lt.s32.totalorder %v438, 8
      %vm447 = vcmp.lt.s32.totalorder %v439, 8
      %vm448 = vcmp.lt.s32.totalorder %v440, 8
      %vm449 = vcmp.lt.s32.totalorder %v441, 8
      %vm450 = vcmp.lt.s32.totalorder %v442, 8
      %v451 = vsel %vm443, 1, 0
      %v452 = vsel %vm444, 1, 0
      %v453 = vsel %vm445, 1, 0
      %v454 = vsel %vm446, 1, 0
      %v455 = vsel %vm447, 1, 0
      %v456 = vsel %vm448, 1, 0
      %v457 = vsel %vm449, 1, 0
      %v458 = vsel %vm450, 1, 0
      %vm459 = vcmp.eq.s32.totalorder %v451, 1
      %vm460 = vcmp.eq.s32.totalorder %v452, 1
      %vm461 = vcmp.eq.s32.totalorder %v453, 1
      %vm462 = vcmp.eq.s32.totalorder %v454, 1
      %vm463 = vcmp.eq.s32.totalorder %v455, 1
      %vm464 = vcmp.eq.s32.totalorder %v456, 1
      %vm465 = vcmp.eq.s32.totalorder %v457, 1
      %vm466 = vcmp.eq.s32.totalorder %v458, 1
      %v467 = vsel %vm459, %v426, 0.0
      %v468 = vsel %vm460, %v427, 0.0
      %v469 = vsel %vm461, %v428, 0.0
      %v470 = vsel %vm462, %v429, 0.0
      %v471 = vsel %vm463, %v430, 0.0
      %v472 = vsel %vm464, %v431, 0.0
      %v473 = vsel %vm465, %v432, 0.0
      %v474 = vsel %vm466, %v433, 0.0
      %v475 = vld [vmem:[%s377] sm:$0xf]
      %v476 = vunpack.c.l.bf16 %v475
      %p477 = scmp.gt.s32.totalorder %s21, 0
      %s478 = scalar_select %p477, 1, 0
      %s479 = scvt.s32.f32 %s478
      %v480 = vstv %s479
      %v481 = vmul.f32 %v476, %v480
      %v482 = vld [vmem:[%s393] sm:$0xf]
      %v483 = vunpack.c.l.bf16 %v482
      %s484 = sadd.s32 %s21, 1
      %p485 = scmp.lt.s32.totalorder %s484, 1
      %s486 = scalar_select %p485, 1, 0
      %s487 = scvt.s32.f32 %s486
      %v488 = vstv %s487
      %v489 = vmul.f32 %v483, %v488
      %v490 = vld [vmem:[%s3] sm:$0x7]
      %v491 = vld [vmem:[%s3 + $0x4] sm:$0x7]
      %v492 = vld [vmem:[%s3 + $0x8] sm:$0x7]
      %v493 = vlaneseq
      %v494 = vshrl.u32 %v493, 7
      %v495 = vrot.slane %v481, 7
      %v496 = vrot.slane %v467, 7
      %v497 = vrot.slane %v468, 7
      %v498 = vrot.slane %v469, 7
      %v499 = vrot.slane %v470, 7
      %v500 = vrot.slane %v471, 7
      %v501 = vrot.slane %v472, 7
      %v502 = vrot.slane %v473, 7
      %v503 = vrot.slane %v474, 7
      %v504 = vrot.slane %v489, 7
      %vm505 = vcmp.gt.s32.totalorder %v494, 0
      %v506 = vsel %vm505, 1, 0
      %v507 = vcvt.s32.f32 %v506
      %v508 = vmul.f32 %v495, %v507
      %v509 = vmul.f32 %v496, %v507
      %v510 = vmul.f32 %v497, %v507
      %v511 = vmul.f32 %v498, %v507
      %v512 = vmul.f32 %v499, %v507
      %v513 = vmul.f32 %v500, %v507
      %v514 = vmul.f32 %v501, %v507
      %v515 = vmul.f32 %v502, %v507
      %v516 = vmul.f32 %v503, %v507
      %v517 = vmul.f32 %v504, %v507
      %v518 = vrot.slane %v481, 1
      %v519 = vrot.slane %v467, 1
      %v520 = vrot.slane %v468, 1
      %v521 = vrot.slane %v469, 1
      %v522 = vrot.slane %v470, 1
      %v523 = vrot.slane %v471, 1
      %v524 = vrot.slane %v472, 1
      %v525 = vrot.slane %v473, 1
      %v526 = vrot.slane %v474, 1
      %v527 = vrot.slane %v489, 1
      %vm528 = vcmp.lt.s32.totalorder %v494, 7
      %v529 = vsel %vm528, 1, 0
      %v530 = vcvt.s32.f32 %v529
      %v531 = vmul.f32 %v518, %v530
      %v532 = vmul.f32 %v519, %v530
      %v533 = vmul.f32 %v520, %v530
      %v534 = vmul.f32 %v521, %v530
      %v535 = vmul.f32 %v522, %v530
      %v536 = vmul.f32 %v523, %v530
      %v537 = vmul.f32 %v524, %v530
      %v538 = vmul.f32 %v525, %v530
      %v539 = vmul.f32 %v526, %v530
      %v540 = vmul.f32 %v527, %v530
      %v541 = vlaneseq
      %v542 = vshrl.u32 %v541, 7
      %v543 = vsub.s32 0, %v542
      %v544 = vrot.slane %v490, %v543
      %v545 = vmul.f32 %v508, %v544
      %v546 = vmul.f32 %v509, %v544
      %v547 = vmul.f32 %v510, %v544
      %v548 = vmul.f32 %v511, %v544
      %v549 = vmul.f32 %v512, %v544
      %v550 = vmul.f32 %v513, %v544
      %v551 = vmul.f32 %v514, %v544
      %v552 = vmul.f32 %v515, %v544
      %v553 = vlaneseq
      %v554 = vshrl.u32 %v553, 7
      %v555 = vsub.s32 1, %v554
      %v556 = vrot.slane %v490, %v555
      %v557 = vmul.f32 %v481, %v556
      %v558 = vmul.f32 %v467, %v556
      %v559 = vmul.f32 %v468, %v556
      %v560 = vmul.f32 %v469, %v556
      %v561 = vmul.f32 %v470, %v556
      %v562 = vmul.f32 %v471, %v556
      %v563 = vmul.f32 %v472, %v556
      %v564 = vmul.f32 %v473, %v556
      %v565 = vadd.f32 %v545, %v557
      %v566 = vadd.f32 %v546, %v558
      %v567 = vadd.f32 %v547, %v559
      %v568 = vadd.f32 %v548, %v560
      %v569 = vadd.f32 %v549, %v561
      %v570 = vadd.f32 %v550, %v562
      %v571 = vadd.f32 %v551, %v563
      %v572 = vadd.f32 %v552, %v564
      %v573 = vlaneseq
      %v574 = vshrl.u32 %v573, 7
      %v575 = vsub.s32 2, %v574
      %v576 = vrot.slane %v490, %v575
      %v577 = vmul.f32 %v531, %v576
      %v578 = vmul.f32 %v532, %v576
      %v579 = vmul.f32 %v533, %v576
      %v580 = vmul.f32 %v534, %v576
      %v581 = vmul.f32 %v535, %v576
      %v582 = vmul.f32 %v536, %v576
      %v583 = vmul.f32 %v537, %v576
      %v584 = vmul.f32 %v538, %v576
      %v585 = vadd.f32 %v565, %v577
      %v586 = vadd.f32 %v566, %v578
      %v587 = vadd.f32 %v567, %v579
      %v588 = vadd.f32 %v568, %v580
      %v589 = vadd.f32 %v569, %v581
      %v590 = vadd.f32 %v570, %v582
      %v591 = vadd.f32 %v571, %v583
      %v592 = vadd.f32 %v572, %v584
      %v593 = vlaneseq
      %v594 = vshrl.u32 %v593, 7
      %v595 = vsub.s32 0, %v594
      %v596 = vrot.slane %v491, %v595
      %v597 = vmul.f32 %v509, %v596
      %v598 = vmul.f32 %v510, %v596
      %v599 = vmul.f32 %v511, %v596
      %v600 = vmul.f32 %v512, %v596
      %v601 = vmul.f32 %v513, %v596
      %v602 = vmul.f32 %v514, %v596
      %v603 = vmul.f32 %v515, %v596
      %v604 = vmul.f32 %v516, %v596
      %v605 = vadd.f32 %v585, %v597
      %v606 = vadd.f32 %v586, %v598
      %v607 = vadd.f32 %v587, %v599
      %v608 = vadd.f32 %v588, %v600
      %v609 = vadd.f32 %v589, %v601
      %v610 = vadd.f32 %v590, %v602
      %v611 = vadd.f32 %v591, %v603
      %v612 = vadd.f32 %v592, %v604
      %v613 = vlaneseq
      %v614 = vshrl.u32 %v613, 7
      %v615 = vsub.s32 1, %v614
      %v616 = vrot.slane %v491, %v615
      %v617 = vmul.f32 %v467, %v616
      %v618 = vmul.f32 %v468, %v616
      %v619 = vmul.f32 %v469, %v616
      %v620 = vmul.f32 %v470, %v616
      %v621 = vmul.f32 %v471, %v616
      %v622 = vmul.f32 %v472, %v616
      %v623 = vmul.f32 %v473, %v616
      %v624 = vmul.f32 %v474, %v616
      %v625 = vadd.f32 %v605, %v617
      %v626 = vadd.f32 %v606, %v618
      %v627 = vadd.f32 %v607, %v619
      %v628 = vadd.f32 %v608, %v620
      %v629 = vadd.f32 %v609, %v621
      %v630 = vadd.f32 %v610, %v622
      %v631 = vadd.f32 %v611, %v623
      %v632 = vadd.f32 %v612, %v624
      %v633 = vlaneseq
      %v634 = vshrl.u32 %v633, 7
      %v635 = vsub.s32 2, %v634
      %v636 = vrot.slane %v491, %v635
      %v637 = vmul.f32 %v532, %v636
      %v638 = vmul.f32 %v533, %v636
      %v639 = vmul.f32 %v534, %v636
      %v640 = vmul.f32 %v535, %v636
      %v641 = vmul.f32 %v536, %v636
      %v642 = vmul.f32 %v537, %v636
      %v643 = vmul.f32 %v538, %v636
      %v644 = vmul.f32 %v539, %v636
      %v645 = vadd.f32 %v625, %v637
      %v646 = vadd.f32 %v626, %v638
      %v647 = vadd.f32 %v627, %v639
      %v648 = vadd.f32 %v628, %v640
      %v649 = vadd.f32 %v629, %v641
      %v650 = vadd.f32 %v630, %v642
      %v651 = vadd.f32 %v631, %v643
      %v652 = vadd.f32 %v632, %v644
      %v653 = vlaneseq
      %v654 = vshrl.u32 %v653, 7
      %v655 = vsub.s32 0, %v654
      %v656 = vrot.slane %v492, %v655
      %v657 = vmul.f32 %v510, %v656
      %v658 = vmul.f32 %v511, %v656
      %v659 = vmul.f32 %v512, %v656
      %v660 = vmul.f32 %v513, %v656
      %v661 = vmul.f32 %v514, %v656
      %v662 = vmul.f32 %v515, %v656
      %v663 = vmul.f32 %v516, %v656
      %v664 = vmul.f32 %v517, %v656
      %v665 = vadd.f32 %v645, %v657
      %v666 = vadd.f32 %v646, %v658
      %v667 = vadd.f32 %v647, %v659
      %v668 = vadd.f32 %v648, %v660
      %v669 = vadd.f32 %v649, %v661
      %v670 = vadd.f32 %v650, %v662
      %v671 = vadd.f32 %v651, %v663
      %v672 = vadd.f32 %v652, %v664
      %v673 = vlaneseq
      %v674 = vshrl.u32 %v673, 7
      %v675 = vsub.s32 1, %v674
      %v676 = vrot.slane %v492, %v675
      %v677 = vmul.f32 %v468, %v676
      %v678 = vmul.f32 %v469, %v676
      %v679 = vmul.f32 %v470, %v676
      %v680 = vmul.f32 %v471, %v676
      %v681 = vmul.f32 %v472, %v676
      %v682 = vmul.f32 %v473, %v676
      %v683 = vmul.f32 %v474, %v676
      %v684 = vmul.f32 %v489, %v676
      %v685 = vadd.f32 %v665, %v677
      %v686 = vadd.f32 %v666, %v678
      %v687 = vadd.f32 %v667, %v679
      %v688 = vadd.f32 %v668, %v680
      %v689 = vadd.f32 %v669, %v681
      %v690 = vadd.f32 %v670, %v682
      %v691 = vadd.f32 %v671, %v683
      %v692 = vadd.f32 %v672, %v684
      %v693 = vlaneseq
      %v694 = vshrl.u32 %v693, 7
      %v695 = vsub.s32 2, %v694
      %v696 = vrot.slane %v492, %v695
      %v697 = vmul.f32 %v533, %v696
      %v698 = vmul.f32 %v534, %v696
      %v699 = vmul.f32 %v535, %v696
      %v700 = vmul.f32 %v536, %v696
      %v701 = vmul.f32 %v537, %v696
      %v702 = vmul.f32 %v538, %v696
      %v703 = vmul.f32 %v539, %v696
      %v704 = vmul.f32 %v540, %v696
      %v705 = vadd.f32 %v685, %v697
      %v706 = vadd.f32 %v686, %v698
      %v707 = vadd.f32 %v687, %v699
      %v708 = vadd.f32 %v688, %v700
      %v709 = vadd.f32 %v689, %v701
      %v710 = vadd.f32 %v690, %v702
      %v711 = vadd.f32 %v691, %v703
      %v712 = vadd.f32 %v692, %v704
      %v713 = vld [vmem:[%s406] sm:$0xff]
      %v714 = vld [vmem:[%s406 + $0x8] sm:$0xff]
      %v715 = vld [vmem:[%s406 + $0x10] sm:$0xff]
      %v716 = vld [vmem:[%s406 + $0x18] sm:$0xff]
      %v717 = vld [vmem:[%s406 + $0x20] sm:$0xff]
      %v718 = vld [vmem:[%s406 + $0x28] sm:$0xff]
      %v719 = vld [vmem:[%s406 + $0x30] sm:$0xff]
      %v720 = vld [vmem:[%s406 + $0x38] sm:$0xff]
      %v721 = vadd.f32 %v705, %v713
      %v722 = vadd.f32 %v706, %v714
      %v723 = vadd.f32 %v707, %v715
      %v724 = vadd.f32 %v708, %v716
      %v725 = vadd.f32 %v709, %v717
      %v726 = vadd.f32 %v710, %v718
      %v727 = vadd.f32 %v711, %v719
      %v728 = vadd.f32 %v712, %v720
      %vm729 = vcmask 130048
      %730 = vst.msk [vmem:[%s416] sm:$0xff] %vm729, %v721
      %731 = vst.msk [vmem:[%s416 + $0x8] sm:$0xff] %vm729, %v722
      %732 = vst.msk [vmem:[%s416 + $0x10] sm:$0xff] %vm729, %v723
      %733 = vst.msk [vmem:[%s416 + $0x18] sm:$0xff] %vm729, %v724
      %734 = vst.msk [vmem:[%s416 + $0x20] sm:$0xff] %vm729, %v725
      %735 = vst.msk [vmem:[%s416 + $0x28] sm:$0xff] %vm729, %v726
      %736 = vst.msk [vmem:[%s416 + $0x30] sm:$0xff] %vm729, %v727
      %737 = vst.msk [vmem:[%s416 + $0x38] sm:$0xff] %vm729, %v728
      %s738 = smul.u32 8, %s21
      %p739 = scmp.lt.s32.totalorder %s20, 1
      %s740 = scalar_select %p739, %s20, 1
      %p741 = scmp.lt.s32.totalorder %s738, 7
      %s742 = scalar_select %p741, %s738, 7
      %s743 = smul.addr %s740, 8
      %s744 = sadd.s32 %s742, %s743
      %s745 = smul.addr %s744, 8
      %s746 = scalar_lea.vmem %s5, %s745
      // Predicated region
      $region41: #{igab_forward.20} parent=39 // pred_check
        %p747 = pneg %p197
      $region42: #{igab_forward.20} parent=39 // pred_check_branch
        %749 = sbr.rel (%p747) target = $region44
      $region43: #{igab_forward.20} parent=39 // pred_region
        %s750 = smul.u32 8, %s21
      $region44: #{igab_forward.20} parent=39 // pred_fallthru
        _
    $region40: #{igab_forward.20} parent=5 // pred_fallthru
      _
    %p751 = scmp.le.s32.totalorder 2, %s11
    // Predicated region
    $region45: #{igab_forward.20} parent=5 // pred_check
      %p752 = pneg %p751
    $region46: #{igab_forward.20} parent=5 // pred_check_branch
      %754 = sbr.rel (%p752) target = $region48
    $region47: #{igab_forward.20} parent=5 // pred_region
      %s755 = ssub.s32 %s11, 2
      // Predicated region
      $region49: #{igab_forward.20} parent=47 // pred_check
        %p756 = pneg %p203
      $region50: #{igab_forward.20} parent=47 // pred_check_branch
        %758 = sbr.rel (%p756) target = $region52
      $region51: #{igab_forward.20} parent=47 // pred_region
        %s759 = smul.u32 8, %s23
        %p760 = scmp.lt.s32.totalorder %s22, 1
        %s761 = scalar_select %p760, %s22, 1
        %p762 = scmp.lt.s32.totalorder %s759, 7
        %s763 = scalar_select %p762, %s759, 7
        %s764 = smul.addr %s761, 8
        %s765 = sadd.s32 %s763, %s764
        %s766 = smul.addr %s765, 8
        %s767 = scalar_lea.vmem %s5, %s766
      $region52: #{igab_forward.20} parent=47 // pred_fallthru
        _
    $region48: #{igab_forward.20} parent=5 // pred_fallthru
      _
  $region6: #{igab_forward.20} parent=0 // loop_footer
    %s15 = sadd.s32 1, %s11
  $region7: #{igab_forward.20} parent=0 // loop_footer_branch
    %10 = sbr.rel target = $region3
  $region8: #{igab_forward.20} parent=0 // loop_exit
    _

// kernel: igab_forward.24
$region0: #{igab_forward.24}
  #allocation0 [shape = 'u32[]', space=smem, size = 0x4, offset = 0x4, fixed_abs, tag = 'smem constant byte address 0x4 - core index']
  #allocation1 [shape = 'u32[144,128]{1,0:T(1,128)}', space=vmem, size = 0x12000, scoped, tag = 'internal scratch']
  %s0 = inlined_call_operand.vmem [shape: bf16[2,8,8,32], index: 0, kind: input, shape index: {}, may-alias: {0,1,2}]
  %s1 = inlined_call_operand.vmem [shape: bf16[2,8,8,32], index: 1, kind: input, shape index: {}, may-alias: {0,1,2}]
  %s2 = inlined_call_operand.vmem [shape: bf16[2,8,8,32], index: 2, kind: input, shape index: {}, may-alias: {0,1,2}]
  %s3 = inlined_call_operand.vmem [shape: f32[3,3,32], index: 3, kind: input, shape index: {}]
  %s4 = inlined_call_operand.vmem [shape: bf16[2,8,8,32], index: 4, kind: output, shape index: {}]
  %s5 = sld [smem:[#allocation0]]
  $region49: #{igab_forward.24} parent=0
    _
  %s7 = ssub.s32 1, %s5
  %s8 = scalar_select 0, %s7, %s5
  loop: start=0, step=1, limit=4
  $region2: #{igab_forward.24} parent=0 // loop_pre_header
    _
  $region3: #{igab_forward.24} parent=0 // loop_header
    %s10 = sphi 0, %s14
    %p11 = scmp.ge.s32.totalorder %s10, 4
    %s17 = sphi 0, %s29
    %s18 = sphi 0, %s25
    %s19 = sphi 0, %s17
    %s20 = sphi 0, %s18
    %s21 = sphi 0, %s19
    %s22 = sphi 0, %s20
    %s34 = sphi 0, %s36
    %s37 = sphi 0, %s34
    %s38 = sphi 0, %s37
    %s54 = sphi 0, %s38
    %s70 = sphi 0, %s72
    %s73 = sphi 0, %s70
    %s74 = sphi 0, %s73
    %s90 = sphi 0, %s74
    %s106 = sphi 0, %s108
    %s109 = sphi 0, %s106
    %s110 = sphi 0, %s109
    %s126 = sphi 0, %s110
    %s130 = sphi 0, %s130
    %s132 = sphi 0, %s130
    %s133 = sphi 0, %s132
    %s147 = sphi 0, %s133
    %s155 = sphi 0, %s157
    %s158 = sphi 0, %s155
    %s159 = sphi 0, %s158
    %s175 = sphi 0, %s159
  $region4: #{igab_forward.24} parent=0 // loop_header_branch
    %13 = sbr.rel (%p11) target = $region8
  $region5: #{igab_forward.24} parent=0 // loop_body
    %s15 = ssub.s32 %s10, 1
    %s16 = ssub.s32 %s10, 2
    %s23 = sadd.s32 1, %s18
    %p24 = scmp.ge.s32.totalorder %s23, 1
    %s25 = scalar_select %p24, 0, %s23
    %s26 = sadd.s32 1, %s17
    %s27 = scalar_select %p24, %s26, %s17
    %p28 = scmp.ge.s32.totalorder %s27, 2
    %s29 = scalar_select %p28, 0, %s27
    %s30 = ssub.s32 %s17, %s29
    %s31 = ssub.s32 %s18, %s25
    %s32 = sor.u32 %s30, %s31
    %p33 = scmp.eq.s32.totalorder %s32, 0
    %s35 = sadd.s32 %s34, 1
    %s36 = scalar_select %p33, %s34, %s35
    %p39 = pneg %p33
    %p40 = scmp.eq.s32.totalorder %s10, 1
    %p41 = por %p39, %p40
    %p42 = scmp.ne.s32.totalorder %s34, %s37
    %p43 = scmp.eq.s32.totalorder %s10, 0
    %p44 = por %p42, %p43
    %p45 = scmp.ne.s32.totalorder %s34, %s37
    %p46 = scmp.eq.s32.totalorder %s15, 1
    %p47 = por %p45, %p46
    %p48 = scmp.ne.s32.totalorder %s37, %s38
    %p49 = scmp.eq.s32.totalorder %s15, 0
    %p50 = por %p48, %p49
    %p51 = scmp.ne.s32.totalorder %s37, %s38
    %p52 = scmp.eq.s32.totalorder %s16, 1
    %p53 = por %p51, %p52
    %p55 = scmp.ne.s32.totalorder %s38, %s54
    %p56 = scmp.eq.s32.totalorder %s16, 0
    %p57 = por %p55, %p56
    %s58 = smul.u32 %s18, 8
    %s59 = ssub.s32 %s58, 1
    %p60 = scmp.gt.s32.totalorder %s59, 0
    %s61 = scalar_select %p60, %s59, 0
    %s62 = smul.u32 %s25, 8
    %s63 = ssub.s32 %s62, 1
    %p64 = scmp.gt.s32.totalorder %s63, 0
    %s65 = scalar_select %p64, %s63, 0
    %s66 = ssub.s32 %s17, %s29
    %s67 = ssub.s32 %s61, %s65
    %s68 = sor.u32 %s66, %s67
    %p69 = scmp.eq.s32.totalorder %s68, 0
    %s71 = sadd.s32 %s70, 1
    %s72 = scalar_select %p69, %s70, %s71
    %p75 = pneg %p69
    %p76 = scmp.eq.s32.totalorder %s10, 1
    %p77 = por %p75, %p76
    %p78 = scmp.ne.s32.totalorder %s70, %s73
    %p79 = scmp.eq.s32.totalorder %s10, 0
    %p80 = por %p78, %p79
    %p81 = scmp.ne.s32.totalorder %s70, %s73
    %p82 = scmp.eq.s32.totalorder %s15, 1
    %p83 = por %p81, %p82
    %p84 = scmp.ne.s32.totalorder %s73, %s74
    %p85 = scmp.eq.s32.totalorder %s15, 0
    %p86 = por %p84, %p85
    %p87 = scmp.ne.s32.totalorder %s73, %s74
    %p88 = scmp.eq.s32.totalorder %s16, 1
    %p89 = por %p87, %p88
    %p91 = scmp.ne.s32.totalorder %s74, %s90
    %p92 = scmp.eq.s32.totalorder %s16, 0
    %p93 = por %p91, %p92
    %s94 = smul.u32 %s18, 8
    %s95 = sadd.s32 %s94, 8
    %p96 = scmp.lt.s32.totalorder %s95, 7
    %s97 = scalar_select %p96, %s95, 7
    %s98 = smul.u32 %s25, 8
    %s99 = sadd.s32 %s98, 8
    %p100 = scmp.lt.s32.totalorder %s99, 7
    %s101 = scalar_select %p100, %s99, 7
    %s102 = ssub.s32 %s17, %s29
    %s103 = ssub.s32 %s97, %s101
    %s104 = sor.u32 %s102, %s103
    %p105 = scmp.eq.s32.totalorder %s104, 0
    %s107 = sadd.s32 %s106, 1
    %s108 = scalar_select %p105, %s106, %s107
    %p111 = pneg %p105
    %p112 = scmp.eq.s32.totalorder %s10, 1
    %p113 = por %p111, %p112
    %p114 = scmp.ne.s32.totalorder %s106, %s109
    %p115 = scmp.eq.s32.totalorder %s10, 0
    %p116 = por %p114, %p115
    %p117 = scmp.ne.s32.totalorder %s106, %s109
    %p118 = scmp.eq.s32.totalorder %s15, 1
    %p119 = por %p117, %p118
    %p120 = scmp.ne.s32.totalorder %s109, %s110
    %p121 = scmp.eq.s32.totalorder %s15, 0
    %p122 = por %p120, %p121
    %p123 = scmp.ne.s32.totalorder %s109, %s110
    %p124 = scmp.eq.s32.totalorder %s16, 1
    %p125 = por %p123, %p124
    %p127 = scmp.ne.s32.totalorder %s110, %s126
    %p128 = scmp.eq.s32.totalorder %s16, 0
    %p129 = por %p127, %p128
    %s131 = sadd.s32 %s130, 1
    %p134 = scmp.eq.s32.totalorder %s10, 1
    %p135 = scmp.ne.s32.totalorder %s130, %s132
    %p136 = scmp.eq.s32.totalorder %s10, 0
    %p137 = por %p135, %p136
    %p138 = scmp.ne.s32.totalorder %s130, %s132
    %p139 = scmp.eq.s32.totalorder %s15, 1
    %p140 = por %p138, %p139
    %p141 = scmp.ne.s32.totalorder %s132, %s133
    %p142 = scmp.eq.s32.totalorder %s15, 0
    %p143 = por %p141, %p142
    %p144 = scmp.ne.s32.totalorder %s132, %s133
    %p145 = scmp.eq.s32.totalorder %s16, 1
    %p146 = por %p144, %p145
    %p148 = scmp.ne.s32.totalorder %s133, %s147
    %p149 = scmp.eq.s32.totalorder %s16, 0
    %p150 = por %p148, %p149
    %s151 = ssub.s32 %s17, %s29
    %s152 = ssub.s32 %s18, %s25
    %s153 = sor.u32 %s151, %s152
    %p154 = scmp.eq.s32.totalorder %s153, 0
    %s156 = sadd.s32 %s155, 1
    %s157 = scalar_select %p154, %s155, %s156
    %p160 = pneg %p154
    %p161 = scmp.eq.s32.totalorder %s10, 1
    %p162 = por %p160, %p161
    %p163 = scmp.ne.s32.totalorder %s155, %s158
    %p164 = scmp.eq.s32.totalorder %s10, 0
    %p165 = por %p163, %p164
    %p166 = scmp.ne.s32.totalorder %s155, %s158
    %p167 = scmp.eq.s32.totalorder %s15, 1
    %p168 = por %p166, %p167
    %p169 = scmp.ne.s32.totalorder %s158, %s159
    %p170 = scmp.eq.s32.totalorder %s15, 0
    %p171 = por %p169, %p170
    %p172 = scmp.ne.s32.totalorder %s158, %s159
    %p173 = scmp.eq.s32.totalorder %s16, 1
    %p174 = por %p172, %p173
    %p176 = scmp.ne.s32.totalorder %s159, %s175
    %p177 = scmp.eq.s32.totalorder %s16, 0
    %p178 = por %p176, %p177
    %p179 = scmp.le.s32.totalorder 1, %s10
    %p180 = scmp.lt.s32.totalorder %s10, 3
    %p181 = pnand %p179, %p180
    %p182 = pneg %p181
    // Predicated region
    $region9: #{igab_forward.24} parent=5 // pred_check
      _
    $region10: #{igab_forward.24} parent=5 // pred_check_branch
      %184 = sbr.rel (%p181) target = $region12
    $region11: #{igab_forward.24} parent=5 // pred_region
      %s185 = ssub.s32 %s10, 1
      // Predicated region
      $region13: #{igab_forward.24} parent=11 // pred_check
        %p186 = pneg %p143
      $region14: #{igab_forward.24} parent=11 // pred_check_branch
        %188 = sbr.rel (%p186) target = $region16
      $region15: #{igab_forward.24} parent=11 // pred_region
        _
      $region16: #{igab_forward.24} parent=11 // pred_fallthru
        _
    $region12: #{igab_forward.24} parent=5 // pred_fallthru
      _
    %p189 = scmp.lt.s32.totalorder %s10, 2
    // Predicated region
    $region17: #{igab_forward.24} parent=5 // pred_check
      %p190 = pneg %p189
    $region18: #{igab_forward.24} parent=5 // pred_check_branch
      %192 = sbr.rel (%p190) target = $region20
    $region19: #{igab_forward.24} parent=5 // pred_region
      // Predicated region
      $region21: #{igab_forward.24} parent=19 // pred_check
        %p193 = pneg %p44
      $region22: #{igab_forward.24} parent=19 // pred_check_branch
        %195 = sbr.rel (%p193) target = $region24
      $region23: #{igab_forward.24} parent=19 // pred_region
        %s196 = smul.u32 8, %s18
        %p197 = scmp.lt.s32.totalorder %s17, 1
        %s198 = scalar_select %p197, %s17, 1
        %p199 = scmp.lt.s32.totalorder %s196, 7
        %s200 = scalar_select %p199, %s196, 7
        %s201 = smul.addr %s198, 8
        %s202 = sadd.s32 %s200, %s201
        %s203 = smul.addr %s202, 4
        %s204 = scalar_lea.vmem %s0, %s203
        %s205 = smul.u32 8, %s18
      $region24: #{igab_forward.24} parent=19 // pred_fallthru
        _
      // Predicated region
      $region25: #{igab_forward.24} parent=19 // pred_check
        %p206 = pneg %p80
      $region26: #{igab_forward.24} parent=19 // pred_check_branch
        %208 = sbr.rel (%p206) target = $region28
      $region27: #{igab_forward.24} parent=19 // pred_region
        %s209 = smul.u32 %s18, 8
        %s210 = ssub.s32 %s209, 1
        %p211 = scmp.gt.s32.totalorder %s210, 0
        %s212 = scalar_select %p211, %s210, 0
        %p213 = scmp.lt.s32.totalorder %s17, 1
        %s214 = scalar_select %p213, %s17, 1
        %p215 = scmp.lt.s32.totalorder %s212, 7
        %s216 = scalar_select %p215, %s212, 7
        %s217 = smul.addr %s214, 8
        %s218 = sadd.s32 %s216, %s217
        %s219 = smul.addr %s218, 4
        %s220 = scalar_lea.vmem %s1, %s219
        %s221 = smul.u32 %s18, 8
        %s222 = ssub.s32 %s221, 1
        %p223 = scmp.gt.s32.totalorder %s222, 0
        %s224 = scalar_select %p223, %s222, 0
      $region28: #{igab_forward.24} parent=19 // pred_fallthru
        _
      // Predicated region
      $region29: #{igab_forward.24} parent=19 // pred_check
        %p225 = pneg %p116
      $region30: #{igab_forward.24} parent=19 // pred_check_branch
        %227 = sbr.rel (%p225) target = $region32
      $region31: #{igab_forward.24} parent=19 // pred_region
        %s228 = smul.u32 %s18, 8
        %s229 = sadd.s32 %s228, 8
        %p230 = scmp.lt.s32.totalorder %s229, 7
        %s231 = scalar_select %p230, %s229, 7
        %p232 = scmp.lt.s32.totalorder %s17, 1
        %s233 = scalar_select %p232, %s17, 1
        %p234 = scmp.lt.s32.totalorder %s231, 7
        %s235 = scalar_select %p234, %s231, 7
        %s236 = smul.addr %s233, 8
        %s237 = sadd.s32 %s235, %s236
        %s238 = smul.addr %s237, 4
        %s239 = scalar_lea.vmem %s2, %s238
        %s240 = smul.u32 %s18, 8
        %s241 = sadd.s32 %s240, 8
        %p242 = scmp.lt.s32.totalorder %s241, 7
        %s243 = scalar_select %p242, %s241, 7
      $region32: #{igab_forward.24} parent=19 // pred_fallthru
        _
    $region20: #{igab_forward.24} parent=5 // pred_fallthru
      _
    %p244 = scmp.le.s32.totalorder 1, %s10
    %p245 = scmp.lt.s32.totalorder %s10, 3
    %p246 = pnand %p244, %p245
    %p247 = pneg %p246
    // Predicated region
    $region33: #{igab_forward.24} parent=5 // pred_check
      _
    $region34: #{igab_forward.24} parent=5 // pred_check_branch
      %249 = sbr.rel (%p246) target = $region36
    $region35: #{igab_forward.24} parent=5 // pred_region
      %s250 = ssub.s32 %s10, 1
      %s251 = smul.u32 8, %s20
      %p252 = scmp.lt.s32.totalorder %s19, 1
      %s253 = scalar_select %p252, %s19, 1
      %p254 = scmp.lt.s32.totalorder %s251, 7
      %s255 = scalar_select %p254, %s251, 7
      %s256 = smul.addr %s253, 8
      %s257 = sadd.s32 %s255, %s256
      %s258 = smul.addr %s257, 4
      %s259 = scalar_lea.vmem %s0, %s258
      %p260 = pneg %p50
      %p261 = pneg %p47
      %s262 = smul.u32 %s20, 8
      %s263 = ssub.s32 %s262, 1
      %p264 = scmp.gt.s32.totalorder %s263, 0
      %s265 = scalar_select %p264, %s263, 0
      %p266 = scmp.lt.s32.totalorder %s19, 1
      %s267 = scalar_select %p266, %s19, 1
      %p268 = scmp.lt.s32.totalorder %s265, 7
      %s269 = scalar_select %p268, %s265, 7
      %s270 = smul.addr %s267, 8
      %s271 = sadd.s32 %s269, %s270
      %s272 = smul.addr %s271, 4
      %s273 = scalar_lea.vmem %s1, %s272
      %p274 = pneg %p86
      %p275 = pneg %p83
      %s276 = smul.u32 %s20, 8
      %s277 = sadd.s32 %s276, 8
      %p278 = scmp.lt.s32.totalorder %s277, 7
      %s279 = scalar_select %p278, %s277, 7
      %p280 = scmp.lt.s32.totalorder %s19, 1
      %s281 = scalar_select %p280, %s19, 1
      %p282 = scmp.lt.s32.totalorder %s279, 7
      %s283 = scalar_select %p282, %s279, 7
      %s284 = smul.addr %s281, 8
      %s285 = sadd.s32 %s283, %s284
      %s286 = smul.addr %s285, 4
      %s287 = scalar_lea.vmem %s2, %s286
      %p288 = pneg %p122
      %p289 = pneg %p119
      %p290 = pneg %p143
      %p291 = pneg %p140
      %p292 = pneg %p171
      %p293 = pneg %p168
      %s294 = smul.u32 8, %s20
      %p295 = scmp.lt.s32.totalorder %s19, 1
      %s296 = scalar_select %p295, %s19, 1
      %p297 = scmp.lt.s32.totalorder %s294, 7
      %s298 = scalar_select %p297, %s294, 7
      %s299 = smul.addr %s296, 8
      %s300 = sadd.s32 %s298, %s299
      %s301 = smul.addr %s300, 4
      %s302 = scalar_lea.vmem %s4, %s301
      %s303 = smul.u32 8, %s20
      %p304 = scmp.lt.s32.totalorder %s19, 1
      %s305 = scalar_select %p304, %s19, 1
      %p306 = scmp.lt.s32.totalorder %s303, 7
      %s307 = scalar_select %p306, %s303, 7
      %s308 = smul.addr %s305, 8
      %s309 = sadd.s32 %s307, %s308
      %s310 = smul.addr %s309, 4
      %s311 = scalar_lea.vmem %s0, %s310
      %s312 = smul.u32 8, %s20
      %s313 = smul.u32 %s20, 8
      %s314 = ssub.s32 %s313, 1
      %p315 = scmp.gt.s32.totalorder %s314, 0
      %s316 = scalar_select %p315, %s314, 0
      %p317 = scmp.lt.s32.totalorder %s19, 1
      %s318 = scalar_select %p317, %s19, 1
      %p319 = scmp.lt.s32.totalorder %s316, 7
      %s320 = scalar_select %p319, %s316, 7
      %s321 = smul.addr %s318, 8
      %s322 = sadd.s32 %s320, %s321
      %s323 = smul.addr %s322, 4
      %s324 = scalar_lea.vmem %s1, %s323
      %s325 = smul.u32 %s20, 8
      %s326 = ssub.s32 %s325, 1
      %p327 = scmp.gt.s32.totalorder %s326, 0
      %s328 = scalar_select %p327, %s326, 0
      %s329 = smul.u32 %s20, 8
      %s330 = sadd.s32 %s329, 8
      %p331 = scmp.lt.s32.totalorder %s330, 7
      %s332 = scalar_select %p331, %s330, 7
      %p333 = scmp.lt.s32.totalorder %s19, 1
      %s334 = scalar_select %p333, %s19, 1
      %p335 = scmp.lt.s32.totalorder %s332, 7
      %s336 = scalar_select %p335, %s332, 7
      %s337 = smul.addr %s334, 8
      %s338 = sadd.s32 %s336, %s337
      %s339 = smul.addr %s338, 4
      %s340 = scalar_lea.vmem %s2, %s339
      %s341 = smul.u32 %s20, 8
      %s342 = sadd.s32 %s341, 8
      %p343 = scmp.lt.s32.totalorder %s342, 7
      %s344 = scalar_select %p343, %s342, 7
      %s345 = smul.u32 8, %s20
      %p346 = scmp.lt.s32.totalorder %s19, 1
      %s347 = scalar_select %p346, %s19, 1
      %p348 = scmp.lt.s32.totalorder %s345, 7
      %s349 = scalar_select %p348, %s345, 7
      %s350 = smul.addr %s347, 8
      %s351 = sadd.s32 %s349, %s350
      %s352 = smul.addr %s351, 4
      %s353 = scalar_lea.vmem %s4, %s352
      %s354 = smul.u32 8, %s20
      %v355 = vld [vmem:[%s311] sm:$0xf]
      %v356 = vld [vmem:[%s311 + $0x4] sm:$0xf]
      %v357 = vld [vmem:[%s311 + $0x8] sm:$0xf]
      %v358 = vld [vmem:[%s311 + $0xc] sm:$0xf]
      %v359 = vld [vmem:[%s311 + $0x10] sm:$0xf]
      %v360 = vld [vmem:[%s311 + $0x14] sm:$0xf]
      %v361 = vld [vmem:[%s311 + $0x18] sm:$0xf]
      %v362 = vld [vmem:[%s311 + $0x1c] sm:$0xf]
      %v363 = vunpack.c.l.bf16 %v355
      %v364 = vunpack.c.l.bf16 %v356
      %v365 = vunpack.c.l.bf16 %v357
      %v366 = vunpack.c.l.bf16 %v358
      %v367 = vunpack.c.l.bf16 %v359
      %v368 = vunpack.c.l.bf16 %v360
      %v369 = vunpack.c.l.bf16 %v361
      %v370 = vunpack.c.l.bf16 %v362
      %s371 = smul.u32 %s20, 8
      %v372 = vstv %s371
      %v373 = vadd.s32 %v372, 1
      %v374 = vadd.s32 %v372, 2
      %v375 = vadd.s32 %v372, 3
      %v376 = vadd.s32 %v372, 4
      %v377 = vadd.s32 %v372, 5
      %v378 = vadd.s32 %v372, 6
      %v379 = vadd.s32 %v372, 7
      %vm380 = vcmp.lt.s32.totalorder %v372, 8
      %vm381 = vcmp.lt.s32.totalorder %v373, 8
      %vm382 = vcmp.lt.s32.totalorder %v374, 8
      %vm383 = vcmp.lt.s32.totalorder %v375, 8
      %vm384 = vcmp.lt.s32.totalorder %v376, 8
      %vm385 = vcmp.lt.s32.totalorder %v377, 8
      %vm386 = vcmp.lt.s32.totalorder %v378, 8
      %vm387 = vcmp.lt.s32.totalorder %v379, 8
      %v388 = vsel %vm380, 1, 0
      %v389 = vsel %vm381, 1, 0
      %v390 = vsel %vm382, 1, 0
      %v391 = vsel %vm383, 1, 0
      %v392 = vsel %vm384, 1, 0
      %v393 = vsel %vm385, 1, 0
      %v394 = vsel %vm386, 1, 0
      %v395 = vsel %vm387, 1, 0
      %vm396 = vcmp.eq.s32.totalorder %v388, 1
      %vm397 = vcmp.eq.s32.totalorder %v389, 1
      %vm398 = vcmp.eq.s32.totalorder %v390, 1
      %vm399 = vcmp.eq.s32.totalorder %v391, 1
      %vm400 = vcmp.eq.s32.totalorder %v392, 1
      %vm401 = vcmp.eq.s32.totalorder %v393, 1
      %vm402 = vcmp.eq.s32.totalorder %v394, 1
      %vm403 = vcmp.eq.s32.totalorder %v395, 1
      %v404 = vsel %vm396, %v363, 0.0
      %v405 = vsel %vm397, %v364, 0.0
      %v406 = vsel %vm398, %v365, 0.0
      %v407 = vsel %vm399, %v366, 0.0
      %v408 = vsel %vm400, %v367, 0.0
      %v409 = vsel %vm401, %v368, 0.0
      %v410 = vsel %vm402, %v369, 0.0
      %v411 = vsel %vm403, %v370, 0.0
      %v412 = vld [vmem:[%s324] sm:$0xf]
      %v413 = vunpack.c.l.bf16 %v412
      %p414 = scmp.gt.s32.totalorder %s20, 0
      %s415 = scalar_select %p414, 1, 0
      %s416 = scvt.s32.f32 %s415
      %v417 = vstv %s416
      %v418 = vmul.f32 %v413, %v417
      %v419 = vld [vmem:[%s340] sm:$0xf]
      %v420 = vunpack.c.l.bf16 %v419
      %s421 = sadd.s32 %s20, 1
      %p422 = scmp.lt.s32.totalorder %s421, 1
      %s423 = scalar_select %p422, 1, 0
      %s424 = scvt.s32.f32 %s423
      %v425 = vstv %s424
      %v426 = vmul.f32 %v420, %v425
      %v427 = vld [vmem:[%s3] sm:$0x7]
      %v428 = vld [vmem:[%s3 + $0x4] sm:$0x7]
      %v429 = vld [vmem:[%s3 + $0x8] sm:$0x7]
      %v430 = vlaneseq
      %v431 = vshrl.u32 %v430, 7
      %v432 = vrot.slane %v418, 7
      %v433 = vrot.slane %v404, 7
      %v434 = vrot.slane %v405, 7
      %v435 = vrot.slane %v406, 7
      %v436 = vrot.slane %v407, 7
      %v437 = vrot.slane %v408, 7
      %v438 = vrot.slane %v409, 7
      %v439 = vrot.slane %v410, 7
      %v440 = vrot.slane %v411, 7
      %v441 = vrot.slane %v426, 7
      %vm442 = vcmp.gt.s32.totalorder %v431, 0
      %v443 = vsel %vm442, 1, 0
      %v444 = vcvt.s32.f32 %v443
      %v445 = vmul.f32 %v432, %v444
      %v446 = vmul.f32 %v433, %v444
      %v447 = vmul.f32 %v434, %v444
      %v448 = vmul.f32 %v435, %v444
      %v449 = vmul.f32 %v436, %v444
      %v450 = vmul.f32 %v437, %v444
      %v451 = vmul.f32 %v438, %v444
      %v452 = vmul.f32 %v439, %v444
      %v453 = vmul.f32 %v440, %v444
      %v454 = vmul.f32 %v441, %v444
      %v455 = vrot.slane %v418, 1
      %v456 = vrot.slane %v404, 1
      %v457 = vrot.slane %v405, 1
      %v458 = vrot.slane %v406, 1
      %v459 = vrot.slane %v407, 1
      %v460 = vrot.slane %v408, 1
      %v461 = vrot.slane %v409, 1
      %v462 = vrot.slane %v410, 1
      %v463 = vrot.slane %v411, 1
      %v464 = vrot.slane %v426, 1
      %vm465 = vcmp.lt.s32.totalorder %v431, 7
      %v466 = vsel %vm465, 1, 0
      %v467 = vcvt.s32.f32 %v466
      %v468 = vmul.f32 %v455, %v467
      %v469 = vmul.f32 %v456, %v467
      %v470 = vmul.f32 %v457, %v467
      %v471 = vmul.f32 %v458, %v467
      %v472 = vmul.f32 %v459, %v467
      %v473 = vmul.f32 %v460, %v467
      %v474 = vmul.f32 %v461, %v467
      %v475 = vmul.f32 %v462, %v467
      %v476 = vmul.f32 %v463, %v467
      %v477 = vmul.f32 %v464, %v467
      %v478 = vlaneseq
      %v479 = vshrl.u32 %v478, 7
      %v480 = vsub.s32 0, %v479
      %v481 = vrot.slane %v427, %v480
      %v482 = vmul.f32 %v445, %v481
      %v483 = vmul.f32 %v446, %v481
      %v484 = vmul.f32 %v447, %v481
      %v485 = vmul.f32 %v448, %v481
      %v486 = vmul.f32 %v449, %v481
      %v487 = vmul.f32 %v450, %v481
      %v488 = vmul.f32 %v451, %v481
      %v489 = vmul.f32 %v452, %v481
      %v490 = vlaneseq
      %v491 = vshrl.u32 %v490, 7
      %v492 = vsub.s32 1, %v491
      %v493 = vrot.slane %v427, %v492
      %v494 = vmul.f32 %v418, %v493
      %v495 = vmul.f32 %v404, %v493
      %v496 = vmul.f32 %v405, %v493
      %v497 = vmul.f32 %v406, %v493
      %v498 = vmul.f32 %v407, %v493
      %v499 = vmul.f32 %v408, %v493
      %v500 = vmul.f32 %v409, %v493
      %v501 = vmul.f32 %v410, %v493
      %v502 = vadd.f32 %v482, %v494
      %v503 = vadd.f32 %v483, %v495
      %v504 = vadd.f32 %v484, %v496
      %v505 = vadd.f32 %v485, %v497
      %v506 = vadd.f32 %v486, %v498
      %v507 = vadd.f32 %v487, %v499
      %v508 = vadd.f32 %v488, %v500
      %v509 = vadd.f32 %v489, %v501
      %v510 = vlaneseq
      %v511 = vshrl.u32 %v510, 7
      %v512 = vsub.s32 2, %v511
      %v513 = vrot.slane %v427, %v512
      %v514 = vmul.f32 %v468, %v513
      %v515 = vmul.f32 %v469, %v513
      %v516 = vmul.f32 %v470, %v513
      %v517 = vmul.f32 %v471, %v513
      %v518 = vmul.f32 %v472, %v513
      %v519 = vmul.f32 %v473, %v513
      %v520 = vmul.f32 %v474, %v513
      %v521 = vmul.f32 %v475, %v513
      %v522 = vadd.f32 %v502, %v514
      %v523 = vadd.f32 %v503, %v515
      %v524 = vadd.f32 %v504, %v516
      %v525 = vadd.f32 %v505, %v517
      %v526 = vadd.f32 %v506, %v518
      %v527 = vadd.f32 %v507, %v519
      %v528 = vadd.f32 %v508, %v520
      %v529 = vadd.f32 %v509, %v521
      %v530 = vlaneseq
      %v531 = vshrl.u32 %v530, 7
      %v532 = vsub.s32 0, %v531
      %v533 = vrot.slane %v428, %v532
      %v534 = vmul.f32 %v446, %v533
      %v535 = vmul.f32 %v447, %v533
      %v536 = vmul.f32 %v448, %v533
      %v537 = vmul.f32 %v449, %v533
      %v538 = vmul.f32 %v450, %v533
      %v539 = vmul.f32 %v451, %v533
      %v540 = vmul.f32 %v452, %v533
      %v541 = vmul.f32 %v453, %v533
      %v542 = vadd.f32 %v522, %v534
      %v543 = vadd.f32 %v523, %v535
      %v544 = vadd.f32 %v524, %v536
      %v545 = vadd.f32 %v525, %v537
      %v546 = vadd.f32 %v526, %v538
      %v547 = vadd.f32 %v527, %v539
      %v548 = vadd.f32 %v528, %v540
      %v549 = vadd.f32 %v529, %v541
      %v550 = vlaneseq
      %v551 = vshrl.u32 %v550, 7
      %v552 = vsub.s32 1, %v551
      %v553 = vrot.slane %v428, %v552
      %v554 = vmul.f32 %v404, %v553
      %v555 = vmul.f32 %v405, %v553
      %v556 = vmul.f32 %v406, %v553
      %v557 = vmul.f32 %v407, %v553
      %v558 = vmul.f32 %v408, %v553
      %v559 = vmul.f32 %v409, %v553
      %v560 = vmul.f32 %v410, %v553
      %v561 = vmul.f32 %v411, %v553
      %v562 = vadd.f32 %v542, %v554
      %v563 = vadd.f32 %v543, %v555
      %v564 = vadd.f32 %v544, %v556
      %v565 = vadd.f32 %v545, %v557
      %v566 = vadd.f32 %v546, %v558
      %v567 = vadd.f32 %v547, %v559
      %v568 = vadd.f32 %v548, %v560
      %v569 = vadd.f32 %v549, %v561
      %v570 = vlaneseq
      %v571 = vshrl.u32 %v570, 7
      %v572 = vsub.s32 2, %v571
      %v573 = vrot.slane %v428, %v572
      %v574 = vmul.f32 %v469, %v573
      %v575 = vmul.f32 %v470, %v573
      %v576 = vmul.f32 %v471, %v573
      %v577 = vmul.f32 %v472, %v573
      %v578 = vmul.f32 %v473, %v573
      %v579 = vmul.f32 %v474, %v573
      %v580 = vmul.f32 %v475, %v573
      %v581 = vmul.f32 %v476, %v573
      %v582 = vadd.f32 %v562, %v574
      %v583 = vadd.f32 %v563, %v575
      %v584 = vadd.f32 %v564, %v576
      %v585 = vadd.f32 %v565, %v577
      %v586 = vadd.f32 %v566, %v578
      %v587 = vadd.f32 %v567, %v579
      %v588 = vadd.f32 %v568, %v580
      %v589 = vadd.f32 %v569, %v581
      %v590 = vlaneseq
      %v591 = vshrl.u32 %v590, 7
      %v592 = vsub.s32 0, %v591
      %v593 = vrot.slane %v429, %v592
      %v594 = vmul.f32 %v447, %v593
      %v595 = vmul.f32 %v448, %v593
      %v596 = vmul.f32 %v449, %v593
      %v597 = vmul.f32 %v450, %v593
      %v598 = vmul.f32 %v451, %v593
      %v599 = vmul.f32 %v452, %v593
      %v600 = vmul.f32 %v453, %v593
      %v601 = vmul.f32 %v454, %v593
      %v602 = vadd.f32 %v582, %v594
      %v603 = vadd.f32 %v583, %v595
      %v604 = vadd.f32 %v584, %v596
      %v605 = vadd.f32 %v585, %v597
      %v606 = vadd.f32 %v586, %v598
      %v607 = vadd.f32 %v587, %v599
      %v608 = vadd.f32 %v588, %v600
      %v609 = vadd.f32 %v589, %v601
      %v610 = vlaneseq
      %v611 = vshrl.u32 %v610, 7
      %v612 = vsub.s32 1, %v611
      %v613 = vrot.slane %v429, %v612
      %v614 = vmul.f32 %v405, %v613
      %v615 = vmul.f32 %v406, %v613
      %v616 = vmul.f32 %v407, %v613
      %v617 = vmul.f32 %v408, %v613
      %v618 = vmul.f32 %v409, %v613
      %v619 = vmul.f32 %v410, %v613
      %v620 = vmul.f32 %v411, %v613
      %v621 = vmul.f32 %v426, %v613
      %v622 = vadd.f32 %v602, %v614
      %v623 = vadd.f32 %v603, %v615
      %v624 = vadd.f32 %v604, %v616
      %v625 = vadd.f32 %v605, %v617
      %v626 = vadd.f32 %v606, %v618
      %v627 = vadd.f32 %v607, %v619
      %v628 = vadd.f32 %v608, %v620
      %v629 = vadd.f32 %v609, %v621
      %v630 = vlaneseq
      %v631 = vshrl.u32 %v630, 7
      %v632 = vsub.s32 2, %v631
      %v633 = vrot.slane %v429, %v632
      %v634 = vmul.f32 %v470, %v633
      %v635 = vmul.f32 %v471, %v633
      %v636 = vmul.f32 %v472, %v633
      %v637 = vmul.f32 %v473, %v633
      %v638 = vmul.f32 %v474, %v633
      %v639 = vmul.f32 %v475, %v633
      %v640 = vmul.f32 %v476, %v633
      %v641 = vmul.f32 %v477, %v633
      %v642 = vadd.f32 %v622, %v634
      %v643 = vadd.f32 %v623, %v635
      %v644 = vadd.f32 %v624, %v636
      %v645 = vadd.f32 %v625, %v637
      %v646 = vadd.f32 %v626, %v638
      %v647 = vadd.f32 %v627, %v639
      %v648 = vadd.f32 %v628, %v640
      %v649 = vadd.f32 %v629, %v641
      %v650 = vmul.f32 %v642, 0.5
      %v651 = vmul.f32 %v643, 0.5
      %v652 = vmul.f32 %v644, 0.5
      %v653 = vmul.f32 %v645, 0.5
      %v654 = vmul.f32 %v646, 0.5
      %v655 = vmul.f32 %v647, 0.5
      %v656 = vmul.f32 %v648, 0.5
      %v657 = vmul.f32 %v649, 0.5
      %v658 = vmul.f32 %v642, 0.70710677
      %v659 = vmul.f32 %v643, 0.70710677
      %v660 = vmul.f32 %v644, 0.70710677
      %v661 = vmul.f32 %v645, 0.70710677
      %v662 = vmul.f32 %v646, 0.70710677
      %v663 = vmul.f32 %v647, 0.70710677
      %v664 = vmul.f32 %v648, 0.70710677
      %v665 = vmul.f32 %v649, 0.70710677
      %v666 = verf.f32.pop %v658
      %v667 = verf.f32.pop %v659
      %v668 = verf.f32.pop %v660
      %v669 = verf.f32.pop %v661
      %v670 = verf.f32.pop %v662
      %v671 = verf.f32.pop %v663
      %v672 = verf.f32.pop %v664
      %v673 = verf.f32.pop %v665
      %v674 = vadd.f32 %v666, 1.0
      %v675 = vadd.f32 %v667, 1.0
      %v676 = vadd.f32 %v668, 1.0
      %v677 = vadd.f32 %v669, 1.0
      %v678 = vadd.f32 %v670, 1.0
      %v679 = vadd.f32 %v671, 1.0
      %v680 = vadd.f32 %v672, 1.0
      %v681 = vadd.f32 %v673, 1.0
      %v682 = vmul.f32 %v650, %v674
      %v683 = vmul.f32 %v651, %v675
      %v684 = vmul.f32 %v652, %v676
      %v685 = vmul.f32 %v653, %v677
      %v686 = vmul.f32 %v654, %v678
      %v687 = vmul.f32 %v655, %v679
      %v688 = vmul.f32 %v656, %v680
      %v689 = vmul.f32 %v657, %v681
      %v690 = vpack.c.bf16 %v682, %v682
      %v691 = vpack.c.bf16 %v683, %v683
      %v692 = vpack.c.bf16 %v684, %v684
      %v693 = vpack.c.bf16 %v685, %v685
      %v694 = vpack.c.bf16 %v686, %v686
      %v695 = vpack.c.bf16 %v687, %v687
      %v696 = vpack.c.bf16 %v688, %v688
      %v697 = vpack.c.bf16 %v689, %v689
      %vm698 = vcmask 257024
      %699 = vst.msk [vmem:[%s353] sm:$0xf] %vm698, %v690
      %700 = vst.msk [vmem:[%s353 + $0x4] sm:$0xf] %vm698, %v691
      %701 = vst.msk [vmem:[%s353 + $0x8] sm:$0xf] %vm698, %v692
      %702 = vst.msk [vmem:[%s353 + $0xc] sm:$0xf] %vm698, %v693
      %703 = vst.msk [vmem:[%s353 + $0x10] sm:$0xf] %vm698, %v694
      %704 = vst.msk [vmem:[%s353 + $0x14] sm:$0xf] %vm698, %v695
      %705 = vst.msk [vmem:[%s353 + $0x18] sm:$0xf] %vm698, %v696
      %706 = vst.msk [vmem:[%s353 + $0x1c] sm:$0xf] %vm698, %v697
      %s707 = smul.u32 8, %s20
      %p708 = scmp.lt.s32.totalorder %s19, 1
      %s709 = scalar_select %p708, %s19, 1
      %p710 = scmp.lt.s32.totalorder %s707, 7
      %s711 = scalar_select %p710, %s707, 7
      %s712 = smul.addr %s709, 8
      %s713 = sadd.s32 %s711, %s712
      %s714 = smul.addr %s713, 4
      %s715 = scalar_lea.vmem %s4, %s714
      // Predicated region
      $region37: #{igab_forward.24} parent=35 // pred_check
        %p716 = pneg %p168
      $region38: #{igab_forward.24} parent=35 // pred_check_branch
        %718 = sbr.rel (%p716) target = $region40
      $region39: #{igab_forward.24} parent=35 // pred_region
        %s719 = smul.u32 8, %s20
      $region40: #{igab_forward.24} parent=35 // pred_fallthru
        _
    $region36: #{igab_forward.24} parent=5 // pred_fallthru
      _
    %p720 = scmp.le.s32.totalorder 2, %s10
    // Predicated region
    $region41: #{igab_forward.24} parent=5 // pred_check
      %p721 = pneg %p720
    $region42: #{igab_forward.24} parent=5 // pred_check_branch
      %723 = sbr.rel (%p721) target = $region44
    $region43: #{igab_forward.24} parent=5 // pred_region
      %s724 = ssub.s32 %s10, 2
      // Predicated region
      $region45: #{igab_forward.24} parent=43 // pred_check
        %p725 = pneg %p174
      $region46: #{igab_forward.24} parent=43 // pred_check_branch
        %727 = sbr.rel (%p725) target = $region48
      $region47: #{igab_forward.24} parent=43 // pred_region
        %s728 = smul.u32 8, %s22
        %p729 = scmp.lt.s32.totalorder %s21, 1
        %s730 = scalar_select %p729, %s21, 1
        %p731 = scmp.lt.s32.totalorder %s728, 7
        %s732 = scalar_select %p731, %s728, 7
        %s733 = smul.addr %s730, 8
        %s734 = sadd.s32 %s732, %s733
        %s735 = smul.addr %s734, 4
        %s736 = scalar_lea.vmem %s4, %s735
      $region48: #{igab_forward.24} parent=43 // pred_fallthru
        _
    $region44: #{igab_forward.24} parent=5 // pred_fallthru
      _
  $region6: #{igab_forward.24} parent=0 // loop_footer
    %s14 = sadd.s32 1, %s10
  $region7: #{igab_forward.24} parent=0 // loop_footer_branch
    %9 = sbr.rel target = $region3
  $region8: #{igab_forward.24} parent=0 // loop_exit
    _

// kernel: igab_forward.23
$region0: #{igab_forward.23}
  #allocation0 [shape = 'u32[]', space=smem, size = 0x4, offset = 0x4, fixed_abs, tag = 'smem constant byte address 0x4 - core index']
  #allocation1 [shape = 'u32[144,128]{1,0:T(1,128)}', space=vmem, size = 0x12000, scoped, tag = 'internal scratch']
  %s0 = inlined_call_operand.vmem [shape: f32[128,16], index: 0, kind: input, shape index: {}]
  %s1 = inlined_call_operand.vmem [shape: bf16[16,32], index: 1, kind: input, shape index: {}]
  %s2 = inlined_call_operand.vmem [shape: f32[2,16], index: 2, kind: input, shape index: {}]
  %s3 = inlined_call_operand.vmem [shape: f32[1,16], index: 3, kind: input, shape index: {}]
  %s4 = inlined_call_operand.vmem [shape: f32[1,16], index: 4, kind: input, shape index: {}]
  %s5 = inlined_call_operand.vmem [shape: bf16[128,32], index: 5, kind: output, shape index: {}]
  %s6 = sld [smem:[#allocation0]]
  $region30: #{igab_forward.23} parent=0
    _
  %s8 = ssub.s32 1, %s6
  %s9 = scalar_select 0, %s8, %s6
  // Predicated region
  $region2: #{igab_forward.23} parent=0 // pred_check
    _
  $region3: #{igab_forward.23} parent=0 // pred_check_branch
    %11 = sbr.rel (0) target = $region5
  $region4: #{igab_forward.23} parent=0 // pred_region
    _
  $region5: #{igab_forward.23} parent=0 // pred_fallthru
    _
  // Predicated region
  $region6: #{igab_forward.23} parent=0 // pred_check
    _
  $region7: #{igab_forward.23} parent=0 // pred_check_branch
    %13 = sbr.rel (0) target = $region9
  $region8: #{igab_forward.23} parent=0 // pred_region
    _
  $region9: #{igab_forward.23} parent=0 // pred_fallthru
    _
  // Predicated region
  $region10: #{igab_forward.23} parent=0 // pred_check
    _
  $region11: #{igab_forward.23} parent=0 // pred_check_branch
    %15 = sbr.rel (0) target = $region13
  $region12: #{igab_forward.23} parent=0 // pred_region
    _
  $region13: #{igab_forward.23} parent=0 // pred_fallthru
    _
  // Predicated region
  $region14: #{igab_forward.23} parent=0 // pred_check
    _
  $region15: #{igab_forward.23} parent=0 // pred_check_branch
    %17 = sbr.rel (0) target = $region17
  $region16: #{igab_forward.23} parent=0 // pred_region
    _
  $region17: #{igab_forward.23} parent=0 // pred_fallthru
    _
  // Predicated region
  $region18: #{igab_forward.23} parent=0 // pred_check
    _
  $region19: #{igab_forward.23} parent=0 // pred_check_branch
    %19 = sbr.rel (0) target = $region21
  $region20: #{igab_forward.23} parent=0 // pred_region
    _
  $region21: #{igab_forward.23} parent=0 // pred_fallthru
    _
  %v21 = vld [vmem:[%s0] sm:$0xff]
  %v22 = vld [vmem:[%s0 + $0x8] sm:$0xff]
  %v23 = vld [vmem:[%s0 + $0x10] sm:$0xff]
  %v24 = vld [vmem:[%s0 + $0x18] sm:$0xff]
  %v25 = vld [vmem:[%s0 + $0x20] sm:$0xff]
  %v26 = vld [vmem:[%s0 + $0x28] sm:$0xff]
  %v27 = vld [vmem:[%s0 + $0x30] sm:$0xff]
  %v28 = vld [vmem:[%s0 + $0x38] sm:$0xff]
  %v29 = vld [vmem:[%s0 + $0x40] sm:$0xff]
  %v30 = vld [vmem:[%s0 + $0x48] sm:$0xff]
  %v31 = vld [vmem:[%s0 + $0x50] sm:$0xff]
  %v32 = vld [vmem:[%s0 + $0x58] sm:$0xff]
  %v33 = vld [vmem:[%s0 + $0x60] sm:$0xff]
  %v34 = vld [vmem:[%s0 + $0x68] sm:$0xff]
  %v35 = vld [vmem:[%s0 + $0x70] sm:$0xff]
  %v36 = vld [vmem:[%s0 + $0x78] sm:$0xff]
  %v37 = vld [vmem:[%s2] sm:$0x1]
  %v38 = vmul.f32 %v37, 0.0078125
  %v39 = vld [vmem:[%s2 + $0x1] sm:$0x1]
  %v40 = vmul.f32 %v39, 0.0078125
  %v41 = vmul.f32 %v38, %v38
  %v42 = vsub.f32 %v40, %v41
  %v43 = vmax.f32 %v42, 0.0
  %v44 = vld [vmem:[%s3] sm:$0x1]
  %v45 = vadd.f32 %v43, 1e-05
  %v46 = vrsqrt.pop %v45
  %v47 = vmul.f32 %v44, %v46
  %v48 = vld [vmem:[%s4] sm:$0x1]
  %v49 = vmul.f32 %v38, %v47
  %v50 = vsub.f32 %v48, %v49
  %v52 = vlaneseq
  %v53 = vshrl.u32 %v52, 7
  %v54 = vsub.s32 0, %v53
  %v55 = vrot.slane %v47, %v54
  %v57 = vmul.f32 %v21, %v55
  %v58 = vmul.f32 %v22, %v55
  %v59 = vmul.f32 %v23, %v55
  %v60 = vmul.f32 %v24, %v55
  %v61 = vmul.f32 %v25, %v55
  %v62 = vmul.f32 %v26, %v55
  %v63 = vmul.f32 %v27, %v55
  %v64 = vmul.f32 %v28, %v55
  %v65 = vmul.f32 %v29, %v55
  %v66 = vmul.f32 %v30, %v55
  %v67 = vmul.f32 %v31, %v55
  %v68 = vmul.f32 %v32, %v55
  %v69 = vmul.f32 %v33, %v55
  %v70 = vmul.f32 %v34, %v55
  %v71 = vmul.f32 %v35, %v55
  %v72 = vmul.f32 %v36, %v55
  %v74 = vlaneseq
  %v75 = vshrl.u32 %v74, 7
  %v76 = vsub.s32 0, %v75
  %v77 = vrot.slane %v50, %v76
  %v79 = vadd.f32 %v57, %v77
  %v80 = vadd.f32 %v58, %v77
  %v81 = vadd.f32 %v59, %v77
  %v82 = vadd.f32 %v60, %v77
  %v83 = vadd.f32 %v61, %v77
  %v84 = vadd.f32 %v62, %v77
  %v85 = vadd.f32 %v63, %v77
  %v86 = vadd.f32 %v64, %v77
  %v87 = vadd.f32 %v65, %v77
  %v88 = vadd.f32 %v66, %v77
  %v89 = vadd.f32 %v67, %v77
  %v90 = vadd.f32 %v68, %v77
  %v91 = vadd.f32 %v69, %v77
  %v92 = vadd.f32 %v70, %v77
  %v93 = vadd.f32 %v71, %v77
  %v94 = vadd.f32 %v72, %v77
  %v95 = vpack.c.bf16 %v80, %v79
  %v96 = vpack.c.bf16 %v82, %v81
  %v97 = vpack.c.bf16 %v84, %v83
  %v98 = vpack.c.bf16 %v86, %v85
  %v99 = vpack.c.bf16 %v88, %v87
  %v100 = vpack.c.bf16 %v90, %v89
  %v101 = vpack.c.bf16 %v92, %v91
  %v102 = vpack.c.bf16 %v94, %v93
  %v103 = vld [vmem:[%s1] sm:$0xf]
  %v104 = vld [vmem:[%s1 + $0x4] sm:$0xf]
  %v107 = vunpack.c.l.b16 %v103
  %v108 = vunpack.c.l.b16 %v104
  %v109 = vpack.c.b16 %v108, %v107
  %vm111 = vcmask 130048
  %v113 = vsel %vm111, %v95, 0
  %v116 = vsel %vm111, %v96, 0
  %v119 = vsel %vm111, %v97, 0
  %v122 = vsel %vm111, %v98, 0
  %v125 = vsel %vm111, %v99, 0
  %v128 = vsel %vm111, %v100, 0
  %v131 = vsel %vm111, %v101, 0
  %v134 = vsel %vm111, %v102, 0
  %136 = vmatprep.subr.bf16.mxu0 0
  %137 = vmatpush1.bf16.msra.mxu0 %v109
  %138 = vmatprep.subr.bf16.mxu0 0
  %139 = vmatpush1.bf16.msra.mxu0 0
  %140 = vmatprep.subr.bf16.mxu0 0
  %141 = vmatpush1.bf16.msra.mxu0 0
  %142 = vmatprep.subr.bf16.mxu0 0
  %143 = vmatpush1.bf16.msra.mxu0 0
  %144 = vmatprep.subr.bf16.mxu0 0
  %145 = vmatpush1.bf16.msra.mxu0 0
  %146 = vmatprep.subr.bf16.mxu0 0
  %147 = vmatpush1.bf16.msra.mxu0 0
  %148 = vmatprep.subr.bf16.mxu0 0
  %149 = vmatpush1.bf16.msra.mxu0 0
  %150 = vmatprep.subr.bf16.mxu0 0
  %151 = vmatpush1.bf16.msra.mxu0 0
  %152 = vmatprep.subr.bf16.mxu0 0
  %153 = vmatpush1.bf16.msra.mxu0 0
  %154 = vmatprep.subr.bf16.mxu0 0
  %155 = vmatpush1.bf16.msra.mxu0 0
  %156 = vmatprep.subr.bf16.mxu0 0
  %157 = vmatpush1.bf16.msra.mxu0 0
  %158 = vmatprep.subr.bf16.mxu0 0
  %159 = vmatpush1.bf16.msra.mxu0 0
  %160 = vmatprep.subr.bf16.mxu0 0
  %161 = vmatpush1.bf16.msra.mxu0 0
  %162 = vmatprep.subr.bf16.mxu0 0
  %163 = vmatpush1.bf16.msra.mxu0 0
  %164 = vmatprep.subr.bf16.mxu0 0
  %165 = vmatpush1.bf16.msra.mxu0 0
  %166 = vmatprep.subr.bf16.mxu0 0
  %167 = vmatpush1.bf16.msra.mxu0 0
  %168 = vmatprep.mubr.bf16.mxu0 0
  %169 = vmatmul.mubr.bf16.gmra.mrb[0].mxu0 %v113
  %v170 = vpop.f32.mrb[0].mxu0
  %v171 = vadd.f32 0.0, %v170
  %v172 = vpop.f32.mrb[0].mxu0
  %v173 = vpop.f32.mrb[0].mxu0
  %v174 = vadd.f32 0.0, %v173
  %v175 = vpop.f32.mrb[0].mxu0
  %176 = vmatprep.mubr.bf16.mxu0 0
  %177 = vmatmul.mubr.bf16.gmra.mrb[0].mxu0 %v116
  %v178 = vpop.f32.mrb[0].mxu0
  %v179 = vadd.f32 0.0, %v178
  %v180 = vpop.f32.mrb[0].mxu0
  %v181 = vpop.f32.mrb[0].mxu0
  %v182 = vadd.f32 0.0, %v181
  %v183 = vpop.f32.mrb[0].mxu0
  %184 = vmatprep.mubr.bf16.mxu0 0
  %185 = vmatmul.mubr.bf16.gmra.mrb[0].mxu0 %v119
  %v186 = vpop.f32.mrb[0].mxu0
  %v187 = vadd.f32 0.0, %v186
  %v188 = vpop.f32.mrb[0].mxu0
  %v189 = vpop.f32.mrb[0].mxu0
  %v190 = vadd.f32 0.0, %v189
  %v191 = vpop.f32.mrb[0].mxu0
  %192 = vmatprep.mubr.bf16.mxu0 0
  %193 = vmatmul.mubr.bf16.gmra.mrb[0].mxu0 %v122
  %v194 = vpop.f32.mrb[0].mxu0
  %v195 = vadd.f32 0.0, %v194
  %v196 = vpop.f32.mrb[0].mxu0
  %v197 = vpop.f32.mrb[0].mxu0
  %v198 = vadd.f32 0.0, %v197
  %v199 = vpop.f32.mrb[0].mxu0
  %200 = vmatprep.mubr.bf16.mxu0 0
  %201 = vmatmul.mubr.bf16.gmra.mrb[0].mxu0 %v125
  %v202 = vpop.f32.mrb[0].mxu0
  %v203 = vadd.f32 0.0, %v202
  %v204 = vpop.f32.mrb[0].mxu0
  %v205 = vpop.f32.mrb[0].mxu0
  %v206 = vadd.f32 0.0, %v205
  %v207 = vpop.f32.mrb[0].mxu0
  %208 = vmatprep.mubr.bf16.mxu0 0
  %209 = vmatmul.mubr.bf16.gmra.mrb[0].mxu0 %v128
  %v210 = vpop.f32.mrb[0].mxu0
  %v211 = vadd.f32 0.0, %v210
  %v212 = vpop.f32.mrb[0].mxu0
  %v213 = vpop.f32.mrb[0].mxu0
  %v214 = vadd.f32 0.0, %v213
  %v215 = vpop.f32.mrb[0].mxu0
  %216 = vmatprep.mubr.bf16.mxu0 0
  %217 = vmatmul.mubr.bf16.gmra.mrb[0].mxu0 %v131
  %v218 = vpop.f32.mrb[0].mxu0
  %v219 = vadd.f32 0.0, %v218
  %v220 = vpop.f32.mrb[0].mxu0
  %v221 = vpop.f32.mrb[0].mxu0
  %v222 = vadd.f32 0.0, %v221
  %v223 = vpop.f32.mrb[0].mxu0
  %224 = vmatprep.mubr.bf16.mxu0 0
  %225 = vmatmul.mubr.bf16.gmra.mrb[0].mxu0 %v134
  %v226 = vpop.f32.mrb[0].mxu0
  %v227 = vadd.f32 0.0, %v226
  %v228 = vpop.f32.mrb[0].mxu0
  %v229 = vpop.f32.mrb[0].mxu0
  %v230 = vadd.f32 0.0, %v229
  %v231 = vpop.f32.mrb[0].mxu0
  %232 = vdwg.mxu0
  %v233 = vmul.f32 %v171, 0.5
  %v234 = vmul.f32 %v174, 0.5
  %v235 = vmul.f32 %v179, 0.5
  %v236 = vmul.f32 %v182, 0.5
  %v237 = vmul.f32 %v187, 0.5
  %v238 = vmul.f32 %v190, 0.5
  %v239 = vmul.f32 %v195, 0.5
  %v240 = vmul.f32 %v198, 0.5
  %v241 = vmul.f32 %v203, 0.5
  %v242 = vmul.f32 %v206, 0.5
  %v243 = vmul.f32 %v211, 0.5
  %v244 = vmul.f32 %v214, 0.5
  %v245 = vmul.f32 %v219, 0.5
  %v246 = vmul.f32 %v222, 0.5
  %v247 = vmul.f32 %v227, 0.5
  %v248 = vmul.f32 %v230, 0.5
  %v249 = vmul.f32 %v171, 0.70710677
  %v250 = vmul.f32 %v174, 0.70710677
  %v251 = vmul.f32 %v179, 0.70710677
  %v252 = vmul.f32 %v182, 0.70710677
  %v253 = vmul.f32 %v187, 0.70710677
  %v254 = vmul.f32 %v190, 0.70710677
  %v255 = vmul.f32 %v195, 0.70710677
  %v256 = vmul.f32 %v198, 0.70710677
  %v257 = vmul.f32 %v203, 0.70710677
  %v258 = vmul.f32 %v206, 0.70710677
  %v259 = vmul.f32 %v211, 0.70710677
  %v260 = vmul.f32 %v214, 0.70710677
  %v261 = vmul.f32 %v219, 0.70710677
  %v262 = vmul.f32 %v222, 0.70710677
  %v263 = vmul.f32 %v227, 0.70710677
  %v264 = vmul.f32 %v230, 0.70710677
  %v265 = verf.f32.pop %v249
  %v266 = verf.f32.pop %v250
  %v267 = verf.f32.pop %v251
  %v268 = verf.f32.pop %v252
  %v269 = verf.f32.pop %v253
  %v270 = verf.f32.pop %v254
  %v271 = verf.f32.pop %v255
  %v272 = verf.f32.pop %v256
  %v273 = verf.f32.pop %v257
  %v274 = verf.f32.pop %v258
  %v275 = verf.f32.pop %v259
  %v276 = verf.f32.pop %v260
  %v277 = verf.f32.pop %v261
  %v278 = verf.f32.pop %v262
  %v279 = verf.f32.pop %v263
  %v280 = verf.f32.pop %v264
  %v281 = vadd.f32 %v265, 1.0
  %v282 = vadd.f32 %v266, 1.0
  %v283 = vadd.f32 %v267, 1.0
  %v284 = vadd.f32 %v268, 1.0
  %v285 = vadd.f32 %v269, 1.0
  %v286 = vadd.f32 %v270, 1.0
  %v287 = vadd.f32 %v271, 1.0
  %v288 = vadd.f32 %v272, 1.0
  %v289 = vadd.f32 %v273, 1.0
  %v290 = vadd.f32 %v274, 1.0
  %v291 = vadd.f32 %v275, 1.0
  %v292 = vadd.f32 %v276, 1.0
  %v293 = vadd.f32 %v277, 1.0
  %v294 = vadd.f32 %v278, 1.0
  %v295 = vadd.f32 %v279, 1.0
  %v296 = vadd.f32 %v280, 1.0
  %v297 = vmul.f32 %v233, %v281
  %v298 = vmul.f32 %v234, %v282
  %v299 = vmul.f32 %v235, %v283
  %v300 = vmul.f32 %v236, %v284
  %v301 = vmul.f32 %v237, %v285
  %v302 = vmul.f32 %v238, %v286
  %v303 = vmul.f32 %v239, %v287
  %v304 = vmul.f32 %v240, %v288
  %v305 = vmul.f32 %v241, %v289
  %v306 = vmul.f32 %v242, %v290
  %v307 = vmul.f32 %v243, %v291
  %v308 = vmul.f32 %v244, %v292
  %v309 = vmul.f32 %v245, %v293
  %v310 = vmul.f32 %v246, %v294
  %v311 = vmul.f32 %v247, %v295
  %v312 = vmul.f32 %v248, %v296
  %v313 = vpack.c.bf16 %v298, %v297
  %v314 = vpack.c.bf16 %v300, %v299
  %v315 = vpack.c.bf16 %v302, %v301
  %v316 = vpack.c.bf16 %v304, %v303
  %v317 = vpack.c.bf16 %v306, %v305
  %v318 = vpack.c.bf16 %v308, %v307
  %v319 = vpack.c.bf16 %v310, %v309
  %v320 = vpack.c.bf16 %v312, %v311
  %v329 = vunpack.c.l.b16 %v313
  %v330 = vunpack.c.h.b16 %v313
  %v331 = vunpack.c.l.b16 %v314
  %v332 = vunpack.c.h.b16 %v314
  %v333 = vunpack.c.l.b16 %v315
  %v334 = vunpack.c.h.b16 %v315
  %v335 = vunpack.c.l.b16 %v316
  %v336 = vunpack.c.h.b16 %v316
  %v337 = vunpack.c.l.b16 %v317
  %v338 = vunpack.c.h.b16 %v317
  %v339 = vunpack.c.l.b16 %v318
  %v340 = vunpack.c.h.b16 %v318
  %v341 = vunpack.c.l.b16 %v319
  %v342 = vunpack.c.h.b16 %v319
  %v343 = vunpack.c.l.b16 %v320
  %v344 = vunpack.c.h.b16 %v320
  %v345 = vpack.c.b16 %v329, %v329
  %v346 = vpack.c.b16 %v330, %v330
  %v347 = vpack.c.b16 %v331, %v331
  %v348 = vpack.c.b16 %v332, %v332
  %v349 = vpack.c.b16 %v333, %v333
  %v350 = vpack.c.b16 %v334, %v334
  %v351 = vpack.c.b16 %v335, %v335
  %v352 = vpack.c.b16 %v336, %v336
  %v353 = vpack.c.b16 %v337, %v337
  %v354 = vpack.c.b16 %v338, %v338
  %v355 = vpack.c.b16 %v339, %v339
  %v356 = vpack.c.b16 %v340, %v340
  %v357 = vpack.c.b16 %v341, %v341
  %v358 = vpack.c.b16 %v342, %v342
  %v359 = vpack.c.b16 %v343, %v343
  %v360 = vpack.c.b16 %v344, %v344
  %vm377 = vcmask 257024
  %378 = vst.msk [vmem:[%s5] sm:$0xf] %vm377, %v345
  %379 = vst.msk [vmem:[%s5 + $0x4] sm:$0xf] %vm377, %v346
  %380 = vst.msk [vmem:[%s5 + $0x8] sm:$0xf] %vm377, %v347
  %381 = vst.msk [vmem:[%s5 + $0xc] sm:$0xf] %vm377, %v348
  %382 = vst.msk [vmem:[%s5 + $0x10] sm:$0xf] %vm377, %v349
  %383 = vst.msk [vmem:[%s5 + $0x14] sm:$0xf] %vm377, %v350
  %384 = vst.msk [vmem:[%s5 + $0x18] sm:$0xf] %vm377, %v351
  %385 = vst.msk [vmem:[%s5 + $0x1c] sm:$0xf] %vm377, %v352
  %386 = vst.msk [vmem:[%s5 + $0x20] sm:$0xf] %vm377, %v353
  %387 = vst.msk [vmem:[%s5 + $0x24] sm:$0xf] %vm377, %v354
  %388 = vst.msk [vmem:[%s5 + $0x28] sm:$0xf] %vm377, %v355
  %389 = vst.msk [vmem:[%s5 + $0x2c] sm:$0xf] %vm377, %v356
  %390 = vst.msk [vmem:[%s5 + $0x30] sm:$0xf] %vm377, %v357
  %391 = vst.msk [vmem:[%s5 + $0x34] sm:$0xf] %vm377, %v358
  %392 = vst.msk [vmem:[%s5 + $0x38] sm:$0xf] %vm377, %v359
  %393 = vst.msk [vmem:[%s5 + $0x3c] sm:$0xf] %vm377, %v360
  // Predicated region
  $region22: #{igab_forward.23} parent=0 // pred_check
    _
  $region23: #{igab_forward.23} parent=0 // pred_check_branch
    %395 = sbr.rel (0) target = $region25
  $region24: #{igab_forward.23} parent=0 // pred_region
    _
  $region25: #{igab_forward.23} parent=0 // pred_fallthru
    _
  // Predicated region
  $region26: #{igab_forward.23} parent=0 // pred_check
    _
  $region27: #{igab_forward.23} parent=0 // pred_check_branch
    %397 = sbr.rel (0) target = $region29
  $region28: #{igab_forward.23} parent=0 // pred_region
    _
  $region29: #{igab_forward.23} parent=0 // pred_fallthru
    _

// kernel: igab_forward.33
$region0: #{igab_forward.33}
  #allocation0 [shape = 'u32[]', space=smem, size = 0x4, offset = 0x4, fixed_abs, tag = 'smem constant byte address 0x4 - core index']
  #allocation1 [shape = 'u32[144,128]{1,0:T(1,128)}', space=vmem, size = 0x12000, scoped, tag = 'internal scratch']
  %s0 = inlined_call_operand.vmem [shape: bf16[128,32], index: 0, kind: input, shape index: {}]
  %s1 = inlined_call_operand.vmem [shape: bf16[32,16], index: 1, kind: input, shape index: {}]
  %s2 = inlined_call_operand.vmem [shape: f32[128,16], index: 2, kind: input, shape index: {}]
  %s3 = inlined_call_operand.hbm [shape: f32[128,16], index: 3, kind: output, shape index: {}]
  %s4 = sld [smem:[#allocation0]]
  $region22: #{igab_forward.33} parent=0
    _
  %s6 = ssub.s32 1, %s4
  %s7 = scalar_select 0, %s6, %s4
  $region1: #{igab_forward.33} parent=0
    #allocation2 [shape = 'u8[65536]{0}', space=vmem, size = 0x10000, scoped, tag = 'output window, operand 0, single buffered']
    #allocation3 [shape = 's32[1]{0}', space=sflag, size = 0x4, scoped, tag = 'scoped memory for igab_forward.33']
    %8 = vsyncpa [#allocation3], 0
    // Predicated region
    $region2: #{igab_forward.33} parent=1 // pred_check
      _
    $region3: #{igab_forward.33} parent=1 // pred_check_branch
      %10 = sbr.rel (0) target = $region5
    $region4: #{igab_forward.33} parent=1 // pred_region
      _
    $region5: #{igab_forward.33} parent=1 // pred_fallthru
      _
    // Predicated region
    $region6: #{igab_forward.33} parent=1 // pred_check
      _
    $region7: #{igab_forward.33} parent=1 // pred_check_branch
      %12 = sbr.rel (0) target = $region9
    $region8: #{igab_forward.33} parent=1 // pred_region
      _
    $region9: #{igab_forward.33} parent=1 // pred_fallthru
      _
    // Predicated region
    $region10: #{igab_forward.33} parent=1 // pred_check
      _
    $region11: #{igab_forward.33} parent=1 // pred_check_branch
      %14 = sbr.rel (0) target = $region13
    $region12: #{igab_forward.33} parent=1 // pred_region
      _
    $region13: #{igab_forward.33} parent=1 // pred_fallthru
      _
    %v16 = vld [vmem:[%s0] sm:$0xf]
    %v17 = vld [vmem:[%s0 + $0x4] sm:$0xf]
    %v18 = vld [vmem:[%s0 + $0x8] sm:$0xf]
    %v19 = vld [vmem:[%s0 + $0xc] sm:$0xf]
    %v20 = vld [vmem:[%s0 + $0x10] sm:$0xf]
    %v21 = vld [vmem:[%s0 + $0x14] sm:$0xf]
    %v22 = vld [vmem:[%s0 + $0x18] sm:$0xf]
    %v23 = vld [vmem:[%s0 + $0x1c] sm:$0xf]
    %v24 = vld [vmem:[%s0 + $0x20] sm:$0xf]
    %v25 = vld [vmem:[%s0 + $0x24] sm:$0xf]
    %v26 = vld [vmem:[%s0 + $0x28] sm:$0xf]
    %v27 = vld [vmem:[%s0 + $0x2c] sm:$0xf]
    %v28 = vld [vmem:[%s0 + $0x30] sm:$0xf]
    %v29 = vld [vmem:[%s0 + $0x34] sm:$0xf]
    %v30 = vld [vmem:[%s0 + $0x38] sm:$0xf]
    %v31 = vld [vmem:[%s0 + $0x3c] sm:$0xf]
    %v32 = vld [vmem:[%s1] sm:$0xf]
    %v33 = vld [vmem:[%s1 + $0x4] sm:$0xf]
    %v34 = vld [vmem:[%s1 + $0x8] sm:$0xf]
    %v35 = vld [vmem:[%s1 + $0xc] sm:$0xf]
    %v36 = vld [vmem:[%s2] sm:$0xff]
    %v37 = vld [vmem:[%s2 + $0x8] sm:$0xff]
    %v38 = vld [vmem:[%s2 + $0x10] sm:$0xff]
    %v39 = vld [vmem:[%s2 + $0x18] sm:$0xff]
    %v40 = vld [vmem:[%s2 + $0x20] sm:$0xff]
    %v41 = vld [vmem:[%s2 + $0x28] sm:$0xff]
    %v42 = vld [vmem:[%s2 + $0x30] sm:$0xff]
    %v43 = vld [vmem:[%s2 + $0x38] sm:$0xff]
    %v44 = vld [vmem:[%s2 + $0x40] sm:$0xff]
    %v45 = vld [vmem:[%s2 + $0x48] sm:$0xff]
    %v46 = vld [vmem:[%s2 + $0x50] sm:$0xff]
    %v47 = vld [vmem:[%s2 + $0x58] sm:$0xff]
    %v48 = vld [vmem:[%s2 + $0x60] sm:$0xff]
    %v49 = vld [vmem:[%s2 + $0x68] sm:$0xff]
    %v50 = vld [vmem:[%s2 + $0x70] sm:$0xff]
    %v51 = vld [vmem:[%s2 + $0x78] sm:$0xff]
    %v68 = vunpack.c.l.b16 %v16
    %v69 = vunpack.c.l.b16 %v17
    %v70 = vunpack.c.l.b16 %v18
    %v71 = vunpack.c.l.b16 %v19
    %v72 = vunpack.c.l.b16 %v20
    %v73 = vunpack.c.l.b16 %v21
    %v74 = vunpack.c.l.b16 %v22
    %v75 = vunpack.c.l.b16 %v23
    %v76 = vunpack.c.l.b16 %v24
    %v77 = vunpack.c.l.b16 %v25
    %v78 = vunpack.c.l.b16 %v26
    %v79 = vunpack.c.l.b16 %v27
    %v80 = vunpack.c.l.b16 %v28
    %v81 = vunpack.c.l.b16 %v29
    %v82 = vunpack.c.l.b16 %v30
    %v83 = vunpack.c.l.b16 %v31
    %v84 = vpack.c.b16 %v69, %v68
    %v85 = vpack.c.b16 %v71, %v70
    %v86 = vpack.c.b16 %v73, %v72
    %v87 = vpack.c.b16 %v75, %v74
    %v88 = vpack.c.b16 %v77, %v76
    %v89 = vpack.c.b16 %v79, %v78
    %v90 = vpack.c.b16 %v81, %v80
    %v91 = vpack.c.b16 %v83, %v82
    %v96 = vunpack.c.l.b16 %v32
    %v97 = vunpack.c.l.b16 %v33
    %v98 = vunpack.c.l.b16 %v34
    %v99 = vunpack.c.l.b16 %v35
    %v100 = vpack.c.b16 %v97, %v96
    %v101 = vpack.c.b16 %v99, %v98
    %vm104 = vcmask 261120
    %v106 = vsel %vm104, %v84, 0
    %v109 = vsel %vm104, %v85, 0
    %v112 = vsel %vm104, %v86, 0
    %v115 = vsel %vm104, %v87, 0
    %v118 = vsel %vm104, %v88, 0
    %v121 = vsel %vm104, %v89, 0
    %v124 = vsel %vm104, %v90, 0
    %v127 = vsel %vm104, %v91, 0
    %129 = vmatprep.subr.bf16.mxu0 0
    %130 = vmatpush1.bf16.msra.mxu0 %v100
    %131 = vmatprep.subr.bf16.mxu0 0
    %132 = vmatpush1.bf16.msra.mxu0 %v101
    %133 = vmatprep.subr.bf16.mxu0 0
    %134 = vmatpush1.bf16.msra.mxu0 0
    %135 = vmatprep.subr.bf16.mxu0 0
    %136 = vmatpush1.bf16.msra.mxu0 0
    %137 = vmatprep.subr.bf16.mxu0 0
    %138 = vmatpush1.bf16.msra.mxu0 0
    %139 = vmatprep.subr.bf16.mxu0 0
    %140 = vmatpush1.bf16.msra.mxu0 0
    %141 = vmatprep.subr.bf16.mxu0 0
    %142 = vmatpush1.bf16.msra.mxu0 0
    %143 = vmatprep.subr.bf16.mxu0 0
    %144 = vmatpush1.bf16.msra.mxu0 0
    %145 = vmatprep.subr.bf16.mxu0 0
    %146 = vmatpush1.bf16.msra.mxu0 0
    %147 = vmatprep.subr.bf16.mxu0 0
    %148 = vmatpush1.bf16.msra.mxu0 0
    %149 = vmatprep.subr.bf16.mxu0 0
    %150 = vmatpush1.bf16.msra.mxu0 0
    %151 = vmatprep.subr.bf16.mxu0 0
    %152 = vmatpush1.bf16.msra.mxu0 0
    %153 = vmatprep.subr.bf16.mxu0 0
    %154 = vmatpush1.bf16.msra.mxu0 0
    %155 = vmatprep.subr.bf16.mxu0 0
    %156 = vmatpush1.bf16.msra.mxu0 0
    %157 = vmatprep.subr.bf16.mxu0 0
    %158 = vmatpush1.bf16.msra.mxu0 0
    %159 = vmatprep.subr.bf16.mxu0 0
    %160 = vmatpush1.bf16.msra.mxu0 0
    %161 = vmatprep.mubr.bf16.mxu0 0
    %162 = vmatmul.mubr.bf16.gmra.mrb[0].mxu0 %v106
    %v163 = vpop.f32.mrb[0].mxu0
    %v164 = vadd.f32 %v36, %v163
    %v165 = vpop.f32.mrb[0].mxu0
    %v166 = vpop.f32.mrb[0].mxu0
    %v167 = vadd.f32 %v37, %v166
    %v168 = vpop.f32.mrb[0].mxu0
    %169 = vmatprep.mubr.bf16.mxu0 0
    %170 = vmatmul.mubr.bf16.gmra.mrb[0].mxu0 %v109
    %v171 = vpop.f32.mrb[0].mxu0
    %v172 = vadd.f32 %v38, %v171
    %v173 = vpop.f32.mrb[0].mxu0
    %v174 = vpop.f32.mrb[0].mxu0
    %v175 = vadd.f32 %v39, %v174
    %v176 = vpop.f32.mrb[0].mxu0
    %177 = vmatprep.mubr.bf16.mxu0 0
    %178 = vmatmul.mubr.bf16.gmra.mrb[0].mxu0 %v112
    %v179 = vpop.f32.mrb[0].mxu0
    %v180 = vadd.f32 %v40, %v179
    %v181 = vpop.f32.mrb[0].mxu0
    %v182 = vpop.f32.mrb[0].mxu0
    %v183 = vadd.f32 %v41, %v182
    %v184 = vpop.f32.mrb[0].mxu0
    %185 = vmatprep.mubr.bf16.mxu0 0
    %186 = vmatmul.mubr.bf16.gmra.mrb[0].mxu0 %v115
    %v187 = vpop.f32.mrb[0].mxu0
    %v188 = vadd.f32 %v42, %v187
    %v189 = vpop.f32.mrb[0].mxu0
    %v190 = vpop.f32.mrb[0].mxu0
    %v191 = vadd.f32 %v43, %v190
    %v192 = vpop.f32.mrb[0].mxu0
    %193 = vmatprep.mubr.bf16.mxu0 0
    %194 = vmatmul.mubr.bf16.gmra.mrb[0].mxu0 %v118
    %v195 = vpop.f32.mrb[0].mxu0
    %v196 = vadd.f32 %v44, %v195
    %v197 = vpop.f32.mrb[0].mxu0
    %v198 = vpop.f32.mrb[0].mxu0
    %v199 = vadd.f32 %v45, %v198
    %v200 = vpop.f32.mrb[0].mxu0
    %201 = vmatprep.mubr.bf16.mxu0 0
    %202 = vmatmul.mubr.bf16.gmra.mrb[0].mxu0 %v121
    %v203 = vpop.f32.mrb[0].mxu0
    %v204 = vadd.f32 %v46, %v203
    %v205 = vpop.f32.mrb[0].mxu0
    %v206 = vpop.f32.mrb[0].mxu0
    %v207 = vadd.f32 %v47, %v206
    %v208 = vpop.f32.mrb[0].mxu0
    %209 = vmatprep.mubr.bf16.mxu0 0
    %210 = vmatmul.mubr.bf16.gmra.mrb[0].mxu0 %v124
    %v211 = vpop.f32.mrb[0].mxu0
    %v212 = vadd.f32 %v48, %v211
    %v213 = vpop.f32.mrb[0].mxu0
    %v214 = vpop.f32.mrb[0].mxu0
    %v215 = vadd.f32 %v49, %v214
    %v216 = vpop.f32.mrb[0].mxu0
    %217 = vmatprep.mubr.bf16.mxu0 0
    %218 = vmatmul.mubr.bf16.gmra.mrb[0].mxu0 %v127
    %v219 = vpop.f32.mrb[0].mxu0
    %v220 = vadd.f32 %v50, %v219
    %v221 = vpop.f32.mrb[0].mxu0
    %v222 = vpop.f32.mrb[0].mxu0
    %v223 = vadd.f32 %v51, %v222
    %v224 = vpop.f32.mrb[0].mxu0
    %225 = vdwg.mxu0
    %vm226 = vcmask 130048
    %227 = vst.msk [vmem:[#allocation2] sm:$0xff] %vm226, %v164
    %228 = vst.msk [vmem:[#allocation2 + $0x8] sm:$0xff] %vm226, %v167
    %229 = vst.msk [vmem:[#allocation2 + $0x10] sm:$0xff] %vm226, %v172
    %230 = vst.msk [vmem:[#allocation2 + $0x18] sm:$0xff] %vm226, %v175
    %231 = vst.msk [vmem:[#allocation2 + $0x20] sm:$0xff] %vm226, %v180
    %232 = vst.msk [vmem:[#allocation2 + $0x28] sm:$0xff] %vm226, %v183
    %233 = vst.msk [vmem:[#allocation2 + $0x30] sm:$0xff] %vm226, %v188
    %234 = vst.msk [vmem:[#allocation2 + $0x38] sm:$0xff] %vm226, %v191
    %235 = vst.msk [vmem:[#allocation2 + $0x40] sm:$0xff] %vm226, %v196
    %236 = vst.msk [vmem:[#allocation2 + $0x48] sm:$0xff] %vm226, %v199
    %237 = vst.msk [vmem:[#allocation2 + $0x50] sm:$0xff] %vm226, %v204
    %238 = vst.msk [vmem:[#allocation2 + $0x58] sm:$0xff] %vm226, %v207
    %239 = vst.msk [vmem:[#allocation2 + $0x60] sm:$0xff] %vm226, %v212
    %240 = vst.msk [vmem:[#allocation2 + $0x68] sm:$0xff] %vm226, %v215
    %241 = vst.msk [vmem:[#allocation2 + $0x70] sm:$0xff] %vm226, %v220
    %242 = vst.msk [vmem:[#allocation2 + $0x78] sm:$0xff] %vm226, %v223
    // Predicated region
    $region14: #{igab_forward.33} parent=1 // pred_check
      _
    $region15: #{igab_forward.33} parent=1 // pred_check_branch
      %244 = sbr.rel (0) target = $region17
    $region16: #{igab_forward.33} parent=1 // pred_region
      %s246 = ssub.s32 2048, 2048
      %247 = vsyncadd [#allocation3], %s246
      %s248 = sshll.u32 [#allocation2], 4
      %s249 = int_to_ptr.vmem [resolvable:$true] %s248
      %254 = dma.vmem_to_hbm [thread:$0]  %s249, 2048, %s3, [#allocation3], 128, 128, 8
    $region17: #{igab_forward.33} parent=1 // pred_fallthru
      _
    // Predicated region
    $region18: #{igab_forward.33} parent=1 // pred_check
      _
    $region19: #{igab_forward.33} parent=1 // pred_check_branch
      %256 = sbr.rel (0) target = $region21
    $region20: #{igab_forward.33} parent=1 // pred_region
      %257 = dma.done [#allocation3], 2048
    $region21: #{igab_forward.33} parent=1 // pred_fallthru
      _
    %258 = vsyncpa [#allocation3], 1

// kernel: igab_forward.25
$region0: #{igab_forward.25}
  #allocation0 [shape = 'u32[]', space=smem, size = 0x4, offset = 0x4, fixed_abs, tag = 'smem constant byte address 0x4 - core index']
  #allocation1 [shape = 'u32[144,128]{1,0:T(1,128)}', space=vmem, size = 0x12000, scoped, tag = 'internal scratch']
  %s0 = inlined_call_operand.vmem [shape: bf16[128,32], index: 0, kind: input, shape index: {}]
  %s1 = inlined_call_operand.vmem [shape: bf16[32,16], index: 1, kind: input, shape index: {}]
  %s2 = inlined_call_operand.vmem [shape: f32[128,16], index: 2, kind: input, shape index: {}]
  %s3 = inlined_call_operand.vmem [shape: f32[128,16], index: 3, kind: output, shape index: {0}]
  %s4 = inlined_call_operand.vmem [shape: f32[2,16], index: 4, kind: output, shape index: {1}]
  %5 = xla_tuple %s3, %s4
  %s6 = sld [smem:[#allocation0]]
  $region34: #{igab_forward.25} parent=0
    _
  %s8 = ssub.s32 1, %s6
  %s9 = scalar_select 0, %s8, %s6
  // Predicated region
  $region2: #{igab_forward.25} parent=0 // pred_check
    _
  $region3: #{igab_forward.25} parent=0 // pred_check_branch
    %11 = sbr.rel (0) target = $region5
  $region4: #{igab_forward.25} parent=0 // pred_region
    _
  $region5: #{igab_forward.25} parent=0 // pred_fallthru
    _
  // Predicated region
  $region6: #{igab_forward.25} parent=0 // pred_check
    _
  $region7: #{igab_forward.25} parent=0 // pred_check_branch
    %13 = sbr.rel (0) target = $region9
  $region8: #{igab_forward.25} parent=0 // pred_region
    _
  $region9: #{igab_forward.25} parent=0 // pred_fallthru
    _
  // Predicated region
  $region10: #{igab_forward.25} parent=0 // pred_check
    _
  $region11: #{igab_forward.25} parent=0 // pred_check_branch
    %15 = sbr.rel (0) target = $region13
  $region12: #{igab_forward.25} parent=0 // pred_region
    _
  $region13: #{igab_forward.25} parent=0 // pred_fallthru
    _
  %v17 = vld [vmem:[%s0] sm:$0xf]
  %v18 = vld [vmem:[%s0 + $0x4] sm:$0xf]
  %v19 = vld [vmem:[%s0 + $0x8] sm:$0xf]
  %v20 = vld [vmem:[%s0 + $0xc] sm:$0xf]
  %v21 = vld [vmem:[%s0 + $0x10] sm:$0xf]
  %v22 = vld [vmem:[%s0 + $0x14] sm:$0xf]
  %v23 = vld [vmem:[%s0 + $0x18] sm:$0xf]
  %v24 = vld [vmem:[%s0 + $0x1c] sm:$0xf]
  %v25 = vld [vmem:[%s0 + $0x20] sm:$0xf]
  %v26 = vld [vmem:[%s0 + $0x24] sm:$0xf]
  %v27 = vld [vmem:[%s0 + $0x28] sm:$0xf]
  %v28 = vld [vmem:[%s0 + $0x2c] sm:$0xf]
  %v29 = vld [vmem:[%s0 + $0x30] sm:$0xf]
  %v30 = vld [vmem:[%s0 + $0x34] sm:$0xf]
  %v31 = vld [vmem:[%s0 + $0x38] sm:$0xf]
  %v32 = vld [vmem:[%s0 + $0x3c] sm:$0xf]
  %v33 = vld [vmem:[%s1] sm:$0xf]
  %v34 = vld [vmem:[%s1 + $0x4] sm:$0xf]
  %v35 = vld [vmem:[%s1 + $0x8] sm:$0xf]
  %v36 = vld [vmem:[%s1 + $0xc] sm:$0xf]
  %v37 = vld [vmem:[%s2] sm:$0xff]
  %v38 = vld [vmem:[%s2 + $0x8] sm:$0xff]
  %v39 = vld [vmem:[%s2 + $0x10] sm:$0xff]
  %v40 = vld [vmem:[%s2 + $0x18] sm:$0xff]
  %v41 = vld [vmem:[%s2 + $0x20] sm:$0xff]
  %v42 = vld [vmem:[%s2 + $0x28] sm:$0xff]
  %v43 = vld [vmem:[%s2 + $0x30] sm:$0xff]
  %v44 = vld [vmem:[%s2 + $0x38] sm:$0xff]
  %v45 = vld [vmem:[%s2 + $0x40] sm:$0xff]
  %v46 = vld [vmem:[%s2 + $0x48] sm:$0xff]
  %v47 = vld [vmem:[%s2 + $0x50] sm:$0xff]
  %v48 = vld [vmem:[%s2 + $0x58] sm:$0xff]
  %v49 = vld [vmem:[%s2 + $0x60] sm:$0xff]
  %v50 = vld [vmem:[%s2 + $0x68] sm:$0xff]
  %v51 = vld [vmem:[%s2 + $0x70] sm:$0xff]
  %v52 = vld [vmem:[%s2 + $0x78] sm:$0xff]
  %v69 = vunpack.c.l.b16 %v17
  %v70 = vunpack.c.l.b16 %v18
  %v71 = vunpack.c.l.b16 %v19
  %v72 = vunpack.c.l.b16 %v20
  %v73 = vunpack.c.l.b16 %v21
  %v74 = vunpack.c.l.b16 %v22
  %v75 = vunpack.c.l.b16 %v23
  %v76 = vunpack.c.l.b16 %v24
  %v77 = vunpack.c.l.b16 %v25
  %v78 = vunpack.c.l.b16 %v26
  %v79 = vunpack.c.l.b16 %v27
  %v80 = vunpack.c.l.b16 %v28
  %v81 = vunpack.c.l.b16 %v29
  %v82 = vunpack.c.l.b16 %v30
  %v83 = vunpack.c.l.b16 %v31
  %v84 = vunpack.c.l.b16 %v32
  %v85 = vpack.c.b16 %v70, %v69
  %v86 = vpack.c.b16 %v72, %v71
  %v87 = vpack.c.b16 %v74, %v73
  %v88 = vpack.c.b16 %v76, %v75
  %v89 = vpack.c.b16 %v78, %v77
  %v90 = vpack.c.b16 %v80, %v79
  %v91 = vpack.c.b16 %v82, %v81
  %v92 = vpack.c.b16 %v84, %v83
  %v97 = vunpack.c.l.b16 %v33
  %v98 = vunpack.c.l.b16 %v34
  %v99 = vunpack.c.l.b16 %v35
  %v100 = vunpack.c.l.b16 %v36
  %v101 = vpack.c.b16 %v98, %v97
  %v102 = vpack.c.b16 %v100, %v99
  %vm105 = vcmask 261120
  %v107 = vsel %vm105, %v85, 0
  %v110 = vsel %vm105, %v86, 0
  %v113 = vsel %vm105, %v87, 0
  %v116 = vsel %vm105, %v88, 0
  %v119 = vsel %vm105, %v89, 0
  %v122 = vsel %vm105, %v90, 0
  %v125 = vsel %vm105, %v91, 0
  %v128 = vsel %vm105, %v92, 0
  %130 = vmatprep.subr.bf16.mxu0 0
  %131 = vmatpush1.bf16.msra.mxu0 %v101
  %132 = vmatprep.subr.bf16.mxu0 0
  %133 = vmatpush1.bf16.msra.mxu0 %v102
  %134 = vmatprep.subr.bf16.mxu0 0
  %135 = vmatpush1.bf16.msra.mxu0 0
  %136 = vmatprep.subr.bf16.mxu0 0
  %137 = vmatpush1.bf16.msra.mxu0 0
  %138 = vmatprep.subr.bf16.mxu0 0
  %139 = vmatpush1.bf16.msra.mxu0 0
  %140 = vmatprep.subr.bf16.mxu0 0
  %141 = vmatpush1.bf16.msra.mxu0 0
  %142 = vmatprep.subr.bf16.mxu0 0
  %143 = vmatpush1.bf16.msra.mxu0 0
  %144 = vmatprep.subr.bf16.mxu0 0
  %145 = vmatpush1.bf16.msra.mxu0 0
  %146 = vmatprep.subr.bf16.mxu0 0
  %147 = vmatpush1.bf16.msra.mxu0 0
  %148 = vmatprep.subr.bf16.mxu0 0
  %149 = vmatpush1.bf16.msra.mxu0 0
  %150 = vmatprep.subr.bf16.mxu0 0
  %151 = vmatpush1.bf16.msra.mxu0 0
  %152 = vmatprep.subr.bf16.mxu0 0
  %153 = vmatpush1.bf16.msra.mxu0 0
  %154 = vmatprep.subr.bf16.mxu0 0
  %155 = vmatpush1.bf16.msra.mxu0 0
  %156 = vmatprep.subr.bf16.mxu0 0
  %157 = vmatpush1.bf16.msra.mxu0 0
  %158 = vmatprep.subr.bf16.mxu0 0
  %159 = vmatpush1.bf16.msra.mxu0 0
  %160 = vmatprep.subr.bf16.mxu0 0
  %161 = vmatpush1.bf16.msra.mxu0 0
  %162 = vmatprep.mubr.bf16.mxu0 0
  %163 = vmatmul.mubr.bf16.gmra.mrb[0].mxu0 %v107
  %v164 = vpop.f32.mrb[0].mxu0
  %v165 = vadd.f32 %v37, %v164
  %v166 = vpop.f32.mrb[0].mxu0
  %v167 = vpop.f32.mrb[0].mxu0
  %v168 = vadd.f32 %v38, %v167
  %v169 = vpop.f32.mrb[0].mxu0
  %170 = vmatprep.mubr.bf16.mxu0 0
  %171 = vmatmul.mubr.bf16.gmra.mrb[0].mxu0 %v110
  %v172 = vpop.f32.mrb[0].mxu0
  %v173 = vadd.f32 %v39, %v172
  %v174 = vpop.f32.mrb[0].mxu0
  %v175 = vpop.f32.mrb[0].mxu0
  %v176 = vadd.f32 %v40, %v175
  %v177 = vpop.f32.mrb[0].mxu0
  %178 = vmatprep.mubr.bf16.mxu0 0
  %179 = vmatmul.mubr.bf16.gmra.mrb[0].mxu0 %v113
  %v180 = vpop.f32.mrb[0].mxu0
  %v181 = vadd.f32 %v41, %v180
  %v182 = vpop.f32.mrb[0].mxu0
  %v183 = vpop.f32.mrb[0].mxu0
  %v184 = vadd.f32 %v42, %v183
  %v185 = vpop.f32.mrb[0].mxu0
  %186 = vmatprep.mubr.bf16.mxu0 0
  %187 = vmatmul.mubr.bf16.gmra.mrb[0].mxu0 %v116
  %v188 = vpop.f32.mrb[0].mxu0
  %v189 = vadd.f32 %v43, %v188
  %v190 = vpop.f32.mrb[0].mxu0
  %v191 = vpop.f32.mrb[0].mxu0
  %v192 = vadd.f32 %v44, %v191
  %v193 = vpop.f32.mrb[0].mxu0
  %194 = vmatprep.mubr.bf16.mxu0 0
  %195 = vmatmul.mubr.bf16.gmra.mrb[0].mxu0 %v119
  %v196 = vpop.f32.mrb[0].mxu0
  %v197 = vadd.f32 %v45, %v196
  %v198 = vpop.f32.mrb[0].mxu0
  %v199 = vpop.f32.mrb[0].mxu0
  %v200 = vadd.f32 %v46, %v199
  %v201 = vpop.f32.mrb[0].mxu0
  %202 = vmatprep.mubr.bf16.mxu0 0
  %203 = vmatmul.mubr.bf16.gmra.mrb[0].mxu0 %v122
  %v204 = vpop.f32.mrb[0].mxu0
  %v205 = vadd.f32 %v47, %v204
  %v206 = vpop.f32.mrb[0].mxu0
  %v207 = vpop.f32.mrb[0].mxu0
  %v208 = vadd.f32 %v48, %v207
  %v209 = vpop.f32.mrb[0].mxu0
  %210 = vmatprep.mubr.bf16.mxu0 0
  %211 = vmatmul.mubr.bf16.gmra.mrb[0].mxu0 %v125
  %v212 = vpop.f32.mrb[0].mxu0
  %v213 = vadd.f32 %v49, %v212
  %v214 = vpop.f32.mrb[0].mxu0
  %v215 = vpop.f32.mrb[0].mxu0
  %v216 = vadd.f32 %v50, %v215
  %v217 = vpop.f32.mrb[0].mxu0
  %218 = vmatprep.mubr.bf16.mxu0 0
  %219 = vmatmul.mubr.bf16.gmra.mrb[0].mxu0 %v128
  %v220 = vpop.f32.mrb[0].mxu0
  %v221 = vadd.f32 %v51, %v220
  %v222 = vpop.f32.mrb[0].mxu0
  %v223 = vpop.f32.mrb[0].mxu0
  %v224 = vadd.f32 %v52, %v223
  %v225 = vpop.f32.mrb[0].mxu0
  %226 = vdwg.mxu0
  %vm227 = vcmask 130048
  %228 = vst.msk [vmem:[%s3] sm:$0xff] %vm227, %v165
  %229 = vst.msk [vmem:[%s3 + $0x8] sm:$0xff] %vm227, %v168
  %230 = vst.msk [vmem:[%s3 + $0x10] sm:$0xff] %vm227, %v173
  %231 = vst.msk [vmem:[%s3 + $0x18] sm:$0xff] %vm227, %v176
  %232 = vst.msk [vmem:[%s3 + $0x20] sm:$0xff] %vm227, %v181
  %233 = vst.msk [vmem:[%s3 + $0x28] sm:$0xff] %vm227, %v184
  %234 = vst.msk [vmem:[%s3 + $0x30] sm:$0xff] %vm227, %v189
  %235 = vst.msk [vmem:[%s3 + $0x38] sm:$0xff] %vm227, %v192
  %236 = vst.msk [vmem:[%s3 + $0x40] sm:$0xff] %vm227, %v197
  %237 = vst.msk [vmem:[%s3 + $0x48] sm:$0xff] %vm227, %v200
  %238 = vst.msk [vmem:[%s3 + $0x50] sm:$0xff] %vm227, %v205
  %239 = vst.msk [vmem:[%s3 + $0x58] sm:$0xff] %vm227, %v208
  %240 = vst.msk [vmem:[%s3 + $0x60] sm:$0xff] %vm227, %v213
  %241 = vst.msk [vmem:[%s3 + $0x68] sm:$0xff] %vm227, %v216
  %242 = vst.msk [vmem:[%s3 + $0x70] sm:$0xff] %vm227, %v221
  %243 = vst.msk [vmem:[%s3 + $0x78] sm:$0xff] %vm227, %v224
  %v244 = vlaneseq
  %v245 = vshrl.u32 %v244, 7
  %v246 = vadd.s32 %v245, 8
  %v247 = vadd.s32 %v245, 16
  %v248 = vadd.s32 %v245, 24
  %v249 = vadd.s32 %v245, 32
  %v250 = vadd.s32 %v245, 40
  %v251 = vadd.s32 %v245, 48
  %v252 = vadd.s32 %v245, 56
  %v253 = vadd.s32 %v245, 64
  %v254 = vadd.s32 %v245, 72
  %v255 = vadd.s32 %v245, 80
  %v256 = vadd.s32 %v245, 88
  %v257 = vadd.s32 %v245, 96
  %v258 = vadd.s32 %v245, 104
  %v259 = vadd.s32 %v245, 112
  %v260 = vadd.s32 %v245, 120
  %s261 = smul.u32 0, 128
  %v262 = vstv %s261
  %v263 = vadd.s32 %v245, %v262
  %v264 = vadd.s32 %v246, %v262
  %v265 = vadd.s32 %v247, %v262
  %v266 = vadd.s32 %v248, %v262
  %v267 = vadd.s32 %v249, %v262
  %v268 = vadd.s32 %v250, %v262
  %v269 = vadd.s32 %v251, %v262
  %v270 = vadd.s32 %v252, %v262
  %v271 = vadd.s32 %v253, %v262
  %v272 = vadd.s32 %v254, %v262
  %v273 = vadd.s32 %v255, %v262
  %v274 = vadd.s32 %v256, %v262
  %v275 = vadd.s32 %v257, %v262
  %v276 = vadd.s32 %v258, %v262
  %v277 = vadd.s32 %v259, %v262
  %v278 = vadd.s32 %v260, %v262
  %v279 = vcvt.s32.f32 %v263
  %v280 = vcvt.s32.f32 %v264
  %v281 = vcvt.s32.f32 %v265
  %v282 = vcvt.s32.f32 %v266
  %v283 = vcvt.s32.f32 %v267
  %v284 = vcvt.s32.f32 %v268
  %v285 = vcvt.s32.f32 %v269
  %v286 = vcvt.s32.f32 %v270
  %v287 = vcvt.s32.f32 %v271
  %v288 = vcvt.s32.f32 %v272
  %v289 = vcvt.s32.f32 %v273
  %v290 = vcvt.s32.f32 %v274
  %v291 = vcvt.s32.f32 %v275
  %v292 = vcvt.s32.f32 %v276
  %v293 = vcvt.s32.f32 %v277
  %v294 = vcvt.s32.f32 %v278
  %vm295 = vcmp.lt.f32.partialorder %v279, 128.0
  %vm296 = vcmp.lt.f32.partialorder %v280, 128.0
  %vm297 = vcmp.lt.f32.partialorder %v281, 128.0
  %vm298 = vcmp.lt.f32.partialorder %v282, 128.0
  %vm299 = vcmp.lt.f32.partialorder %v283, 128.0
  %vm300 = vcmp.lt.f32.partialorder %v284, 128.0
  %vm301 = vcmp.lt.f32.partialorder %v285, 128.0
  %vm302 = vcmp.lt.f32.partialorder %v286, 128.0
  %vm303 = vcmp.lt.f32.partialorder %v287, 128.0
  %vm304 = vcmp.lt.f32.partialorder %v288, 128.0
  %vm305 = vcmp.lt.f32.partialorder %v289, 128.0
  %vm306 = vcmp.lt.f32.partialorder %v290, 128.0
  %vm307 = vcmp.lt.f32.partialorder %v291, 128.0
  %vm308 = vcmp.lt.f32.partialorder %v292, 128.0
  %vm309 = vcmp.lt.f32.partialorder %v293, 128.0
  %vm310 = vcmp.lt.f32.partialorder %v294, 128.0
  %v311 = vsel %vm295, 1, 0
  %v312 = vsel %vm296, 1, 0
  %v313 = vsel %vm297, 1, 0
  %v314 = vsel %vm298, 1, 0
  %v315 = vsel %vm299, 1, 0
  %v316 = vsel %vm300, 1, 0
  %v317 = vsel %vm301, 1, 0
  %v318 = vsel %vm302, 1, 0
  %v319 = vsel %vm303, 1, 0
  %v320 = vsel %vm304, 1, 0
  %v321 = vsel %vm305, 1, 0
  %v322 = vsel %vm306, 1, 0
  %v323 = vsel %vm307, 1, 0
  %v324 = vsel %vm308, 1, 0
  %v325 = vsel %vm309, 1, 0
  %v326 = vsel %vm310, 1, 0
  %vm327 = vcmp.eq.s32.totalorder %v311, 1
  %vm328 = vcmp.eq.s32.totalorder %v312, 1
  %vm329 = vcmp.eq.s32.totalorder %v313, 1
  %vm330 = vcmp.eq.s32.totalorder %v314, 1
  %vm331 = vcmp.eq.s32.totalorder %v315, 1
  %vm332 = vcmp.eq.s32.totalorder %v316, 1
  %vm333 = vcmp.eq.s32.totalorder %v317, 1
  %vm334 = vcmp.eq.s32.totalorder %v318, 1
  %vm335 = vcmp.eq.s32.totalorder %v319, 1
  %vm336 = vcmp.eq.s32.totalorder %v320, 1
  %vm337 = vcmp.eq.s32.totalorder %v321, 1
  %vm338 = vcmp.eq.s32.totalorder %v322, 1
  %vm339 = vcmp.eq.s32.totalorder %v323, 1
  %vm340 = vcmp.eq.s32.totalorder %v324, 1
  %vm341 = vcmp.eq.s32.totalorder %v325, 1
  %vm342 = vcmp.eq.s32.totalorder %v326, 1
  %v343 = vsel %vm327, %v165, 0.0
  %v344 = vsel %vm328, %v168, 0.0
  %v345 = vsel %vm329, %v173, 0.0
  %v346 = vsel %vm330, %v176, 0.0
  %v347 = vsel %vm331, %v181, 0.0
  %v348 = vsel %vm332, %v184, 0.0
  %v349 = vsel %vm333, %v189, 0.0
  %v350 = vsel %vm334, %v192, 0.0
  %v351 = vsel %vm335, %v197, 0.0
  %v352 = vsel %vm336, %v200, 0.0
  %v353 = vsel %vm337, %v205, 0.0
  %v354 = vsel %vm338, %v208, 0.0
  %v355 = vsel %vm339, %v213, 0.0
  %v356 = vsel %vm340, %v216, 0.0
  %v357 = vsel %vm341, %v221, 0.0
  %v358 = vsel %vm342, %v224, 0.0
  %p359 = scmp.eq.s32.totalorder 0, 0
  // Predicated region
  $region14: #{igab_forward.25} parent=0 // pred_check
    %p360 = pneg %p359
  $region15: #{igab_forward.25} parent=0 // pred_check_branch
    %362 = sbr.rel (%p360) target = $region17
  $region16: #{igab_forward.25} parent=0 // pred_region
    %vm363 = vcmask 123904
    %364 = vst.msk [vmem:[%s4] sm:$0x3] %vm363, 0.0
  $region17: #{igab_forward.25} parent=0 // pred_fallthru
    _
  %v365 = vld [vmem:[%s4] sm:$0x1]
  %v366 = vsel %vm227, %v343, 0.0
  %v367 = vsel %vm227, %v344, 0.0
  %v368 = vadd.f32 %v366, %v367
  %v369 = vsel %vm227, %v345, 0.0
  %v370 = vadd.f32 %v368, %v369
  %v371 = vsel %vm227, %v346, 0.0
  %v372 = vadd.f32 %v370, %v371
  %v373 = vsel %vm227, %v347, 0.0
  %v374 = vadd.f32 %v372, %v373
  %v375 = vsel %vm227, %v348, 0.0
  %v376 = vadd.f32 %v374, %v375
  %v377 = vsel %vm227, %v349, 0.0
  %v378 = vadd.f32 %v376, %v377
  %v379 = vsel %vm227, %v350, 0.0
  %v380 = vadd.f32 %v378, %v379
  %v381 = vsel %vm227, %v351, 0.0
  %v382 = vadd.f32 %v380, %v381
  %v383 = vsel %vm227, %v352, 0.0
  %v384 = vadd.f32 %v382, %v383
  %v385 = vsel %vm227, %v353, 0.0
  %v386 = vadd.f32 %v384, %v385
  %v387 = vsel %vm227, %v354, 0.0
  %v388 = vadd.f32 %v386, %v387
  %v389 = vsel %vm227, %v355, 0.0
  %v390 = vadd.f32 %v388, %v389
  %v391 = vsel %vm227, %v356, 0.0
  %v392 = vadd.f32 %v390, %v391
  %v393 = vsel %vm227, %v357, 0.0
  %v394 = vadd.f32 %v392, %v393
  %v395 = vsel %vm227, %v358, 0.0
  %v396 = vadd.f32 %v394, %v395
  %v397 = vrot.slane %v396, 4
  %v398 = vadd.f32 %v396, %v397
  %v399 = vrot.slane %v398, 2
  %v400 = vadd.f32 %v398, %v399
  %v401 = vrot.slane %v400, 1
  %v402 = vadd.f32 %v400, %v401
  %v403 = vadd.f32 %v365, %v402
  %vm404 = vcmask 122880
  %405 = vst.msk [vmem:[%s4] sm:$0x1] %vm404, %v403
  %v406 = vld [vmem:[%s4 + $0x1] sm:$0x1]
  %v407 = vmul.f32 %v343, %v343
  %v408 = vmul.f32 %v344, %v344
  %v409 = vmul.f32 %v345, %v345
  %v410 = vmul.f32 %v346, %v346
  %v411 = vmul.f32 %v347, %v347
  %v412 = vmul.f32 %v348, %v348
  %v413 = vmul.f32 %v349, %v349
  %v414 = vmul.f32 %v350, %v350
  %v415 = vmul.f32 %v351, %v351
  %v416 = vmul.f32 %v352, %v352
  %v417 = vmul.f32 %v353, %v353
  %v418 = vmul.f32 %v354, %v354
  %v419 = vmul.f32 %v355, %v355
  %v420 = vmul.f32 %v356, %v356
  %v421 = vmul.f32 %v357, %v357
  %v422 = vmul.f32 %v358, %v358
  %v423 = vsel %vm227, %v407, 0.0
  %v424 = vsel %vm227, %v408, 0.0
  %v425 = vadd.f32 %v423, %v424
  %v426 = vsel %vm227, %v409, 0.0
  %v427 = vadd.f32 %v425, %v426
  %v428 = vsel %vm227, %v410, 0.0
  %v429 = vadd.f32 %v427, %v428
  %v430 = vsel %vm227, %v411, 0.0
  %v431 = vadd.f32 %v429, %v430
  %v432 = vsel %vm227, %v412, 0.0
  %v433 = vadd.f32 %v431, %v432
  %v434 = vsel %vm227, %v413, 0.0
  %v435 = vadd.f32 %v433, %v434
  %v436 = vsel %vm227, %v414, 0.0
  %v437 = vadd.f32 %v435, %v436
  %v438 = vsel %vm227, %v415, 0.0
  %v439 = vadd.f32 %v437, %v438
  %v440 = vsel %vm227, %v416, 0.0
  %v441 = vadd.f32 %v439, %v440
  %v442 = vsel %vm227, %v417, 0.0
  %v443 = vadd.f32 %v441, %v442
  %v444 = vsel %vm227, %v418, 0.0
  %v445 = vadd.f32 %v443, %v444
  %v446 = vsel %vm227, %v419, 0.0
  %v447 = vadd.f32 %v445, %v446
  %v448 = vsel %vm227, %v420, 0.0
  %v449 = vadd.f32 %v447, %v448
  %v450 = vsel %vm227, %v421, 0.0
  %v451 = vadd.f32 %v449, %v450
  %v452 = vsel %vm227, %v422, 0.0
  %v453 = vadd.f32 %v451, %v452
  %v454 = vrot.slane %v453, 4
  %v455 = vadd.f32 %v453, %v454
  %v456 = vrot.slane %v455, 2
  %v457 = vadd.f32 %v455, %v456
  %v458 = vrot.slane %v457, 1
  %v459 = vadd.f32 %v457, %v458
  %v460 = vadd.f32 %v406, %v459
  %461 = vst.msk [vmem:[%s4 + $0x1] sm:$0x1] %vm404, %v460
  // Predicated region
  $region18: #{igab_forward.25} parent=0 // pred_check
    _
  $region19: #{igab_forward.25} parent=0 // pred_check_branch
    %463 = sbr.rel (0) target = $region21
  $region20: #{igab_forward.25} parent=0 // pred_region
    _
  $region21: #{igab_forward.25} parent=0 // pred_fallthru
    _
  // Predicated region
  $region22: #{igab_forward.25} parent=0 // pred_check
    _
  $region23: #{igab_forward.25} parent=0 // pred_check_branch
    %465 = sbr.rel (0) target = $region25
  $region24: #{igab_forward.25} parent=0 // pred_region
    _
  $region25: #{igab_forward.25} parent=0 // pred_fallthru
    _
  // Predicated region
  $region26: #{igab_forward.25} parent=0 // pred_check
    _
  $region27: #{igab_forward.25} parent=0 // pred_check_branch
    %467 = sbr.rel (0) target = $region29
  $region28: #{igab_forward.25} parent=0 // pred_region
    _
  $region29: #{igab_forward.25} parent=0 // pred_fallthru
    _
  // Predicated region
  $region30: #{igab_forward.25} parent=0 // pred_check
    _
  $region31: #{igab_forward.25} parent=0 // pred_check_branch
    %469 = sbr.rel (0) target = $region33
  $region32: #{igab_forward.25} parent=0 // pred_region
    _
  $region33: #{igab_forward.25} parent=0 // pred_fallthru
    _

</llo_original>
